<compile_context>
chip_gen: v5e
topology: v5e:2x2
jax: 0.10.0
libtpu: 0.0.40
codegen_flags: <defaults>
</compile_context>

<pallas_src>
import functools

import jax
import jax.numpy as jnp
from jax.experimental import pallas as pl
from jax.experimental.pallas import tpu as pltpu

LANE = 128      # vreg lane width
SUBLANE = 8     # f32 sublane depth


def _round_up(x, m):
    return ((x + m - 1) // m) * m


# ----------------------------- Pallas kernel -------------------------------

def _fused_encoder_classifier_kernel(x_ref, cw_ref, lw_ref, lb_ref, o_ref,
                                     *, H, W, C):
    """In-kernel im2col conv + ReLU + GAP + fused classifier head.

    x_ref  : [bt, H+2, W+2, C]  zero-padded NHWC image tile (bf16)
    cw_ref : [9C+1, Fp]         conv weights; last row = conv bias (bf16)
    lw_ref : [Fp, Cp]           classifier weights * 1/(H*W) (bf16)
    lb_ref : [1, Cp]            classifier bias (f32)
    o_ref  : [bt, Cp]           logits (f32, lane-dense padded)
    """
    bt = x_ref.shape[0]
    x = x_ref[...]                                        # [bt, H+2, W+2, C]

    # Build the 3x3 im2col patches in VMEM from 9 shifted views.  The trailing
    # ones column folds the conv bias into the matmul (no separate VALU add).
    cols = [x[:, di:di + H, dj:dj + W, :]
            for di in range(3) for dj in range(3)]        # 9 x [bt, H, W, C]
    cols.append(jnp.ones((bt, H, W, 1), x.dtype))
    patches = jnp.concatenate(cols, axis=-1)              # [bt, H, W, 9C+1]
    p2d = patches.reshape(bt * H * W, 9 * C + 1)

    # One tall 2-D MXU matmul (bf16 in, f32 accumulate); f32 ReLU epilogue.
    # (On v6e/v7x a bf16 ReLU pass would halve vreg traffic; kept f32 so the
    # same kernel stays optimal-ish on v5e which has no bf16 VPU path.)
    y = jnp.dot(p2d, cw_ref[...], preferred_element_type=jnp.float32)
    y = jnp.maximum(y, 0.0)                               # [bt*H*W, Fp]

    # Global average pool as a plain sum; 1/(H*W) is folded into lw.
    feats = y.reshape(bt, H * W, -1).sum(axis=1)          # [bt, Fp] f32

    # Fused classifier: bf16 MXU matmul, f32 bias add + store.
    logits = jnp.dot(feats.astype(lw_ref.dtype), lw_ref[...],
                     preferred_element_type=jnp.float32) + lb_ref[...]
    o_ref[...] = logits.astype(o_ref.dtype)


# ------------------------------- wrapper ------------------------------------

@functools.partial(jax.jit, static_argnames=("compute_dtype",))
def simclr_forward(x_nchw, params, *, compute_dtype=jnp.bfloat16):
    conv_w, conv_b = params["conv_w"], params["conv_b"]   # [9*C_in, F], [F]
    lin_w, lin_b = params["lin_w"], params["lin_b"]       # [F, C_out], [C_out]

    B, C_in, H, W = x_nchw.shape
    K, F = conv_w.shape
    assert K == 9 * C_in
    C_out = lin_w.shape[1]
    K1 = K + 1                                            # + bias row / ones col

    # Lane-dense padded feature / class dims.  (On v6e/v7x, round F to 256 when
    # the real encoder's F >= 256 to fill both MXU halves.)
    Fp = _round_up(F, LANE)
    Cp = _round_up(C_out, LANE)

    # Batch tiling: keep the per-tile f32 conv activation under a VMEM budget,
    # and when the batch is large enough give the "parallel" grid axis >= 2
    # tiles so v7x can shard it across its two TensorCores.
    act_bytes_per_row = H * W * Fp * 4
    bt = max(SUBLANE, (8 * 1024 * 1024 // act_bytes_per_row) // SUBLANE * SUBLANE)
    Bp = _round_up(B, SUBLANE)
    bt = min(bt, Bp)
    if Bp // bt < 2 and Bp >= 2 * SUBLANE:
        bt = _round_up(Bp // 2, SUBLANE)
    Bp = _round_up(Bp, bt)
    n_b = Bp // bt

    # Raw NHWC image with spatial zero padding (conv padding=1); batch padded
    # with zero rows that are sliced off below.  NO 9x im2col expansion in HBM.
    x_nhwc = jnp.transpose(x_nchw, (0, 2, 3, 1))
    x_pad = jnp.pad(x_nhwc, ((0, Bp - B), (1, 1), (1, 1), (0, 0)))
    x_pad = x_pad.astype(compute_dtype)                   # [Bp, H+2, W+2, C_in]

    # Conv weight with the bias folded in as an extra (last) row; F zero-padded
    # to Fp (exact: padded columns stay 0 through ReLU and hit zero lw rows).
    cw = jnp.zeros((K1, Fp), jnp.float32)
    cw = cw.at[:K, :F].set(conv_w).at[K, :F].set(conv_b)
    cw = cw.astype(compute_dtype)

    # Classifier weight in bf16 with the 1/(H*W) GAP scale folded in; bias f32.
    lw = (jnp.zeros((Fp, Cp), jnp.float32)
          .at[:F, :C_out].set(lin_w / (H * W)).astype(compute_dtype))
    lb = jnp.zeros((1, Cp), jnp.float32).at[0, :C_out].set(lin_b)

    kernel = functools.partial(_fused_encoder_classifier_kernel,
                               H=H, W=W, C=C_in)

    cost = pl.CostEstimate(
        flops=2 * Bp * H * W * K1 * Fp + 2 * Bp * Fp * Cp,
        transcendentals=0,
        bytes_accessed=(x_pad.size * x_pad.dtype.itemsize
                        + cw.size * cw.dtype.itemsize
                        + lw.size * lw.dtype.itemsize
                        + lb.size * 4 + Bp * Cp * 4),
    )

    out = pl.pallas_call(
        kernel,
        out_shape=jax.ShapeDtypeStruct((Bp, Cp), jnp.float32),
        grid_spec=pltpu.PrefetchScalarGridSpec(
            num_scalar_prefetch=0,
            grid=(n_b,),
            in_specs=[
                pl.BlockSpec((bt, H + 2, W + 2, C_in), lambda b: (b, 0, 0, 0)),
                # Grid-invariant weights (DMA'd once).  On v7x at real encoder
                # sizes, single-buffer these (pipeline_mode=pl.Buffered(1)) to
                # free scoped VMEM for larger image tiles.
                pl.BlockSpec((K1, Fp), lambda b: (0, 0)),
                pl.BlockSpec((Fp, Cp), lambda b: (0, 0)),
                pl.BlockSpec((1, Cp), lambda b: (0, 0)),
            ],
            out_specs=pl.BlockSpec((bt, Cp), lambda b: (b, 0)),
        ),
        compiler_params=pltpu.CompilerParams(
            dimension_semantics=("parallel",),
            vmem_limit_bytes=32 * 1024 * 1024),
        cost_estimate=cost,
    )(x_pad, cw, lw, lb)

    return out[:B, :C_out]


# --------------------------------- main --------------------------------------

def _im2col_3x3_ref(x_nchw):
    """Reference NCHW -> [B, H*W, 9C] patches (same tap ordering as kernel)."""
    B, C, H, W = x_nchw.shape
    xn = jnp.transpose(x_nchw, (0, 2, 3, 1))
    xp = jnp.pad(xn, ((0, 0), (1, 1), (1, 1), (0, 0)))
    cols = [xp[:, di:di + H, dj:dj + W, :] for di in range(3) for dj in range(3)]
    return jnp.concatenate(cols, axis=-1).reshape(B, H * W, 9 * C)


if __name__ == "__main__":
    B, C_in, H, W = 2, 4, 16, 16
    F = 32                 # linear_in_features of the (synthetic) encoder
    NUM_CLASSES = 10       # linear_out_features
    K = 3 * 3 * C_in

    key = jax.random.PRNGKey(0)
    k_x, k_cw, k_lw = jax.random.split(key, 3)

    x = jax.random.normal(k_x, (B, C_in, H, W), dtype=jnp.float32)

    # deterministic synthetic weights (mirroring init_params: kaiming-ish conv,
    # normal(std=0.001) linear, zero biases)
    conv_w = jax.random.normal(k_cw, (K, F), dtype=jnp.float32) * (2.0 / K) ** 0.5
    conv_b = jnp.zeros((F,), dtype=jnp.float32)
    lin_w = jax.random.normal(k_lw, (F, NUM_CLASSES), dtype=jnp.float32) * 0.001
    lin_b = jnp.zeros((NUM_CLASSES,), dtype=jnp.float32)

    params = {"conv_w": conv_w, "conv_b": conv_b, "lin_w": lin_w, "lin_b": lin_b}

    out = simclr_forward(x, params)
    out = jax.block_until_ready(out)
    assert out.shape == (B, NUM_CLASSES)

    # pure-JAX reference mirroring the kernel numerics (bf16 MXU inputs, f32
    # accumulation, GAP-sum with the 1/HW scale folded into the bf16 lw).
    patches_ref = _im2col_3x3_ref(x).astype(jnp.bfloat16)
    y_ref = jnp.einsum("bpk,kf->bpf", patches_ref, conv_w.astype(jnp.bfloat16),
                       preferred_element_type=jnp.float32)
    y_ref = jnp.maximum(
        y_ref + conv_b.astype(jnp.bfloat16).astype(jnp.float32)[None, None, :], 0.0)
    feats_ref = y_ref.sum(axis=1)                               # [B, F] f32 sums
    lw_q = (lin_w / (H * W)).astype(jnp.bfloat16)
    ref = jnp.dot(feats_ref.astype(jnp.bfloat16), lw_q,
                  preferred_element_type=jnp.float32) + lin_b[None, :]

    assert jnp.allclose(out, ref, atol=1e-3, rtol=1e-2), (
        f"max abs err {jnp.max(jnp.abs(out - ref))}")

    # TODO(synk): the real timm encoder architecture is unspecified; a minimal
    # conv+ReLU+GAP encoder stands in for it.  projection_head is not used by
    # forward() and is therefore not implemented.
    print("KERNEL_OK")
</pallas_src>

<mosaic_0001>
module attributes {stable_mosaic.version = 11 : i64} {
  func.func @_fused_encoder_classifier_kernel(%arg0: i32, %arg1: memref<8x18x18x4xbf16, #tpu.memory_space<vmem>>, %arg2: memref<37x128xbf16, #tpu.memory_space<vmem>>, %arg3: memref<128x128xbf16, #tpu.memory_space<vmem>>, %arg4: memref<1x128xf32, #tpu.memory_space<vmem>>, %arg5: memref<8x128xf32, #tpu.memory_space<vmem>>) attributes {dimension_semantics = [#tpu.dimension_semantics<parallel>], iteration_bounds = array<i64: 1>, scalar_prefetch = 0 : i64, scratch_operands = 0 : i64, tpu.core_type = #tpu.core_type<tc>, window_params = [{transform_indices = @transform_0, window_bounds = array<i64: 8, 18, 18, 4>}, {pipeline_mode = #tpu.pipeline_mode<synchronous>, transform_indices = @transform_1, window_bounds = array<i64: 37, 128>}, {pipeline_mode = #tpu.pipeline_mode<synchronous>, transform_indices = @transform_2, window_bounds = array<i64: 128, 128>}, {pipeline_mode = #tpu.pipeline_mode<synchronous>, transform_indices = @transform_3, window_bounds = array<i64: 1, 128>}, {transform_indices = @transform_4, window_bounds = array<i64: 8, 128>}]} {
    %c0 = arith.constant 0 : index
    %c0_0 = arith.constant 0 : index
    %c0_1 = arith.constant 0 : index
    %c0_2 = arith.constant 0 : index
    %0 = vector.load %arg1[%c0, %c0_0, %c0_1, %c0_2] : memref<8x18x18x4xbf16, #tpu.memory_space<vmem>>, vector<8x18x18x4xbf16>
    %1 = vector.extract_strided_slice %0 {offsets = [0, 0, 0, 0], sizes = [8, 16, 16, 4], strides = [1, 1, 1, 1]} : vector<8x18x18x4xbf16> to vector<8x16x16x4xbf16>
    %2 = vector.extract_strided_slice %0 {offsets = [0, 0, 1, 0], sizes = [8, 16, 16, 4], strides = [1, 1, 1, 1]} : vector<8x18x18x4xbf16> to vector<8x16x16x4xbf16>
    %3 = vector.extract_strided_slice %0 {offsets = [0, 0, 2, 0], sizes = [8, 16, 16, 4], strides = [1, 1, 1, 1]} : vector<8x18x18x4xbf16> to vector<8x16x16x4xbf16>
    %4 = vector.extract_strided_slice %0 {offsets = [0, 1, 0, 0], sizes = [8, 16, 16, 4], strides = [1, 1, 1, 1]} : vector<8x18x18x4xbf16> to vector<8x16x16x4xbf16>
    %5 = vector.extract_strided_slice %0 {offsets = [0, 1, 1, 0], sizes = [8, 16, 16, 4], strides = [1, 1, 1, 1]} : vector<8x18x18x4xbf16> to vector<8x16x16x4xbf16>
    %6 = vector.extract_strided_slice %0 {offsets = [0, 1, 2, 0], sizes = [8, 16, 16, 4], strides = [1, 1, 1, 1]} : vector<8x18x18x4xbf16> to vector<8x16x16x4xbf16>
    %7 = vector.extract_strided_slice %0 {offsets = [0, 2, 0, 0], sizes = [8, 16, 16, 4], strides = [1, 1, 1, 1]} : vector<8x18x18x4xbf16> to vector<8x16x16x4xbf16>
    %8 = vector.extract_strided_slice %0 {offsets = [0, 2, 1, 0], sizes = [8, 16, 16, 4], strides = [1, 1, 1, 1]} : vector<8x18x18x4xbf16> to vector<8x16x16x4xbf16>
    %9 = vector.extract_strided_slice %0 {offsets = [0, 2, 2, 0], sizes = [8, 16, 16, 4], strides = [1, 1, 1, 1]} : vector<8x18x18x4xbf16> to vector<8x16x16x4xbf16>
    %cst = arith.constant 1.000000e+00 : bf16
    %10 = vector.broadcast %cst : bf16 to vector<8x16x16x1xbf16>
    %11 = tpu.concatenate %1, %2, %3, %4, %5, %6, %7, %8, %9, %10 in 3 : vector<8x16x16x4xbf16>, vector<8x16x16x4xbf16>, vector<8x16x16x4xbf16>, vector<8x16x16x4xbf16>, vector<8x16x16x4xbf16>, vector<8x16x16x4xbf16>, vector<8x16x16x4xbf16>, vector<8x16x16x4xbf16>, vector<8x16x16x4xbf16>, vector<8x16x16x1xbf16> -> vector<8x16x16x37xbf16>
    %12 = vector.shape_cast %11 : vector<8x16x16x37xbf16> to vector<2048x37xbf16>
    %c0_3 = arith.constant 0 : index
    %c0_4 = arith.constant 0 : index
    %13 = vector.load %arg2[%c0_3, %c0_4] : memref<37x128xbf16, #tpu.memory_space<vmem>>, vector<37x128xbf16>
    %cst_5 = arith.constant dense<0.000000e+00> : vector<2048x128xf32>
    %14 = tpu.matmul %12, %13, %cst_5 {dimension_numbers = #tpu.dot_dimension_numbers<[1], [0], [0], [1], [0, 0, 1, 1], [], []>} : vector<2048x37xbf16>, vector<37x128xbf16>, vector<2048x128xf32> -> vector<2048x128xf32>
    %cst_6 = arith.constant 0.000000e+00 : f32
    %15 = vector.broadcast %cst_6 : f32 to vector<2048x128xf32>
    %16 = arith.maximumf %14, %15 : vector<2048x128xf32>
    %17 = vector.shape_cast %16 : vector<2048x128xf32> to vector<8x256x128xf32>
    %cst_7 = arith.constant dense<0.000000e+00> : vector<8x128xf32>
    %18 = vector.multi_reduction <add>, %17, %cst_7 [1] : vector<8x256x128xf32> to vector<8x128xf32>
    %19 = arith.truncf %18 : vector<8x128xf32> to vector<8x128xbf16>
    %c0_8 = arith.constant 0 : index
    %c0_9 = arith.constant 0 : index
    %20 = vector.load %arg3[%c0_8, %c0_9] : memref<128x128xbf16, #tpu.memory_space<vmem>>, vector<128x128xbf16>
    %cst_10 = arith.constant dense<0.000000e+00> : vector<8x128xf32>
    %21 = tpu.matmul %19, %20, %cst_10 {dimension_numbers = #tpu.dot_dimension_numbers<[1], [0], [0], [1], [0, 0, 1, 1], [], []>} : vector<8x128xbf16>, vector<128x128xbf16>, vector<8x128xf32> -> vector<8x128xf32>
    %c0_11 = arith.constant 0 : index
    %c0_12 = arith.constant 0 : index
    %22 = vector.load %arg4[%c0_11, %c0_12] : memref<1x128xf32, #tpu.memory_space<vmem>>, vector<1x128xf32>
    %23 = vector.broadcast %22 : vector<1x128xf32> to vector<8x128xf32>
    %24 = arith.addf %21, %23 : vector<8x128xf32>
    %c0_13 = arith.constant 0 : index
    %c0_14 = arith.constant 0 : index
    %25 = vector.load %arg5[%c0_13, %c0_14] : memref<8x128xf32, #tpu.memory_space<vmem>>, vector<8x128xf32>
    tpu.vector_store %arg5[%c0_13, %c0_14], %24 {strides = array<i32>} : memref<8x128xf32, #tpu.memory_space<vmem>>, vector<8x128xf32>,
    return
  }
  func.func @transform_0(%arg0: i32) -> (i32, i32, i32, i32) {
    %c0_i32 = arith.constant 0 : i32
    %c0_i32_0 = arith.constant 0 : i32
    %c0_i32_1 = arith.constant 0 : i32
    %c0_i32_2 = arith.constant 0 : i32
    return %arg0, %c0_i32, %c0_i32_0, %c0_i32_1 : i32, i32, i32, i32
  }
  func.func @transform_1(%arg0: i32) -> (i32, i32) {
    %c0_i32 = arith.constant 0 : i32
    %c0_i32_0 = arith.constant 0 : i32
    %c0_i32_1 = arith.constant 0 : i32
    return %c0_i32, %c0_i32_0 : i32, i32
  }
  func.func @transform_2(%arg0: i32) -> (i32, i32) {
    %c0_i32 = arith.constant 0 : i32
    %c0_i32_0 = arith.constant 0 : i32
    %c0_i32_1 = arith.constant 0 : i32
    return %c0_i32, %c0_i32_0 : i32, i32
  }
  func.func @transform_3(%arg0: i32) -> (i32, i32) {
    %c0_i32 = arith.constant 0 : i32
    %c0_i32_0 = arith.constant 0 : i32
    %c0_i32_1 = arith.constant 0 : i32
    return %c0_i32, %c0_i32_0 : i32, i32
  }
  func.func @transform_4(%arg0: i32) -> (i32, i32) {
    %c0_i32 = arith.constant 0 : i32
    %c0_i32_0 = arith.constant 0 : i32
    return %arg0, %c0_i32 : i32, i32
  }
}

</mosaic_0001>

<llo_original>
// kernel: simclr_forward.1
$region0: #{simclr_forward.1}
  #allocation0 [shape = 'u32[]', space=smem, size = 0x4, offset = 0x4, fixed_abs, tag = 'smem constant byte address 0x4 - core index']
  #allocation1 [shape = 'u32[72,128]{1,0:T(1,128)}', space=vmem, size = 0x9000, scoped, tag = 'internal scratch']
  %s0 = inlined_call_operand.vmem [shape: bf16[8,18,18,4], index: 0, kind: input, shape index: {}]
  %s1 = inlined_call_operand.vmem [shape: bf16[37,128], index: 1, kind: input, shape index: {}]
  %s2 = inlined_call_operand.vmem [shape: bf16[128,128], index: 2, kind: input, shape index: {}]
  %s3 = inlined_call_operand.vmem [shape: f32[1,128], index: 3, kind: input, shape index: {}]
  %s4 = inlined_call_operand.vmem [shape: f32[8,128], index: 4, kind: output, shape index: {}]
  %s5 = sld [smem:[#allocation0]]
  $region26: #{simclr_forward.1} parent=0
    _
  %s7 = ssub.s32 1, %s5
  %s8 = scalar_select 0, %s7, %s5
  // Predicated region
  $region2: #{simclr_forward.1} parent=0 // pred_check
    _
  $region3: #{simclr_forward.1} parent=0 // pred_check_branch
    %10 = sbr.rel (0) target = $region5
  $region4: #{simclr_forward.1} parent=0 // pred_region
    _
  $region5: #{simclr_forward.1} parent=0 // pred_fallthru
    _
  // Predicated region
  $region6: #{simclr_forward.1} parent=0 // pred_check
    _
  $region7: #{simclr_forward.1} parent=0 // pred_check_branch
    %12 = sbr.rel (0) target = $region9
  $region8: #{simclr_forward.1} parent=0 // pred_region
    _
  $region9: #{simclr_forward.1} parent=0 // pred_fallthru
    _
  // Predicated region
  $region10: #{simclr_forward.1} parent=0 // pred_check
    _
  $region11: #{simclr_forward.1} parent=0 // pred_check_branch
    %14 = sbr.rel (0) target = $region13
  $region12: #{simclr_forward.1} parent=0 // pred_region
    _
  $region13: #{simclr_forward.1} parent=0 // pred_fallthru
    _
  // Predicated region
  $region14: #{simclr_forward.1} parent=0 // pred_check
    _
  $region15: #{simclr_forward.1} parent=0 // pred_check_branch
    %16 = sbr.rel (0) target = $region17
  $region16: #{simclr_forward.1} parent=0 // pred_region
    _
  $region17: #{simclr_forward.1} parent=0 // pred_fallthru
    _
  %v19 = vld [vmem:[%s0] sm:$0xf]
  %v20 = vld [vmem:[%s0 + $0x4] sm:$0xf]
  %v21 = vld [vmem:[%s0 + $0x8] sm:$0x1]
  %v22 = vld [vmem:[%s0 + $0xc] sm:$0xf]
  %v23 = vld [vmem:[%s0 + $0x10] sm:$0xf]
  %v24 = vld [vmem:[%s0 + $0x14] sm:$0x1]
  %v25 = vld [vmem:[%s0 + $0x18] sm:$0xf]
  %v26 = vld [vmem:[%s0 + $0x1c] sm:$0xf]
  %v27 = vld [vmem:[%s0 + $0x20] sm:$0x1]
  %v28 = vld [vmem:[%s0 + $0x24] sm:$0xf]
  %v29 = vld [vmem:[%s0 + $0x28] sm:$0xf]
  %v30 = vld [vmem:[%s0 + $0x2c] sm:$0x1]
  %v31 = vld [vmem:[%s0 + $0x30] sm:$0xf]
  %v32 = vld [vmem:[%s0 + $0x34] sm:$0xf]
  %v33 = vld [vmem:[%s0 + $0x38] sm:$0x1]
  %v34 = vld [vmem:[%s0 + $0x3c] sm:$0xf]
  %v35 = vld [vmem:[%s0 + $0x40] sm:$0xf]
  %v36 = vld [vmem:[%s0 + $0x44] sm:$0x1]
  %v37 = vld [vmem:[%s0 + $0x48] sm:$0xf]
  %v38 = vld [vmem:[%s0 + $0x4c] sm:$0xf]
  %v39 = vld [vmem:[%s0 + $0x50] sm:$0x1]
  %v40 = vld [vmem:[%s0 + $0x54] sm:$0xf]
  %v41 = vld [vmem:[%s0 + $0x58] sm:$0xf]
  %v42 = vld [vmem:[%s0 + $0x5c] sm:$0x1]
  %v43 = vld [vmem:[%s0 + $0x60] sm:$0xf]
  %v44 = vld [vmem:[%s0 + $0x64] sm:$0xf]
  %v45 = vld [vmem:[%s0 + $0x68] sm:$0x1]
  %v46 = vld [vmem:[%s0 + $0x6c] sm:$0xf]
  %v47 = vld [vmem:[%s0 + $0x70] sm:$0xf]
  %v48 = vld [vmem:[%s0 + $0x74] sm:$0x1]
  %v49 = vld [vmem:[%s0 + $0x78] sm:$0xf]
  %v50 = vld [vmem:[%s0 + $0x7c] sm:$0xf]
  %v51 = vld [vmem:[%s0 + $0x80] sm:$0x1]
  %v52 = vld [vmem:[%s0 + $0x84] sm:$0xf]
  %v53 = vld [vmem:[%s0 + $0x88] sm:$0xf]
  %v54 = vld [vmem:[%s0 + $0x8c] sm:$0x1]
  %v55 = vld [vmem:[%s0 + $0x90] sm:$0xf]
  %v56 = vld [vmem:[%s0 + $0x94] sm:$0xf]
  %v57 = vld [vmem:[%s0 + $0x98] sm:$0x1]
  %v58 = vld [vmem:[%s0 + $0x9c] sm:$0xf]
  %v59 = vld [vmem:[%s0 + $0xa0] sm:$0xf]
  %v60 = vld [vmem:[%s0 + $0xa4] sm:$0x1]
  %v61 = vld [vmem:[%s0 + $0xa8] sm:$0xf]
  %v62 = vld [vmem:[%s0 + $0xac] sm:$0xf]
  %v63 = vld [vmem:[%s0 + $0xb0] sm:$0x1]
  %v64 = vld [vmem:[%s0 + $0xb4] sm:$0xf]
  %v65 = vld [vmem:[%s0 + $0xb8] sm:$0xf]
  %v66 = vld [vmem:[%s0 + $0xbc] sm:$0x1]
  %v67 = vld [vmem:[%s0 + $0xc0] sm:$0xf]
  %v68 = vld [vmem:[%s0 + $0xc4] sm:$0xf]
  %v69 = vld [vmem:[%s0 + $0xc8] sm:$0x1]
  %v70 = vld [vmem:[%s0 + $0xcc] sm:$0xf]
  %v71 = vld [vmem:[%s0 + $0xd0] sm:$0xf]
  %v72 = vld [vmem:[%s0 + $0xd4] sm:$0x1]
  %v73 = vld [vmem:[%s0 + $0xd8] sm:$0xf]
  %v74 = vld [vmem:[%s0 + $0xdc] sm:$0xf]
  %v75 = vld [vmem:[%s0 + $0xe0] sm:$0x1]
  %v76 = vld [vmem:[%s0 + $0xe4] sm:$0xf]
  %v77 = vld [vmem:[%s0 + $0xe8] sm:$0xf]
  %v78 = vld [vmem:[%s0 + $0xec] sm:$0x1]
  %v79 = vld [vmem:[%s0 + $0xf0] sm:$0xf]
  %v80 = vld [vmem:[%s0 + $0xf4] sm:$0xf]
  %v81 = vld [vmem:[%s0 + $0xf8] sm:$0x1]
  %v82 = vld [vmem:[%s0 + $0xfc] sm:$0xf]
  %v83 = vld [vmem:[%s0 + $0x100] sm:$0xf]
  %v84 = vld [vmem:[%s0 + $0x104] sm:$0x1]
  %v85 = vld [vmem:[%s0 + $0x108] sm:$0xf]
  %v86 = vld [vmem:[%s0 + $0x10c] sm:$0xf]
  %v87 = vld [vmem:[%s0 + $0x110] sm:$0x1]
  %v88 = vld [vmem:[%s0 + $0x114] sm:$0xf]
  %v89 = vld [vmem:[%s0 + $0x118] sm:$0xf]
  %v90 = vld [vmem:[%s0 + $0x11c] sm:$0x1]
  %v91 = vld [vmem:[%s0 + $0x120] sm:$0xf]
  %v92 = vld [vmem:[%s0 + $0x124] sm:$0xf]
  %v93 = vld [vmem:[%s0 + $0x128] sm:$0x1]
  %v94 = vld [vmem:[%s0 + $0x12c] sm:$0xf]
  %v95 = vld [vmem:[%s0 + $0x130] sm:$0xf]
  %v96 = vld [vmem:[%s0 + $0x134] sm:$0x1]
  %v97 = vld [vmem:[%s0 + $0x138] sm:$0xf]
  %v98 = vld [vmem:[%s0 + $0x13c] sm:$0xf]
  %v99 = vld [vmem:[%s0 + $0x140] sm:$0x1]
  %v100 = vld [vmem:[%s0 + $0x144] sm:$0xf]
  %v101 = vld [vmem:[%s0 + $0x148] sm:$0xf]
  %v102 = vld [vmem:[%s0 + $0x14c] sm:$0x1]
  %v103 = vld [vmem:[%s0 + $0x150] sm:$0xf]
  %v104 = vld [vmem:[%s0 + $0x154] sm:$0xf]
  %v105 = vld [vmem:[%s0 + $0x158] sm:$0x1]
  %v106 = vld [vmem:[%s0 + $0x15c] sm:$0xf]
  %v107 = vld [vmem:[%s0 + $0x160] sm:$0xf]
  %v108 = vld [vmem:[%s0 + $0x164] sm:$0x1]
  %v109 = vld [vmem:[%s0 + $0x168] sm:$0xf]
  %v110 = vld [vmem:[%s0 + $0x16c] sm:$0xf]
  %v111 = vld [vmem:[%s0 + $0x170] sm:$0x1]
  %v112 = vld [vmem:[%s0 + $0x174] sm:$0xf]
  %v113 = vld [vmem:[%s0 + $0x178] sm:$0xf]
  %v114 = vld [vmem:[%s0 + $0x17c] sm:$0x1]
  %v115 = vld [vmem:[%s0 + $0x180] sm:$0xf]
  %v116 = vld [vmem:[%s0 + $0x184] sm:$0xf]
  %v117 = vld [vmem:[%s0 + $0x188] sm:$0x1]
  %v118 = vld [vmem:[%s0 + $0x18c] sm:$0xf]
  %v119 = vld [vmem:[%s0 + $0x190] sm:$0xf]
  %v120 = vld [vmem:[%s0 + $0x194] sm:$0x1]
  %v121 = vld [vmem:[%s0 + $0x198] sm:$0xf]
  %v122 = vld [vmem:[%s0 + $0x19c] sm:$0xf]
  %v123 = vld [vmem:[%s0 + $0x1a0] sm:$0x1]
  %v124 = vld [vmem:[%s0 + $0x1a4] sm:$0xf]
  %v125 = vld [vmem:[%s0 + $0x1a8] sm:$0xf]
  %v126 = vld [vmem:[%s0 + $0x1ac] sm:$0x1]
  %v127 = vld [vmem:[%s0 + $0x1b0] sm:$0xf]
  %v128 = vld [vmem:[%s0 + $0x1b4] sm:$0xf]
  %v129 = vld [vmem:[%s0 + $0x1b8] sm:$0x1]
  %v130 = vld [vmem:[%s0 + $0x1bc] sm:$0xf]
  %v131 = vld [vmem:[%s0 + $0x1c0] sm:$0xf]
  %v132 = vld [vmem:[%s0 + $0x1c4] sm:$0x1]
  %v133 = vld [vmem:[%s0 + $0x1c8] sm:$0xf]
  %v134 = vld [vmem:[%s0 + $0x1cc] sm:$0xf]
  %v135 = vld [vmem:[%s0 + $0x1d0] sm:$0x1]
  %v136 = vld [vmem:[%s0 + $0x1d4] sm:$0xf]
  %v137 = vld [vmem:[%s0 + $0x1d8] sm:$0xf]
  %v138 = vld [vmem:[%s0 + $0x1dc] sm:$0x1]
  %v139 = vld [vmem:[%s0 + $0x1e0] sm:$0xf]
  %v140 = vld [vmem:[%s0 + $0x1e4] sm:$0xf]
  %v141 = vld [vmem:[%s0 + $0x1e8] sm:$0x1]
  %v142 = vld [vmem:[%s0 + $0x1ec] sm:$0xf]
  %v143 = vld [vmem:[%s0 + $0x1f0] sm:$0xf]
  %v144 = vld [vmem:[%s0 + $0x1f4] sm:$0x1]
  %v145 = vld [vmem:[%s0 + $0x1f8] sm:$0xf]
  %v146 = vld [vmem:[%s0 + $0x1fc] sm:$0xf]
  %v147 = vld [vmem:[%s0 + $0x200] sm:$0x1]
  %v148 = vld [vmem:[%s0 + $0x204] sm:$0xf]
  %v149 = vld [vmem:[%s0 + $0x208] sm:$0xf]
  %v150 = vld [vmem:[%s0 + $0x20c] sm:$0x1]
  %v151 = vld [vmem:[%s0 + $0x210] sm:$0xf]
  %v152 = vld [vmem:[%s0 + $0x214] sm:$0xf]
  %v153 = vld [vmem:[%s0 + $0x218] sm:$0x1]
  %v154 = vld [vmem:[%s0 + $0x21c] sm:$0xf]
  %v155 = vld [vmem:[%s0 + $0x220] sm:$0xf]
  %v156 = vld [vmem:[%s0 + $0x224] sm:$0x1]
  %v157 = vld [vmem:[%s0 + $0x228] sm:$0xf]
  %v158 = vld [vmem:[%s0 + $0x22c] sm:$0xf]
  %v159 = vld [vmem:[%s0 + $0x230] sm:$0x1]
  %v160 = vld [vmem:[%s0 + $0x234] sm:$0xf]
  %v161 = vld [vmem:[%s0 + $0x238] sm:$0xf]
  %v162 = vld [vmem:[%s0 + $0x23c] sm:$0x1]
  %v163 = vld [vmem:[%s0 + $0x240] sm:$0xf]
  %v164 = vld [vmem:[%s0 + $0x244] sm:$0xf]
  %v165 = vld [vmem:[%s0 + $0x248] sm:$0x1]
  %v166 = vld [vmem:[%s0 + $0x24c] sm:$0xf]
  %v167 = vld [vmem:[%s0 + $0x250] sm:$0xf]
  %v168 = vld [vmem:[%s0 + $0x254] sm:$0x1]
  %v169 = vld [vmem:[%s0 + $0x258] sm:$0xf]
  %v170 = vld [vmem:[%s0 + $0x25c] sm:$0xf]
  %v171 = vld [vmem:[%s0 + $0x260] sm:$0x1]
  %v172 = vld [vmem:[%s0 + $0x264] sm:$0xf]
  %v173 = vld [vmem:[%s0 + $0x268] sm:$0xf]
  %v174 = vld [vmem:[%s0 + $0x26c] sm:$0x1]
  %v175 = vld [vmem:[%s0 + $0x270] sm:$0xf]
  %v176 = vld [vmem:[%s0 + $0x274] sm:$0xf]
  %v177 = vld [vmem:[%s0 + $0x278] sm:$0x1]
  %v178 = vld [vmem:[%s0 + $0x27c] sm:$0xf]
  %v179 = vld [vmem:[%s0 + $0x280] sm:$0xf]
  %v180 = vld [vmem:[%s0 + $0x284] sm:$0x1]
  %v181 = vld [vmem:[%s0 + $0x288] sm:$0xf]
  %v182 = vld [vmem:[%s0 + $0x28c] sm:$0xf]
  %v183 = vld [vmem:[%s0 + $0x290] sm:$0x1]
  %v184 = vld [vmem:[%s0 + $0x294] sm:$0xf]
  %v185 = vld [vmem:[%s0 + $0x298] sm:$0xf]
  %v186 = vld [vmem:[%s0 + $0x29c] sm:$0x1]
  %v187 = vld [vmem:[%s0 + $0x2a0] sm:$0xf]
  %v188 = vld [vmem:[%s0 + $0x2a4] sm:$0xf]
  %v189 = vld [vmem:[%s0 + $0x2a8] sm:$0x1]
  %v190 = vld [vmem:[%s0 + $0x2ac] sm:$0xf]
  %v191 = vld [vmem:[%s0 + $0x2b0] sm:$0xf]
  %v192 = vld [vmem:[%s0 + $0x2b4] sm:$0x1]
  %v193 = vld [vmem:[%s0 + $0x2b8] sm:$0xf]
  %v194 = vld [vmem:[%s0 + $0x2bc] sm:$0xf]
  %v195 = vld [vmem:[%s0 + $0x2c0] sm:$0x1]
  %v196 = vld [vmem:[%s0 + $0x2c4] sm:$0xf]
  %v197 = vld [vmem:[%s0 + $0x2c8] sm:$0xf]
  %v198 = vld [vmem:[%s0 + $0x2cc] sm:$0x1]
  %v199 = vld [vmem:[%s0 + $0x2d0] sm:$0xf]
  %v200 = vld [vmem:[%s0 + $0x2d4] sm:$0xf]
  %v201 = vld [vmem:[%s0 + $0x2d8] sm:$0x1]
  %v202 = vld [vmem:[%s0 + $0x2dc] sm:$0xf]
  %v203 = vld [vmem:[%s0 + $0x2e0] sm:$0xf]
  %v204 = vld [vmem:[%s0 + $0x2e4] sm:$0x1]
  %v205 = vld [vmem:[%s0 + $0x2e8] sm:$0xf]
  %v206 = vld [vmem:[%s0 + $0x2ec] sm:$0xf]
  %v207 = vld [vmem:[%s0 + $0x2f0] sm:$0x1]
  %v208 = vld [vmem:[%s0 + $0x2f4] sm:$0xf]
  %v209 = vld [vmem:[%s0 + $0x2f8] sm:$0xf]
  %v210 = vld [vmem:[%s0 + $0x2fc] sm:$0x1]
  %v211 = vld [vmem:[%s0 + $0x300] sm:$0xf]
  %v212 = vld [vmem:[%s0 + $0x304] sm:$0xf]
  %v213 = vld [vmem:[%s0 + $0x308] sm:$0x1]
  %v214 = vld [vmem:[%s0 + $0x30c] sm:$0xf]
  %v215 = vld [vmem:[%s0 + $0x310] sm:$0xf]
  %v216 = vld [vmem:[%s0 + $0x314] sm:$0x1]
  %v217 = vld [vmem:[%s0 + $0x318] sm:$0xf]
  %v218 = vld [vmem:[%s0 + $0x31c] sm:$0xf]
  %v219 = vld [vmem:[%s0 + $0x320] sm:$0x1]
  %v220 = vld [vmem:[%s0 + $0x324] sm:$0xf]
  %v221 = vld [vmem:[%s0 + $0x328] sm:$0xf]
  %v222 = vld [vmem:[%s0 + $0x32c] sm:$0x1]
  %v223 = vld [vmem:[%s0 + $0x330] sm:$0xf]
  %v224 = vld [vmem:[%s0 + $0x334] sm:$0xf]
  %v225 = vld [vmem:[%s0 + $0x338] sm:$0x1]
  %v226 = vld [vmem:[%s0 + $0x33c] sm:$0xf]
  %v227 = vld [vmem:[%s0 + $0x340] sm:$0xf]
  %v228 = vld [vmem:[%s0 + $0x344] sm:$0x1]
  %v229 = vld [vmem:[%s0 + $0x348] sm:$0xf]
  %v230 = vld [vmem:[%s0 + $0x34c] sm:$0xf]
  %v231 = vld [vmem:[%s0 + $0x350] sm:$0x1]
  %v232 = vld [vmem:[%s0 + $0x354] sm:$0xf]
  %v233 = vld [vmem:[%s0 + $0x358] sm:$0xf]
  %v234 = vld [vmem:[%s0 + $0x35c] sm:$0x1]
  %v235 = vld [vmem:[%s0 + $0x360] sm:$0xf]
  %v236 = vld [vmem:[%s0 + $0x364] sm:$0xf]
  %v237 = vld [vmem:[%s0 + $0x368] sm:$0x1]
  %v238 = vld [vmem:[%s0 + $0x36c] sm:$0xf]
  %v239 = vld [vmem:[%s0 + $0x370] sm:$0xf]
  %v240 = vld [vmem:[%s0 + $0x374] sm:$0x1]
  %v241 = vld [vmem:[%s0 + $0x378] sm:$0xf]
  %v242 = vld [vmem:[%s0 + $0x37c] sm:$0xf]
  %v243 = vld [vmem:[%s0 + $0x380] sm:$0x1]
  %v244 = vld [vmem:[%s0 + $0x384] sm:$0xf]
  %v245 = vld [vmem:[%s0 + $0x388] sm:$0xf]
  %v246 = vld [vmem:[%s0 + $0x38c] sm:$0x1]
  %v247 = vld [vmem:[%s0 + $0x390] sm:$0xf]
  %v248 = vld [vmem:[%s0 + $0x394] sm:$0xf]
  %v249 = vld [vmem:[%s0 + $0x398] sm:$0x1]
  %v250 = vld [vmem:[%s0 + $0x39c] sm:$0xf]
  %v251 = vld [vmem:[%s0 + $0x3a0] sm:$0xf]
  %v252 = vld [vmem:[%s0 + $0x3a4] sm:$0x1]
  %v253 = vld [vmem:[%s0 + $0x3a8] sm:$0xf]
  %v254 = vld [vmem:[%s0 + $0x3ac] sm:$0xf]
  %v255 = vld [vmem:[%s0 + $0x3b0] sm:$0x1]
  %v256 = vld [vmem:[%s0 + $0x3b4] sm:$0xf]
  %v257 = vld [vmem:[%s0 + $0x3b8] sm:$0xf]
  %v258 = vld [vmem:[%s0 + $0x3bc] sm:$0x1]
  %v259 = vld [vmem:[%s0 + $0x3c0] sm:$0xf]
  %v260 = vld [vmem:[%s0 + $0x3c4] sm:$0xf]
  %v261 = vld [vmem:[%s0 + $0x3c8] sm:$0x1]
  %v262 = vld [vmem:[%s0 + $0x3cc] sm:$0xf]
  %v263 = vld [vmem:[%s0 + $0x3d0] sm:$0xf]
  %v264 = vld [vmem:[%s0 + $0x3d4] sm:$0x1]
  %v265 = vld [vmem:[%s0 + $0x3d8] sm:$0xf]
  %v266 = vld [vmem:[%s0 + $0x3dc] sm:$0xf]
  %v267 = vld [vmem:[%s0 + $0x3e0] sm:$0x1]
  %v268 = vld [vmem:[%s0 + $0x3e4] sm:$0xf]
  %v269 = vld [vmem:[%s0 + $0x3e8] sm:$0xf]
  %v270 = vld [vmem:[%s0 + $0x3ec] sm:$0x1]
  %v271 = vld [vmem:[%s0 + $0x3f0] sm:$0xf]
  %v272 = vld [vmem:[%s0 + $0x3f4] sm:$0xf]
  %v273 = vld [vmem:[%s0 + $0x3f8] sm:$0x1]
  %v274 = vld [vmem:[%s0 + $0x3fc] sm:$0xf]
  %v275 = vld [vmem:[%s0 + $0x400] sm:$0xf]
  %v276 = vld [vmem:[%s0 + $0x404] sm:$0x1]
  %v277 = vld [vmem:[%s0 + $0x408] sm:$0xf]
  %v278 = vld [vmem:[%s0 + $0x40c] sm:$0xf]
  %v279 = vld [vmem:[%s0 + $0x410] sm:$0x1]
  %v280 = vld [vmem:[%s0 + $0x414] sm:$0xf]
  %v281 = vld [vmem:[%s0 + $0x418] sm:$0xf]
  %v282 = vld [vmem:[%s0 + $0x41c] sm:$0x1]
  %v283 = vld [vmem:[%s0 + $0x420] sm:$0xf]
  %v284 = vld [vmem:[%s0 + $0x424] sm:$0xf]
  %v285 = vld [vmem:[%s0 + $0x428] sm:$0x1]
  %v286 = vld [vmem:[%s0 + $0x42c] sm:$0xf]
  %v287 = vld [vmem:[%s0 + $0x430] sm:$0xf]
  %v288 = vld [vmem:[%s0 + $0x434] sm:$0x1]
  %v289 = vld [vmem:[%s0 + $0x438] sm:$0xf]
  %v290 = vld [vmem:[%s0 + $0x43c] sm:$0xf]
  %v291 = vld [vmem:[%s0 + $0x440] sm:$0x1]
  %v292 = vld [vmem:[%s0 + $0x444] sm:$0xf]
  %v293 = vld [vmem:[%s0 + $0x448] sm:$0xf]
  %v294 = vld [vmem:[%s0 + $0x44c] sm:$0x1]
  %v295 = vld [vmem:[%s0 + $0x450] sm:$0xf]
  %v296 = vld [vmem:[%s0 + $0x454] sm:$0xf]
  %v297 = vld [vmem:[%s0 + $0x458] sm:$0x1]
  %v298 = vld [vmem:[%s0 + $0x45c] sm:$0xf]
  %v299 = vld [vmem:[%s0 + $0x460] sm:$0xf]
  %v300 = vld [vmem:[%s0 + $0x464] sm:$0x1]
  %v301 = vld [vmem:[%s0 + $0x468] sm:$0xf]
  %v302 = vld [vmem:[%s0 + $0x46c] sm:$0xf]
  %v303 = vld [vmem:[%s0 + $0x470] sm:$0x1]
  %v304 = vld [vmem:[%s0 + $0x474] sm:$0xf]
  %v305 = vld [vmem:[%s0 + $0x478] sm:$0xf]
  %v306 = vld [vmem:[%s0 + $0x47c] sm:$0x1]
  %v307 = vld [vmem:[%s0 + $0x480] sm:$0xf]
  %v308 = vld [vmem:[%s0 + $0x484] sm:$0xf]
  %v309 = vld [vmem:[%s0 + $0x488] sm:$0x1]
  %v310 = vld [vmem:[%s0 + $0x48c] sm:$0xf]
  %v311 = vld [vmem:[%s0 + $0x490] sm:$0xf]
  %v312 = vld [vmem:[%s0 + $0x494] sm:$0x1]
  %v313 = vld [vmem:[%s0 + $0x498] sm:$0xf]
  %v314 = vld [vmem:[%s0 + $0x49c] sm:$0xf]
  %v315 = vld [vmem:[%s0 + $0x4a0] sm:$0x1]
  %v316 = vld [vmem:[%s0 + $0x4a4] sm:$0xf]
  %v317 = vld [vmem:[%s0 + $0x4a8] sm:$0xf]
  %v318 = vld [vmem:[%s0 + $0x4ac] sm:$0x1]
  %v319 = vld [vmem:[%s0 + $0x4b0] sm:$0xf]
  %v320 = vld [vmem:[%s0 + $0x4b4] sm:$0xf]
  %v321 = vld [vmem:[%s0 + $0x4b8] sm:$0x1]
  %v322 = vld [vmem:[%s0 + $0x4bc] sm:$0xf]
  %v323 = vld [vmem:[%s0 + $0x4c0] sm:$0xf]
  %v324 = vld [vmem:[%s0 + $0x4c4] sm:$0x1]
  %v325 = vld [vmem:[%s0 + $0x4c8] sm:$0xf]
  %v326 = vld [vmem:[%s0 + $0x4cc] sm:$0xf]
  %v327 = vld [vmem:[%s0 + $0x4d0] sm:$0x1]
  %v328 = vld [vmem:[%s0 + $0x4d4] sm:$0xf]
  %v329 = vld [vmem:[%s0 + $0x4d8] sm:$0xf]
  %v330 = vld [vmem:[%s0 + $0x4dc] sm:$0x1]
  %v331 = vld [vmem:[%s0 + $0x4e0] sm:$0xf]
  %v332 = vld [vmem:[%s0 + $0x4e4] sm:$0xf]
  %v333 = vld [vmem:[%s0 + $0x4e8] sm:$0x1]
  %v334 = vld [vmem:[%s0 + $0x4ec] sm:$0xf]
  %v335 = vld [vmem:[%s0 + $0x4f0] sm:$0xf]
  %v336 = vld [vmem:[%s0 + $0x4f4] sm:$0x1]
  %v337 = vld [vmem:[%s0 + $0x4f8] sm:$0xf]
  %v338 = vld [vmem:[%s0 + $0x4fc] sm:$0xf]
  %v339 = vld [vmem:[%s0 + $0x500] sm:$0x1]
  %v340 = vld [vmem:[%s0 + $0x504] sm:$0xf]
  %v341 = vld [vmem:[%s0 + $0x508] sm:$0xf]
  %v342 = vld [vmem:[%s0 + $0x50c] sm:$0x1]
  %v343 = vld [vmem:[%s0 + $0x510] sm:$0xf]
  %v344 = vld [vmem:[%s0 + $0x514] sm:$0xf]
  %v345 = vld [vmem:[%s0 + $0x518] sm:$0x1]
  %v346 = vld [vmem:[%s0 + $0x51c] sm:$0xf]
  %v347 = vld [vmem:[%s0 + $0x520] sm:$0xf]
  %v348 = vld [vmem:[%s0 + $0x524] sm:$0x1]
  %v349 = vld [vmem:[%s0 + $0x528] sm:$0xf]
  %v350 = vld [vmem:[%s0 + $0x52c] sm:$0xf]
  %v351 = vld [vmem:[%s0 + $0x530] sm:$0x1]
  %v352 = vld [vmem:[%s0 + $0x534] sm:$0xf]
  %v353 = vld [vmem:[%s0 + $0x538] sm:$0xf]
  %v354 = vld [vmem:[%s0 + $0x53c] sm:$0x1]
  %v355 = vld [vmem:[%s0 + $0x540] sm:$0xf]
  %v356 = vld [vmem:[%s0 + $0x544] sm:$0xf]
  %v357 = vld [vmem:[%s0 + $0x548] sm:$0x1]
  %v358 = vld [vmem:[%s0 + $0x54c] sm:$0xf]
  %v359 = vld [vmem:[%s0 + $0x550] sm:$0xf]
  %v360 = vld [vmem:[%s0 + $0x554] sm:$0x1]
  %v361 = vld [vmem:[%s0 + $0x558] sm:$0xf]
  %v362 = vld [vmem:[%s0 + $0x55c] sm:$0xf]
  %v363 = vld [vmem:[%s0 + $0x560] sm:$0x1]
  %v364 = vld [vmem:[%s0 + $0x564] sm:$0xf]
  %v365 = vld [vmem:[%s0 + $0x568] sm:$0xf]
  %v366 = vld [vmem:[%s0 + $0x56c] sm:$0x1]
  %v367 = vld [vmem:[%s0 + $0x570] sm:$0xf]
  %v368 = vld [vmem:[%s0 + $0x574] sm:$0xf]
  %v369 = vld [vmem:[%s0 + $0x578] sm:$0x1]
  %v370 = vld [vmem:[%s0 + $0x57c] sm:$0xf]
  %v371 = vld [vmem:[%s0 + $0x580] sm:$0xf]
  %v372 = vld [vmem:[%s0 + $0x584] sm:$0x1]
  %v373 = vld [vmem:[%s0 + $0x588] sm:$0xf]
  %v374 = vld [vmem:[%s0 + $0x58c] sm:$0xf]
  %v375 = vld [vmem:[%s0 + $0x590] sm:$0x1]
  %v376 = vld [vmem:[%s0 + $0x594] sm:$0xf]
  %v377 = vld [vmem:[%s0 + $0x598] sm:$0xf]
  %v378 = vld [vmem:[%s0 + $0x59c] sm:$0x1]
  %v379 = vld [vmem:[%s0 + $0x5a0] sm:$0xf]
  %v380 = vld [vmem:[%s0 + $0x5a4] sm:$0xf]
  %v381 = vld [vmem:[%s0 + $0x5a8] sm:$0x1]
  %v382 = vld [vmem:[%s0 + $0x5ac] sm:$0xf]
  %v383 = vld [vmem:[%s0 + $0x5b0] sm:$0xf]
  %v384 = vld [vmem:[%s0 + $0x5b4] sm:$0x1]
  %v385 = vld [vmem:[%s0 + $0x5b8] sm:$0xf]
  %v386 = vld [vmem:[%s0 + $0x5bc] sm:$0xf]
  %v387 = vld [vmem:[%s0 + $0x5c0] sm:$0x1]
  %v388 = vld [vmem:[%s0 + $0x5c4] sm:$0xf]
  %v389 = vld [vmem:[%s0 + $0x5c8] sm:$0xf]
  %v390 = vld [vmem:[%s0 + $0x5cc] sm:$0x1]
  %v391 = vld [vmem:[%s0 + $0x5d0] sm:$0xf]
  %v392 = vld [vmem:[%s0 + $0x5d4] sm:$0xf]
  %v393 = vld [vmem:[%s0 + $0x5d8] sm:$0x1]
  %v394 = vld [vmem:[%s0 + $0x5dc] sm:$0xf]
  %v395 = vld [vmem:[%s0 + $0x5e0] sm:$0xf]
  %v396 = vld [vmem:[%s0 + $0x5e4] sm:$0x1]
  %v397 = vld [vmem:[%s0 + $0x5e8] sm:$0xf]
  %v398 = vld [vmem:[%s0 + $0x5ec] sm:$0xf]
  %v399 = vld [vmem:[%s0 + $0x5f0] sm:$0x1]
  %v400 = vld [vmem:[%s0 + $0x5f4] sm:$0xf]
  %v401 = vld [vmem:[%s0 + $0x5f8] sm:$0xf]
  %v402 = vld [vmem:[%s0 + $0x5fc] sm:$0x1]
  %v403 = vld [vmem:[%s0 + $0x600] sm:$0xf]
  %v404 = vld [vmem:[%s0 + $0x604] sm:$0xf]
  %v405 = vld [vmem:[%s0 + $0x608] sm:$0x1]
  %v406 = vld [vmem:[%s0 + $0x60c] sm:$0xf]
  %v407 = vld [vmem:[%s0 + $0x610] sm:$0xf]
  %v408 = vld [vmem:[%s0 + $0x614] sm:$0x1]
  %v409 = vld [vmem:[%s0 + $0x618] sm:$0xf]
  %v410 = vld [vmem:[%s0 + $0x61c] sm:$0xf]
  %v411 = vld [vmem:[%s0 + $0x620] sm:$0x1]
  %v412 = vld [vmem:[%s0 + $0x624] sm:$0xf]
  %v413 = vld [vmem:[%s0 + $0x628] sm:$0xf]
  %v414 = vld [vmem:[%s0 + $0x62c] sm:$0x1]
  %v415 = vld [vmem:[%s0 + $0x630] sm:$0xf]
  %v416 = vld [vmem:[%s0 + $0x634] sm:$0xf]
  %v417 = vld [vmem:[%s0 + $0x638] sm:$0x1]
  %v418 = vld [vmem:[%s0 + $0x63c] sm:$0xf]
  %v419 = vld [vmem:[%s0 + $0x640] sm:$0xf]
  %v420 = vld [vmem:[%s0 + $0x644] sm:$0x1]
  %v421 = vld [vmem:[%s0 + $0x648] sm:$0xf]
  %v422 = vld [vmem:[%s0 + $0x64c] sm:$0xf]
  %v423 = vld [vmem:[%s0 + $0x650] sm:$0x1]
  %v424 = vld [vmem:[%s0 + $0x654] sm:$0xf]
  %v425 = vld [vmem:[%s0 + $0x658] sm:$0xf]
  %v426 = vld [vmem:[%s0 + $0x65c] sm:$0x1]
  %v427 = vld [vmem:[%s0 + $0x660] sm:$0xf]
  %v428 = vld [vmem:[%s0 + $0x664] sm:$0xf]
  %v429 = vld [vmem:[%s0 + $0x668] sm:$0x1]
  %v430 = vld [vmem:[%s0 + $0x66c] sm:$0xf]
  %v431 = vld [vmem:[%s0 + $0x670] sm:$0xf]
  %v432 = vld [vmem:[%s0 + $0x674] sm:$0x1]
  %v433 = vld [vmem:[%s0 + $0x678] sm:$0xf]
  %v434 = vld [vmem:[%s0 + $0x67c] sm:$0xf]
  %v435 = vld [vmem:[%s0 + $0x680] sm:$0x1]
  %v436 = vld [vmem:[%s0 + $0x684] sm:$0xf]
  %v437 = vld [vmem:[%s0 + $0x688] sm:$0xf]
  %v438 = vld [vmem:[%s0 + $0x68c] sm:$0x1]
  %v439 = vld [vmem:[%s0 + $0x690] sm:$0xf]
  %v440 = vld [vmem:[%s0 + $0x694] sm:$0xf]
  %v441 = vld [vmem:[%s0 + $0x698] sm:$0x1]
  %v442 = vld [vmem:[%s0 + $0x69c] sm:$0xf]
  %v443 = vld [vmem:[%s0 + $0x6a0] sm:$0xf]
  %v444 = vld [vmem:[%s0 + $0x6a4] sm:$0x1]
  %v445 = vld [vmem:[%s0 + $0x6a8] sm:$0xf]
  %v446 = vld [vmem:[%s0 + $0x6ac] sm:$0xf]
  %v447 = vld [vmem:[%s0 + $0x6b0] sm:$0x1]
  %v448 = vld [vmem:[%s0 + $0x6b4] sm:$0xf]
  %v449 = vld [vmem:[%s0 + $0x6b8] sm:$0xf]
  %v450 = vld [vmem:[%s0 + $0x6bc] sm:$0x1]
  %v707 = vunpack.c.l.b16 %v19
  %v708 = vunpack.c.l.b16 %v20
  %v709 = vunpack.c.l.b16 %v22
  %v710 = vunpack.c.l.b16 %v23
  %v711 = vunpack.c.l.b16 %v25
  %v712 = vunpack.c.l.b16 %v26
  %v713 = vunpack.c.l.b16 %v28
  %v714 = vunpack.c.l.b16 %v29
  %v715 = vunpack.c.l.b16 %v31
  %v716 = vunpack.c.l.b16 %v32
  %v717 = vunpack.c.l.b16 %v34
  %v718 = vunpack.c.l.b16 %v35
  %v719 = vunpack.c.l.b16 %v37
  %v720 = vunpack.c.l.b16 %v38
  %v721 = vunpack.c.l.b16 %v40
  %v722 = vunpack.c.l.b16 %v41
  %v723 = vunpack.c.l.b16 %v43
  %v724 = vunpack.c.l.b16 %v44
  %v725 = vunpack.c.l.b16 %v46
  %v726 = vunpack.c.l.b16 %v47
  %v727 = vunpack.c.l.b16 %v49
  %v728 = vunpack.c.l.b16 %v50
  %v729 = vunpack.c.l.b16 %v52
  %v730 = vunpack.c.l.b16 %v53
  %v731 = vunpack.c.l.b16 %v55
  %v732 = vunpack.c.l.b16 %v56
  %v733 = vunpack.c.l.b16 %v58
  %v734 = vunpack.c.l.b16 %v59
  %v735 = vunpack.c.l.b16 %v61
  %v736 = vunpack.c.l.b16 %v62
  %v737 = vunpack.c.l.b16 %v64
  %v738 = vunpack.c.l.b16 %v65
  %v739 = vunpack.c.l.b16 %v73
  %v740 = vunpack.c.l.b16 %v74
  %v741 = vunpack.c.l.b16 %v76
  %v742 = vunpack.c.l.b16 %v77
  %v743 = vunpack.c.l.b16 %v79
  %v744 = vunpack.c.l.b16 %v80
  %v745 = vunpack.c.l.b16 %v82
  %v746 = vunpack.c.l.b16 %v83
  %v747 = vunpack.c.l.b16 %v85
  %v748 = vunpack.c.l.b16 %v86
  %v749 = vunpack.c.l.b16 %v88
  %v750 = vunpack.c.l.b16 %v89
  %v751 = vunpack.c.l.b16 %v91
  %v752 = vunpack.c.l.b16 %v92
  %v753 = vunpack.c.l.b16 %v94
  %v754 = vunpack.c.l.b16 %v95
  %v755 = vunpack.c.l.b16 %v97
  %v756 = vunpack.c.l.b16 %v98
  %v757 = vunpack.c.l.b16 %v100
  %v758 = vunpack.c.l.b16 %v101
  %v759 = vunpack.c.l.b16 %v103
  %v760 = vunpack.c.l.b16 %v104
  %v761 = vunpack.c.l.b16 %v106
  %v762 = vunpack.c.l.b16 %v107
  %v763 = vunpack.c.l.b16 %v109
  %v764 = vunpack.c.l.b16 %v110
  %v765 = vunpack.c.l.b16 %v112
  %v766 = vunpack.c.l.b16 %v113
  %v767 = vunpack.c.l.b16 %v115
  %v768 = vunpack.c.l.b16 %v116
  %v769 = vunpack.c.l.b16 %v118
  %v770 = vunpack.c.l.b16 %v119
  %v771 = vunpack.c.l.b16 %v127
  %v772 = vunpack.c.l.b16 %v128
  %v773 = vunpack.c.l.b16 %v130
  %v774 = vunpack.c.l.b16 %v131
  %v775 = vunpack.c.l.b16 %v133
  %v776 = vunpack.c.l.b16 %v134
  %v777 = vunpack.c.l.b16 %v136
  %v778 = vunpack.c.l.b16 %v137
  %v779 = vunpack.c.l.b16 %v139
  %v780 = vunpack.c.l.b16 %v140
  %v781 = vunpack.c.l.b16 %v142
  %v782 = vunpack.c.l.b16 %v143
  %v783 = vunpack.c.l.b16 %v145
  %v784 = vunpack.c.l.b16 %v146
  %v785 = vunpack.c.l.b16 %v148
  %v786 = vunpack.c.l.b16 %v149
  %v787 = vunpack.c.l.b16 %v151
  %v788 = vunpack.c.l.b16 %v152
  %v789 = vunpack.c.l.b16 %v154
  %v790 = vunpack.c.l.b16 %v155
  %v791 = vunpack.c.l.b16 %v157
  %v792 = vunpack.c.l.b16 %v158
  %v793 = vunpack.c.l.b16 %v160
  %v794 = vunpack.c.l.b16 %v161
  %v795 = vunpack.c.l.b16 %v163
  %v796 = vunpack.c.l.b16 %v164
  %v797 = vunpack.c.l.b16 %v166
  %v798 = vunpack.c.l.b16 %v167
  %v799 = vunpack.c.l.b16 %v169
  %v800 = vunpack.c.l.b16 %v170
  %v801 = vunpack.c.l.b16 %v172
  %v802 = vunpack.c.l.b16 %v173
  %v803 = vunpack.c.l.b16 %v181
  %v804 = vunpack.c.l.b16 %v182
  %v805 = vunpack.c.l.b16 %v184
  %v806 = vunpack.c.l.b16 %v185
  %v807 = vunpack.c.l.b16 %v187
  %v808 = vunpack.c.l.b16 %v188
  %v809 = vunpack.c.l.b16 %v190
  %v810 = vunpack.c.l.b16 %v191
  %v811 = vunpack.c.l.b16 %v193
  %v812 = vunpack.c.l.b16 %v194
  %v813 = vunpack.c.l.b16 %v196
  %v814 = vunpack.c.l.b16 %v197
  %v815 = vunpack.c.l.b16 %v199
  %v816 = vunpack.c.l.b16 %v200
  %v817 = vunpack.c.l.b16 %v202
  %v818 = vunpack.c.l.b16 %v203
  %v819 = vunpack.c.l.b16 %v205
  %v820 = vunpack.c.l.b16 %v206
  %v821 = vunpack.c.l.b16 %v208
  %v822 = vunpack.c.l.b16 %v209
  %v823 = vunpack.c.l.b16 %v211
  %v824 = vunpack.c.l.b16 %v212
  %v825 = vunpack.c.l.b16 %v214
  %v826 = vunpack.c.l.b16 %v215
  %v827 = vunpack.c.l.b16 %v217
  %v828 = vunpack.c.l.b16 %v218
  %v829 = vunpack.c.l.b16 %v220
  %v830 = vunpack.c.l.b16 %v221
  %v831 = vunpack.c.l.b16 %v223
  %v832 = vunpack.c.l.b16 %v224
  %v833 = vunpack.c.l.b16 %v226
  %v834 = vunpack.c.l.b16 %v227
  %v835 = vunpack.c.l.b16 %v235
  %v836 = vunpack.c.l.b16 %v236
  %v837 = vunpack.c.l.b16 %v238
  %v838 = vunpack.c.l.b16 %v239
  %v839 = vunpack.c.l.b16 %v241
  %v840 = vunpack.c.l.b16 %v242
  %v841 = vunpack.c.l.b16 %v244
  %v842 = vunpack.c.l.b16 %v245
  %v843 = vunpack.c.l.b16 %v247
  %v844 = vunpack.c.l.b16 %v248
  %v845 = vunpack.c.l.b16 %v250
  %v846 = vunpack.c.l.b16 %v251
  %v847 = vunpack.c.l.b16 %v253
  %v848 = vunpack.c.l.b16 %v254
  %v849 = vunpack.c.l.b16 %v256
  %v850 = vunpack.c.l.b16 %v257
  %v851 = vunpack.c.l.b16 %v259
  %v852 = vunpack.c.l.b16 %v260
  %v853 = vunpack.c.l.b16 %v262
  %v854 = vunpack.c.l.b16 %v263
  %v855 = vunpack.c.l.b16 %v265
  %v856 = vunpack.c.l.b16 %v266
  %v857 = vunpack.c.l.b16 %v268
  %v858 = vunpack.c.l.b16 %v269
  %v859 = vunpack.c.l.b16 %v271
  %v860 = vunpack.c.l.b16 %v272
  %v861 = vunpack.c.l.b16 %v274
  %v862 = vunpack.c.l.b16 %v275
  %v863 = vunpack.c.l.b16 %v277
  %v864 = vunpack.c.l.b16 %v278
  %v865 = vunpack.c.l.b16 %v280
  %v866 = vunpack.c.l.b16 %v281
  %v867 = vunpack.c.l.b16 %v289
  %v868 = vunpack.c.l.b16 %v290
  %v869 = vunpack.c.l.b16 %v292
  %v870 = vunpack.c.l.b16 %v293
  %v871 = vunpack.c.l.b16 %v295
  %v872 = vunpack.c.l.b16 %v296
  %v873 = vunpack.c.l.b16 %v298
  %v874 = vunpack.c.l.b16 %v299
  %v875 = vunpack.c.l.b16 %v301
  %v876 = vunpack.c.l.b16 %v302
  %v877 = vunpack.c.l.b16 %v304
  %v878 = vunpack.c.l.b16 %v305
  %v879 = vunpack.c.l.b16 %v307
  %v880 = vunpack.c.l.b16 %v308
  %v881 = vunpack.c.l.b16 %v310
  %v882 = vunpack.c.l.b16 %v311
  %v883 = vunpack.c.l.b16 %v313
  %v884 = vunpack.c.l.b16 %v314
  %v885 = vunpack.c.l.b16 %v316
  %v886 = vunpack.c.l.b16 %v317
  %v887 = vunpack.c.l.b16 %v319
  %v888 = vunpack.c.l.b16 %v320
  %v889 = vunpack.c.l.b16 %v322
  %v890 = vunpack.c.l.b16 %v323
  %v891 = vunpack.c.l.b16 %v325
  %v892 = vunpack.c.l.b16 %v326
  %v893 = vunpack.c.l.b16 %v328
  %v894 = vunpack.c.l.b16 %v329
  %v895 = vunpack.c.l.b16 %v331
  %v896 = vunpack.c.l.b16 %v332
  %v897 = vunpack.c.l.b16 %v334
  %v898 = vunpack.c.l.b16 %v335
  %v899 = vunpack.c.l.b16 %v343
  %v900 = vunpack.c.l.b16 %v344
  %v901 = vunpack.c.l.b16 %v346
  %v902 = vunpack.c.l.b16 %v347
  %v903 = vunpack.c.l.b16 %v349
  %v904 = vunpack.c.l.b16 %v350
  %v905 = vunpack.c.l.b16 %v352
  %v906 = vunpack.c.l.b16 %v353
  %v907 = vunpack.c.l.b16 %v355
  %v908 = vunpack.c.l.b16 %v356
  %v909 = vunpack.c.l.b16 %v358
  %v910 = vunpack.c.l.b16 %v359
  %v911 = vunpack.c.l.b16 %v361
  %v912 = vunpack.c.l.b16 %v362
  %v913 = vunpack.c.l.b16 %v364
  %v914 = vunpack.c.l.b16 %v365
  %v915 = vunpack.c.l.b16 %v367
  %v916 = vunpack.c.l.b16 %v368
  %v917 = vunpack.c.l.b16 %v370
  %v918 = vunpack.c.l.b16 %v371
  %v919 = vunpack.c.l.b16 %v373
  %v920 = vunpack.c.l.b16 %v374
  %v921 = vunpack.c.l.b16 %v376
  %v922 = vunpack.c.l.b16 %v377
  %v923 = vunpack.c.l.b16 %v379
  %v924 = vunpack.c.l.b16 %v380
  %v925 = vunpack.c.l.b16 %v382
  %v926 = vunpack.c.l.b16 %v383
  %v927 = vunpack.c.l.b16 %v385
  %v928 = vunpack.c.l.b16 %v386
  %v929 = vunpack.c.l.b16 %v388
  %v930 = vunpack.c.l.b16 %v389
  %v931 = vunpack.c.l.b16 %v397
  %v932 = vunpack.c.l.b16 %v398
  %v933 = vunpack.c.l.b16 %v400
  %v934 = vunpack.c.l.b16 %v401
  %v935 = vunpack.c.l.b16 %v403
  %v936 = vunpack.c.l.b16 %v404
  %v937 = vunpack.c.l.b16 %v406
  %v938 = vunpack.c.l.b16 %v407
  %v939 = vunpack.c.l.b16 %v409
  %v940 = vunpack.c.l.b16 %v410
  %v941 = vunpack.c.l.b16 %v412
  %v942 = vunpack.c.l.b16 %v413
  %v943 = vunpack.c.l.b16 %v415
  %v944 = vunpack.c.l.b16 %v416
  %v945 = vunpack.c.l.b16 %v418
  %v946 = vunpack.c.l.b16 %v419
  %v947 = vunpack.c.l.b16 %v421
  %v948 = vunpack.c.l.b16 %v422
  %v949 = vunpack.c.l.b16 %v424
  %v950 = vunpack.c.l.b16 %v425
  %v951 = vunpack.c.l.b16 %v427
  %v952 = vunpack.c.l.b16 %v428
  %v953 = vunpack.c.l.b16 %v430
  %v954 = vunpack.c.l.b16 %v431
  %v955 = vunpack.c.l.b16 %v433
  %v956 = vunpack.c.l.b16 %v434
  %v957 = vunpack.c.l.b16 %v436
  %v958 = vunpack.c.l.b16 %v437
  %v959 = vunpack.c.l.b16 %v439
  %v960 = vunpack.c.l.b16 %v440
  %v961 = vunpack.c.l.b16 %v442
  %v962 = vunpack.c.l.b16 %v443
  %v963 = vpack.c.b16 %v708, %v707
  %v964 = vpack.c.b16 %v710, %v709
  %v965 = vpack.c.b16 %v712, %v711
  %v966 = vpack.c.b16 %v714, %v713
  %v967 = vpack.c.b16 %v716, %v715
  %v968 = vpack.c.b16 %v718, %v717
  %v969 = vpack.c.b16 %v720, %v719
  %v970 = vpack.c.b16 %v722, %v721
  %v971 = vpack.c.b16 %v724, %v723
  %v972 = vpack.c.b16 %v726, %v725
  %v973 = vpack.c.b16 %v728, %v727
  %v974 = vpack.c.b16 %v730, %v729
  %v975 = vpack.c.b16 %v732, %v731
  %v976 = vpack.c.b16 %v734, %v733
  %v977 = vpack.c.b16 %v736, %v735
  %v978 = vpack.c.b16 %v738, %v737
  %v979 = vpack.c.b16 %v740, %v739
  %v980 = vpack.c.b16 %v742, %v741
  %v981 = vpack.c.b16 %v744, %v743
  %v982 = vpack.c.b16 %v746, %v745
  %v983 = vpack.c.b16 %v748, %v747
  %v984 = vpack.c.b16 %v750, %v749
  %v985 = vpack.c.b16 %v752, %v751
  %v986 = vpack.c.b16 %v754, %v753
  %v987 = vpack.c.b16 %v756, %v755
  %v988 = vpack.c.b16 %v758, %v757
  %v989 = vpack.c.b16 %v760, %v759
  %v990 = vpack.c.b16 %v762, %v761
  %v991 = vpack.c.b16 %v764, %v763
  %v992 = vpack.c.b16 %v766, %v765
  %v993 = vpack.c.b16 %v768, %v767
  %v994 = vpack.c.b16 %v770, %v769
  %v995 = vpack.c.b16 %v772, %v771
  %v996 = vpack.c.b16 %v774, %v773
  %v997 = vpack.c.b16 %v776, %v775
  %v998 = vpack.c.b16 %v778, %v777
  %v999 = vpack.c.b16 %v780, %v779
  %v1000 = vpack.c.b16 %v782, %v781
  %v1001 = vpack.c.b16 %v784, %v783
  %v1002 = vpack.c.b16 %v786, %v785
  %v1003 = vpack.c.b16 %v788, %v787
  %v1004 = vpack.c.b16 %v790, %v789
  %v1005 = vpack.c.b16 %v792, %v791
  %v1006 = vpack.c.b16 %v794, %v793
  %v1007 = vpack.c.b16 %v796, %v795
  %v1008 = vpack.c.b16 %v798, %v797
  %v1009 = vpack.c.b16 %v800, %v799
  %v1010 = vpack.c.b16 %v802, %v801
  %v1011 = vpack.c.b16 %v804, %v803
  %v1012 = vpack.c.b16 %v806, %v805
  %v1013 = vpack.c.b16 %v808, %v807
  %v1014 = vpack.c.b16 %v810, %v809
  %v1015 = vpack.c.b16 %v812, %v811
  %v1016 = vpack.c.b16 %v814, %v813
  %v1017 = vpack.c.b16 %v816, %v815
  %v1018 = vpack.c.b16 %v818, %v817
  %v1019 = vpack.c.b16 %v820, %v819
  %v1020 = vpack.c.b16 %v822, %v821
  %v1021 = vpack.c.b16 %v824, %v823
  %v1022 = vpack.c.b16 %v826, %v825
  %v1023 = vpack.c.b16 %v828, %v827
  %v1024 = vpack.c.b16 %v830, %v829
  %v1025 = vpack.c.b16 %v832, %v831
  %v1026 = vpack.c.b16 %v834, %v833
  %v1027 = vpack.c.b16 %v836, %v835
  %v1028 = vpack.c.b16 %v838, %v837
  %v1029 = vpack.c.b16 %v840, %v839
  %v1030 = vpack.c.b16 %v842, %v841
  %v1031 = vpack.c.b16 %v844, %v843
  %v1032 = vpack.c.b16 %v846, %v845
  %v1033 = vpack.c.b16 %v848, %v847
  %v1034 = vpack.c.b16 %v850, %v849
  %v1035 = vpack.c.b16 %v852, %v851
  %v1036 = vpack.c.b16 %v854, %v853
  %v1037 = vpack.c.b16 %v856, %v855
  %v1038 = vpack.c.b16 %v858, %v857
  %v1039 = vpack.c.b16 %v860, %v859
  %v1040 = vpack.c.b16 %v862, %v861
  %v1041 = vpack.c.b16 %v864, %v863
  %v1042 = vpack.c.b16 %v866, %v865
  %v1043 = vpack.c.b16 %v868, %v867
  %v1044 = vpack.c.b16 %v870, %v869
  %v1045 = vpack.c.b16 %v872, %v871
  %v1046 = vpack.c.b16 %v874, %v873
  %v1047 = vpack.c.b16 %v876, %v875
  %v1048 = vpack.c.b16 %v878, %v877
  %v1049 = vpack.c.b16 %v880, %v879
  %v1050 = vpack.c.b16 %v882, %v881
  %v1051 = vpack.c.b16 %v884, %v883
  %v1052 = vpack.c.b16 %v886, %v885
  %v1053 = vpack.c.b16 %v888, %v887
  %v1054 = vpack.c.b16 %v890, %v889
  %v1055 = vpack.c.b16 %v892, %v891
  %v1056 = vpack.c.b16 %v894, %v893
  %v1057 = vpack.c.b16 %v896, %v895
  %v1058 = vpack.c.b16 %v898, %v897
  %v1059 = vpack.c.b16 %v900, %v899
  %v1060 = vpack.c.b16 %v902, %v901
  %v1061 = vpack.c.b16 %v904, %v903
  %v1062 = vpack.c.b16 %v906, %v905
  %v1063 = vpack.c.b16 %v908, %v907
  %v1064 = vpack.c.b16 %v910, %v909
  %v1065 = vpack.c.b16 %v912, %v911
  %v1066 = vpack.c.b16 %v914, %v913
  %v1067 = vpack.c.b16 %v916, %v915
  %v1068 = vpack.c.b16 %v918, %v917
  %v1069 = vpack.c.b16 %v920, %v919
  %v1070 = vpack.c.b16 %v922, %v921
  %v1071 = vpack.c.b16 %v924, %v923
  %v1072 = vpack.c.b16 %v926, %v925
  %v1073 = vpack.c.b16 %v928, %v927
  %v1074 = vpack.c.b16 %v930, %v929
  %v1075 = vpack.c.b16 %v932, %v931
  %v1076 = vpack.c.b16 %v934, %v933
  %v1077 = vpack.c.b16 %v936, %v935
  %v1078 = vpack.c.b16 %v938, %v937
  %v1079 = vpack.c.b16 %v940, %v939
  %v1080 = vpack.c.b16 %v942, %v941
  %v1081 = vpack.c.b16 %v944, %v943
  %v1082 = vpack.c.b16 %v946, %v945
  %v1083 = vpack.c.b16 %v948, %v947
  %v1084 = vpack.c.b16 %v950, %v949
  %v1085 = vpack.c.b16 %v952, %v951
  %v1086 = vpack.c.b16 %v954, %v953
  %v1087 = vpack.c.b16 %v956, %v955
  %v1088 = vpack.c.b16 %v958, %v957
  %v1089 = vpack.c.b16 %v960, %v959
  %v1090 = vpack.c.b16 %v962, %v961
  %v1219 = vunpack.c.l.b16 %v21
  %v1220 = vunpack.c.l.b16 %v24
  %v1221 = vunpack.c.l.b16 %v27
  %v1222 = vunpack.c.l.b16 %v30
  %v1223 = vunpack.c.l.b16 %v33
  %v1224 = vunpack.c.l.b16 %v36
  %v1225 = vunpack.c.l.b16 %v39
  %v1226 = vunpack.c.l.b16 %v42
  %v1227 = vunpack.c.l.b16 %v45
  %v1228 = vunpack.c.l.b16 %v48
  %v1229 = vunpack.c.l.b16 %v51
  %v1230 = vunpack.c.l.b16 %v54
  %v1231 = vunpack.c.l.b16 %v57
  %v1232 = vunpack.c.l.b16 %v60
  %v1233 = vunpack.c.l.b16 %v63
  %v1234 = vunpack.c.l.b16 %v66
  %v1235 = vunpack.c.l.b16 %v75
  %v1236 = vunpack.c.l.b16 %v78
  %v1237 = vunpack.c.l.b16 %v81
  %v1238 = vunpack.c.l.b16 %v84
  %v1239 = vunpack.c.l.b16 %v87
  %v1240 = vunpack.c.l.b16 %v90
  %v1241 = vunpack.c.l.b16 %v93
  %v1242 = vunpack.c.l.b16 %v96
  %v1243 = vunpack.c.l.b16 %v99
  %v1244 = vunpack.c.l.b16 %v102
  %v1245 = vunpack.c.l.b16 %v105
  %v1246 = vunpack.c.l.b16 %v108
  %v1247 = vunpack.c.l.b16 %v111
  %v1248 = vunpack.c.l.b16 %v114
  %v1249 = vunpack.c.l.b16 %v117
  %v1250 = vunpack.c.l.b16 %v120
  %v1251 = vunpack.c.l.b16 %v129
  %v1252 = vunpack.c.l.b16 %v132
  %v1253 = vunpack.c.l.b16 %v135
  %v1254 = vunpack.c.l.b16 %v138
  %v1255 = vunpack.c.l.b16 %v141
  %v1256 = vunpack.c.l.b16 %v144
  %v1257 = vunpack.c.l.b16 %v147
  %v1258 = vunpack.c.l.b16 %v150
  %v1259 = vunpack.c.l.b16 %v153
  %v1260 = vunpack.c.l.b16 %v156
  %v1261 = vunpack.c.l.b16 %v159
  %v1262 = vunpack.c.l.b16 %v162
  %v1263 = vunpack.c.l.b16 %v165
  %v1264 = vunpack.c.l.b16 %v168
  %v1265 = vunpack.c.l.b16 %v171
  %v1266 = vunpack.c.l.b16 %v174
  %v1267 = vunpack.c.l.b16 %v183
  %v1268 = vunpack.c.l.b16 %v186
  %v1269 = vunpack.c.l.b16 %v189
  %v1270 = vunpack.c.l.b16 %v192
  %v1271 = vunpack.c.l.b16 %v195
  %v1272 = vunpack.c.l.b16 %v198
  %v1273 = vunpack.c.l.b16 %v201
  %v1274 = vunpack.c.l.b16 %v204
  %v1275 = vunpack.c.l.b16 %v207
  %v1276 = vunpack.c.l.b16 %v210
  %v1277 = vunpack.c.l.b16 %v213
  %v1278 = vunpack.c.l.b16 %v216
  %v1279 = vunpack.c.l.b16 %v219
  %v1280 = vunpack.c.l.b16 %v222
  %v1281 = vunpack.c.l.b16 %v225
  %v1282 = vunpack.c.l.b16 %v228
  %v1283 = vunpack.c.l.b16 %v237
  %v1284 = vunpack.c.l.b16 %v240
  %v1285 = vunpack.c.l.b16 %v243
  %v1286 = vunpack.c.l.b16 %v246
  %v1287 = vunpack.c.l.b16 %v249
  %v1288 = vunpack.c.l.b16 %v252
  %v1289 = vunpack.c.l.b16 %v255
  %v1290 = vunpack.c.l.b16 %v258
  %v1291 = vunpack.c.l.b16 %v261
  %v1292 = vunpack.c.l.b16 %v264
  %v1293 = vunpack.c.l.b16 %v267
  %v1294 = vunpack.c.l.b16 %v270
  %v1295 = vunpack.c.l.b16 %v273
  %v1296 = vunpack.c.l.b16 %v276
  %v1297 = vunpack.c.l.b16 %v279
  %v1298 = vunpack.c.l.b16 %v282
  %v1299 = vunpack.c.l.b16 %v291
  %v1300 = vunpack.c.l.b16 %v294
  %v1301 = vunpack.c.l.b16 %v297
  %v1302 = vunpack.c.l.b16 %v300
  %v1303 = vunpack.c.l.b16 %v303
  %v1304 = vunpack.c.l.b16 %v306
  %v1305 = vunpack.c.l.b16 %v309
  %v1306 = vunpack.c.l.b16 %v312
  %v1307 = vunpack.c.l.b16 %v315
  %v1308 = vunpack.c.l.b16 %v318
  %v1309 = vunpack.c.l.b16 %v321
  %v1310 = vunpack.c.l.b16 %v324
  %v1311 = vunpack.c.l.b16 %v327
  %v1312 = vunpack.c.l.b16 %v330
  %v1313 = vunpack.c.l.b16 %v333
  %v1314 = vunpack.c.l.b16 %v336
  %v1315 = vunpack.c.l.b16 %v345
  %v1316 = vunpack.c.l.b16 %v348
  %v1317 = vunpack.c.l.b16 %v351
  %v1318 = vunpack.c.l.b16 %v354
  %v1319 = vunpack.c.l.b16 %v357
  %v1320 = vunpack.c.l.b16 %v360
  %v1321 = vunpack.c.l.b16 %v363
  %v1322 = vunpack.c.l.b16 %v366
  %v1323 = vunpack.c.l.b16 %v369
  %v1324 = vunpack.c.l.b16 %v372
  %v1325 = vunpack.c.l.b16 %v375
  %v1326 = vunpack.c.l.b16 %v378
  %v1327 = vunpack.c.l.b16 %v381
  %v1328 = vunpack.c.l.b16 %v384
  %v1329 = vunpack.c.l.b16 %v387
  %v1330 = vunpack.c.l.b16 %v390
  %v1331 = vunpack.c.l.b16 %v399
  %v1332 = vunpack.c.l.b16 %v402
  %v1333 = vunpack.c.l.b16 %v405
  %v1334 = vunpack.c.l.b16 %v408
  %v1335 = vunpack.c.l.b16 %v411
  %v1336 = vunpack.c.l.b16 %v414
  %v1337 = vunpack.c.l.b16 %v417
  %v1338 = vunpack.c.l.b16 %v420
  %v1339 = vunpack.c.l.b16 %v423
  %v1340 = vunpack.c.l.b16 %v426
  %v1341 = vunpack.c.l.b16 %v429
  %v1342 = vunpack.c.l.b16 %v432
  %v1343 = vunpack.c.l.b16 %v435
  %v1344 = vunpack.c.l.b16 %v438
  %v1345 = vunpack.c.l.b16 %v441
  %v1346 = vunpack.c.l.b16 %v444
  %v1347 = vpack.c.b16 %v1219, %v1219
  %v1348 = vpack.c.b16 %v1220, %v1220
  %v1349 = vpack.c.b16 %v1221, %v1221
  %v1350 = vpack.c.b16 %v1222, %v1222
  %v1351 = vpack.c.b16 %v1223, %v1223
  %v1352 = vpack.c.b16 %v1224, %v1224
  %v1353 = vpack.c.b16 %v1225, %v1225
  %v1354 = vpack.c.b16 %v1226, %v1226
  %v1355 = vpack.c.b16 %v1227, %v1227
  %v1356 = vpack.c.b16 %v1228, %v1228
  %v1357 = vpack.c.b16 %v1229, %v1229
  %v1358 = vpack.c.b16 %v1230, %v1230
  %v1359 = vpack.c.b16 %v1231, %v1231
  %v1360 = vpack.c.b16 %v1232, %v1232
  %v1361 = vpack.c.b16 %v1233, %v1233
  %v1362 = vpack.c.b16 %v1234, %v1234
  %v1363 = vpack.c.b16 %v1235, %v1235
  %v1364 = vpack.c.b16 %v1236, %v1236
  %v1365 = vpack.c.b16 %v1237, %v1237
  %v1366 = vpack.c.b16 %v1238, %v1238
  %v1367 = vpack.c.b16 %v1239, %v1239
  %v1368 = vpack.c.b16 %v1240, %v1240
  %v1369 = vpack.c.b16 %v1241, %v1241
  %v1370 = vpack.c.b16 %v1242, %v1242
  %v1371 = vpack.c.b16 %v1243, %v1243
  %v1372 = vpack.c.b16 %v1244, %v1244
  %v1373 = vpack.c.b16 %v1245, %v1245
  %v1374 = vpack.c.b16 %v1246, %v1246
  %v1375 = vpack.c.b16 %v1247, %v1247
  %v1376 = vpack.c.b16 %v1248, %v1248
  %v1377 = vpack.c.b16 %v1249, %v1249
  %v1378 = vpack.c.b16 %v1250, %v1250
  %v1379 = vpack.c.b16 %v1251, %v1251
  %v1380 = vpack.c.b16 %v1252, %v1252
  %v1381 = vpack.c.b16 %v1253, %v1253
  %v1382 = vpack.c.b16 %v1254, %v1254
  %v1383 = vpack.c.b16 %v1255, %v1255
  %v1384 = vpack.c.b16 %v1256, %v1256
  %v1385 = vpack.c.b16 %v1257, %v1257
  %v1386 = vpack.c.b16 %v1258, %v1258
  %v1387 = vpack.c.b16 %v1259, %v1259
  %v1388 = vpack.c.b16 %v1260, %v1260
  %v1389 = vpack.c.b16 %v1261, %v1261
  %v1390 = vpack.c.b16 %v1262, %v1262
  %v1391 = vpack.c.b16 %v1263, %v1263
  %v1392 = vpack.c.b16 %v1264, %v1264
  %v1393 = vpack.c.b16 %v1265, %v1265
  %v1394 = vpack.c.b16 %v1266, %v1266
  %v1395 = vpack.c.b16 %v1267, %v1267
  %v1396 = vpack.c.b16 %v1268, %v1268
  %v1397 = vpack.c.b16 %v1269, %v1269
  %v1398 = vpack.c.b16 %v1270, %v1270
  %v1399 = vpack.c.b16 %v1271, %v1271
  %v1400 = vpack.c.b16 %v1272, %v1272
  %v1401 = vpack.c.b16 %v1273, %v1273
  %v1402 = vpack.c.b16 %v1274, %v1274
  %v1403 = vpack.c.b16 %v1275, %v1275
  %v1404 = vpack.c.b16 %v1276, %v1276
  %v1405 = vpack.c.b16 %v1277, %v1277
  %v1406 = vpack.c.b16 %v1278, %v1278
  %v1407 = vpack.c.b16 %v1279, %v1279
  %v1408 = vpack.c.b16 %v1280, %v1280
  %v1409 = vpack.c.b16 %v1281, %v1281
  %v1410 = vpack.c.b16 %v1282, %v1282
  %v1411 = vpack.c.b16 %v1283, %v1283
  %v1412 = vpack.c.b16 %v1284, %v1284
  %v1413 = vpack.c.b16 %v1285, %v1285
  %v1414 = vpack.c.b16 %v1286, %v1286
  %v1415 = vpack.c.b16 %v1287, %v1287
  %v1416 = vpack.c.b16 %v1288, %v1288
  %v1417 = vpack.c.b16 %v1289, %v1289
  %v1418 = vpack.c.b16 %v1290, %v1290
  %v1419 = vpack.c.b16 %v1291, %v1291
  %v1420 = vpack.c.b16 %v1292, %v1292
  %v1421 = vpack.c.b16 %v1293, %v1293
  %v1422 = vpack.c.b16 %v1294, %v1294
  %v1423 = vpack.c.b16 %v1295, %v1295
  %v1424 = vpack.c.b16 %v1296, %v1296
  %v1425 = vpack.c.b16 %v1297, %v1297
  %v1426 = vpack.c.b16 %v1298, %v1298
  %v1427 = vpack.c.b16 %v1299, %v1299
  %v1428 = vpack.c.b16 %v1300, %v1300
  %v1429 = vpack.c.b16 %v1301, %v1301
  %v1430 = vpack.c.b16 %v1302, %v1302
  %v1431 = vpack.c.b16 %v1303, %v1303
  %v1432 = vpack.c.b16 %v1304, %v1304
  %v1433 = vpack.c.b16 %v1305, %v1305
  %v1434 = vpack.c.b16 %v1306, %v1306
  %v1435 = vpack.c.b16 %v1307, %v1307
  %v1436 = vpack.c.b16 %v1308, %v1308
  %v1437 = vpack.c.b16 %v1309, %v1309
  %v1438 = vpack.c.b16 %v1310, %v1310
  %v1439 = vpack.c.b16 %v1311, %v1311
  %v1440 = vpack.c.b16 %v1312, %v1312
  %v1441 = vpack.c.b16 %v1313, %v1313
  %v1442 = vpack.c.b16 %v1314, %v1314
  %v1443 = vpack.c.b16 %v1315, %v1315
  %v1444 = vpack.c.b16 %v1316, %v1316
  %v1445 = vpack.c.b16 %v1317, %v1317
  %v1446 = vpack.c.b16 %v1318, %v1318
  %v1447 = vpack.c.b16 %v1319, %v1319
  %v1448 = vpack.c.b16 %v1320, %v1320
  %v1449 = vpack.c.b16 %v1321, %v1321
  %v1450 = vpack.c.b16 %v1322, %v1322
  %v1451 = vpack.c.b16 %v1323, %v1323
  %v1452 = vpack.c.b16 %v1324, %v1324
  %v1453 = vpack.c.b16 %v1325, %v1325
  %v1454 = vpack.c.b16 %v1326, %v1326
  %v1455 = vpack.c.b16 %v1327, %v1327
  %v1456 = vpack.c.b16 %v1328, %v1328
  %v1457 = vpack.c.b16 %v1329, %v1329
  %v1458 = vpack.c.b16 %v1330, %v1330
  %v1459 = vpack.c.b16 %v1331, %v1331
  %v1460 = vpack.c.b16 %v1332, %v1332
  %v1461 = vpack.c.b16 %v1333, %v1333
  %v1462 = vpack.c.b16 %v1334, %v1334
  %v1463 = vpack.c.b16 %v1335, %v1335
  %v1464 = vpack.c.b16 %v1336, %v1336
  %v1465 = vpack.c.b16 %v1337, %v1337
  %v1466 = vpack.c.b16 %v1338, %v1338
  %v1467 = vpack.c.b16 %v1339, %v1339
  %v1468 = vpack.c.b16 %v1340, %v1340
  %v1469 = vpack.c.b16 %v1341, %v1341
  %v1470 = vpack.c.b16 %v1342, %v1342
  %v1471 = vpack.c.b16 %v1343, %v1343
  %v1472 = vpack.c.b16 %v1344, %v1344
  %v1473 = vpack.c.b16 %v1345, %v1345
  %v1474 = vpack.c.b16 %v1346, %v1346
  %vm1475 = vsmask.f32 7424
  %v1477 = vshrl.u32 %v963, 16
  %v1479 = vshll.u32 %v963, 16
  %v1481 = vrot.slane %v1479, 1
  %v1482 = vor.u32 %v1477, %v1481
  %v1484 = vshll.u32 %v1347, 16
  %v1486 = vrot.slane %v1484, 1
  %v1487 = vsel %vm1475, %v1482, %v1486
  %v1489 = vshrl.u32 %v964, 16
  %v1491 = vshll.u32 %v964, 16
  %v1493 = vrot.slane %v1491, 1
  %v1494 = vor.u32 %v1489, %v1493
  %v1496 = vshll.u32 %v1348, 16
  %v1498 = vrot.slane %v1496, 1
  %v1499 = vsel %vm1475, %v1494, %v1498
  %v1501 = vshrl.u32 %v965, 16
  %v1503 = vshll.u32 %v965, 16
  %v1505 = vrot.slane %v1503, 1
  %v1506 = vor.u32 %v1501, %v1505
  %v1508 = vshll.u32 %v1349, 16
  %v1510 = vrot.slane %v1508, 1
  %v1511 = vsel %vm1475, %v1506, %v1510
  %v1513 = vshrl.u32 %v966, 16
  %v1515 = vshll.u32 %v966, 16
  %v1517 = vrot.slane %v1515, 1
  %v1518 = vor.u32 %v1513, %v1517
  %v1520 = vshll.u32 %v1350, 16
  %v1522 = vrot.slane %v1520, 1
  %v1523 = vsel %vm1475, %v1518, %v1522
  %v1525 = vshrl.u32 %v967, 16
  %v1527 = vshll.u32 %v967, 16
  %v1529 = vrot.slane %v1527, 1
  %v1530 = vor.u32 %v1525, %v1529
  %v1532 = vshll.u32 %v1351, 16
  %v1534 = vrot.slane %v1532, 1
  %v1535 = vsel %vm1475, %v1530, %v1534
  %v1537 = vshrl.u32 %v968, 16
  %v1539 = vshll.u32 %v968, 16
  %v1541 = vrot.slane %v1539, 1
  %v1542 = vor.u32 %v1537, %v1541
  %v1544 = vshll.u32 %v1352, 16
  %v1546 = vrot.slane %v1544, 1
  %v1547 = vsel %vm1475, %v1542, %v1546
  %v1549 = vshrl.u32 %v969, 16
  %v1551 = vshll.u32 %v969, 16
  %v1553 = vrot.slane %v1551, 1
  %v1554 = vor.u32 %v1549, %v1553
  %v1556 = vshll.u32 %v1353, 16
  %v1558 = vrot.slane %v1556, 1
  %v1559 = vsel %vm1475, %v1554, %v1558
  %v1561 = vshrl.u32 %v970, 16
  %v1563 = vshll.u32 %v970, 16
  %v1565 = vrot.slane %v1563, 1
  %v1566 = vor.u32 %v1561, %v1565
  %v1568 = vshll.u32 %v1354, 16
  %v1570 = vrot.slane %v1568, 1
  %v1571 = vsel %vm1475, %v1566, %v1570
  %v1573 = vshrl.u32 %v971, 16
  %v1575 = vshll.u32 %v971, 16
  %v1577 = vrot.slane %v1575, 1
  %v1578 = vor.u32 %v1573, %v1577
  %v1580 = vshll.u32 %v1355, 16
  %v1582 = vrot.slane %v1580, 1
  %v1583 = vsel %vm1475, %v1578, %v1582
  %v1585 = vshrl.u32 %v972, 16
  %v1587 = vshll.u32 %v972, 16
  %v1589 = vrot.slane %v1587, 1
  %v1590 = vor.u32 %v1585, %v1589
  %v1592 = vshll.u32 %v1356, 16
  %v1594 = vrot.slane %v1592, 1
  %v1595 = vsel %vm1475, %v1590, %v1594
  %v1597 = vshrl.u32 %v973, 16
  %v1599 = vshll.u32 %v973, 16
  %v1601 = vrot.slane %v1599, 1
  %v1602 = vor.u32 %v1597, %v1601
  %v1604 = vshll.u32 %v1357, 16
  %v1606 = vrot.slane %v1604, 1
  %v1607 = vsel %vm1475, %v1602, %v1606
  %v1609 = vshrl.u32 %v974, 16
  %v1611 = vshll.u32 %v974, 16
  %v1613 = vrot.slane %v1611, 1
  %v1614 = vor.u32 %v1609, %v1613
  %v1616 = vshll.u32 %v1358, 16
  %v1618 = vrot.slane %v1616, 1
  %v1619 = vsel %vm1475, %v1614, %v1618
  %v1621 = vshrl.u32 %v975, 16
  %v1623 = vshll.u32 %v975, 16
  %v1625 = vrot.slane %v1623, 1
  %v1626 = vor.u32 %v1621, %v1625
  %v1628 = vshll.u32 %v1359, 16
  %v1630 = vrot.slane %v1628, 1
  %v1631 = vsel %vm1475, %v1626, %v1630
  %v1633 = vshrl.u32 %v976, 16
  %v1635 = vshll.u32 %v976, 16
  %v1637 = vrot.slane %v1635, 1
  %v1638 = vor.u32 %v1633, %v1637
  %v1640 = vshll.u32 %v1360, 16
  %v1642 = vrot.slane %v1640, 1
  %v1643 = vsel %vm1475, %v1638, %v1642
  %v1645 = vshrl.u32 %v977, 16
  %v1647 = vshll.u32 %v977, 16
  %v1649 = vrot.slane %v1647, 1
  %v1650 = vor.u32 %v1645, %v1649
  %v1652 = vshll.u32 %v1361, 16
  %v1654 = vrot.slane %v1652, 1
  %v1655 = vsel %vm1475, %v1650, %v1654
  %v1657 = vshrl.u32 %v978, 16
  %v1659 = vshll.u32 %v978, 16
  %v1661 = vrot.slane %v1659, 1
  %v1662 = vor.u32 %v1657, %v1661
  %v1664 = vshll.u32 %v1362, 16
  %v1666 = vrot.slane %v1664, 1
  %v1667 = vsel %vm1475, %v1662, %v1666
  %v1669 = vshrl.u32 %v979, 16
  %v1671 = vshll.u32 %v979, 16
  %v1673 = vrot.slane %v1671, 1
  %v1674 = vor.u32 %v1669, %v1673
  %v1676 = vshll.u32 %v1363, 16
  %v1678 = vrot.slane %v1676, 1
  %v1679 = vsel %vm1475, %v1674, %v1678
  %v1681 = vshrl.u32 %v980, 16
  %v1683 = vshll.u32 %v980, 16
  %v1685 = vrot.slane %v1683, 1
  %v1686 = vor.u32 %v1681, %v1685
  %v1688 = vshll.u32 %v1364, 16
  %v1690 = vrot.slane %v1688, 1
  %v1691 = vsel %vm1475, %v1686, %v1690
  %v1693 = vshrl.u32 %v981, 16
  %v1695 = vshll.u32 %v981, 16
  %v1697 = vrot.slane %v1695, 1
  %v1698 = vor.u32 %v1693, %v1697
  %v1700 = vshll.u32 %v1365, 16
  %v1702 = vrot.slane %v1700, 1
  %v1703 = vsel %vm1475, %v1698, %v1702
  %v1705 = vshrl.u32 %v982, 16
  %v1707 = vshll.u32 %v982, 16
  %v1709 = vrot.slane %v1707, 1
  %v1710 = vor.u32 %v1705, %v1709
  %v1712 = vshll.u32 %v1366, 16
  %v1714 = vrot.slane %v1712, 1
  %v1715 = vsel %vm1475, %v1710, %v1714
  %v1717 = vshrl.u32 %v983, 16
  %v1719 = vshll.u32 %v983, 16
  %v1721 = vrot.slane %v1719, 1
  %v1722 = vor.u32 %v1717, %v1721
  %v1724 = vshll.u32 %v1367, 16
  %v1726 = vrot.slane %v1724, 1
  %v1727 = vsel %vm1475, %v1722, %v1726
  %v1729 = vshrl.u32 %v984, 16
  %v1731 = vshll.u32 %v984, 16
  %v1733 = vrot.slane %v1731, 1
  %v1734 = vor.u32 %v1729, %v1733
  %v1736 = vshll.u32 %v1368, 16
  %v1738 = vrot.slane %v1736, 1
  %v1739 = vsel %vm1475, %v1734, %v1738
  %v1741 = vshrl.u32 %v985, 16
  %v1743 = vshll.u32 %v985, 16
  %v1745 = vrot.slane %v1743, 1
  %v1746 = vor.u32 %v1741, %v1745
  %v1748 = vshll.u32 %v1369, 16
  %v1750 = vrot.slane %v1748, 1
  %v1751 = vsel %vm1475, %v1746, %v1750
  %v1753 = vshrl.u32 %v986, 16
  %v1755 = vshll.u32 %v986, 16
  %v1757 = vrot.slane %v1755, 1
  %v1758 = vor.u32 %v1753, %v1757
  %v1760 = vshll.u32 %v1370, 16
  %v1762 = vrot.slane %v1760, 1
  %v1763 = vsel %vm1475, %v1758, %v1762
  %v1765 = vshrl.u32 %v987, 16
  %v1767 = vshll.u32 %v987, 16
  %v1769 = vrot.slane %v1767, 1
  %v1770 = vor.u32 %v1765, %v1769
  %v1772 = vshll.u32 %v1371, 16
  %v1774 = vrot.slane %v1772, 1
  %v1775 = vsel %vm1475, %v1770, %v1774
  %v1777 = vshrl.u32 %v988, 16
  %v1779 = vshll.u32 %v988, 16
  %v1781 = vrot.slane %v1779, 1
  %v1782 = vor.u32 %v1777, %v1781
  %v1784 = vshll.u32 %v1372, 16
  %v1786 = vrot.slane %v1784, 1
  %v1787 = vsel %vm1475, %v1782, %v1786
  %v1789 = vshrl.u32 %v989, 16
  %v1791 = vshll.u32 %v989, 16
  %v1793 = vrot.slane %v1791, 1
  %v1794 = vor.u32 %v1789, %v1793
  %v1796 = vshll.u32 %v1373, 16
  %v1798 = vrot.slane %v1796, 1
  %v1799 = vsel %vm1475, %v1794, %v1798
  %v1801 = vshrl.u32 %v990, 16
  %v1803 = vshll.u32 %v990, 16
  %v1805 = vrot.slane %v1803, 1
  %v1806 = vor.u32 %v1801, %v1805
  %v1808 = vshll.u32 %v1374, 16
  %v1810 = vrot.slane %v1808, 1
  %v1811 = vsel %vm1475, %v1806, %v1810
  %v1813 = vshrl.u32 %v991, 16
  %v1815 = vshll.u32 %v991, 16
  %v1817 = vrot.slane %v1815, 1
  %v1818 = vor.u32 %v1813, %v1817
  %v1820 = vshll.u32 %v1375, 16
  %v1822 = vrot.slane %v1820, 1
  %v1823 = vsel %vm1475, %v1818, %v1822
  %v1825 = vshrl.u32 %v992, 16
  %v1827 = vshll.u32 %v992, 16
  %v1829 = vrot.slane %v1827, 1
  %v1830 = vor.u32 %v1825, %v1829
  %v1832 = vshll.u32 %v1376, 16
  %v1834 = vrot.slane %v1832, 1
  %v1835 = vsel %vm1475, %v1830, %v1834
  %v1837 = vshrl.u32 %v993, 16
  %v1839 = vshll.u32 %v993, 16
  %v1841 = vrot.slane %v1839, 1
  %v1842 = vor.u32 %v1837, %v1841
  %v1844 = vshll.u32 %v1377, 16
  %v1846 = vrot.slane %v1844, 1
  %v1847 = vsel %vm1475, %v1842, %v1846
  %v1849 = vshrl.u32 %v994, 16
  %v1851 = vshll.u32 %v994, 16
  %v1853 = vrot.slane %v1851, 1
  %v1854 = vor.u32 %v1849, %v1853
  %v1856 = vshll.u32 %v1378, 16
  %v1858 = vrot.slane %v1856, 1
  %v1859 = vsel %vm1475, %v1854, %v1858
  %v1861 = vshrl.u32 %v995, 16
  %v1863 = vshll.u32 %v995, 16
  %v1865 = vrot.slane %v1863, 1
  %v1866 = vor.u32 %v1861, %v1865
  %v1868 = vshll.u32 %v1379, 16
  %v1870 = vrot.slane %v1868, 1
  %v1871 = vsel %vm1475, %v1866, %v1870
  %v1873 = vshrl.u32 %v996, 16
  %v1875 = vshll.u32 %v996, 16
  %v1877 = vrot.slane %v1875, 1
  %v1878 = vor.u32 %v1873, %v1877
  %v1880 = vshll.u32 %v1380, 16
  %v1882 = vrot.slane %v1880, 1
  %v1883 = vsel %vm1475, %v1878, %v1882
  %v1885 = vshrl.u32 %v997, 16
  %v1887 = vshll.u32 %v997, 16
  %v1889 = vrot.slane %v1887, 1
  %v1890 = vor.u32 %v1885, %v1889
  %v1892 = vshll.u32 %v1381, 16
  %v1894 = vrot.slane %v1892, 1
  %v1895 = vsel %vm1475, %v1890, %v1894
  %v1897 = vshrl.u32 %v998, 16
  %v1899 = vshll.u32 %v998, 16
  %v1901 = vrot.slane %v1899, 1
  %v1902 = vor.u32 %v1897, %v1901
  %v1904 = vshll.u32 %v1382, 16
  %v1906 = vrot.slane %v1904, 1
  %v1907 = vsel %vm1475, %v1902, %v1906
  %v1909 = vshrl.u32 %v999, 16
  %v1911 = vshll.u32 %v999, 16
  %v1913 = vrot.slane %v1911, 1
  %v1914 = vor.u32 %v1909, %v1913
  %v1916 = vshll.u32 %v1383, 16
  %v1918 = vrot.slane %v1916, 1
  %v1919 = vsel %vm1475, %v1914, %v1918
  %v1921 = vshrl.u32 %v1000, 16
  %v1923 = vshll.u32 %v1000, 16
  %v1925 = vrot.slane %v1923, 1
  %v1926 = vor.u32 %v1921, %v1925
  %v1928 = vshll.u32 %v1384, 16
  %v1930 = vrot.slane %v1928, 1
  %v1931 = vsel %vm1475, %v1926, %v1930
  %v1933 = vshrl.u32 %v1001, 16
  %v1935 = vshll.u32 %v1001, 16
  %v1937 = vrot.slane %v1935, 1
  %v1938 = vor.u32 %v1933, %v1937
  %v1940 = vshll.u32 %v1385, 16
  %v1942 = vrot.slane %v1940, 1
  %v1943 = vsel %vm1475, %v1938, %v1942
  %v1945 = vshrl.u32 %v1002, 16
  %v1947 = vshll.u32 %v1002, 16
  %v1949 = vrot.slane %v1947, 1
  %v1950 = vor.u32 %v1945, %v1949
  %v1952 = vshll.u32 %v1386, 16
  %v1954 = vrot.slane %v1952, 1
  %v1955 = vsel %vm1475, %v1950, %v1954
  %v1957 = vshrl.u32 %v1003, 16
  %v1959 = vshll.u32 %v1003, 16
  %v1961 = vrot.slane %v1959, 1
  %v1962 = vor.u32 %v1957, %v1961
  %v1964 = vshll.u32 %v1387, 16
  %v1966 = vrot.slane %v1964, 1
  %v1967 = vsel %vm1475, %v1962, %v1966
  %v1969 = vshrl.u32 %v1004, 16
  %v1971 = vshll.u32 %v1004, 16
  %v1973 = vrot.slane %v1971, 1
  %v1974 = vor.u32 %v1969, %v1973
  %v1976 = vshll.u32 %v1388, 16
  %v1978 = vrot.slane %v1976, 1
  %v1979 = vsel %vm1475, %v1974, %v1978
  %v1981 = vshrl.u32 %v1005, 16
  %v1983 = vshll.u32 %v1005, 16
  %v1985 = vrot.slane %v1983, 1
  %v1986 = vor.u32 %v1981, %v1985
  %v1988 = vshll.u32 %v1389, 16
  %v1990 = vrot.slane %v1988, 1
  %v1991 = vsel %vm1475, %v1986, %v1990
  %v1993 = vshrl.u32 %v1006, 16
  %v1995 = vshll.u32 %v1006, 16
  %v1997 = vrot.slane %v1995, 1
  %v1998 = vor.u32 %v1993, %v1997
  %v2000 = vshll.u32 %v1390, 16
  %v2002 = vrot.slane %v2000, 1
  %v2003 = vsel %vm1475, %v1998, %v2002
  %v2005 = vshrl.u32 %v1007, 16
  %v2007 = vshll.u32 %v1007, 16
  %v2009 = vrot.slane %v2007, 1
  %v2010 = vor.u32 %v2005, %v2009
  %v2012 = vshll.u32 %v1391, 16
  %v2014 = vrot.slane %v2012, 1
  %v2015 = vsel %vm1475, %v2010, %v2014
  %v2017 = vshrl.u32 %v1008, 16
  %v2019 = vshll.u32 %v1008, 16
  %v2021 = vrot.slane %v2019, 1
  %v2022 = vor.u32 %v2017, %v2021
  %v2024 = vshll.u32 %v1392, 16
  %v2026 = vrot.slane %v2024, 1
  %v2027 = vsel %vm1475, %v2022, %v2026
  %v2029 = vshrl.u32 %v1009, 16
  %v2031 = vshll.u32 %v1009, 16
  %v2033 = vrot.slane %v2031, 1
  %v2034 = vor.u32 %v2029, %v2033
  %v2036 = vshll.u32 %v1393, 16
  %v2038 = vrot.slane %v2036, 1
  %v2039 = vsel %vm1475, %v2034, %v2038
  %v2041 = vshrl.u32 %v1010, 16
  %v2043 = vshll.u32 %v1010, 16
  %v2045 = vrot.slane %v2043, 1
  %v2046 = vor.u32 %v2041, %v2045
  %v2048 = vshll.u32 %v1394, 16
  %v2050 = vrot.slane %v2048, 1
  %v2051 = vsel %vm1475, %v2046, %v2050
  %v2053 = vshrl.u32 %v1011, 16
  %v2055 = vshll.u32 %v1011, 16
  %v2057 = vrot.slane %v2055, 1
  %v2058 = vor.u32 %v2053, %v2057
  %v2060 = vshll.u32 %v1395, 16
  %v2062 = vrot.slane %v2060, 1
  %v2063 = vsel %vm1475, %v2058, %v2062
  %v2065 = vshrl.u32 %v1012, 16
  %v2067 = vshll.u32 %v1012, 16
  %v2069 = vrot.slane %v2067, 1
  %v2070 = vor.u32 %v2065, %v2069
  %v2072 = vshll.u32 %v1396, 16
  %v2074 = vrot.slane %v2072, 1
  %v2075 = vsel %vm1475, %v2070, %v2074
  %v2077 = vshrl.u32 %v1013, 16
  %v2079 = vshll.u32 %v1013, 16
  %v2081 = vrot.slane %v2079, 1
  %v2082 = vor.u32 %v2077, %v2081
  %v2084 = vshll.u32 %v1397, 16
  %v2086 = vrot.slane %v2084, 1
  %v2087 = vsel %vm1475, %v2082, %v2086
  %v2089 = vshrl.u32 %v1014, 16
  %v2091 = vshll.u32 %v1014, 16
  %v2093 = vrot.slane %v2091, 1
  %v2094 = vor.u32 %v2089, %v2093
  %v2096 = vshll.u32 %v1398, 16
  %v2098 = vrot.slane %v2096, 1
  %v2099 = vsel %vm1475, %v2094, %v2098
  %v2101 = vshrl.u32 %v1015, 16
  %v2103 = vshll.u32 %v1015, 16
  %v2105 = vrot.slane %v2103, 1
  %v2106 = vor.u32 %v2101, %v2105
  %v2108 = vshll.u32 %v1399, 16
  %v2110 = vrot.slane %v2108, 1
  %v2111 = vsel %vm1475, %v2106, %v2110
  %v2113 = vshrl.u32 %v1016, 16
  %v2115 = vshll.u32 %v1016, 16
  %v2117 = vrot.slane %v2115, 1
  %v2118 = vor.u32 %v2113, %v2117
  %v2120 = vshll.u32 %v1400, 16
  %v2122 = vrot.slane %v2120, 1
  %v2123 = vsel %vm1475, %v2118, %v2122
  %v2125 = vshrl.u32 %v1017, 16
  %v2127 = vshll.u32 %v1017, 16
  %v2129 = vrot.slane %v2127, 1
  %v2130 = vor.u32 %v2125, %v2129
  %v2132 = vshll.u32 %v1401, 16
  %v2134 = vrot.slane %v2132, 1
  %v2135 = vsel %vm1475, %v2130, %v2134
  %v2137 = vshrl.u32 %v1018, 16
  %v2139 = vshll.u32 %v1018, 16
  %v2141 = vrot.slane %v2139, 1
  %v2142 = vor.u32 %v2137, %v2141
  %v2144 = vshll.u32 %v1402, 16
  %v2146 = vrot.slane %v2144, 1
  %v2147 = vsel %vm1475, %v2142, %v2146
  %v2149 = vshrl.u32 %v1019, 16
  %v2151 = vshll.u32 %v1019, 16
  %v2153 = vrot.slane %v2151, 1
  %v2154 = vor.u32 %v2149, %v2153
  %v2156 = vshll.u32 %v1403, 16
  %v2158 = vrot.slane %v2156, 1
  %v2159 = vsel %vm1475, %v2154, %v2158
  %v2161 = vshrl.u32 %v1020, 16
  %v2163 = vshll.u32 %v1020, 16
  %v2165 = vrot.slane %v2163, 1
  %v2166 = vor.u32 %v2161, %v2165
  %v2168 = vshll.u32 %v1404, 16
  %v2170 = vrot.slane %v2168, 1
  %v2171 = vsel %vm1475, %v2166, %v2170
  %v2173 = vshrl.u32 %v1021, 16
  %v2175 = vshll.u32 %v1021, 16
  %v2177 = vrot.slane %v2175, 1
  %v2178 = vor.u32 %v2173, %v2177
  %v2180 = vshll.u32 %v1405, 16
  %v2182 = vrot.slane %v2180, 1
  %v2183 = vsel %vm1475, %v2178, %v2182
  %v2185 = vshrl.u32 %v1022, 16
  %v2187 = vshll.u32 %v1022, 16
  %v2189 = vrot.slane %v2187, 1
  %v2190 = vor.u32 %v2185, %v2189
  %v2192 = vshll.u32 %v1406, 16
  %v2194 = vrot.slane %v2192, 1
  %v2195 = vsel %vm1475, %v2190, %v2194
  %v2197 = vshrl.u32 %v1023, 16
  %v2199 = vshll.u32 %v1023, 16
  %v2201 = vrot.slane %v2199, 1
  %v2202 = vor.u32 %v2197, %v2201
  %v2204 = vshll.u32 %v1407, 16
  %v2206 = vrot.slane %v2204, 1
  %v2207 = vsel %vm1475, %v2202, %v2206
  %v2209 = vshrl.u32 %v1024, 16
  %v2211 = vshll.u32 %v1024, 16
  %v2213 = vrot.slane %v2211, 1
  %v2214 = vor.u32 %v2209, %v2213
  %v2216 = vshll.u32 %v1408, 16
  %v2218 = vrot.slane %v2216, 1
  %v2219 = vsel %vm1475, %v2214, %v2218
  %v2221 = vshrl.u32 %v1025, 16
  %v2223 = vshll.u32 %v1025, 16
  %v2225 = vrot.slane %v2223, 1
  %v2226 = vor.u32 %v2221, %v2225
  %v2228 = vshll.u32 %v1409, 16
  %v2230 = vrot.slane %v2228, 1
  %v2231 = vsel %vm1475, %v2226, %v2230
  %v2233 = vshrl.u32 %v1026, 16
  %v2235 = vshll.u32 %v1026, 16
  %v2237 = vrot.slane %v2235, 1
  %v2238 = vor.u32 %v2233, %v2237
  %v2240 = vshll.u32 %v1410, 16
  %v2242 = vrot.slane %v2240, 1
  %v2243 = vsel %vm1475, %v2238, %v2242
  %v2245 = vshrl.u32 %v1027, 16
  %v2247 = vshll.u32 %v1027, 16
  %v2249 = vrot.slane %v2247, 1
  %v2250 = vor.u32 %v2245, %v2249
  %v2252 = vshll.u32 %v1411, 16
  %v2254 = vrot.slane %v2252, 1
  %v2255 = vsel %vm1475, %v2250, %v2254
  %v2257 = vshrl.u32 %v1028, 16
  %v2259 = vshll.u32 %v1028, 16
  %v2261 = vrot.slane %v2259, 1
  %v2262 = vor.u32 %v2257, %v2261
  %v2264 = vshll.u32 %v1412, 16
  %v2266 = vrot.slane %v2264, 1
  %v2267 = vsel %vm1475, %v2262, %v2266
  %v2269 = vshrl.u32 %v1029, 16
  %v2271 = vshll.u32 %v1029, 16
  %v2273 = vrot.slane %v2271, 1
  %v2274 = vor.u32 %v2269, %v2273
  %v2276 = vshll.u32 %v1413, 16
  %v2278 = vrot.slane %v2276, 1
  %v2279 = vsel %vm1475, %v2274, %v2278
  %v2281 = vshrl.u32 %v1030, 16
  %v2283 = vshll.u32 %v1030, 16
  %v2285 = vrot.slane %v2283, 1
  %v2286 = vor.u32 %v2281, %v2285
  %v2288 = vshll.u32 %v1414, 16
  %v2290 = vrot.slane %v2288, 1
  %v2291 = vsel %vm1475, %v2286, %v2290
  %v2293 = vshrl.u32 %v1031, 16
  %v2295 = vshll.u32 %v1031, 16
  %v2297 = vrot.slane %v2295, 1
  %v2298 = vor.u32 %v2293, %v2297
  %v2300 = vshll.u32 %v1415, 16
  %v2302 = vrot.slane %v2300, 1
  %v2303 = vsel %vm1475, %v2298, %v2302
  %v2305 = vshrl.u32 %v1032, 16
  %v2307 = vshll.u32 %v1032, 16
  %v2309 = vrot.slane %v2307, 1
  %v2310 = vor.u32 %v2305, %v2309
  %v2312 = vshll.u32 %v1416, 16
  %v2314 = vrot.slane %v2312, 1
  %v2315 = vsel %vm1475, %v2310, %v2314
  %v2317 = vshrl.u32 %v1033, 16
  %v2319 = vshll.u32 %v1033, 16
  %v2321 = vrot.slane %v2319, 1
  %v2322 = vor.u32 %v2317, %v2321
  %v2324 = vshll.u32 %v1417, 16
  %v2326 = vrot.slane %v2324, 1
  %v2327 = vsel %vm1475, %v2322, %v2326
  %v2329 = vshrl.u32 %v1034, 16
  %v2331 = vshll.u32 %v1034, 16
  %v2333 = vrot.slane %v2331, 1
  %v2334 = vor.u32 %v2329, %v2333
  %v2336 = vshll.u32 %v1418, 16
  %v2338 = vrot.slane %v2336, 1
  %v2339 = vsel %vm1475, %v2334, %v2338
  %v2341 = vshrl.u32 %v1035, 16
  %v2343 = vshll.u32 %v1035, 16
  %v2345 = vrot.slane %v2343, 1
  %v2346 = vor.u32 %v2341, %v2345
  %v2348 = vshll.u32 %v1419, 16
  %v2350 = vrot.slane %v2348, 1
  %v2351 = vsel %vm1475, %v2346, %v2350
  %v2353 = vshrl.u32 %v1036, 16
  %v2355 = vshll.u32 %v1036, 16
  %v2357 = vrot.slane %v2355, 1
  %v2358 = vor.u32 %v2353, %v2357
  %v2360 = vshll.u32 %v1420, 16
  %v2362 = vrot.slane %v2360, 1
  %v2363 = vsel %vm1475, %v2358, %v2362
  %v2365 = vshrl.u32 %v1037, 16
  %v2367 = vshll.u32 %v1037, 16
  %v2369 = vrot.slane %v2367, 1
  %v2370 = vor.u32 %v2365, %v2369
  %v2372 = vshll.u32 %v1421, 16
  %v2374 = vrot.slane %v2372, 1
  %v2375 = vsel %vm1475, %v2370, %v2374
  %v2377 = vshrl.u32 %v1038, 16
  %v2379 = vshll.u32 %v1038, 16
  %v2381 = vrot.slane %v2379, 1
  %v2382 = vor.u32 %v2377, %v2381
  %v2384 = vshll.u32 %v1422, 16
  %v2386 = vrot.slane %v2384, 1
  %v2387 = vsel %vm1475, %v2382, %v2386
  %v2389 = vshrl.u32 %v1039, 16
  %v2391 = vshll.u32 %v1039, 16
  %v2393 = vrot.slane %v2391, 1
  %v2394 = vor.u32 %v2389, %v2393
  %v2396 = vshll.u32 %v1423, 16
  %v2398 = vrot.slane %v2396, 1
  %v2399 = vsel %vm1475, %v2394, %v2398
  %v2401 = vshrl.u32 %v1040, 16
  %v2403 = vshll.u32 %v1040, 16
  %v2405 = vrot.slane %v2403, 1
  %v2406 = vor.u32 %v2401, %v2405
  %v2408 = vshll.u32 %v1424, 16
  %v2410 = vrot.slane %v2408, 1
  %v2411 = vsel %vm1475, %v2406, %v2410
  %v2413 = vshrl.u32 %v1041, 16
  %v2415 = vshll.u32 %v1041, 16
  %v2417 = vrot.slane %v2415, 1
  %v2418 = vor.u32 %v2413, %v2417
  %v2420 = vshll.u32 %v1425, 16
  %v2422 = vrot.slane %v2420, 1
  %v2423 = vsel %vm1475, %v2418, %v2422
  %v2425 = vshrl.u32 %v1042, 16
  %v2427 = vshll.u32 %v1042, 16
  %v2429 = vrot.slane %v2427, 1
  %v2430 = vor.u32 %v2425, %v2429
  %v2432 = vshll.u32 %v1426, 16
  %v2434 = vrot.slane %v2432, 1
  %v2435 = vsel %vm1475, %v2430, %v2434
  %v2437 = vshrl.u32 %v1043, 16
  %v2439 = vshll.u32 %v1043, 16
  %v2441 = vrot.slane %v2439, 1
  %v2442 = vor.u32 %v2437, %v2441
  %v2444 = vshll.u32 %v1427, 16
  %v2446 = vrot.slane %v2444, 1
  %v2447 = vsel %vm1475, %v2442, %v2446
  %v2449 = vshrl.u32 %v1044, 16
  %v2451 = vshll.u32 %v1044, 16
  %v2453 = vrot.slane %v2451, 1
  %v2454 = vor.u32 %v2449, %v2453
  %v2456 = vshll.u32 %v1428, 16
  %v2458 = vrot.slane %v2456, 1
  %v2459 = vsel %vm1475, %v2454, %v2458
  %v2461 = vshrl.u32 %v1045, 16
  %v2463 = vshll.u32 %v1045, 16
  %v2465 = vrot.slane %v2463, 1
  %v2466 = vor.u32 %v2461, %v2465
  %v2468 = vshll.u32 %v1429, 16
  %v2470 = vrot.slane %v2468, 1
  %v2471 = vsel %vm1475, %v2466, %v2470
  %v2473 = vshrl.u32 %v1046, 16
  %v2475 = vshll.u32 %v1046, 16
  %v2477 = vrot.slane %v2475, 1
  %v2478 = vor.u32 %v2473, %v2477
  %v2480 = vshll.u32 %v1430, 16
  %v2482 = vrot.slane %v2480, 1
  %v2483 = vsel %vm1475, %v2478, %v2482
  %v2485 = vshrl.u32 %v1047, 16
  %v2487 = vshll.u32 %v1047, 16
  %v2489 = vrot.slane %v2487, 1
  %v2490 = vor.u32 %v2485, %v2489
  %v2492 = vshll.u32 %v1431, 16
  %v2494 = vrot.slane %v2492, 1
  %v2495 = vsel %vm1475, %v2490, %v2494
  %v2497 = vshrl.u32 %v1048, 16
  %v2499 = vshll.u32 %v1048, 16
  %v2501 = vrot.slane %v2499, 1
  %v2502 = vor.u32 %v2497, %v2501
  %v2504 = vshll.u32 %v1432, 16
  %v2506 = vrot.slane %v2504, 1
  %v2507 = vsel %vm1475, %v2502, %v2506
  %v2509 = vshrl.u32 %v1049, 16
  %v2511 = vshll.u32 %v1049, 16
  %v2513 = vrot.slane %v2511, 1
  %v2514 = vor.u32 %v2509, %v2513
  %v2516 = vshll.u32 %v1433, 16
  %v2518 = vrot.slane %v2516, 1
  %v2519 = vsel %vm1475, %v2514, %v2518
  %v2521 = vshrl.u32 %v1050, 16
  %v2523 = vshll.u32 %v1050, 16
  %v2525 = vrot.slane %v2523, 1
  %v2526 = vor.u32 %v2521, %v2525
  %v2528 = vshll.u32 %v1434, 16
  %v2530 = vrot.slane %v2528, 1
  %v2531 = vsel %vm1475, %v2526, %v2530
  %v2533 = vshrl.u32 %v1051, 16
  %v2535 = vshll.u32 %v1051, 16
  %v2537 = vrot.slane %v2535, 1
  %v2538 = vor.u32 %v2533, %v2537
  %v2540 = vshll.u32 %v1435, 16
  %v2542 = vrot.slane %v2540, 1
  %v2543 = vsel %vm1475, %v2538, %v2542
  %v2545 = vshrl.u32 %v1052, 16
  %v2547 = vshll.u32 %v1052, 16
  %v2549 = vrot.slane %v2547, 1
  %v2550 = vor.u32 %v2545, %v2549
  %v2552 = vshll.u32 %v1436, 16
  %v2554 = vrot.slane %v2552, 1
  %v2555 = vsel %vm1475, %v2550, %v2554
  %v2557 = vshrl.u32 %v1053, 16
  %v2559 = vshll.u32 %v1053, 16
  %v2561 = vrot.slane %v2559, 1
  %v2562 = vor.u32 %v2557, %v2561
  %v2564 = vshll.u32 %v1437, 16
  %v2566 = vrot.slane %v2564, 1
  %v2567 = vsel %vm1475, %v2562, %v2566
  %v2569 = vshrl.u32 %v1054, 16
  %v2571 = vshll.u32 %v1054, 16
  %v2573 = vrot.slane %v2571, 1
  %v2574 = vor.u32 %v2569, %v2573
  %v2576 = vshll.u32 %v1438, 16
  %v2578 = vrot.slane %v2576, 1
  %v2579 = vsel %vm1475, %v2574, %v2578
  %v2581 = vshrl.u32 %v1055, 16
  %v2583 = vshll.u32 %v1055, 16
  %v2585 = vrot.slane %v2583, 1
  %v2586 = vor.u32 %v2581, %v2585
  %v2588 = vshll.u32 %v1439, 16
  %v2590 = vrot.slane %v2588, 1
  %v2591 = vsel %vm1475, %v2586, %v2590
  %v2593 = vshrl.u32 %v1056, 16
  %v2595 = vshll.u32 %v1056, 16
  %v2597 = vrot.slane %v2595, 1
  %v2598 = vor.u32 %v2593, %v2597
  %v2600 = vshll.u32 %v1440, 16
  %v2602 = vrot.slane %v2600, 1
  %v2603 = vsel %vm1475, %v2598, %v2602
  %v2605 = vshrl.u32 %v1057, 16
  %v2607 = vshll.u32 %v1057, 16
  %v2609 = vrot.slane %v2607, 1
  %v2610 = vor.u32 %v2605, %v2609
  %v2612 = vshll.u32 %v1441, 16
  %v2614 = vrot.slane %v2612, 1
  %v2615 = vsel %vm1475, %v2610, %v2614
  %v2617 = vshrl.u32 %v1058, 16
  %v2619 = vshll.u32 %v1058, 16
  %v2621 = vrot.slane %v2619, 1
  %v2622 = vor.u32 %v2617, %v2621
  %v2624 = vshll.u32 %v1442, 16
  %v2626 = vrot.slane %v2624, 1
  %v2627 = vsel %vm1475, %v2622, %v2626
  %v2629 = vshrl.u32 %v1059, 16
  %v2631 = vshll.u32 %v1059, 16
  %v2633 = vrot.slane %v2631, 1
  %v2634 = vor.u32 %v2629, %v2633
  %v2636 = vshll.u32 %v1443, 16
  %v2638 = vrot.slane %v2636, 1
  %v2639 = vsel %vm1475, %v2634, %v2638
  %v2641 = vshrl.u32 %v1060, 16
  %v2643 = vshll.u32 %v1060, 16
  %v2645 = vrot.slane %v2643, 1
  %v2646 = vor.u32 %v2641, %v2645
  %v2648 = vshll.u32 %v1444, 16
  %v2650 = vrot.slane %v2648, 1
  %v2651 = vsel %vm1475, %v2646, %v2650
  %v2653 = vshrl.u32 %v1061, 16
  %v2655 = vshll.u32 %v1061, 16
  %v2657 = vrot.slane %v2655, 1
  %v2658 = vor.u32 %v2653, %v2657
  %v2660 = vshll.u32 %v1445, 16
  %v2662 = vrot.slane %v2660, 1
  %v2663 = vsel %vm1475, %v2658, %v2662
  %v2665 = vshrl.u32 %v1062, 16
  %v2667 = vshll.u32 %v1062, 16
  %v2669 = vrot.slane %v2667, 1
  %v2670 = vor.u32 %v2665, %v2669
  %v2672 = vshll.u32 %v1446, 16
  %v2674 = vrot.slane %v2672, 1
  %v2675 = vsel %vm1475, %v2670, %v2674
  %v2677 = vshrl.u32 %v1063, 16
  %v2679 = vshll.u32 %v1063, 16
  %v2681 = vrot.slane %v2679, 1
  %v2682 = vor.u32 %v2677, %v2681
  %v2684 = vshll.u32 %v1447, 16
  %v2686 = vrot.slane %v2684, 1
  %v2687 = vsel %vm1475, %v2682, %v2686
  %v2689 = vshrl.u32 %v1064, 16
  %v2691 = vshll.u32 %v1064, 16
  %v2693 = vrot.slane %v2691, 1
  %v2694 = vor.u32 %v2689, %v2693
  %v2696 = vshll.u32 %v1448, 16
  %v2698 = vrot.slane %v2696, 1
  %v2699 = vsel %vm1475, %v2694, %v2698
  %v2701 = vshrl.u32 %v1065, 16
  %v2703 = vshll.u32 %v1065, 16
  %v2705 = vrot.slane %v2703, 1
  %v2706 = vor.u32 %v2701, %v2705
  %v2708 = vshll.u32 %v1449, 16
  %v2710 = vrot.slane %v2708, 1
  %v2711 = vsel %vm1475, %v2706, %v2710
  %v2713 = vshrl.u32 %v1066, 16
  %v2715 = vshll.u32 %v1066, 16
  %v2717 = vrot.slane %v2715, 1
  %v2718 = vor.u32 %v2713, %v2717
  %v2720 = vshll.u32 %v1450, 16
  %v2722 = vrot.slane %v2720, 1
  %v2723 = vsel %vm1475, %v2718, %v2722
  %v2725 = vshrl.u32 %v1067, 16
  %v2727 = vshll.u32 %v1067, 16
  %v2729 = vrot.slane %v2727, 1
  %v2730 = vor.u32 %v2725, %v2729
  %v2732 = vshll.u32 %v1451, 16
  %v2734 = vrot.slane %v2732, 1
  %v2735 = vsel %vm1475, %v2730, %v2734
  %v2737 = vshrl.u32 %v1068, 16
  %v2739 = vshll.u32 %v1068, 16
  %v2741 = vrot.slane %v2739, 1
  %v2742 = vor.u32 %v2737, %v2741
  %v2744 = vshll.u32 %v1452, 16
  %v2746 = vrot.slane %v2744, 1
  %v2747 = vsel %vm1475, %v2742, %v2746
  %v2749 = vshrl.u32 %v1069, 16
  %v2751 = vshll.u32 %v1069, 16
  %v2753 = vrot.slane %v2751, 1
  %v2754 = vor.u32 %v2749, %v2753
  %v2756 = vshll.u32 %v1453, 16
  %v2758 = vrot.slane %v2756, 1
  %v2759 = vsel %vm1475, %v2754, %v2758
  %v2761 = vshrl.u32 %v1070, 16
  %v2763 = vshll.u32 %v1070, 16
  %v2765 = vrot.slane %v2763, 1
  %v2766 = vor.u32 %v2761, %v2765
  %v2768 = vshll.u32 %v1454, 16
  %v2770 = vrot.slane %v2768, 1
  %v2771 = vsel %vm1475, %v2766, %v2770
  %v2773 = vshrl.u32 %v1071, 16
  %v2775 = vshll.u32 %v1071, 16
  %v2777 = vrot.slane %v2775, 1
  %v2778 = vor.u32 %v2773, %v2777
  %v2780 = vshll.u32 %v1455, 16
  %v2782 = vrot.slane %v2780, 1
  %v2783 = vsel %vm1475, %v2778, %v2782
  %v2785 = vshrl.u32 %v1072, 16
  %v2787 = vshll.u32 %v1072, 16
  %v2789 = vrot.slane %v2787, 1
  %v2790 = vor.u32 %v2785, %v2789
  %v2792 = vshll.u32 %v1456, 16
  %v2794 = vrot.slane %v2792, 1
  %v2795 = vsel %vm1475, %v2790, %v2794
  %v2797 = vshrl.u32 %v1073, 16
  %v2799 = vshll.u32 %v1073, 16
  %v2801 = vrot.slane %v2799, 1
  %v2802 = vor.u32 %v2797, %v2801
  %v2804 = vshll.u32 %v1457, 16
  %v2806 = vrot.slane %v2804, 1
  %v2807 = vsel %vm1475, %v2802, %v2806
  %v2809 = vshrl.u32 %v1074, 16
  %v2811 = vshll.u32 %v1074, 16
  %v2813 = vrot.slane %v2811, 1
  %v2814 = vor.u32 %v2809, %v2813
  %v2816 = vshll.u32 %v1458, 16
  %v2818 = vrot.slane %v2816, 1
  %v2819 = vsel %vm1475, %v2814, %v2818
  %v2821 = vshrl.u32 %v1075, 16
  %v2823 = vshll.u32 %v1075, 16
  %v2825 = vrot.slane %v2823, 1
  %v2826 = vor.u32 %v2821, %v2825
  %v2828 = vshll.u32 %v1459, 16
  %v2830 = vrot.slane %v2828, 1
  %v2831 = vsel %vm1475, %v2826, %v2830
  %v2833 = vshrl.u32 %v1076, 16
  %v2835 = vshll.u32 %v1076, 16
  %v2837 = vrot.slane %v2835, 1
  %v2838 = vor.u32 %v2833, %v2837
  %v2840 = vshll.u32 %v1460, 16
  %v2842 = vrot.slane %v2840, 1
  %v2843 = vsel %vm1475, %v2838, %v2842
  %v2845 = vshrl.u32 %v1077, 16
  %v2847 = vshll.u32 %v1077, 16
  %v2849 = vrot.slane %v2847, 1
  %v2850 = vor.u32 %v2845, %v2849
  %v2852 = vshll.u32 %v1461, 16
  %v2854 = vrot.slane %v2852, 1
  %v2855 = vsel %vm1475, %v2850, %v2854
  %v2857 = vshrl.u32 %v1078, 16
  %v2859 = vshll.u32 %v1078, 16
  %v2861 = vrot.slane %v2859, 1
  %v2862 = vor.u32 %v2857, %v2861
  %v2864 = vshll.u32 %v1462, 16
  %v2866 = vrot.slane %v2864, 1
  %v2867 = vsel %vm1475, %v2862, %v2866
  %v2869 = vshrl.u32 %v1079, 16
  %v2871 = vshll.u32 %v1079, 16
  %v2873 = vrot.slane %v2871, 1
  %v2874 = vor.u32 %v2869, %v2873
  %v2876 = vshll.u32 %v1463, 16
  %v2878 = vrot.slane %v2876, 1
  %v2879 = vsel %vm1475, %v2874, %v2878
  %v2881 = vshrl.u32 %v1080, 16
  %v2883 = vshll.u32 %v1080, 16
  %v2885 = vrot.slane %v2883, 1
  %v2886 = vor.u32 %v2881, %v2885
  %v2888 = vshll.u32 %v1464, 16
  %v2890 = vrot.slane %v2888, 1
  %v2891 = vsel %vm1475, %v2886, %v2890
  %v2893 = vshrl.u32 %v1081, 16
  %v2895 = vshll.u32 %v1081, 16
  %v2897 = vrot.slane %v2895, 1
  %v2898 = vor.u32 %v2893, %v2897
  %v2900 = vshll.u32 %v1465, 16
  %v2902 = vrot.slane %v2900, 1
  %v2903 = vsel %vm1475, %v2898, %v2902
  %v2905 = vshrl.u32 %v1082, 16
  %v2907 = vshll.u32 %v1082, 16
  %v2909 = vrot.slane %v2907, 1
  %v2910 = vor.u32 %v2905, %v2909
  %v2912 = vshll.u32 %v1466, 16
  %v2914 = vrot.slane %v2912, 1
  %v2915 = vsel %vm1475, %v2910, %v2914
  %v2917 = vshrl.u32 %v1083, 16
  %v2919 = vshll.u32 %v1083, 16
  %v2921 = vrot.slane %v2919, 1
  %v2922 = vor.u32 %v2917, %v2921
  %v2924 = vshll.u32 %v1467, 16
  %v2926 = vrot.slane %v2924, 1
  %v2927 = vsel %vm1475, %v2922, %v2926
  %v2929 = vshrl.u32 %v1084, 16
  %v2931 = vshll.u32 %v1084, 16
  %v2933 = vrot.slane %v2931, 1
  %v2934 = vor.u32 %v2929, %v2933
  %v2936 = vshll.u32 %v1468, 16
  %v2938 = vrot.slane %v2936, 1
  %v2939 = vsel %vm1475, %v2934, %v2938
  %v2941 = vshrl.u32 %v1085, 16
  %v2943 = vshll.u32 %v1085, 16
  %v2945 = vrot.slane %v2943, 1
  %v2946 = vor.u32 %v2941, %v2945
  %v2948 = vshll.u32 %v1469, 16
  %v2950 = vrot.slane %v2948, 1
  %v2951 = vsel %vm1475, %v2946, %v2950
  %v2953 = vshrl.u32 %v1086, 16
  %v2955 = vshll.u32 %v1086, 16
  %v2957 = vrot.slane %v2955, 1
  %v2958 = vor.u32 %v2953, %v2957
  %v2960 = vshll.u32 %v1470, 16
  %v2962 = vrot.slane %v2960, 1
  %v2963 = vsel %vm1475, %v2958, %v2962
  %v2965 = vshrl.u32 %v1087, 16
  %v2967 = vshll.u32 %v1087, 16
  %v2969 = vrot.slane %v2967, 1
  %v2970 = vor.u32 %v2965, %v2969
  %v2972 = vshll.u32 %v1471, 16
  %v2974 = vrot.slane %v2972, 1
  %v2975 = vsel %vm1475, %v2970, %v2974
  %v2977 = vshrl.u32 %v1088, 16
  %v2979 = vshll.u32 %v1088, 16
  %v2981 = vrot.slane %v2979, 1
  %v2982 = vor.u32 %v2977, %v2981
  %v2984 = vshll.u32 %v1472, 16
  %v2986 = vrot.slane %v2984, 1
  %v2987 = vsel %vm1475, %v2982, %v2986
  %v2989 = vshrl.u32 %v1089, 16
  %v2991 = vshll.u32 %v1089, 16
  %v2993 = vrot.slane %v2991, 1
  %v2994 = vor.u32 %v2989, %v2993
  %v2996 = vshll.u32 %v1473, 16
  %v2998 = vrot.slane %v2996, 1
  %v2999 = vsel %vm1475, %v2994, %v2998
  %v3001 = vshrl.u32 %v1090, 16
  %v3003 = vshll.u32 %v1090, 16
  %v3005 = vrot.slane %v3003, 1
  %v3006 = vor.u32 %v3001, %v3005
  %v3008 = vshll.u32 %v1474, 16
  %v3010 = vrot.slane %v3008, 1
  %v3011 = vsel %vm1475, %v3006, %v3010
  %3012 = vrot.lane.b32.xlu0 %v1487, 4
  %v3013 = vpop.permute.xlu0 %3012
  %3014 = vrot.lane.b32.xlu0 %v1499, 4
  %v3015 = vpop.permute.xlu0 %3014
  %3016 = vrot.lane.b32.xlu0 %v1511, 4
  %v3017 = vpop.permute.xlu0 %3016
  %3018 = vrot.lane.b32.xlu0 %v1523, 4
  %v3019 = vpop.permute.xlu0 %3018
  %3020 = vrot.lane.b32.xlu0 %v1535, 4
  %v3021 = vpop.permute.xlu0 %3020
  %3022 = vrot.lane.b32.xlu0 %v1547, 4
  %v3023 = vpop.permute.xlu0 %3022
  %3024 = vrot.lane.b32.xlu0 %v1559, 4
  %v3025 = vpop.permute.xlu0 %3024
  %3026 = vrot.lane.b32.xlu0 %v1571, 4
  %v3027 = vpop.permute.xlu0 %3026
  %3028 = vrot.lane.b32.xlu0 %v1583, 4
  %v3029 = vpop.permute.xlu0 %3028
  %3030 = vrot.lane.b32.xlu0 %v1595, 4
  %v3031 = vpop.permute.xlu0 %3030
  %3032 = vrot.lane.b32.xlu0 %v1607, 4
  %v3033 = vpop.permute.xlu0 %3032
  %3034 = vrot.lane.b32.xlu0 %v1619, 4
  %v3035 = vpop.permute.xlu0 %3034
  %3036 = vrot.lane.b32.xlu0 %v1631, 4
  %v3037 = vpop.permute.xlu0 %3036
  %3038 = vrot.lane.b32.xlu0 %v1643, 4
  %v3039 = vpop.permute.xlu0 %3038
  %3040 = vrot.lane.b32.xlu0 %v1655, 4
  %v3041 = vpop.permute.xlu0 %3040
  %3042 = vrot.lane.b32.xlu0 %v1667, 4
  %v3043 = vpop.permute.xlu0 %3042
  %3044 = vrot.lane.b32.xlu0 %v1679, 4
  %v3045 = vpop.permute.xlu0 %3044
  %3046 = vrot.lane.b32.xlu0 %v1691, 4
  %v3047 = vpop.permute.xlu0 %3046
  %3048 = vrot.lane.b32.xlu0 %v1703, 4
  %v3049 = vpop.permute.xlu0 %3048
  %3050 = vrot.lane.b32.xlu0 %v1715, 4
  %v3051 = vpop.permute.xlu0 %3050
  %3052 = vrot.lane.b32.xlu0 %v1727, 4
  %v3053 = vpop.permute.xlu0 %3052
  %3054 = vrot.lane.b32.xlu0 %v1739, 4
  %v3055 = vpop.permute.xlu0 %3054
  %3056 = vrot.lane.b32.xlu0 %v1751, 4
  %v3057 = vpop.permute.xlu0 %3056
  %3058 = vrot.lane.b32.xlu0 %v1763, 4
  %v3059 = vpop.permute.xlu0 %3058
  %3060 = vrot.lane.b32.xlu0 %v1775, 4
  %v3061 = vpop.permute.xlu0 %3060
  %3062 = vrot.lane.b32.xlu0 %v1787, 4
  %v3063 = vpop.permute.xlu0 %3062
  %3064 = vrot.lane.b32.xlu0 %v1799, 4
  %v3065 = vpop.permute.xlu0 %3064
  %3066 = vrot.lane.b32.xlu0 %v1811, 4
  %v3067 = vpop.permute.xlu0 %3066
  %3068 = vrot.lane.b32.xlu0 %v1823, 4
  %v3069 = vpop.permute.xlu0 %3068
  %3070 = vrot.lane.b32.xlu0 %v1835, 4
  %v3071 = vpop.permute.xlu0 %3070
  %3072 = vrot.lane.b32.xlu0 %v1847, 4
  %v3073 = vpop.permute.xlu0 %3072
  %3074 = vrot.lane.b32.xlu0 %v1859, 4
  %v3075 = vpop.permute.xlu0 %3074
  %3076 = vrot.lane.b32.xlu0 %v1871, 4
  %v3077 = vpop.permute.xlu0 %3076
  %3078 = vrot.lane.b32.xlu0 %v1883, 4
  %v3079 = vpop.permute.xlu0 %3078
  %3080 = vrot.lane.b32.xlu0 %v1895, 4
  %v3081 = vpop.permute.xlu0 %3080
  %3082 = vrot.lane.b32.xlu0 %v1907, 4
  %v3083 = vpop.permute.xlu0 %3082
  %3084 = vrot.lane.b32.xlu0 %v1919, 4
  %v3085 = vpop.permute.xlu0 %3084
  %3086 = vrot.lane.b32.xlu0 %v1931, 4
  %v3087 = vpop.permute.xlu0 %3086
  %3088 = vrot.lane.b32.xlu0 %v1943, 4
  %v3089 = vpop.permute.xlu0 %3088
  %3090 = vrot.lane.b32.xlu0 %v1955, 4
  %v3091 = vpop.permute.xlu0 %3090
  %3092 = vrot.lane.b32.xlu0 %v1967, 4
  %v3093 = vpop.permute.xlu0 %3092
  %3094 = vrot.lane.b32.xlu0 %v1979, 4
  %v3095 = vpop.permute.xlu0 %3094
  %3096 = vrot.lane.b32.xlu0 %v1991, 4
  %v3097 = vpop.permute.xlu0 %3096
  %3098 = vrot.lane.b32.xlu0 %v2003, 4
  %v3099 = vpop.permute.xlu0 %3098
  %3100 = vrot.lane.b32.xlu0 %v2015, 4
  %v3101 = vpop.permute.xlu0 %3100
  %3102 = vrot.lane.b32.xlu0 %v2027, 4
  %v3103 = vpop.permute.xlu0 %3102
  %3104 = vrot.lane.b32.xlu0 %v2039, 4
  %v3105 = vpop.permute.xlu0 %3104
  %3106 = vrot.lane.b32.xlu0 %v2051, 4
  %v3107 = vpop.permute.xlu0 %3106
  %3108 = vrot.lane.b32.xlu0 %v2063, 4
  %v3109 = vpop.permute.xlu0 %3108
  %3110 = vrot.lane.b32.xlu0 %v2075, 4
  %v3111 = vpop.permute.xlu0 %3110
  %3112 = vrot.lane.b32.xlu0 %v2087, 4
  %v3113 = vpop.permute.xlu0 %3112
  %3114 = vrot.lane.b32.xlu0 %v2099, 4
  %v3115 = vpop.permute.xlu0 %3114
  %3116 = vrot.lane.b32.xlu0 %v2111, 4
  %v3117 = vpop.permute.xlu0 %3116
  %3118 = vrot.lane.b32.xlu0 %v2123, 4
  %v3119 = vpop.permute.xlu0 %3118
  %3120 = vrot.lane.b32.xlu0 %v2135, 4
  %v3121 = vpop.permute.xlu0 %3120
  %3122 = vrot.lane.b32.xlu0 %v2147, 4
  %v3123 = vpop.permute.xlu0 %3122
  %3124 = vrot.lane.b32.xlu0 %v2159, 4
  %v3125 = vpop.permute.xlu0 %3124
  %3126 = vrot.lane.b32.xlu0 %v2171, 4
  %v3127 = vpop.permute.xlu0 %3126
  %3128 = vrot.lane.b32.xlu0 %v2183, 4
  %v3129 = vpop.permute.xlu0 %3128
  %3130 = vrot.lane.b32.xlu0 %v2195, 4
  %v3131 = vpop.permute.xlu0 %3130
  %3132 = vrot.lane.b32.xlu0 %v2207, 4
  %v3133 = vpop.permute.xlu0 %3132
  %3134 = vrot.lane.b32.xlu0 %v2219, 4
  %v3135 = vpop.permute.xlu0 %3134
  %3136 = vrot.lane.b32.xlu0 %v2231, 4
  %v3137 = vpop.permute.xlu0 %3136
  %3138 = vrot.lane.b32.xlu0 %v2243, 4
  %v3139 = vpop.permute.xlu0 %3138
  %3140 = vrot.lane.b32.xlu0 %v2255, 4
  %v3141 = vpop.permute.xlu0 %3140
  %3142 = vrot.lane.b32.xlu0 %v2267, 4
  %v3143 = vpop.permute.xlu0 %3142
  %3144 = vrot.lane.b32.xlu0 %v2279, 4
  %v3145 = vpop.permute.xlu0 %3144
  %3146 = vrot.lane.b32.xlu0 %v2291, 4
  %v3147 = vpop.permute.xlu0 %3146
  %3148 = vrot.lane.b32.xlu0 %v2303, 4
  %v3149 = vpop.permute.xlu0 %3148
  %3150 = vrot.lane.b32.xlu0 %v2315, 4
  %v3151 = vpop.permute.xlu0 %3150
  %3152 = vrot.lane.b32.xlu0 %v2327, 4
  %v3153 = vpop.permute.xlu0 %3152
  %3154 = vrot.lane.b32.xlu0 %v2339, 4
  %v3155 = vpop.permute.xlu0 %3154
  %3156 = vrot.lane.b32.xlu0 %v2351, 4
  %v3157 = vpop.permute.xlu0 %3156
  %3158 = vrot.lane.b32.xlu0 %v2363, 4
  %v3159 = vpop.permute.xlu0 %3158
  %3160 = vrot.lane.b32.xlu0 %v2375, 4
  %v3161 = vpop.permute.xlu0 %3160
  %3162 = vrot.lane.b32.xlu0 %v2387, 4
  %v3163 = vpop.permute.xlu0 %3162
  %3164 = vrot.lane.b32.xlu0 %v2399, 4
  %v3165 = vpop.permute.xlu0 %3164
  %3166 = vrot.lane.b32.xlu0 %v2411, 4
  %v3167 = vpop.permute.xlu0 %3166
  %3168 = vrot.lane.b32.xlu0 %v2423, 4
  %v3169 = vpop.permute.xlu0 %3168
  %3170 = vrot.lane.b32.xlu0 %v2435, 4
  %v3171 = vpop.permute.xlu0 %3170
  %3172 = vrot.lane.b32.xlu0 %v2447, 4
  %v3173 = vpop.permute.xlu0 %3172
  %3174 = vrot.lane.b32.xlu0 %v2459, 4
  %v3175 = vpop.permute.xlu0 %3174
  %3176 = vrot.lane.b32.xlu0 %v2471, 4
  %v3177 = vpop.permute.xlu0 %3176
  %3178 = vrot.lane.b32.xlu0 %v2483, 4
  %v3179 = vpop.permute.xlu0 %3178
  %3180 = vrot.lane.b32.xlu0 %v2495, 4
  %v3181 = vpop.permute.xlu0 %3180
  %3182 = vrot.lane.b32.xlu0 %v2507, 4
  %v3183 = vpop.permute.xlu0 %3182
  %3184 = vrot.lane.b32.xlu0 %v2519, 4
  %v3185 = vpop.permute.xlu0 %3184
  %3186 = vrot.lane.b32.xlu0 %v2531, 4
  %v3187 = vpop.permute.xlu0 %3186
  %3188 = vrot.lane.b32.xlu0 %v2543, 4
  %v3189 = vpop.permute.xlu0 %3188
  %3190 = vrot.lane.b32.xlu0 %v2555, 4
  %v3191 = vpop.permute.xlu0 %3190
  %3192 = vrot.lane.b32.xlu0 %v2567, 4
  %v3193 = vpop.permute.xlu0 %3192
  %3194 = vrot.lane.b32.xlu0 %v2579, 4
  %v3195 = vpop.permute.xlu0 %3194
  %3196 = vrot.lane.b32.xlu0 %v2591, 4
  %v3197 = vpop.permute.xlu0 %3196
  %3198 = vrot.lane.b32.xlu0 %v2603, 4
  %v3199 = vpop.permute.xlu0 %3198
  %3200 = vrot.lane.b32.xlu0 %v2615, 4
  %v3201 = vpop.permute.xlu0 %3200
  %3202 = vrot.lane.b32.xlu0 %v2627, 4
  %v3203 = vpop.permute.xlu0 %3202
  %3204 = vrot.lane.b32.xlu0 %v2639, 4
  %v3205 = vpop.permute.xlu0 %3204
  %3206 = vrot.lane.b32.xlu0 %v2651, 4
  %v3207 = vpop.permute.xlu0 %3206
  %3208 = vrot.lane.b32.xlu0 %v2663, 4
  %v3209 = vpop.permute.xlu0 %3208
  %3210 = vrot.lane.b32.xlu0 %v2675, 4
  %v3211 = vpop.permute.xlu0 %3210
  %3212 = vrot.lane.b32.xlu0 %v2687, 4
  %v3213 = vpop.permute.xlu0 %3212
  %3214 = vrot.lane.b32.xlu0 %v2699, 4
  %v3215 = vpop.permute.xlu0 %3214
  %3216 = vrot.lane.b32.xlu0 %v2711, 4
  %v3217 = vpop.permute.xlu0 %3216
  %3218 = vrot.lane.b32.xlu0 %v2723, 4
  %v3219 = vpop.permute.xlu0 %3218
  %3220 = vrot.lane.b32.xlu0 %v2735, 4
  %v3221 = vpop.permute.xlu0 %3220
  %3222 = vrot.lane.b32.xlu0 %v2747, 4
  %v3223 = vpop.permute.xlu0 %3222
  %3224 = vrot.lane.b32.xlu0 %v2759, 4
  %v3225 = vpop.permute.xlu0 %3224
  %3226 = vrot.lane.b32.xlu0 %v2771, 4
  %v3227 = vpop.permute.xlu0 %3226
  %3228 = vrot.lane.b32.xlu0 %v2783, 4
  %v3229 = vpop.permute.xlu0 %3228
  %3230 = vrot.lane.b32.xlu0 %v2795, 4
  %v3231 = vpop.permute.xlu0 %3230
  %3232 = vrot.lane.b32.xlu0 %v2807, 4
  %v3233 = vpop.permute.xlu0 %3232
  %3234 = vrot.lane.b32.xlu0 %v2819, 4
  %v3235 = vpop.permute.xlu0 %3234
  %3236 = vrot.lane.b32.xlu0 %v2831, 4
  %v3237 = vpop.permute.xlu0 %3236
  %3238 = vrot.lane.b32.xlu0 %v2843, 4
  %v3239 = vpop.permute.xlu0 %3238
  %3240 = vrot.lane.b32.xlu0 %v2855, 4
  %v3241 = vpop.permute.xlu0 %3240
  %3242 = vrot.lane.b32.xlu0 %v2867, 4
  %v3243 = vpop.permute.xlu0 %3242
  %3244 = vrot.lane.b32.xlu0 %v2879, 4
  %v3245 = vpop.permute.xlu0 %3244
  %3246 = vrot.lane.b32.xlu0 %v2891, 4
  %v3247 = vpop.permute.xlu0 %3246
  %3248 = vrot.lane.b32.xlu0 %v2903, 4
  %v3249 = vpop.permute.xlu0 %3248
  %3250 = vrot.lane.b32.xlu0 %v2915, 4
  %v3251 = vpop.permute.xlu0 %3250
  %3252 = vrot.lane.b32.xlu0 %v2927, 4
  %v3253 = vpop.permute.xlu0 %3252
  %3254 = vrot.lane.b32.xlu0 %v2939, 4
  %v3255 = vpop.permute.xlu0 %3254
  %3256 = vrot.lane.b32.xlu0 %v2951, 4
  %v3257 = vpop.permute.xlu0 %3256
  %3258 = vrot.lane.b32.xlu0 %v2963, 4
  %v3259 = vpop.permute.xlu0 %3258
  %3260 = vrot.lane.b32.xlu0 %v2975, 4
  %v3261 = vpop.permute.xlu0 %3260
  %3262 = vrot.lane.b32.xlu0 %v2987, 4
  %v3263 = vpop.permute.xlu0 %3262
  %3264 = vrot.lane.b32.xlu0 %v2999, 4
  %v3265 = vpop.permute.xlu0 %3264
  %3266 = vrot.lane.b32.xlu0 %v3011, 4
  %v3267 = vpop.permute.xlu0 %3266
  %vm3268 = vcmask 1046528
  %v3269 = vrot.slane %v963, 1
  %v3270 = vrot.slane %v1347, 1
  %v3271 = vsel %vm3268, %v3269, %v3270
  %v3272 = vrot.slane %v964, 1
  %v3273 = vrot.slane %v1348, 1
  %v3274 = vsel %vm3268, %v3272, %v3273
  %v3275 = vrot.slane %v965, 1
  %v3276 = vrot.slane %v1349, 1
  %v3277 = vsel %vm3268, %v3275, %v3276
  %v3278 = vrot.slane %v966, 1
  %v3279 = vrot.slane %v1350, 1
  %v3280 = vsel %vm3268, %v3278, %v3279
  %v3281 = vrot.slane %v967, 1
  %v3282 = vrot.slane %v1351, 1
  %v3283 = vsel %vm3268, %v3281, %v3282
  %v3284 = vrot.slane %v968, 1
  %v3285 = vrot.slane %v1352, 1
  %v3286 = vsel %vm3268, %v3284, %v3285
  %v3287 = vrot.slane %v969, 1
  %v3288 = vrot.slane %v1353, 1
  %v3289 = vsel %vm3268, %v3287, %v3288
  %v3290 = vrot.slane %v970, 1
  %v3291 = vrot.slane %v1354, 1
  %v3292 = vsel %vm3268, %v3290, %v3291
  %v3293 = vrot.slane %v971, 1
  %v3294 = vrot.slane %v1355, 1
  %v3295 = vsel %vm3268, %v3293, %v3294
  %v3296 = vrot.slane %v972, 1
  %v3297 = vrot.slane %v1356, 1
  %v3298 = vsel %vm3268, %v3296, %v3297
  %v3299 = vrot.slane %v973, 1
  %v3300 = vrot.slane %v1357, 1
  %v3301 = vsel %vm3268, %v3299, %v3300
  %v3302 = vrot.slane %v974, 1
  %v3303 = vrot.slane %v1358, 1
  %v3304 = vsel %vm3268, %v3302, %v3303
  %v3305 = vrot.slane %v975, 1
  %v3306 = vrot.slane %v1359, 1
  %v3307 = vsel %vm3268, %v3305, %v3306
  %v3308 = vrot.slane %v976, 1
  %v3309 = vrot.slane %v1360, 1
  %v3310 = vsel %vm3268, %v3308, %v3309
  %v3311 = vrot.slane %v977, 1
  %v3312 = vrot.slane %v1361, 1
  %v3313 = vsel %vm3268, %v3311, %v3312
  %v3314 = vrot.slane %v978, 1
  %v3315 = vrot.slane %v1362, 1
  %v3316 = vsel %vm3268, %v3314, %v3315
  %v3317 = vrot.slane %v979, 1
  %v3318 = vrot.slane %v1363, 1
  %v3319 = vsel %vm3268, %v3317, %v3318
  %v3320 = vrot.slane %v980, 1
  %v3321 = vrot.slane %v1364, 1
  %v3322 = vsel %vm3268, %v3320, %v3321
  %v3323 = vrot.slane %v981, 1
  %v3324 = vrot.slane %v1365, 1
  %v3325 = vsel %vm3268, %v3323, %v3324
  %v3326 = vrot.slane %v982, 1
  %v3327 = vrot.slane %v1366, 1
  %v3328 = vsel %vm3268, %v3326, %v3327
  %v3329 = vrot.slane %v983, 1
  %v3330 = vrot.slane %v1367, 1
  %v3331 = vsel %vm3268, %v3329, %v3330
  %v3332 = vrot.slane %v984, 1
  %v3333 = vrot.slane %v1368, 1
  %v3334 = vsel %vm3268, %v3332, %v3333
  %v3335 = vrot.slane %v985, 1
  %v3336 = vrot.slane %v1369, 1
  %v3337 = vsel %vm3268, %v3335, %v3336
  %v3338 = vrot.slane %v986, 1
  %v3339 = vrot.slane %v1370, 1
  %v3340 = vsel %vm3268, %v3338, %v3339
  %v3341 = vrot.slane %v987, 1
  %v3342 = vrot.slane %v1371, 1
  %v3343 = vsel %vm3268, %v3341, %v3342
  %v3344 = vrot.slane %v988, 1
  %v3345 = vrot.slane %v1372, 1
  %v3346 = vsel %vm3268, %v3344, %v3345
  %v3347 = vrot.slane %v989, 1
  %v3348 = vrot.slane %v1373, 1
  %v3349 = vsel %vm3268, %v3347, %v3348
  %v3350 = vrot.slane %v990, 1
  %v3351 = vrot.slane %v1374, 1
  %v3352 = vsel %vm3268, %v3350, %v3351
  %v3353 = vrot.slane %v991, 1
  %v3354 = vrot.slane %v1375, 1
  %v3355 = vsel %vm3268, %v3353, %v3354
  %v3356 = vrot.slane %v992, 1
  %v3357 = vrot.slane %v1376, 1
  %v3358 = vsel %vm3268, %v3356, %v3357
  %v3359 = vrot.slane %v993, 1
  %v3360 = vrot.slane %v1377, 1
  %v3361 = vsel %vm3268, %v3359, %v3360
  %v3362 = vrot.slane %v994, 1
  %v3363 = vrot.slane %v1378, 1
  %v3364 = vsel %vm3268, %v3362, %v3363
  %v3365 = vrot.slane %v995, 1
  %v3366 = vrot.slane %v1379, 1
  %v3367 = vsel %vm3268, %v3365, %v3366
  %v3368 = vrot.slane %v996, 1
  %v3369 = vrot.slane %v1380, 1
  %v3370 = vsel %vm3268, %v3368, %v3369
  %v3371 = vrot.slane %v997, 1
  %v3372 = vrot.slane %v1381, 1
  %v3373 = vsel %vm3268, %v3371, %v3372
  %v3374 = vrot.slane %v998, 1
  %v3375 = vrot.slane %v1382, 1
  %v3376 = vsel %vm3268, %v3374, %v3375
  %v3377 = vrot.slane %v999, 1
  %v3378 = vrot.slane %v1383, 1
  %v3379 = vsel %vm3268, %v3377, %v3378
  %v3380 = vrot.slane %v1000, 1
  %v3381 = vrot.slane %v1384, 1
  %v3382 = vsel %vm3268, %v3380, %v3381
  %v3383 = vrot.slane %v1001, 1
  %v3384 = vrot.slane %v1385, 1
  %v3385 = vsel %vm3268, %v3383, %v3384
  %v3386 = vrot.slane %v1002, 1
  %v3387 = vrot.slane %v1386, 1
  %v3388 = vsel %vm3268, %v3386, %v3387
  %v3389 = vrot.slane %v1003, 1
  %v3390 = vrot.slane %v1387, 1
  %v3391 = vsel %vm3268, %v3389, %v3390
  %v3392 = vrot.slane %v1004, 1
  %v3393 = vrot.slane %v1388, 1
  %v3394 = vsel %vm3268, %v3392, %v3393
  %v3395 = vrot.slane %v1005, 1
  %v3396 = vrot.slane %v1389, 1
  %v3397 = vsel %vm3268, %v3395, %v3396
  %v3398 = vrot.slane %v1006, 1
  %v3399 = vrot.slane %v1390, 1
  %v3400 = vsel %vm3268, %v3398, %v3399
  %v3401 = vrot.slane %v1007, 1
  %v3402 = vrot.slane %v1391, 1
  %v3403 = vsel %vm3268, %v3401, %v3402
  %v3404 = vrot.slane %v1008, 1
  %v3405 = vrot.slane %v1392, 1
  %v3406 = vsel %vm3268, %v3404, %v3405
  %v3407 = vrot.slane %v1009, 1
  %v3408 = vrot.slane %v1393, 1
  %v3409 = vsel %vm3268, %v3407, %v3408
  %v3410 = vrot.slane %v1010, 1
  %v3411 = vrot.slane %v1394, 1
  %v3412 = vsel %vm3268, %v3410, %v3411
  %v3413 = vrot.slane %v1011, 1
  %v3414 = vrot.slane %v1395, 1
  %v3415 = vsel %vm3268, %v3413, %v3414
  %v3416 = vrot.slane %v1012, 1
  %v3417 = vrot.slane %v1396, 1
  %v3418 = vsel %vm3268, %v3416, %v3417
  %v3419 = vrot.slane %v1013, 1
  %v3420 = vrot.slane %v1397, 1
  %v3421 = vsel %vm3268, %v3419, %v3420
  %v3422 = vrot.slane %v1014, 1
  %v3423 = vrot.slane %v1398, 1
  %v3424 = vsel %vm3268, %v3422, %v3423
  %v3425 = vrot.slane %v1015, 1
  %v3426 = vrot.slane %v1399, 1
  %v3427 = vsel %vm3268, %v3425, %v3426
  %v3428 = vrot.slane %v1016, 1
  %v3429 = vrot.slane %v1400, 1
  %v3430 = vsel %vm3268, %v3428, %v3429
  %v3431 = vrot.slane %v1017, 1
  %v3432 = vrot.slane %v1401, 1
  %v3433 = vsel %vm3268, %v3431, %v3432
  %v3434 = vrot.slane %v1018, 1
  %v3435 = vrot.slane %v1402, 1
  %v3436 = vsel %vm3268, %v3434, %v3435
  %v3437 = vrot.slane %v1019, 1
  %v3438 = vrot.slane %v1403, 1
  %v3439 = vsel %vm3268, %v3437, %v3438
  %v3440 = vrot.slane %v1020, 1
  %v3441 = vrot.slane %v1404, 1
  %v3442 = vsel %vm3268, %v3440, %v3441
  %v3443 = vrot.slane %v1021, 1
  %v3444 = vrot.slane %v1405, 1
  %v3445 = vsel %vm3268, %v3443, %v3444
  %v3446 = vrot.slane %v1022, 1
  %v3447 = vrot.slane %v1406, 1
  %v3448 = vsel %vm3268, %v3446, %v3447
  %v3449 = vrot.slane %v1023, 1
  %v3450 = vrot.slane %v1407, 1
  %v3451 = vsel %vm3268, %v3449, %v3450
  %v3452 = vrot.slane %v1024, 1
  %v3453 = vrot.slane %v1408, 1
  %v3454 = vsel %vm3268, %v3452, %v3453
  %v3455 = vrot.slane %v1025, 1
  %v3456 = vrot.slane %v1409, 1
  %v3457 = vsel %vm3268, %v3455, %v3456
  %v3458 = vrot.slane %v1026, 1
  %v3459 = vrot.slane %v1410, 1
  %v3460 = vsel %vm3268, %v3458, %v3459
  %v3461 = vrot.slane %v1027, 1
  %v3462 = vrot.slane %v1411, 1
  %v3463 = vsel %vm3268, %v3461, %v3462
  %v3464 = vrot.slane %v1028, 1
  %v3465 = vrot.slane %v1412, 1
  %v3466 = vsel %vm3268, %v3464, %v3465
  %v3467 = vrot.slane %v1029, 1
  %v3468 = vrot.slane %v1413, 1
  %v3469 = vsel %vm3268, %v3467, %v3468
  %v3470 = vrot.slane %v1030, 1
  %v3471 = vrot.slane %v1414, 1
  %v3472 = vsel %vm3268, %v3470, %v3471
  %v3473 = vrot.slane %v1031, 1
  %v3474 = vrot.slane %v1415, 1
  %v3475 = vsel %vm3268, %v3473, %v3474
  %v3476 = vrot.slane %v1032, 1
  %v3477 = vrot.slane %v1416, 1
  %v3478 = vsel %vm3268, %v3476, %v3477
  %v3479 = vrot.slane %v1033, 1
  %v3480 = vrot.slane %v1417, 1
  %v3481 = vsel %vm3268, %v3479, %v3480
  %v3482 = vrot.slane %v1034, 1
  %v3483 = vrot.slane %v1418, 1
  %v3484 = vsel %vm3268, %v3482, %v3483
  %v3485 = vrot.slane %v1035, 1
  %v3486 = vrot.slane %v1419, 1
  %v3487 = vsel %vm3268, %v3485, %v3486
  %v3488 = vrot.slane %v1036, 1
  %v3489 = vrot.slane %v1420, 1
  %v3490 = vsel %vm3268, %v3488, %v3489
  %v3491 = vrot.slane %v1037, 1
  %v3492 = vrot.slane %v1421, 1
  %v3493 = vsel %vm3268, %v3491, %v3492
  %v3494 = vrot.slane %v1038, 1
  %v3495 = vrot.slane %v1422, 1
  %v3496 = vsel %vm3268, %v3494, %v3495
  %v3497 = vrot.slane %v1039, 1
  %v3498 = vrot.slane %v1423, 1
  %v3499 = vsel %vm3268, %v3497, %v3498
  %v3500 = vrot.slane %v1040, 1
  %v3501 = vrot.slane %v1424, 1
  %v3502 = vsel %vm3268, %v3500, %v3501
  %v3503 = vrot.slane %v1041, 1
  %v3504 = vrot.slane %v1425, 1
  %v3505 = vsel %vm3268, %v3503, %v3504
  %v3506 = vrot.slane %v1042, 1
  %v3507 = vrot.slane %v1426, 1
  %v3508 = vsel %vm3268, %v3506, %v3507
  %v3509 = vrot.slane %v1043, 1
  %v3510 = vrot.slane %v1427, 1
  %v3511 = vsel %vm3268, %v3509, %v3510
  %v3512 = vrot.slane %v1044, 1
  %v3513 = vrot.slane %v1428, 1
  %v3514 = vsel %vm3268, %v3512, %v3513
  %v3515 = vrot.slane %v1045, 1
  %v3516 = vrot.slane %v1429, 1
  %v3517 = vsel %vm3268, %v3515, %v3516
  %v3518 = vrot.slane %v1046, 1
  %v3519 = vrot.slane %v1430, 1
  %v3520 = vsel %vm3268, %v3518, %v3519
  %v3521 = vrot.slane %v1047, 1
  %v3522 = vrot.slane %v1431, 1
  %v3523 = vsel %vm3268, %v3521, %v3522
  %v3524 = vrot.slane %v1048, 1
  %v3525 = vrot.slane %v1432, 1
  %v3526 = vsel %vm3268, %v3524, %v3525
  %v3527 = vrot.slane %v1049, 1
  %v3528 = vrot.slane %v1433, 1
  %v3529 = vsel %vm3268, %v3527, %v3528
  %v3530 = vrot.slane %v1050, 1
  %v3531 = vrot.slane %v1434, 1
  %v3532 = vsel %vm3268, %v3530, %v3531
  %v3533 = vrot.slane %v1051, 1
  %v3534 = vrot.slane %v1435, 1
  %v3535 = vsel %vm3268, %v3533, %v3534
  %v3536 = vrot.slane %v1052, 1
  %v3537 = vrot.slane %v1436, 1
  %v3538 = vsel %vm3268, %v3536, %v3537
  %v3539 = vrot.slane %v1053, 1
  %v3540 = vrot.slane %v1437, 1
  %v3541 = vsel %vm3268, %v3539, %v3540
  %v3542 = vrot.slane %v1054, 1
  %v3543 = vrot.slane %v1438, 1
  %v3544 = vsel %vm3268, %v3542, %v3543
  %v3545 = vrot.slane %v1055, 1
  %v3546 = vrot.slane %v1439, 1
  %v3547 = vsel %vm3268, %v3545, %v3546
  %v3548 = vrot.slane %v1056, 1
  %v3549 = vrot.slane %v1440, 1
  %v3550 = vsel %vm3268, %v3548, %v3549
  %v3551 = vrot.slane %v1057, 1
  %v3552 = vrot.slane %v1441, 1
  %v3553 = vsel %vm3268, %v3551, %v3552
  %v3554 = vrot.slane %v1058, 1
  %v3555 = vrot.slane %v1442, 1
  %v3556 = vsel %vm3268, %v3554, %v3555
  %v3557 = vrot.slane %v1059, 1
  %v3558 = vrot.slane %v1443, 1
  %v3559 = vsel %vm3268, %v3557, %v3558
  %v3560 = vrot.slane %v1060, 1
  %v3561 = vrot.slane %v1444, 1
  %v3562 = vsel %vm3268, %v3560, %v3561
  %v3563 = vrot.slane %v1061, 1
  %v3564 = vrot.slane %v1445, 1
  %v3565 = vsel %vm3268, %v3563, %v3564
  %v3566 = vrot.slane %v1062, 1
  %v3567 = vrot.slane %v1446, 1
  %v3568 = vsel %vm3268, %v3566, %v3567
  %v3569 = vrot.slane %v1063, 1
  %v3570 = vrot.slane %v1447, 1
  %v3571 = vsel %vm3268, %v3569, %v3570
  %v3572 = vrot.slane %v1064, 1
  %v3573 = vrot.slane %v1448, 1
  %v3574 = vsel %vm3268, %v3572, %v3573
  %v3575 = vrot.slane %v1065, 1
  %v3576 = vrot.slane %v1449, 1
  %v3577 = vsel %vm3268, %v3575, %v3576
  %v3578 = vrot.slane %v1066, 1
  %v3579 = vrot.slane %v1450, 1
  %v3580 = vsel %vm3268, %v3578, %v3579
  %v3581 = vrot.slane %v1067, 1
  %v3582 = vrot.slane %v1451, 1
  %v3583 = vsel %vm3268, %v3581, %v3582
  %v3584 = vrot.slane %v1068, 1
  %v3585 = vrot.slane %v1452, 1
  %v3586 = vsel %vm3268, %v3584, %v3585
  %v3587 = vrot.slane %v1069, 1
  %v3588 = vrot.slane %v1453, 1
  %v3589 = vsel %vm3268, %v3587, %v3588
  %v3590 = vrot.slane %v1070, 1
  %v3591 = vrot.slane %v1454, 1
  %v3592 = vsel %vm3268, %v3590, %v3591
  %v3593 = vrot.slane %v1071, 1
  %v3594 = vrot.slane %v1455, 1
  %v3595 = vsel %vm3268, %v3593, %v3594
  %v3596 = vrot.slane %v1072, 1
  %v3597 = vrot.slane %v1456, 1
  %v3598 = vsel %vm3268, %v3596, %v3597
  %v3599 = vrot.slane %v1073, 1
  %v3600 = vrot.slane %v1457, 1
  %v3601 = vsel %vm3268, %v3599, %v3600
  %v3602 = vrot.slane %v1074, 1
  %v3603 = vrot.slane %v1458, 1
  %v3604 = vsel %vm3268, %v3602, %v3603
  %v3605 = vrot.slane %v1075, 1
  %v3606 = vrot.slane %v1459, 1
  %v3607 = vsel %vm3268, %v3605, %v3606
  %v3608 = vrot.slane %v1076, 1
  %v3609 = vrot.slane %v1460, 1
  %v3610 = vsel %vm3268, %v3608, %v3609
  %v3611 = vrot.slane %v1077, 1
  %v3612 = vrot.slane %v1461, 1
  %v3613 = vsel %vm3268, %v3611, %v3612
  %v3614 = vrot.slane %v1078, 1
  %v3615 = vrot.slane %v1462, 1
  %v3616 = vsel %vm3268, %v3614, %v3615
  %v3617 = vrot.slane %v1079, 1
  %v3618 = vrot.slane %v1463, 1
  %v3619 = vsel %vm3268, %v3617, %v3618
  %v3620 = vrot.slane %v1080, 1
  %v3621 = vrot.slane %v1464, 1
  %v3622 = vsel %vm3268, %v3620, %v3621
  %v3623 = vrot.slane %v1081, 1
  %v3624 = vrot.slane %v1465, 1
  %v3625 = vsel %vm3268, %v3623, %v3624
  %v3626 = vrot.slane %v1082, 1
  %v3627 = vrot.slane %v1466, 1
  %v3628 = vsel %vm3268, %v3626, %v3627
  %v3629 = vrot.slane %v1083, 1
  %v3630 = vrot.slane %v1467, 1
  %v3631 = vsel %vm3268, %v3629, %v3630
  %v3632 = vrot.slane %v1084, 1
  %v3633 = vrot.slane %v1468, 1
  %v3634 = vsel %vm3268, %v3632, %v3633
  %v3635 = vrot.slane %v1085, 1
  %v3636 = vrot.slane %v1469, 1
  %v3637 = vsel %vm3268, %v3635, %v3636
  %v3638 = vrot.slane %v1086, 1
  %v3639 = vrot.slane %v1470, 1
  %v3640 = vsel %vm3268, %v3638, %v3639
  %v3641 = vrot.slane %v1087, 1
  %v3642 = vrot.slane %v1471, 1
  %v3643 = vsel %vm3268, %v3641, %v3642
  %v3644 = vrot.slane %v1088, 1
  %v3645 = vrot.slane %v1472, 1
  %v3646 = vsel %vm3268, %v3644, %v3645
  %v3647 = vrot.slane %v1089, 1
  %v3648 = vrot.slane %v1473, 1
  %v3649 = vsel %vm3268, %v3647, %v3648
  %v3650 = vrot.slane %v1090, 1
  %v3651 = vrot.slane %v1474, 1
  %v3652 = vsel %vm3268, %v3650, %v3651
  %3653 = vrot.lane.b32.xlu0 %v3271, 8
  %v3654 = vpop.permute.xlu0 %3653
  %3655 = vrot.lane.b32.xlu0 %v3274, 8
  %v3656 = vpop.permute.xlu0 %3655
  %3657 = vrot.lane.b32.xlu0 %v3277, 8
  %v3658 = vpop.permute.xlu0 %3657
  %3659 = vrot.lane.b32.xlu0 %v3280, 8
  %v3660 = vpop.permute.xlu0 %3659
  %3661 = vrot.lane.b32.xlu0 %v3283, 8
  %v3662 = vpop.permute.xlu0 %3661
  %3663 = vrot.lane.b32.xlu0 %v3286, 8
  %v3664 = vpop.permute.xlu0 %3663
  %3665 = vrot.lane.b32.xlu0 %v3289, 8
  %v3666 = vpop.permute.xlu0 %3665
  %3667 = vrot.lane.b32.xlu0 %v3292, 8
  %v3668 = vpop.permute.xlu0 %3667
  %3669 = vrot.lane.b32.xlu0 %v3295, 8
  %v3670 = vpop.permute.xlu0 %3669
  %3671 = vrot.lane.b32.xlu0 %v3298, 8
  %v3672 = vpop.permute.xlu0 %3671
  %3673 = vrot.lane.b32.xlu0 %v3301, 8
  %v3674 = vpop.permute.xlu0 %3673
  %3675 = vrot.lane.b32.xlu0 %v3304, 8
  %v3676 = vpop.permute.xlu0 %3675
  %3677 = vrot.lane.b32.xlu0 %v3307, 8
  %v3678 = vpop.permute.xlu0 %3677
  %3679 = vrot.lane.b32.xlu0 %v3310, 8
  %v3680 = vpop.permute.xlu0 %3679
  %3681 = vrot.lane.b32.xlu0 %v3313, 8
  %v3682 = vpop.permute.xlu0 %3681
  %3683 = vrot.lane.b32.xlu0 %v3316, 8
  %v3684 = vpop.permute.xlu0 %3683
  %3685 = vrot.lane.b32.xlu0 %v3319, 8
  %v3686 = vpop.permute.xlu0 %3685
  %3687 = vrot.lane.b32.xlu0 %v3322, 8
  %v3688 = vpop.permute.xlu0 %3687
  %3689 = vrot.lane.b32.xlu0 %v3325, 8
  %v3690 = vpop.permute.xlu0 %3689
  %3691 = vrot.lane.b32.xlu0 %v3328, 8
  %v3692 = vpop.permute.xlu0 %3691
  %3693 = vrot.lane.b32.xlu0 %v3331, 8
  %v3694 = vpop.permute.xlu0 %3693
  %3695 = vrot.lane.b32.xlu0 %v3334, 8
  %v3696 = vpop.permute.xlu0 %3695
  %3697 = vrot.lane.b32.xlu0 %v3337, 8
  %v3698 = vpop.permute.xlu0 %3697
  %3699 = vrot.lane.b32.xlu0 %v3340, 8
  %v3700 = vpop.permute.xlu0 %3699
  %3701 = vrot.lane.b32.xlu0 %v3343, 8
  %v3702 = vpop.permute.xlu0 %3701
  %3703 = vrot.lane.b32.xlu0 %v3346, 8
  %v3704 = vpop.permute.xlu0 %3703
  %3705 = vrot.lane.b32.xlu0 %v3349, 8
  %v3706 = vpop.permute.xlu0 %3705
  %3707 = vrot.lane.b32.xlu0 %v3352, 8
  %v3708 = vpop.permute.xlu0 %3707
  %3709 = vrot.lane.b32.xlu0 %v3355, 8
  %v3710 = vpop.permute.xlu0 %3709
  %3711 = vrot.lane.b32.xlu0 %v3358, 8
  %v3712 = vpop.permute.xlu0 %3711
  %3713 = vrot.lane.b32.xlu0 %v3361, 8
  %v3714 = vpop.permute.xlu0 %3713
  %3715 = vrot.lane.b32.xlu0 %v3364, 8
  %v3716 = vpop.permute.xlu0 %3715
  %3717 = vrot.lane.b32.xlu0 %v3367, 8
  %v3718 = vpop.permute.xlu0 %3717
  %3719 = vrot.lane.b32.xlu0 %v3370, 8
  %v3720 = vpop.permute.xlu0 %3719
  %3721 = vrot.lane.b32.xlu0 %v3373, 8
  %v3722 = vpop.permute.xlu0 %3721
  %3723 = vrot.lane.b32.xlu0 %v3376, 8
  %v3724 = vpop.permute.xlu0 %3723
  %3725 = vrot.lane.b32.xlu0 %v3379, 8
  %v3726 = vpop.permute.xlu0 %3725
  %3727 = vrot.lane.b32.xlu0 %v3382, 8
  %v3728 = vpop.permute.xlu0 %3727
  %3729 = vrot.lane.b32.xlu0 %v3385, 8
  %v3730 = vpop.permute.xlu0 %3729
  %3731 = vrot.lane.b32.xlu0 %v3388, 8
  %v3732 = vpop.permute.xlu0 %3731
  %3733 = vrot.lane.b32.xlu0 %v3391, 8
  %v3734 = vpop.permute.xlu0 %3733
  %3735 = vrot.lane.b32.xlu0 %v3394, 8
  %v3736 = vpop.permute.xlu0 %3735
  %3737 = vrot.lane.b32.xlu0 %v3397, 8
  %v3738 = vpop.permute.xlu0 %3737
  %3739 = vrot.lane.b32.xlu0 %v3400, 8
  %v3740 = vpop.permute.xlu0 %3739
  %3741 = vrot.lane.b32.xlu0 %v3403, 8
  %v3742 = vpop.permute.xlu0 %3741
  %3743 = vrot.lane.b32.xlu0 %v3406, 8
  %v3744 = vpop.permute.xlu0 %3743
  %3745 = vrot.lane.b32.xlu0 %v3409, 8
  %v3746 = vpop.permute.xlu0 %3745
  %3747 = vrot.lane.b32.xlu0 %v3412, 8
  %v3748 = vpop.permute.xlu0 %3747
  %3749 = vrot.lane.b32.xlu0 %v3415, 8
  %v3750 = vpop.permute.xlu0 %3749
  %3751 = vrot.lane.b32.xlu0 %v3418, 8
  %v3752 = vpop.permute.xlu0 %3751
  %3753 = vrot.lane.b32.xlu0 %v3421, 8
  %v3754 = vpop.permute.xlu0 %3753
  %3755 = vrot.lane.b32.xlu0 %v3424, 8
  %v3756 = vpop.permute.xlu0 %3755
  %3757 = vrot.lane.b32.xlu0 %v3427, 8
  %v3758 = vpop.permute.xlu0 %3757
  %3759 = vrot.lane.b32.xlu0 %v3430, 8
  %v3760 = vpop.permute.xlu0 %3759
  %3761 = vrot.lane.b32.xlu0 %v3433, 8
  %v3762 = vpop.permute.xlu0 %3761
  %3763 = vrot.lane.b32.xlu0 %v3436, 8
  %v3764 = vpop.permute.xlu0 %3763
  %3765 = vrot.lane.b32.xlu0 %v3439, 8
  %v3766 = vpop.permute.xlu0 %3765
  %3767 = vrot.lane.b32.xlu0 %v3442, 8
  %v3768 = vpop.permute.xlu0 %3767
  %3769 = vrot.lane.b32.xlu0 %v3445, 8
  %v3770 = vpop.permute.xlu0 %3769
  %3771 = vrot.lane.b32.xlu0 %v3448, 8
  %v3772 = vpop.permute.xlu0 %3771
  %3773 = vrot.lane.b32.xlu0 %v3451, 8
  %v3774 = vpop.permute.xlu0 %3773
  %3775 = vrot.lane.b32.xlu0 %v3454, 8
  %v3776 = vpop.permute.xlu0 %3775
  %3777 = vrot.lane.b32.xlu0 %v3457, 8
  %v3778 = vpop.permute.xlu0 %3777
  %3779 = vrot.lane.b32.xlu0 %v3460, 8
  %v3780 = vpop.permute.xlu0 %3779
  %3781 = vrot.lane.b32.xlu0 %v3463, 8
  %v3782 = vpop.permute.xlu0 %3781
  %3783 = vrot.lane.b32.xlu0 %v3466, 8
  %v3784 = vpop.permute.xlu0 %3783
  %3785 = vrot.lane.b32.xlu0 %v3469, 8
  %v3786 = vpop.permute.xlu0 %3785
  %3787 = vrot.lane.b32.xlu0 %v3472, 8
  %v3788 = vpop.permute.xlu0 %3787
  %3789 = vrot.lane.b32.xlu0 %v3475, 8
  %v3790 = vpop.permute.xlu0 %3789
  %3791 = vrot.lane.b32.xlu0 %v3478, 8
  %v3792 = vpop.permute.xlu0 %3791
  %3793 = vrot.lane.b32.xlu0 %v3481, 8
  %v3794 = vpop.permute.xlu0 %3793
  %3795 = vrot.lane.b32.xlu0 %v3484, 8
  %v3796 = vpop.permute.xlu0 %3795
  %3797 = vrot.lane.b32.xlu0 %v3487, 8
  %v3798 = vpop.permute.xlu0 %3797
  %3799 = vrot.lane.b32.xlu0 %v3490, 8
  %v3800 = vpop.permute.xlu0 %3799
  %3801 = vrot.lane.b32.xlu0 %v3493, 8
  %v3802 = vpop.permute.xlu0 %3801
  %3803 = vrot.lane.b32.xlu0 %v3496, 8
  %v3804 = vpop.permute.xlu0 %3803
  %3805 = vrot.lane.b32.xlu0 %v3499, 8
  %v3806 = vpop.permute.xlu0 %3805
  %3807 = vrot.lane.b32.xlu0 %v3502, 8
  %v3808 = vpop.permute.xlu0 %3807
  %3809 = vrot.lane.b32.xlu0 %v3505, 8
  %v3810 = vpop.permute.xlu0 %3809
  %3811 = vrot.lane.b32.xlu0 %v3508, 8
  %v3812 = vpop.permute.xlu0 %3811
  %3813 = vrot.lane.b32.xlu0 %v3511, 8
  %v3814 = vpop.permute.xlu0 %3813
  %3815 = vrot.lane.b32.xlu0 %v3514, 8
  %v3816 = vpop.permute.xlu0 %3815
  %3817 = vrot.lane.b32.xlu0 %v3517, 8
  %v3818 = vpop.permute.xlu0 %3817
  %3819 = vrot.lane.b32.xlu0 %v3520, 8
  %v3820 = vpop.permute.xlu0 %3819
  %3821 = vrot.lane.b32.xlu0 %v3523, 8
  %v3822 = vpop.permute.xlu0 %3821
  %3823 = vrot.lane.b32.xlu0 %v3526, 8
  %v3824 = vpop.permute.xlu0 %3823
  %3825 = vrot.lane.b32.xlu0 %v3529, 8
  %v3826 = vpop.permute.xlu0 %3825
  %3827 = vrot.lane.b32.xlu0 %v3532, 8
  %v3828 = vpop.permute.xlu0 %3827
  %3829 = vrot.lane.b32.xlu0 %v3535, 8
  %v3830 = vpop.permute.xlu0 %3829
  %3831 = vrot.lane.b32.xlu0 %v3538, 8
  %v3832 = vpop.permute.xlu0 %3831
  %3833 = vrot.lane.b32.xlu0 %v3541, 8
  %v3834 = vpop.permute.xlu0 %3833
  %3835 = vrot.lane.b32.xlu0 %v3544, 8
  %v3836 = vpop.permute.xlu0 %3835
  %3837 = vrot.lane.b32.xlu0 %v3547, 8
  %v3838 = vpop.permute.xlu0 %3837
  %3839 = vrot.lane.b32.xlu0 %v3550, 8
  %v3840 = vpop.permute.xlu0 %3839
  %3841 = vrot.lane.b32.xlu0 %v3553, 8
  %v3842 = vpop.permute.xlu0 %3841
  %3843 = vrot.lane.b32.xlu0 %v3556, 8
  %v3844 = vpop.permute.xlu0 %3843
  %3845 = vrot.lane.b32.xlu0 %v3559, 8
  %v3846 = vpop.permute.xlu0 %3845
  %3847 = vrot.lane.b32.xlu0 %v3562, 8
  %v3848 = vpop.permute.xlu0 %3847
  %3849 = vrot.lane.b32.xlu0 %v3565, 8
  %v3850 = vpop.permute.xlu0 %3849
  %3851 = vrot.lane.b32.xlu0 %v3568, 8
  %v3852 = vpop.permute.xlu0 %3851
  %3853 = vrot.lane.b32.xlu0 %v3571, 8
  %v3854 = vpop.permute.xlu0 %3853
  %3855 = vrot.lane.b32.xlu0 %v3574, 8
  %v3856 = vpop.permute.xlu0 %3855
  %3857 = vrot.lane.b32.xlu0 %v3577, 8
  %v3858 = vpop.permute.xlu0 %3857
  %3859 = vrot.lane.b32.xlu0 %v3580, 8
  %v3860 = vpop.permute.xlu0 %3859
  %3861 = vrot.lane.b32.xlu0 %v3583, 8
  %v3862 = vpop.permute.xlu0 %3861
  %3863 = vrot.lane.b32.xlu0 %v3586, 8
  %v3864 = vpop.permute.xlu0 %3863
  %3865 = vrot.lane.b32.xlu0 %v3589, 8
  %v3866 = vpop.permute.xlu0 %3865
  %3867 = vrot.lane.b32.xlu0 %v3592, 8
  %v3868 = vpop.permute.xlu0 %3867
  %3869 = vrot.lane.b32.xlu0 %v3595, 8
  %v3870 = vpop.permute.xlu0 %3869
  %3871 = vrot.lane.b32.xlu0 %v3598, 8
  %v3872 = vpop.permute.xlu0 %3871
  %3873 = vrot.lane.b32.xlu0 %v3601, 8
  %v3874 = vpop.permute.xlu0 %3873
  %3875 = vrot.lane.b32.xlu0 %v3604, 8
  %v3876 = vpop.permute.xlu0 %3875
  %3877 = vrot.lane.b32.xlu0 %v3607, 8
  %v3878 = vpop.permute.xlu0 %3877
  %3879 = vrot.lane.b32.xlu0 %v3610, 8
  %v3880 = vpop.permute.xlu0 %3879
  %3881 = vrot.lane.b32.xlu0 %v3613, 8
  %v3882 = vpop.permute.xlu0 %3881
  %3883 = vrot.lane.b32.xlu0 %v3616, 8
  %v3884 = vpop.permute.xlu0 %3883
  %3885 = vrot.lane.b32.xlu0 %v3619, 8
  %v3886 = vpop.permute.xlu0 %3885
  %3887 = vrot.lane.b32.xlu0 %v3622, 8
  %v3888 = vpop.permute.xlu0 %3887
  %3889 = vrot.lane.b32.xlu0 %v3625, 8
  %v3890 = vpop.permute.xlu0 %3889
  %3891 = vrot.lane.b32.xlu0 %v3628, 8
  %v3892 = vpop.permute.xlu0 %3891
  %3893 = vrot.lane.b32.xlu0 %v3631, 8
  %v3894 = vpop.permute.xlu0 %3893
  %3895 = vrot.lane.b32.xlu0 %v3634, 8
  %v3896 = vpop.permute.xlu0 %3895
  %3897 = vrot.lane.b32.xlu0 %v3637, 8
  %v3898 = vpop.permute.xlu0 %3897
  %3899 = vrot.lane.b32.xlu0 %v3640, 8
  %v3900 = vpop.permute.xlu0 %3899
  %3901 = vrot.lane.b32.xlu0 %v3643, 8
  %v3902 = vpop.permute.xlu0 %3901
  %3903 = vrot.lane.b32.xlu0 %v3646, 8
  %v3904 = vpop.permute.xlu0 %3903
  %3905 = vrot.lane.b32.xlu0 %v3649, 8
  %v3906 = vpop.permute.xlu0 %3905
  %3907 = vrot.lane.b32.xlu0 %v3652, 8
  %v3908 = vpop.permute.xlu0 %3907
  %v3925 = vunpack.c.l.b16 %v67
  %v3926 = vunpack.c.l.b16 %v68
  %v3927 = vunpack.c.l.b16 %v121
  %v3928 = vunpack.c.l.b16 %v122
  %v3929 = vunpack.c.l.b16 %v175
  %v3930 = vunpack.c.l.b16 %v176
  %v3931 = vunpack.c.l.b16 %v229
  %v3932 = vunpack.c.l.b16 %v230
  %v3933 = vunpack.c.l.b16 %v283
  %v3934 = vunpack.c.l.b16 %v284
  %v3935 = vunpack.c.l.b16 %v337
  %v3936 = vunpack.c.l.b16 %v338
  %v3937 = vunpack.c.l.b16 %v391
  %v3938 = vunpack.c.l.b16 %v392
  %v3939 = vunpack.c.l.b16 %v445
  %v3940 = vunpack.c.l.b16 %v446
  %v3941 = vpack.c.b16 %v3926, %v3925
  %v3942 = vpack.c.b16 %v3928, %v3927
  %v3943 = vpack.c.b16 %v3930, %v3929
  %v3944 = vpack.c.b16 %v3932, %v3931
  %v3945 = vpack.c.b16 %v3934, %v3933
  %v3946 = vpack.c.b16 %v3936, %v3935
  %v3947 = vpack.c.b16 %v3938, %v3937
  %v3948 = vpack.c.b16 %v3940, %v3939
  %3949 = vrot.lane.b32.xlu0 %v964, 12
  %v3950 = vpop.permute.xlu0 %3949
  %3951 = vrot.lane.b32.xlu0 %v965, 12
  %v3952 = vpop.permute.xlu0 %3951
  %3953 = vrot.lane.b32.xlu0 %v966, 12
  %v3954 = vpop.permute.xlu0 %3953
  %3955 = vrot.lane.b32.xlu0 %v967, 12
  %v3956 = vpop.permute.xlu0 %3955
  %3957 = vrot.lane.b32.xlu0 %v968, 12
  %v3958 = vpop.permute.xlu0 %3957
  %3959 = vrot.lane.b32.xlu0 %v969, 12
  %v3960 = vpop.permute.xlu0 %3959
  %3961 = vrot.lane.b32.xlu0 %v970, 12
  %v3962 = vpop.permute.xlu0 %3961
  %3963 = vrot.lane.b32.xlu0 %v971, 12
  %v3964 = vpop.permute.xlu0 %3963
  %3965 = vrot.lane.b32.xlu0 %v972, 12
  %v3966 = vpop.permute.xlu0 %3965
  %3967 = vrot.lane.b32.xlu0 %v973, 12
  %v3968 = vpop.permute.xlu0 %3967
  %3969 = vrot.lane.b32.xlu0 %v974, 12
  %v3970 = vpop.permute.xlu0 %3969
  %3971 = vrot.lane.b32.xlu0 %v975, 12
  %v3972 = vpop.permute.xlu0 %3971
  %3973 = vrot.lane.b32.xlu0 %v976, 12
  %v3974 = vpop.permute.xlu0 %3973
  %3975 = vrot.lane.b32.xlu0 %v977, 12
  %v3976 = vpop.permute.xlu0 %3975
  %3977 = vrot.lane.b32.xlu0 %v978, 12
  %v3978 = vpop.permute.xlu0 %3977
  %3979 = vrot.lane.b32.xlu0 %v3941, 12
  %v3980 = vpop.permute.xlu0 %3979
  %3981 = vrot.lane.b32.xlu0 %v980, 12
  %v3982 = vpop.permute.xlu0 %3981
  %3983 = vrot.lane.b32.xlu0 %v981, 12
  %v3984 = vpop.permute.xlu0 %3983
  %3985 = vrot.lane.b32.xlu0 %v982, 12
  %v3986 = vpop.permute.xlu0 %3985
  %3987 = vrot.lane.b32.xlu0 %v983, 12
  %v3988 = vpop.permute.xlu0 %3987
  %3989 = vrot.lane.b32.xlu0 %v984, 12
  %v3990 = vpop.permute.xlu0 %3989
  %3991 = vrot.lane.b32.xlu0 %v985, 12
  %v3992 = vpop.permute.xlu0 %3991
  %3993 = vrot.lane.b32.xlu0 %v986, 12
  %v3994 = vpop.permute.xlu0 %3993
  %3995 = vrot.lane.b32.xlu0 %v987, 12
  %v3996 = vpop.permute.xlu0 %3995
  %3997 = vrot.lane.b32.xlu0 %v988, 12
  %v3998 = vpop.permute.xlu0 %3997
  %3999 = vrot.lane.b32.xlu0 %v989, 12
  %v4000 = vpop.permute.xlu0 %3999
  %4001 = vrot.lane.b32.xlu0 %v990, 12
  %v4002 = vpop.permute.xlu0 %4001
  %4003 = vrot.lane.b32.xlu0 %v991, 12
  %v4004 = vpop.permute.xlu0 %4003
  %4005 = vrot.lane.b32.xlu0 %v992, 12
  %v4006 = vpop.permute.xlu0 %4005
  %4007 = vrot.lane.b32.xlu0 %v993, 12
  %v4008 = vpop.permute.xlu0 %4007
  %4009 = vrot.lane.b32.xlu0 %v994, 12
  %v4010 = vpop.permute.xlu0 %4009
  %4011 = vrot.lane.b32.xlu0 %v3942, 12
  %v4012 = vpop.permute.xlu0 %4011
  %4013 = vrot.lane.b32.xlu0 %v996, 12
  %v4014 = vpop.permute.xlu0 %4013
  %4015 = vrot.lane.b32.xlu0 %v997, 12
  %v4016 = vpop.permute.xlu0 %4015
  %4017 = vrot.lane.b32.xlu0 %v998, 12
  %v4018 = vpop.permute.xlu0 %4017
  %4019 = vrot.lane.b32.xlu0 %v999, 12
  %v4020 = vpop.permute.xlu0 %4019
  %4021 = vrot.lane.b32.xlu0 %v1000, 12
  %v4022 = vpop.permute.xlu0 %4021
  %4023 = vrot.lane.b32.xlu0 %v1001, 12
  %v4024 = vpop.permute.xlu0 %4023
  %4025 = vrot.lane.b32.xlu0 %v1002, 12
  %v4026 = vpop.permute.xlu0 %4025
  %4027 = vrot.lane.b32.xlu0 %v1003, 12
  %v4028 = vpop.permute.xlu0 %4027
  %4029 = vrot.lane.b32.xlu0 %v1004, 12
  %v4030 = vpop.permute.xlu0 %4029
  %4031 = vrot.lane.b32.xlu0 %v1005, 12
  %v4032 = vpop.permute.xlu0 %4031
  %4033 = vrot.lane.b32.xlu0 %v1006, 12
  %v4034 = vpop.permute.xlu0 %4033
  %4035 = vrot.lane.b32.xlu0 %v1007, 12
  %v4036 = vpop.permute.xlu0 %4035
  %4037 = vrot.lane.b32.xlu0 %v1008, 12
  %v4038 = vpop.permute.xlu0 %4037
  %4039 = vrot.lane.b32.xlu0 %v1009, 12
  %v4040 = vpop.permute.xlu0 %4039
  %4041 = vrot.lane.b32.xlu0 %v1010, 12
  %v4042 = vpop.permute.xlu0 %4041
  %4043 = vrot.lane.b32.xlu0 %v3943, 12
  %v4044 = vpop.permute.xlu0 %4043
  %4045 = vrot.lane.b32.xlu0 %v1012, 12
  %v4046 = vpop.permute.xlu0 %4045
  %4047 = vrot.lane.b32.xlu0 %v1013, 12
  %v4048 = vpop.permute.xlu0 %4047
  %4049 = vrot.lane.b32.xlu0 %v1014, 12
  %v4050 = vpop.permute.xlu0 %4049
  %4051 = vrot.lane.b32.xlu0 %v1015, 12
  %v4052 = vpop.permute.xlu0 %4051
  %4053 = vrot.lane.b32.xlu0 %v1016, 12
  %v4054 = vpop.permute.xlu0 %4053
  %4055 = vrot.lane.b32.xlu0 %v1017, 12
  %v4056 = vpop.permute.xlu0 %4055
  %4057 = vrot.lane.b32.xlu0 %v1018, 12
  %v4058 = vpop.permute.xlu0 %4057
  %4059 = vrot.lane.b32.xlu0 %v1019, 12
  %v4060 = vpop.permute.xlu0 %4059
  %4061 = vrot.lane.b32.xlu0 %v1020, 12
  %v4062 = vpop.permute.xlu0 %4061
  %4063 = vrot.lane.b32.xlu0 %v1021, 12
  %v4064 = vpop.permute.xlu0 %4063
  %4065 = vrot.lane.b32.xlu0 %v1022, 12
  %v4066 = vpop.permute.xlu0 %4065
  %4067 = vrot.lane.b32.xlu0 %v1023, 12
  %v4068 = vpop.permute.xlu0 %4067
  %4069 = vrot.lane.b32.xlu0 %v1024, 12
  %v4070 = vpop.permute.xlu0 %4069
  %4071 = vrot.lane.b32.xlu0 %v1025, 12
  %v4072 = vpop.permute.xlu0 %4071
  %4073 = vrot.lane.b32.xlu0 %v1026, 12
  %v4074 = vpop.permute.xlu0 %4073
  %4075 = vrot.lane.b32.xlu0 %v3944, 12
  %v4076 = vpop.permute.xlu0 %4075
  %4077 = vrot.lane.b32.xlu0 %v1028, 12
  %v4078 = vpop.permute.xlu0 %4077
  %4079 = vrot.lane.b32.xlu0 %v1029, 12
  %v4080 = vpop.permute.xlu0 %4079
  %4081 = vrot.lane.b32.xlu0 %v1030, 12
  %v4082 = vpop.permute.xlu0 %4081
  %4083 = vrot.lane.b32.xlu0 %v1031, 12
  %v4084 = vpop.permute.xlu0 %4083
  %4085 = vrot.lane.b32.xlu0 %v1032, 12
  %v4086 = vpop.permute.xlu0 %4085
  %4087 = vrot.lane.b32.xlu0 %v1033, 12
  %v4088 = vpop.permute.xlu0 %4087
  %4089 = vrot.lane.b32.xlu0 %v1034, 12
  %v4090 = vpop.permute.xlu0 %4089
  %4091 = vrot.lane.b32.xlu0 %v1035, 12
  %v4092 = vpop.permute.xlu0 %4091
  %4093 = vrot.lane.b32.xlu0 %v1036, 12
  %v4094 = vpop.permute.xlu0 %4093
  %4095 = vrot.lane.b32.xlu0 %v1037, 12
  %v4096 = vpop.permute.xlu0 %4095
  %4097 = vrot.lane.b32.xlu0 %v1038, 12
  %v4098 = vpop.permute.xlu0 %4097
  %4099 = vrot.lane.b32.xlu0 %v1039, 12
  %v4100 = vpop.permute.xlu0 %4099
  %4101 = vrot.lane.b32.xlu0 %v1040, 12
  %v4102 = vpop.permute.xlu0 %4101
  %4103 = vrot.lane.b32.xlu0 %v1041, 12
  %v4104 = vpop.permute.xlu0 %4103
  %4105 = vrot.lane.b32.xlu0 %v1042, 12
  %v4106 = vpop.permute.xlu0 %4105
  %4107 = vrot.lane.b32.xlu0 %v3945, 12
  %v4108 = vpop.permute.xlu0 %4107
  %4109 = vrot.lane.b32.xlu0 %v1044, 12
  %v4110 = vpop.permute.xlu0 %4109
  %4111 = vrot.lane.b32.xlu0 %v1045, 12
  %v4112 = vpop.permute.xlu0 %4111
  %4113 = vrot.lane.b32.xlu0 %v1046, 12
  %v4114 = vpop.permute.xlu0 %4113
  %4115 = vrot.lane.b32.xlu0 %v1047, 12
  %v4116 = vpop.permute.xlu0 %4115
  %4117 = vrot.lane.b32.xlu0 %v1048, 12
  %v4118 = vpop.permute.xlu0 %4117
  %4119 = vrot.lane.b32.xlu0 %v1049, 12
  %v4120 = vpop.permute.xlu0 %4119
  %4121 = vrot.lane.b32.xlu0 %v1050, 12
  %v4122 = vpop.permute.xlu0 %4121
  %4123 = vrot.lane.b32.xlu0 %v1051, 12
  %v4124 = vpop.permute.xlu0 %4123
  %4125 = vrot.lane.b32.xlu0 %v1052, 12
  %v4126 = vpop.permute.xlu0 %4125
  %4127 = vrot.lane.b32.xlu0 %v1053, 12
  %v4128 = vpop.permute.xlu0 %4127
  %4129 = vrot.lane.b32.xlu0 %v1054, 12
  %v4130 = vpop.permute.xlu0 %4129
  %4131 = vrot.lane.b32.xlu0 %v1055, 12
  %v4132 = vpop.permute.xlu0 %4131
  %4133 = vrot.lane.b32.xlu0 %v1056, 12
  %v4134 = vpop.permute.xlu0 %4133
  %4135 = vrot.lane.b32.xlu0 %v1057, 12
  %v4136 = vpop.permute.xlu0 %4135
  %4137 = vrot.lane.b32.xlu0 %v1058, 12
  %v4138 = vpop.permute.xlu0 %4137
  %4139 = vrot.lane.b32.xlu0 %v3946, 12
  %v4140 = vpop.permute.xlu0 %4139
  %4141 = vrot.lane.b32.xlu0 %v1060, 12
  %v4142 = vpop.permute.xlu0 %4141
  %4143 = vrot.lane.b32.xlu0 %v1061, 12
  %v4144 = vpop.permute.xlu0 %4143
  %4145 = vrot.lane.b32.xlu0 %v1062, 12
  %v4146 = vpop.permute.xlu0 %4145
  %4147 = vrot.lane.b32.xlu0 %v1063, 12
  %v4148 = vpop.permute.xlu0 %4147
  %4149 = vrot.lane.b32.xlu0 %v1064, 12
  %v4150 = vpop.permute.xlu0 %4149
  %4151 = vrot.lane.b32.xlu0 %v1065, 12
  %v4152 = vpop.permute.xlu0 %4151
  %4153 = vrot.lane.b32.xlu0 %v1066, 12
  %v4154 = vpop.permute.xlu0 %4153
  %4155 = vrot.lane.b32.xlu0 %v1067, 12
  %v4156 = vpop.permute.xlu0 %4155
  %4157 = vrot.lane.b32.xlu0 %v1068, 12
  %v4158 = vpop.permute.xlu0 %4157
  %4159 = vrot.lane.b32.xlu0 %v1069, 12
  %v4160 = vpop.permute.xlu0 %4159
  %4161 = vrot.lane.b32.xlu0 %v1070, 12
  %v4162 = vpop.permute.xlu0 %4161
  %4163 = vrot.lane.b32.xlu0 %v1071, 12
  %v4164 = vpop.permute.xlu0 %4163
  %4165 = vrot.lane.b32.xlu0 %v1072, 12
  %v4166 = vpop.permute.xlu0 %4165
  %4167 = vrot.lane.b32.xlu0 %v1073, 12
  %v4168 = vpop.permute.xlu0 %4167
  %4169 = vrot.lane.b32.xlu0 %v1074, 12
  %v4170 = vpop.permute.xlu0 %4169
  %4171 = vrot.lane.b32.xlu0 %v3947, 12
  %v4172 = vpop.permute.xlu0 %4171
  %4173 = vrot.lane.b32.xlu0 %v1076, 12
  %v4174 = vpop.permute.xlu0 %4173
  %4175 = vrot.lane.b32.xlu0 %v1077, 12
  %v4176 = vpop.permute.xlu0 %4175
  %4177 = vrot.lane.b32.xlu0 %v1078, 12
  %v4178 = vpop.permute.xlu0 %4177
  %4179 = vrot.lane.b32.xlu0 %v1079, 12
  %v4180 = vpop.permute.xlu0 %4179
  %4181 = vrot.lane.b32.xlu0 %v1080, 12
  %v4182 = vpop.permute.xlu0 %4181
  %4183 = vrot.lane.b32.xlu0 %v1081, 12
  %v4184 = vpop.permute.xlu0 %4183
  %4185 = vrot.lane.b32.xlu0 %v1082, 12
  %v4186 = vpop.permute.xlu0 %4185
  %4187 = vrot.lane.b32.xlu0 %v1083, 12
  %v4188 = vpop.permute.xlu0 %4187
  %4189 = vrot.lane.b32.xlu0 %v1084, 12
  %v4190 = vpop.permute.xlu0 %4189
  %4191 = vrot.lane.b32.xlu0 %v1085, 12
  %v4192 = vpop.permute.xlu0 %4191
  %4193 = vrot.lane.b32.xlu0 %v1086, 12
  %v4194 = vpop.permute.xlu0 %4193
  %4195 = vrot.lane.b32.xlu0 %v1087, 12
  %v4196 = vpop.permute.xlu0 %4195
  %4197 = vrot.lane.b32.xlu0 %v1088, 12
  %v4198 = vpop.permute.xlu0 %4197
  %4199 = vrot.lane.b32.xlu0 %v1089, 12
  %v4200 = vpop.permute.xlu0 %4199
  %4201 = vrot.lane.b32.xlu0 %v1090, 12
  %v4202 = vpop.permute.xlu0 %4201
  %4203 = vrot.lane.b32.xlu0 %v3948, 12
  %v4204 = vpop.permute.xlu0 %4203
  %v4213 = vunpack.c.l.b16 %v69
  %v4214 = vunpack.c.l.b16 %v123
  %v4215 = vunpack.c.l.b16 %v177
  %v4216 = vunpack.c.l.b16 %v231
  %v4217 = vunpack.c.l.b16 %v285
  %v4218 = vunpack.c.l.b16 %v339
  %v4219 = vunpack.c.l.b16 %v393
  %v4220 = vunpack.c.l.b16 %v447
  %v4221 = vpack.c.b16 %v4213, %v4213
  %v4222 = vpack.c.b16 %v4214, %v4214
  %v4223 = vpack.c.b16 %v4215, %v4215
  %v4224 = vpack.c.b16 %v4216, %v4216
  %v4225 = vpack.c.b16 %v4217, %v4217
  %v4226 = vpack.c.b16 %v4218, %v4218
  %v4227 = vpack.c.b16 %v4219, %v4219
  %v4228 = vpack.c.b16 %v4220, %v4220
  %v4230 = vshrl.u32 %v3941, 16
  %v4232 = vshll.u32 %v3941, 16
  %v4234 = vrot.slane %v4232, 1
  %v4235 = vor.u32 %v4230, %v4234
  %v4237 = vshll.u32 %v4221, 16
  %v4239 = vrot.slane %v4237, 1
  %v4240 = vsel %vm1475, %v4235, %v4239
  %v4242 = vshrl.u32 %v3942, 16
  %v4244 = vshll.u32 %v3942, 16
  %v4246 = vrot.slane %v4244, 1
  %v4247 = vor.u32 %v4242, %v4246
  %v4249 = vshll.u32 %v4222, 16
  %v4251 = vrot.slane %v4249, 1
  %v4252 = vsel %vm1475, %v4247, %v4251
  %v4254 = vshrl.u32 %v3943, 16
  %v4256 = vshll.u32 %v3943, 16
  %v4258 = vrot.slane %v4256, 1
  %v4259 = vor.u32 %v4254, %v4258
  %v4261 = vshll.u32 %v4223, 16
  %v4263 = vrot.slane %v4261, 1
  %v4264 = vsel %vm1475, %v4259, %v4263
  %v4266 = vshrl.u32 %v3944, 16
  %v4268 = vshll.u32 %v3944, 16
  %v4270 = vrot.slane %v4268, 1
  %v4271 = vor.u32 %v4266, %v4270
  %v4273 = vshll.u32 %v4224, 16
  %v4275 = vrot.slane %v4273, 1
  %v4276 = vsel %vm1475, %v4271, %v4275
  %v4278 = vshrl.u32 %v3945, 16
  %v4280 = vshll.u32 %v3945, 16
  %v4282 = vrot.slane %v4280, 1
  %v4283 = vor.u32 %v4278, %v4282
  %v4285 = vshll.u32 %v4225, 16
  %v4287 = vrot.slane %v4285, 1
  %v4288 = vsel %vm1475, %v4283, %v4287
  %v4290 = vshrl.u32 %v3946, 16
  %v4292 = vshll.u32 %v3946, 16
  %v4294 = vrot.slane %v4292, 1
  %v4295 = vor.u32 %v4290, %v4294
  %v4297 = vshll.u32 %v4226, 16
  %v4299 = vrot.slane %v4297, 1
  %v4300 = vsel %vm1475, %v4295, %v4299
  %v4302 = vshrl.u32 %v3947, 16
  %v4304 = vshll.u32 %v3947, 16
  %v4306 = vrot.slane %v4304, 1
  %v4307 = vor.u32 %v4302, %v4306
  %v4309 = vshll.u32 %v4227, 16
  %v4311 = vrot.slane %v4309, 1
  %v4312 = vsel %vm1475, %v4307, %v4311
  %v4314 = vshrl.u32 %v3948, 16
  %v4316 = vshll.u32 %v3948, 16
  %v4318 = vrot.slane %v4316, 1
  %v4319 = vor.u32 %v4314, %v4318
  %v4321 = vshll.u32 %v4228, 16
  %v4323 = vrot.slane %v4321, 1
  %v4324 = vsel %vm1475, %v4319, %v4323
  %4325 = vrot.lane.b32.xlu0 %v1499, 16
  %v4326 = vpop.permute.xlu0 %4325
  %4327 = vrot.lane.b32.xlu0 %v1511, 16
  %v4328 = vpop.permute.xlu0 %4327
  %4329 = vrot.lane.b32.xlu0 %v1523, 16
  %v4330 = vpop.permute.xlu0 %4329
  %4331 = vrot.lane.b32.xlu0 %v1535, 16
  %v4332 = vpop.permute.xlu0 %4331
  %4333 = vrot.lane.b32.xlu0 %v1547, 16
  %v4334 = vpop.permute.xlu0 %4333
  %4335 = vrot.lane.b32.xlu0 %v1559, 16
  %v4336 = vpop.permute.xlu0 %4335
  %4337 = vrot.lane.b32.xlu0 %v1571, 16
  %v4338 = vpop.permute.xlu0 %4337
  %4339 = vrot.lane.b32.xlu0 %v1583, 16
  %v4340 = vpop.permute.xlu0 %4339
  %4341 = vrot.lane.b32.xlu0 %v1595, 16
  %v4342 = vpop.permute.xlu0 %4341
  %4343 = vrot.lane.b32.xlu0 %v1607, 16
  %v4344 = vpop.permute.xlu0 %4343
  %4345 = vrot.lane.b32.xlu0 %v1619, 16
  %v4346 = vpop.permute.xlu0 %4345
  %4347 = vrot.lane.b32.xlu0 %v1631, 16
  %v4348 = vpop.permute.xlu0 %4347
  %4349 = vrot.lane.b32.xlu0 %v1643, 16
  %v4350 = vpop.permute.xlu0 %4349
  %4351 = vrot.lane.b32.xlu0 %v1655, 16
  %v4352 = vpop.permute.xlu0 %4351
  %4353 = vrot.lane.b32.xlu0 %v1667, 16
  %v4354 = vpop.permute.xlu0 %4353
  %4355 = vrot.lane.b32.xlu0 %v4240, 16
  %v4356 = vpop.permute.xlu0 %4355
  %4357 = vrot.lane.b32.xlu0 %v1691, 16
  %v4358 = vpop.permute.xlu0 %4357
  %4359 = vrot.lane.b32.xlu0 %v1703, 16
  %v4360 = vpop.permute.xlu0 %4359
  %4361 = vrot.lane.b32.xlu0 %v1715, 16
  %v4362 = vpop.permute.xlu0 %4361
  %4363 = vrot.lane.b32.xlu0 %v1727, 16
  %v4364 = vpop.permute.xlu0 %4363
  %4365 = vrot.lane.b32.xlu0 %v1739, 16
  %v4366 = vpop.permute.xlu0 %4365
  %4367 = vrot.lane.b32.xlu0 %v1751, 16
  %v4368 = vpop.permute.xlu0 %4367
  %4369 = vrot.lane.b32.xlu0 %v1763, 16
  %v4370 = vpop.permute.xlu0 %4369
  %4371 = vrot.lane.b32.xlu0 %v1775, 16
  %v4372 = vpop.permute.xlu0 %4371
  %4373 = vrot.lane.b32.xlu0 %v1787, 16
  %v4374 = vpop.permute.xlu0 %4373
  %4375 = vrot.lane.b32.xlu0 %v1799, 16
  %v4376 = vpop.permute.xlu0 %4375
  %4377 = vrot.lane.b32.xlu0 %v1811, 16
  %v4378 = vpop.permute.xlu0 %4377
  %4379 = vrot.lane.b32.xlu0 %v1823, 16
  %v4380 = vpop.permute.xlu0 %4379
  %4381 = vrot.lane.b32.xlu0 %v1835, 16
  %v4382 = vpop.permute.xlu0 %4381
  %4383 = vrot.lane.b32.xlu0 %v1847, 16
  %v4384 = vpop.permute.xlu0 %4383
  %4385 = vrot.lane.b32.xlu0 %v1859, 16
  %v4386 = vpop.permute.xlu0 %4385
  %4387 = vrot.lane.b32.xlu0 %v4252, 16
  %v4388 = vpop.permute.xlu0 %4387
  %4389 = vrot.lane.b32.xlu0 %v1883, 16
  %v4390 = vpop.permute.xlu0 %4389
  %4391 = vrot.lane.b32.xlu0 %v1895, 16
  %v4392 = vpop.permute.xlu0 %4391
  %4393 = vrot.lane.b32.xlu0 %v1907, 16
  %v4394 = vpop.permute.xlu0 %4393
  %4395 = vrot.lane.b32.xlu0 %v1919, 16
  %v4396 = vpop.permute.xlu0 %4395
  %4397 = vrot.lane.b32.xlu0 %v1931, 16
  %v4398 = vpop.permute.xlu0 %4397
  %4399 = vrot.lane.b32.xlu0 %v1943, 16
  %v4400 = vpop.permute.xlu0 %4399
  %4401 = vrot.lane.b32.xlu0 %v1955, 16
  %v4402 = vpop.permute.xlu0 %4401
  %4403 = vrot.lane.b32.xlu0 %v1967, 16
  %v4404 = vpop.permute.xlu0 %4403
  %4405 = vrot.lane.b32.xlu0 %v1979, 16
  %v4406 = vpop.permute.xlu0 %4405
  %4407 = vrot.lane.b32.xlu0 %v1991, 16
  %v4408 = vpop.permute.xlu0 %4407
  %4409 = vrot.lane.b32.xlu0 %v2003, 16
  %v4410 = vpop.permute.xlu0 %4409
  %4411 = vrot.lane.b32.xlu0 %v2015, 16
  %v4412 = vpop.permute.xlu0 %4411
  %4413 = vrot.lane.b32.xlu0 %v2027, 16
  %v4414 = vpop.permute.xlu0 %4413
  %4415 = vrot.lane.b32.xlu0 %v2039, 16
  %v4416 = vpop.permute.xlu0 %4415
  %4417 = vrot.lane.b32.xlu0 %v2051, 16
  %v4418 = vpop.permute.xlu0 %4417
  %4419 = vrot.lane.b32.xlu0 %v4264, 16
  %v4420 = vpop.permute.xlu0 %4419
  %4421 = vrot.lane.b32.xlu0 %v2075, 16
  %v4422 = vpop.permute.xlu0 %4421
  %4423 = vrot.lane.b32.xlu0 %v2087, 16
  %v4424 = vpop.permute.xlu0 %4423
  %4425 = vrot.lane.b32.xlu0 %v2099, 16
  %v4426 = vpop.permute.xlu0 %4425
  %4427 = vrot.lane.b32.xlu0 %v2111, 16
  %v4428 = vpop.permute.xlu0 %4427
  %4429 = vrot.lane.b32.xlu0 %v2123, 16
  %v4430 = vpop.permute.xlu0 %4429
  %4431 = vrot.lane.b32.xlu0 %v2135, 16
  %v4432 = vpop.permute.xlu0 %4431
  %4433 = vrot.lane.b32.xlu0 %v2147, 16
  %v4434 = vpop.permute.xlu0 %4433
  %4435 = vrot.lane.b32.xlu0 %v2159, 16
  %v4436 = vpop.permute.xlu0 %4435
  %4437 = vrot.lane.b32.xlu0 %v2171, 16
  %v4438 = vpop.permute.xlu0 %4437
  %4439 = vrot.lane.b32.xlu0 %v2183, 16
  %v4440 = vpop.permute.xlu0 %4439
  %4441 = vrot.lane.b32.xlu0 %v2195, 16
  %v4442 = vpop.permute.xlu0 %4441
  %4443 = vrot.lane.b32.xlu0 %v2207, 16
  %v4444 = vpop.permute.xlu0 %4443
  %4445 = vrot.lane.b32.xlu0 %v2219, 16
  %v4446 = vpop.permute.xlu0 %4445
  %4447 = vrot.lane.b32.xlu0 %v2231, 16
  %v4448 = vpop.permute.xlu0 %4447
  %4449 = vrot.lane.b32.xlu0 %v2243, 16
  %v4450 = vpop.permute.xlu0 %4449
  %4451 = vrot.lane.b32.xlu0 %v4276, 16
  %v4452 = vpop.permute.xlu0 %4451
  %4453 = vrot.lane.b32.xlu0 %v2267, 16
  %v4454 = vpop.permute.xlu0 %4453
  %4455 = vrot.lane.b32.xlu0 %v2279, 16
  %v4456 = vpop.permute.xlu0 %4455
  %4457 = vrot.lane.b32.xlu0 %v2291, 16
  %v4458 = vpop.permute.xlu0 %4457
  %4459 = vrot.lane.b32.xlu0 %v2303, 16
  %v4460 = vpop.permute.xlu0 %4459
  %4461 = vrot.lane.b32.xlu0 %v2315, 16
  %v4462 = vpop.permute.xlu0 %4461
  %4463 = vrot.lane.b32.xlu0 %v2327, 16
  %v4464 = vpop.permute.xlu0 %4463
  %4465 = vrot.lane.b32.xlu0 %v2339, 16
  %v4466 = vpop.permute.xlu0 %4465
  %4467 = vrot.lane.b32.xlu0 %v2351, 16
  %v4468 = vpop.permute.xlu0 %4467
  %4469 = vrot.lane.b32.xlu0 %v2363, 16
  %v4470 = vpop.permute.xlu0 %4469
  %4471 = vrot.lane.b32.xlu0 %v2375, 16
  %v4472 = vpop.permute.xlu0 %4471
  %4473 = vrot.lane.b32.xlu0 %v2387, 16
  %v4474 = vpop.permute.xlu0 %4473
  %4475 = vrot.lane.b32.xlu0 %v2399, 16
  %v4476 = vpop.permute.xlu0 %4475
  %4477 = vrot.lane.b32.xlu0 %v2411, 16
  %v4478 = vpop.permute.xlu0 %4477
  %4479 = vrot.lane.b32.xlu0 %v2423, 16
  %v4480 = vpop.permute.xlu0 %4479
  %4481 = vrot.lane.b32.xlu0 %v2435, 16
  %v4482 = vpop.permute.xlu0 %4481
  %4483 = vrot.lane.b32.xlu0 %v4288, 16
  %v4484 = vpop.permute.xlu0 %4483
  %4485 = vrot.lane.b32.xlu0 %v2459, 16
  %v4486 = vpop.permute.xlu0 %4485
  %4487 = vrot.lane.b32.xlu0 %v2471, 16
  %v4488 = vpop.permute.xlu0 %4487
  %4489 = vrot.lane.b32.xlu0 %v2483, 16
  %v4490 = vpop.permute.xlu0 %4489
  %4491 = vrot.lane.b32.xlu0 %v2495, 16
  %v4492 = vpop.permute.xlu0 %4491
  %4493 = vrot.lane.b32.xlu0 %v2507, 16
  %v4494 = vpop.permute.xlu0 %4493
  %4495 = vrot.lane.b32.xlu0 %v2519, 16
  %v4496 = vpop.permute.xlu0 %4495
  %4497 = vrot.lane.b32.xlu0 %v2531, 16
  %v4498 = vpop.permute.xlu0 %4497
  %4499 = vrot.lane.b32.xlu0 %v2543, 16
  %v4500 = vpop.permute.xlu0 %4499
  %4501 = vrot.lane.b32.xlu0 %v2555, 16
  %v4502 = vpop.permute.xlu0 %4501
  %4503 = vrot.lane.b32.xlu0 %v2567, 16
  %v4504 = vpop.permute.xlu0 %4503
  %4505 = vrot.lane.b32.xlu0 %v2579, 16
  %v4506 = vpop.permute.xlu0 %4505
  %4507 = vrot.lane.b32.xlu0 %v2591, 16
  %v4508 = vpop.permute.xlu0 %4507
  %4509 = vrot.lane.b32.xlu0 %v2603, 16
  %v4510 = vpop.permute.xlu0 %4509
  %4511 = vrot.lane.b32.xlu0 %v2615, 16
  %v4512 = vpop.permute.xlu0 %4511
  %4513 = vrot.lane.b32.xlu0 %v2627, 16
  %v4514 = vpop.permute.xlu0 %4513
  %4515 = vrot.lane.b32.xlu0 %v4300, 16
  %v4516 = vpop.permute.xlu0 %4515
  %4517 = vrot.lane.b32.xlu0 %v2651, 16
  %v4518 = vpop.permute.xlu0 %4517
  %4519 = vrot.lane.b32.xlu0 %v2663, 16
  %v4520 = vpop.permute.xlu0 %4519
  %4521 = vrot.lane.b32.xlu0 %v2675, 16
  %v4522 = vpop.permute.xlu0 %4521
  %4523 = vrot.lane.b32.xlu0 %v2687, 16
  %v4524 = vpop.permute.xlu0 %4523
  %4525 = vrot.lane.b32.xlu0 %v2699, 16
  %v4526 = vpop.permute.xlu0 %4525
  %4527 = vrot.lane.b32.xlu0 %v2711, 16
  %v4528 = vpop.permute.xlu0 %4527
  %4529 = vrot.lane.b32.xlu0 %v2723, 16
  %v4530 = vpop.permute.xlu0 %4529
  %4531 = vrot.lane.b32.xlu0 %v2735, 16
  %v4532 = vpop.permute.xlu0 %4531
  %4533 = vrot.lane.b32.xlu0 %v2747, 16
  %v4534 = vpop.permute.xlu0 %4533
  %4535 = vrot.lane.b32.xlu0 %v2759, 16
  %v4536 = vpop.permute.xlu0 %4535
  %4537 = vrot.lane.b32.xlu0 %v2771, 16
  %v4538 = vpop.permute.xlu0 %4537
  %4539 = vrot.lane.b32.xlu0 %v2783, 16
  %v4540 = vpop.permute.xlu0 %4539
  %4541 = vrot.lane.b32.xlu0 %v2795, 16
  %v4542 = vpop.permute.xlu0 %4541
  %4543 = vrot.lane.b32.xlu0 %v2807, 16
  %v4544 = vpop.permute.xlu0 %4543
  %4545 = vrot.lane.b32.xlu0 %v2819, 16
  %v4546 = vpop.permute.xlu0 %4545
  %4547 = vrot.lane.b32.xlu0 %v4312, 16
  %v4548 = vpop.permute.xlu0 %4547
  %4549 = vrot.lane.b32.xlu0 %v2843, 16
  %v4550 = vpop.permute.xlu0 %4549
  %4551 = vrot.lane.b32.xlu0 %v2855, 16
  %v4552 = vpop.permute.xlu0 %4551
  %4553 = vrot.lane.b32.xlu0 %v2867, 16
  %v4554 = vpop.permute.xlu0 %4553
  %4555 = vrot.lane.b32.xlu0 %v2879, 16
  %v4556 = vpop.permute.xlu0 %4555
  %4557 = vrot.lane.b32.xlu0 %v2891, 16
  %v4558 = vpop.permute.xlu0 %4557
  %4559 = vrot.lane.b32.xlu0 %v2903, 16
  %v4560 = vpop.permute.xlu0 %4559
  %4561 = vrot.lane.b32.xlu0 %v2915, 16
  %v4562 = vpop.permute.xlu0 %4561
  %4563 = vrot.lane.b32.xlu0 %v2927, 16
  %v4564 = vpop.permute.xlu0 %4563
  %4565 = vrot.lane.b32.xlu0 %v2939, 16
  %v4566 = vpop.permute.xlu0 %4565
  %4567 = vrot.lane.b32.xlu0 %v2951, 16
  %v4568 = vpop.permute.xlu0 %4567
  %4569 = vrot.lane.b32.xlu0 %v2963, 16
  %v4570 = vpop.permute.xlu0 %4569
  %4571 = vrot.lane.b32.xlu0 %v2975, 16
  %v4572 = vpop.permute.xlu0 %4571
  %4573 = vrot.lane.b32.xlu0 %v2987, 16
  %v4574 = vpop.permute.xlu0 %4573
  %4575 = vrot.lane.b32.xlu0 %v2999, 16
  %v4576 = vpop.permute.xlu0 %4575
  %4577 = vrot.lane.b32.xlu0 %v3011, 16
  %v4578 = vpop.permute.xlu0 %4577
  %4579 = vrot.lane.b32.xlu0 %v4324, 16
  %v4580 = vpop.permute.xlu0 %4579
  %v4581 = vrot.slane %v3941, 1
  %v4582 = vrot.slane %v4221, 1
  %v4583 = vsel %vm3268, %v4581, %v4582
  %v4584 = vrot.slane %v3942, 1
  %v4585 = vrot.slane %v4222, 1
  %v4586 = vsel %vm3268, %v4584, %v4585
  %v4587 = vrot.slane %v3943, 1
  %v4588 = vrot.slane %v4223, 1
  %v4589 = vsel %vm3268, %v4587, %v4588
  %v4590 = vrot.slane %v3944, 1
  %v4591 = vrot.slane %v4224, 1
  %v4592 = vsel %vm3268, %v4590, %v4591
  %v4593 = vrot.slane %v3945, 1
  %v4594 = vrot.slane %v4225, 1
  %v4595 = vsel %vm3268, %v4593, %v4594
  %v4596 = vrot.slane %v3946, 1
  %v4597 = vrot.slane %v4226, 1
  %v4598 = vsel %vm3268, %v4596, %v4597
  %v4599 = vrot.slane %v3947, 1
  %v4600 = vrot.slane %v4227, 1
  %v4601 = vsel %vm3268, %v4599, %v4600
  %v4602 = vrot.slane %v3948, 1
  %v4603 = vrot.slane %v4228, 1
  %v4604 = vsel %vm3268, %v4602, %v4603
  %4605 = vrot.lane.b32.xlu0 %v3274, 20
  %v4606 = vpop.permute.xlu0 %4605
  %4607 = vrot.lane.b32.xlu0 %v3277, 20
  %v4608 = vpop.permute.xlu0 %4607
  %4609 = vrot.lane.b32.xlu0 %v3280, 20
  %v4610 = vpop.permute.xlu0 %4609
  %4611 = vrot.lane.b32.xlu0 %v3283, 20
  %v4612 = vpop.permute.xlu0 %4611
  %4613 = vrot.lane.b32.xlu0 %v3286, 20
  %v4614 = vpop.permute.xlu0 %4613
  %4615 = vrot.lane.b32.xlu0 %v3289, 20
  %v4616 = vpop.permute.xlu0 %4615
  %4617 = vrot.lane.b32.xlu0 %v3292, 20
  %v4618 = vpop.permute.xlu0 %4617
  %4619 = vrot.lane.b32.xlu0 %v3295, 20
  %v4620 = vpop.permute.xlu0 %4619
  %4621 = vrot.lane.b32.xlu0 %v3298, 20
  %v4622 = vpop.permute.xlu0 %4621
  %4623 = vrot.lane.b32.xlu0 %v3301, 20
  %v4624 = vpop.permute.xlu0 %4623
  %4625 = vrot.lane.b32.xlu0 %v3304, 20
  %v4626 = vpop.permute.xlu0 %4625
  %4627 = vrot.lane.b32.xlu0 %v3307, 20
  %v4628 = vpop.permute.xlu0 %4627
  %4629 = vrot.lane.b32.xlu0 %v3310, 20
  %v4630 = vpop.permute.xlu0 %4629
  %4631 = vrot.lane.b32.xlu0 %v3313, 20
  %v4632 = vpop.permute.xlu0 %4631
  %4633 = vrot.lane.b32.xlu0 %v3316, 20
  %v4634 = vpop.permute.xlu0 %4633
  %4635 = vrot.lane.b32.xlu0 %v4583, 20
  %v4636 = vpop.permute.xlu0 %4635
  %4637 = vrot.lane.b32.xlu0 %v3322, 20
  %v4638 = vpop.permute.xlu0 %4637
  %4639 = vrot.lane.b32.xlu0 %v3325, 20
  %v4640 = vpop.permute.xlu0 %4639
  %4641 = vrot.lane.b32.xlu0 %v3328, 20
  %v4642 = vpop.permute.xlu0 %4641
  %4643 = vrot.lane.b32.xlu0 %v3331, 20
  %v4644 = vpop.permute.xlu0 %4643
  %4645 = vrot.lane.b32.xlu0 %v3334, 20
  %v4646 = vpop.permute.xlu0 %4645
  %4647 = vrot.lane.b32.xlu0 %v3337, 20
  %v4648 = vpop.permute.xlu0 %4647
  %4649 = vrot.lane.b32.xlu0 %v3340, 20
  %v4650 = vpop.permute.xlu0 %4649
  %4651 = vrot.lane.b32.xlu0 %v3343, 20
  %v4652 = vpop.permute.xlu0 %4651
  %4653 = vrot.lane.b32.xlu0 %v3346, 20
  %v4654 = vpop.permute.xlu0 %4653
  %4655 = vrot.lane.b32.xlu0 %v3349, 20
  %v4656 = vpop.permute.xlu0 %4655
  %4657 = vrot.lane.b32.xlu0 %v3352, 20
  %v4658 = vpop.permute.xlu0 %4657
  %4659 = vrot.lane.b32.xlu0 %v3355, 20
  %v4660 = vpop.permute.xlu0 %4659
  %4661 = vrot.lane.b32.xlu0 %v3358, 20
  %v4662 = vpop.permute.xlu0 %4661
  %4663 = vrot.lane.b32.xlu0 %v3361, 20
  %v4664 = vpop.permute.xlu0 %4663
  %4665 = vrot.lane.b32.xlu0 %v3364, 20
  %v4666 = vpop.permute.xlu0 %4665
  %4667 = vrot.lane.b32.xlu0 %v4586, 20
  %v4668 = vpop.permute.xlu0 %4667
  %4669 = vrot.lane.b32.xlu0 %v3370, 20
  %v4670 = vpop.permute.xlu0 %4669
  %4671 = vrot.lane.b32.xlu0 %v3373, 20
  %v4672 = vpop.permute.xlu0 %4671
  %4673 = vrot.lane.b32.xlu0 %v3376, 20
  %v4674 = vpop.permute.xlu0 %4673
  %4675 = vrot.lane.b32.xlu0 %v3379, 20
  %v4676 = vpop.permute.xlu0 %4675
  %4677 = vrot.lane.b32.xlu0 %v3382, 20
  %v4678 = vpop.permute.xlu0 %4677
  %4679 = vrot.lane.b32.xlu0 %v3385, 20
  %v4680 = vpop.permute.xlu0 %4679
  %4681 = vrot.lane.b32.xlu0 %v3388, 20
  %v4682 = vpop.permute.xlu0 %4681
  %4683 = vrot.lane.b32.xlu0 %v3391, 20
  %v4684 = vpop.permute.xlu0 %4683
  %4685 = vrot.lane.b32.xlu0 %v3394, 20
  %v4686 = vpop.permute.xlu0 %4685
  %4687 = vrot.lane.b32.xlu0 %v3397, 20
  %v4688 = vpop.permute.xlu0 %4687
  %4689 = vrot.lane.b32.xlu0 %v3400, 20
  %v4690 = vpop.permute.xlu0 %4689
  %4691 = vrot.lane.b32.xlu0 %v3403, 20
  %v4692 = vpop.permute.xlu0 %4691
  %4693 = vrot.lane.b32.xlu0 %v3406, 20
  %v4694 = vpop.permute.xlu0 %4693
  %4695 = vrot.lane.b32.xlu0 %v3409, 20
  %v4696 = vpop.permute.xlu0 %4695
  %4697 = vrot.lane.b32.xlu0 %v3412, 20
  %v4698 = vpop.permute.xlu0 %4697
  %4699 = vrot.lane.b32.xlu0 %v4589, 20
  %v4700 = vpop.permute.xlu0 %4699
  %4701 = vrot.lane.b32.xlu0 %v3418, 20
  %v4702 = vpop.permute.xlu0 %4701
  %4703 = vrot.lane.b32.xlu0 %v3421, 20
  %v4704 = vpop.permute.xlu0 %4703
  %4705 = vrot.lane.b32.xlu0 %v3424, 20
  %v4706 = vpop.permute.xlu0 %4705
  %4707 = vrot.lane.b32.xlu0 %v3427, 20
  %v4708 = vpop.permute.xlu0 %4707
  %4709 = vrot.lane.b32.xlu0 %v3430, 20
  %v4710 = vpop.permute.xlu0 %4709
  %4711 = vrot.lane.b32.xlu0 %v3433, 20
  %v4712 = vpop.permute.xlu0 %4711
  %4713 = vrot.lane.b32.xlu0 %v3436, 20
  %v4714 = vpop.permute.xlu0 %4713
  %4715 = vrot.lane.b32.xlu0 %v3439, 20
  %v4716 = vpop.permute.xlu0 %4715
  %4717 = vrot.lane.b32.xlu0 %v3442, 20
  %v4718 = vpop.permute.xlu0 %4717
  %4719 = vrot.lane.b32.xlu0 %v3445, 20
  %v4720 = vpop.permute.xlu0 %4719
  %4721 = vrot.lane.b32.xlu0 %v3448, 20
  %v4722 = vpop.permute.xlu0 %4721
  %4723 = vrot.lane.b32.xlu0 %v3451, 20
  %v4724 = vpop.permute.xlu0 %4723
  %4725 = vrot.lane.b32.xlu0 %v3454, 20
  %v4726 = vpop.permute.xlu0 %4725
  %4727 = vrot.lane.b32.xlu0 %v3457, 20
  %v4728 = vpop.permute.xlu0 %4727
  %4729 = vrot.lane.b32.xlu0 %v3460, 20
  %v4730 = vpop.permute.xlu0 %4729
  %4731 = vrot.lane.b32.xlu0 %v4592, 20
  %v4732 = vpop.permute.xlu0 %4731
  %4733 = vrot.lane.b32.xlu0 %v3466, 20
  %v4734 = vpop.permute.xlu0 %4733
  %4735 = vrot.lane.b32.xlu0 %v3469, 20
  %v4736 = vpop.permute.xlu0 %4735
  %4737 = vrot.lane.b32.xlu0 %v3472, 20
  %v4738 = vpop.permute.xlu0 %4737
  %4739 = vrot.lane.b32.xlu0 %v3475, 20
  %v4740 = vpop.permute.xlu0 %4739
  %4741 = vrot.lane.b32.xlu0 %v3478, 20
  %v4742 = vpop.permute.xlu0 %4741
  %4743 = vrot.lane.b32.xlu0 %v3481, 20
  %v4744 = vpop.permute.xlu0 %4743
  %4745 = vrot.lane.b32.xlu0 %v3484, 20
  %v4746 = vpop.permute.xlu0 %4745
  %4747 = vrot.lane.b32.xlu0 %v3487, 20
  %v4748 = vpop.permute.xlu0 %4747
  %4749 = vrot.lane.b32.xlu0 %v3490, 20
  %v4750 = vpop.permute.xlu0 %4749
  %4751 = vrot.lane.b32.xlu0 %v3493, 20
  %v4752 = vpop.permute.xlu0 %4751
  %4753 = vrot.lane.b32.xlu0 %v3496, 20
  %v4754 = vpop.permute.xlu0 %4753
  %4755 = vrot.lane.b32.xlu0 %v3499, 20
  %v4756 = vpop.permute.xlu0 %4755
  %4757 = vrot.lane.b32.xlu0 %v3502, 20
  %v4758 = vpop.permute.xlu0 %4757
  %4759 = vrot.lane.b32.xlu0 %v3505, 20
  %v4760 = vpop.permute.xlu0 %4759
  %4761 = vrot.lane.b32.xlu0 %v3508, 20
  %v4762 = vpop.permute.xlu0 %4761
  %4763 = vrot.lane.b32.xlu0 %v4595, 20
  %v4764 = vpop.permute.xlu0 %4763
  %4765 = vrot.lane.b32.xlu0 %v3514, 20
  %v4766 = vpop.permute.xlu0 %4765
  %4767 = vrot.lane.b32.xlu0 %v3517, 20
  %v4768 = vpop.permute.xlu0 %4767
  %4769 = vrot.lane.b32.xlu0 %v3520, 20
  %v4770 = vpop.permute.xlu0 %4769
  %4771 = vrot.lane.b32.xlu0 %v3523, 20
  %v4772 = vpop.permute.xlu0 %4771
  %4773 = vrot.lane.b32.xlu0 %v3526, 20
  %v4774 = vpop.permute.xlu0 %4773
  %4775 = vrot.lane.b32.xlu0 %v3529, 20
  %v4776 = vpop.permute.xlu0 %4775
  %4777 = vrot.lane.b32.xlu0 %v3532, 20
  %v4778 = vpop.permute.xlu0 %4777
  %4779 = vrot.lane.b32.xlu0 %v3535, 20
  %v4780 = vpop.permute.xlu0 %4779
  %4781 = vrot.lane.b32.xlu0 %v3538, 20
  %v4782 = vpop.permute.xlu0 %4781
  %4783 = vrot.lane.b32.xlu0 %v3541, 20
  %v4784 = vpop.permute.xlu0 %4783
  %4785 = vrot.lane.b32.xlu0 %v3544, 20
  %v4786 = vpop.permute.xlu0 %4785
  %4787 = vrot.lane.b32.xlu0 %v3547, 20
  %v4788 = vpop.permute.xlu0 %4787
  %4789 = vrot.lane.b32.xlu0 %v3550, 20
  %v4790 = vpop.permute.xlu0 %4789
  %4791 = vrot.lane.b32.xlu0 %v3553, 20
  %v4792 = vpop.permute.xlu0 %4791
  %4793 = vrot.lane.b32.xlu0 %v3556, 20
  %v4794 = vpop.permute.xlu0 %4793
  %4795 = vrot.lane.b32.xlu0 %v4598, 20
  %v4796 = vpop.permute.xlu0 %4795
  %4797 = vrot.lane.b32.xlu0 %v3562, 20
  %v4798 = vpop.permute.xlu0 %4797
  %4799 = vrot.lane.b32.xlu0 %v3565, 20
  %v4800 = vpop.permute.xlu0 %4799
  %4801 = vrot.lane.b32.xlu0 %v3568, 20
  %v4802 = vpop.permute.xlu0 %4801
  %4803 = vrot.lane.b32.xlu0 %v3571, 20
  %v4804 = vpop.permute.xlu0 %4803
  %4805 = vrot.lane.b32.xlu0 %v3574, 20
  %v4806 = vpop.permute.xlu0 %4805
  %4807 = vrot.lane.b32.xlu0 %v3577, 20
  %v4808 = vpop.permute.xlu0 %4807
  %4809 = vrot.lane.b32.xlu0 %v3580, 20
  %v4810 = vpop.permute.xlu0 %4809
  %4811 = vrot.lane.b32.xlu0 %v3583, 20
  %v4812 = vpop.permute.xlu0 %4811
  %4813 = vrot.lane.b32.xlu0 %v3586, 20
  %v4814 = vpop.permute.xlu0 %4813
  %4815 = vrot.lane.b32.xlu0 %v3589, 20
  %v4816 = vpop.permute.xlu0 %4815
  %4817 = vrot.lane.b32.xlu0 %v3592, 20
  %v4818 = vpop.permute.xlu0 %4817
  %4819 = vrot.lane.b32.xlu0 %v3595, 20
  %v4820 = vpop.permute.xlu0 %4819
  %4821 = vrot.lane.b32.xlu0 %v3598, 20
  %v4822 = vpop.permute.xlu0 %4821
  %4823 = vrot.lane.b32.xlu0 %v3601, 20
  %v4824 = vpop.permute.xlu0 %4823
  %4825 = vrot.lane.b32.xlu0 %v3604, 20
  %v4826 = vpop.permute.xlu0 %4825
  %4827 = vrot.lane.b32.xlu0 %v4601, 20
  %v4828 = vpop.permute.xlu0 %4827
  %4829 = vrot.lane.b32.xlu0 %v3610, 20
  %v4830 = vpop.permute.xlu0 %4829
  %4831 = vrot.lane.b32.xlu0 %v3613, 20
  %v4832 = vpop.permute.xlu0 %4831
  %4833 = vrot.lane.b32.xlu0 %v3616, 20
  %v4834 = vpop.permute.xlu0 %4833
  %4835 = vrot.lane.b32.xlu0 %v3619, 20
  %v4836 = vpop.permute.xlu0 %4835
  %4837 = vrot.lane.b32.xlu0 %v3622, 20
  %v4838 = vpop.permute.xlu0 %4837
  %4839 = vrot.lane.b32.xlu0 %v3625, 20
  %v4840 = vpop.permute.xlu0 %4839
  %4841 = vrot.lane.b32.xlu0 %v3628, 20
  %v4842 = vpop.permute.xlu0 %4841
  %4843 = vrot.lane.b32.xlu0 %v3631, 20
  %v4844 = vpop.permute.xlu0 %4843
  %4845 = vrot.lane.b32.xlu0 %v3634, 20
  %v4846 = vpop.permute.xlu0 %4845
  %4847 = vrot.lane.b32.xlu0 %v3637, 20
  %v4848 = vpop.permute.xlu0 %4847
  %4849 = vrot.lane.b32.xlu0 %v3640, 20
  %v4850 = vpop.permute.xlu0 %4849
  %4851 = vrot.lane.b32.xlu0 %v3643, 20
  %v4852 = vpop.permute.xlu0 %4851
  %4853 = vrot.lane.b32.xlu0 %v3646, 20
  %v4854 = vpop.permute.xlu0 %4853
  %4855 = vrot.lane.b32.xlu0 %v3649, 20
  %v4856 = vpop.permute.xlu0 %4855
  %4857 = vrot.lane.b32.xlu0 %v3652, 20
  %v4858 = vpop.permute.xlu0 %4857
  %4859 = vrot.lane.b32.xlu0 %v4604, 20
  %v4860 = vpop.permute.xlu0 %4859
  %v4877 = vunpack.c.l.b16 %v70
  %v4878 = vunpack.c.l.b16 %v71
  %v4879 = vunpack.c.l.b16 %v124
  %v4880 = vunpack.c.l.b16 %v125
  %v4881 = vunpack.c.l.b16 %v178
  %v4882 = vunpack.c.l.b16 %v179
  %v4883 = vunpack.c.l.b16 %v232
  %v4884 = vunpack.c.l.b16 %v233
  %v4885 = vunpack.c.l.b16 %v286
  %v4886 = vunpack.c.l.b16 %v287
  %v4887 = vunpack.c.l.b16 %v340
  %v4888 = vunpack.c.l.b16 %v341
  %v4889 = vunpack.c.l.b16 %v394
  %v4890 = vunpack.c.l.b16 %v395
  %v4891 = vunpack.c.l.b16 %v448
  %v4892 = vunpack.c.l.b16 %v449
  %v4893 = vpack.c.b16 %v4878, %v4877
  %v4894 = vpack.c.b16 %v4880, %v4879
  %v4895 = vpack.c.b16 %v4882, %v4881
  %v4896 = vpack.c.b16 %v4884, %v4883
  %v4897 = vpack.c.b16 %v4886, %v4885
  %v4898 = vpack.c.b16 %v4888, %v4887
  %v4899 = vpack.c.b16 %v4890, %v4889
  %v4900 = vpack.c.b16 %v4892, %v4891
  %4901 = vrot.lane.b32.xlu0 %v965, 24
  %v4902 = vpop.permute.xlu0 %4901
  %4903 = vrot.lane.b32.xlu0 %v966, 24
  %v4904 = vpop.permute.xlu0 %4903
  %4905 = vrot.lane.b32.xlu0 %v967, 24
  %v4906 = vpop.permute.xlu0 %4905
  %4907 = vrot.lane.b32.xlu0 %v968, 24
  %v4908 = vpop.permute.xlu0 %4907
  %4909 = vrot.lane.b32.xlu0 %v969, 24
  %v4910 = vpop.permute.xlu0 %4909
  %4911 = vrot.lane.b32.xlu0 %v970, 24
  %v4912 = vpop.permute.xlu0 %4911
  %4913 = vrot.lane.b32.xlu0 %v971, 24
  %v4914 = vpop.permute.xlu0 %4913
  %4915 = vrot.lane.b32.xlu0 %v972, 24
  %v4916 = vpop.permute.xlu0 %4915
  %4917 = vrot.lane.b32.xlu0 %v973, 24
  %v4918 = vpop.permute.xlu0 %4917
  %4919 = vrot.lane.b32.xlu0 %v974, 24
  %v4920 = vpop.permute.xlu0 %4919
  %4921 = vrot.lane.b32.xlu0 %v975, 24
  %v4922 = vpop.permute.xlu0 %4921
  %4923 = vrot.lane.b32.xlu0 %v976, 24
  %v4924 = vpop.permute.xlu0 %4923
  %4925 = vrot.lane.b32.xlu0 %v977, 24
  %v4926 = vpop.permute.xlu0 %4925
  %4927 = vrot.lane.b32.xlu0 %v978, 24
  %v4928 = vpop.permute.xlu0 %4927
  %4929 = vrot.lane.b32.xlu0 %v3941, 24
  %v4930 = vpop.permute.xlu0 %4929
  %4931 = vrot.lane.b32.xlu0 %v4893, 24
  %v4932 = vpop.permute.xlu0 %4931
  %4933 = vrot.lane.b32.xlu0 %v981, 24
  %v4934 = vpop.permute.xlu0 %4933
  %4935 = vrot.lane.b32.xlu0 %v982, 24
  %v4936 = vpop.permute.xlu0 %4935
  %4937 = vrot.lane.b32.xlu0 %v983, 24
  %v4938 = vpop.permute.xlu0 %4937
  %4939 = vrot.lane.b32.xlu0 %v984, 24
  %v4940 = vpop.permute.xlu0 %4939
  %4941 = vrot.lane.b32.xlu0 %v985, 24
  %v4942 = vpop.permute.xlu0 %4941
  %4943 = vrot.lane.b32.xlu0 %v986, 24
  %v4944 = vpop.permute.xlu0 %4943
  %4945 = vrot.lane.b32.xlu0 %v987, 24
  %v4946 = vpop.permute.xlu0 %4945
  %4947 = vrot.lane.b32.xlu0 %v988, 24
  %v4948 = vpop.permute.xlu0 %4947
  %4949 = vrot.lane.b32.xlu0 %v989, 24
  %v4950 = vpop.permute.xlu0 %4949
  %4951 = vrot.lane.b32.xlu0 %v990, 24
  %v4952 = vpop.permute.xlu0 %4951
  %4953 = vrot.lane.b32.xlu0 %v991, 24
  %v4954 = vpop.permute.xlu0 %4953
  %4955 = vrot.lane.b32.xlu0 %v992, 24
  %v4956 = vpop.permute.xlu0 %4955
  %4957 = vrot.lane.b32.xlu0 %v993, 24
  %v4958 = vpop.permute.xlu0 %4957
  %4959 = vrot.lane.b32.xlu0 %v994, 24
  %v4960 = vpop.permute.xlu0 %4959
  %4961 = vrot.lane.b32.xlu0 %v3942, 24
  %v4962 = vpop.permute.xlu0 %4961
  %4963 = vrot.lane.b32.xlu0 %v4894, 24
  %v4964 = vpop.permute.xlu0 %4963
  %4965 = vrot.lane.b32.xlu0 %v997, 24
  %v4966 = vpop.permute.xlu0 %4965
  %4967 = vrot.lane.b32.xlu0 %v998, 24
  %v4968 = vpop.permute.xlu0 %4967
  %4969 = vrot.lane.b32.xlu0 %v999, 24
  %v4970 = vpop.permute.xlu0 %4969
  %4971 = vrot.lane.b32.xlu0 %v1000, 24
  %v4972 = vpop.permute.xlu0 %4971
  %4973 = vrot.lane.b32.xlu0 %v1001, 24
  %v4974 = vpop.permute.xlu0 %4973
  %4975 = vrot.lane.b32.xlu0 %v1002, 24
  %v4976 = vpop.permute.xlu0 %4975
  %4977 = vrot.lane.b32.xlu0 %v1003, 24
  %v4978 = vpop.permute.xlu0 %4977
  %4979 = vrot.lane.b32.xlu0 %v1004, 24
  %v4980 = vpop.permute.xlu0 %4979
  %4981 = vrot.lane.b32.xlu0 %v1005, 24
  %v4982 = vpop.permute.xlu0 %4981
  %4983 = vrot.lane.b32.xlu0 %v1006, 24
  %v4984 = vpop.permute.xlu0 %4983
  %4985 = vrot.lane.b32.xlu0 %v1007, 24
  %v4986 = vpop.permute.xlu0 %4985
  %4987 = vrot.lane.b32.xlu0 %v1008, 24
  %v4988 = vpop.permute.xlu0 %4987
  %4989 = vrot.lane.b32.xlu0 %v1009, 24
  %v4990 = vpop.permute.xlu0 %4989
  %4991 = vrot.lane.b32.xlu0 %v1010, 24
  %v4992 = vpop.permute.xlu0 %4991
  %4993 = vrot.lane.b32.xlu0 %v3943, 24
  %v4994 = vpop.permute.xlu0 %4993
  %4995 = vrot.lane.b32.xlu0 %v4895, 24
  %v4996 = vpop.permute.xlu0 %4995
  %4997 = vrot.lane.b32.xlu0 %v1013, 24
  %v4998 = vpop.permute.xlu0 %4997
  %4999 = vrot.lane.b32.xlu0 %v1014, 24
  %v5000 = vpop.permute.xlu0 %4999
  %5001 = vrot.lane.b32.xlu0 %v1015, 24
  %v5002 = vpop.permute.xlu0 %5001
  %5003 = vrot.lane.b32.xlu0 %v1016, 24
  %v5004 = vpop.permute.xlu0 %5003
  %5005 = vrot.lane.b32.xlu0 %v1017, 24
  %v5006 = vpop.permute.xlu0 %5005
  %5007 = vrot.lane.b32.xlu0 %v1018, 24
  %v5008 = vpop.permute.xlu0 %5007
  %5009 = vrot.lane.b32.xlu0 %v1019, 24
  %v5010 = vpop.permute.xlu0 %5009
  %5011 = vrot.lane.b32.xlu0 %v1020, 24
  %v5012 = vpop.permute.xlu0 %5011
  %5013 = vrot.lane.b32.xlu0 %v1021, 24
  %v5014 = vpop.permute.xlu0 %5013
  %5015 = vrot.lane.b32.xlu0 %v1022, 24
  %v5016 = vpop.permute.xlu0 %5015
  %5017 = vrot.lane.b32.xlu0 %v1023, 24
  %v5018 = vpop.permute.xlu0 %5017
  %5019 = vrot.lane.b32.xlu0 %v1024, 24
  %v5020 = vpop.permute.xlu0 %5019
  %5021 = vrot.lane.b32.xlu0 %v1025, 24
  %v5022 = vpop.permute.xlu0 %5021
  %5023 = vrot.lane.b32.xlu0 %v1026, 24
  %v5024 = vpop.permute.xlu0 %5023
  %5025 = vrot.lane.b32.xlu0 %v3944, 24
  %v5026 = vpop.permute.xlu0 %5025
  %5027 = vrot.lane.b32.xlu0 %v4896, 24
  %v5028 = vpop.permute.xlu0 %5027
  %5029 = vrot.lane.b32.xlu0 %v1029, 24
  %v5030 = vpop.permute.xlu0 %5029
  %5031 = vrot.lane.b32.xlu0 %v1030, 24
  %v5032 = vpop.permute.xlu0 %5031
  %5033 = vrot.lane.b32.xlu0 %v1031, 24
  %v5034 = vpop.permute.xlu0 %5033
  %5035 = vrot.lane.b32.xlu0 %v1032, 24
  %v5036 = vpop.permute.xlu0 %5035
  %5037 = vrot.lane.b32.xlu0 %v1033, 24
  %v5038 = vpop.permute.xlu0 %5037
  %5039 = vrot.lane.b32.xlu0 %v1034, 24
  %v5040 = vpop.permute.xlu0 %5039
  %5041 = vrot.lane.b32.xlu0 %v1035, 24
  %v5042 = vpop.permute.xlu0 %5041
  %5043 = vrot.lane.b32.xlu0 %v1036, 24
  %v5044 = vpop.permute.xlu0 %5043
  %5045 = vrot.lane.b32.xlu0 %v1037, 24
  %v5046 = vpop.permute.xlu0 %5045
  %5047 = vrot.lane.b32.xlu0 %v1038, 24
  %v5048 = vpop.permute.xlu0 %5047
  %5049 = vrot.lane.b32.xlu0 %v1039, 24
  %v5050 = vpop.permute.xlu0 %5049
  %5051 = vrot.lane.b32.xlu0 %v1040, 24
  %v5052 = vpop.permute.xlu0 %5051
  %5053 = vrot.lane.b32.xlu0 %v1041, 24
  %v5054 = vpop.permute.xlu0 %5053
  %5055 = vrot.lane.b32.xlu0 %v1042, 24
  %v5056 = vpop.permute.xlu0 %5055
  %5057 = vrot.lane.b32.xlu0 %v3945, 24
  %v5058 = vpop.permute.xlu0 %5057
  %5059 = vrot.lane.b32.xlu0 %v4897, 24
  %v5060 = vpop.permute.xlu0 %5059
  %5061 = vrot.lane.b32.xlu0 %v1045, 24
  %v5062 = vpop.permute.xlu0 %5061
  %5063 = vrot.lane.b32.xlu0 %v1046, 24
  %v5064 = vpop.permute.xlu0 %5063
  %5065 = vrot.lane.b32.xlu0 %v1047, 24
  %v5066 = vpop.permute.xlu0 %5065
  %5067 = vrot.lane.b32.xlu0 %v1048, 24
  %v5068 = vpop.permute.xlu0 %5067
  %5069 = vrot.lane.b32.xlu0 %v1049, 24
  %v5070 = vpop.permute.xlu0 %5069
  %5071 = vrot.lane.b32.xlu0 %v1050, 24
  %v5072 = vpop.permute.xlu0 %5071
  %5073 = vrot.lane.b32.xlu0 %v1051, 24
  %v5074 = vpop.permute.xlu0 %5073
  %5075 = vrot.lane.b32.xlu0 %v1052, 24
  %v5076 = vpop.permute.xlu0 %5075
  %5077 = vrot.lane.b32.xlu0 %v1053, 24
  %v5078 = vpop.permute.xlu0 %5077
  %5079 = vrot.lane.b32.xlu0 %v1054, 24
  %v5080 = vpop.permute.xlu0 %5079
  %5081 = vrot.lane.b32.xlu0 %v1055, 24
  %v5082 = vpop.permute.xlu0 %5081
  %5083 = vrot.lane.b32.xlu0 %v1056, 24
  %v5084 = vpop.permute.xlu0 %5083
  %5085 = vrot.lane.b32.xlu0 %v1057, 24
  %v5086 = vpop.permute.xlu0 %5085
  %5087 = vrot.lane.b32.xlu0 %v1058, 24
  %v5088 = vpop.permute.xlu0 %5087
  %5089 = vrot.lane.b32.xlu0 %v3946, 24
  %v5090 = vpop.permute.xlu0 %5089
  %5091 = vrot.lane.b32.xlu0 %v4898, 24
  %v5092 = vpop.permute.xlu0 %5091
  %5093 = vrot.lane.b32.xlu0 %v1061, 24
  %v5094 = vpop.permute.xlu0 %5093
  %5095 = vrot.lane.b32.xlu0 %v1062, 24
  %v5096 = vpop.permute.xlu0 %5095
  %5097 = vrot.lane.b32.xlu0 %v1063, 24
  %v5098 = vpop.permute.xlu0 %5097
  %5099 = vrot.lane.b32.xlu0 %v1064, 24
  %v5100 = vpop.permute.xlu0 %5099
  %5101 = vrot.lane.b32.xlu0 %v1065, 24
  %v5102 = vpop.permute.xlu0 %5101
  %5103 = vrot.lane.b32.xlu0 %v1066, 24
  %v5104 = vpop.permute.xlu0 %5103
  %5105 = vrot.lane.b32.xlu0 %v1067, 24
  %v5106 = vpop.permute.xlu0 %5105
  %5107 = vrot.lane.b32.xlu0 %v1068, 24
  %v5108 = vpop.permute.xlu0 %5107
  %5109 = vrot.lane.b32.xlu0 %v1069, 24
  %v5110 = vpop.permute.xlu0 %5109
  %5111 = vrot.lane.b32.xlu0 %v1070, 24
  %v5112 = vpop.permute.xlu0 %5111
  %5113 = vrot.lane.b32.xlu0 %v1071, 24
  %v5114 = vpop.permute.xlu0 %5113
  %5115 = vrot.lane.b32.xlu0 %v1072, 24
  %v5116 = vpop.permute.xlu0 %5115
  %5117 = vrot.lane.b32.xlu0 %v1073, 24
  %v5118 = vpop.permute.xlu0 %5117
  %5119 = vrot.lane.b32.xlu0 %v1074, 24
  %v5120 = vpop.permute.xlu0 %5119
  %5121 = vrot.lane.b32.xlu0 %v3947, 24
  %v5122 = vpop.permute.xlu0 %5121
  %5123 = vrot.lane.b32.xlu0 %v4899, 24
  %v5124 = vpop.permute.xlu0 %5123
  %5125 = vrot.lane.b32.xlu0 %v1077, 24
  %v5126 = vpop.permute.xlu0 %5125
  %5127 = vrot.lane.b32.xlu0 %v1078, 24
  %v5128 = vpop.permute.xlu0 %5127
  %5129 = vrot.lane.b32.xlu0 %v1079, 24
  %v5130 = vpop.permute.xlu0 %5129
  %5131 = vrot.lane.b32.xlu0 %v1080, 24
  %v5132 = vpop.permute.xlu0 %5131
  %5133 = vrot.lane.b32.xlu0 %v1081, 24
  %v5134 = vpop.permute.xlu0 %5133
  %5135 = vrot.lane.b32.xlu0 %v1082, 24
  %v5136 = vpop.permute.xlu0 %5135
  %5137 = vrot.lane.b32.xlu0 %v1083, 24
  %v5138 = vpop.permute.xlu0 %5137
  %5139 = vrot.lane.b32.xlu0 %v1084, 24
  %v5140 = vpop.permute.xlu0 %5139
  %5141 = vrot.lane.b32.xlu0 %v1085, 24
  %v5142 = vpop.permute.xlu0 %5141
  %5143 = vrot.lane.b32.xlu0 %v1086, 24
  %v5144 = vpop.permute.xlu0 %5143
  %5145 = vrot.lane.b32.xlu0 %v1087, 24
  %v5146 = vpop.permute.xlu0 %5145
  %5147 = vrot.lane.b32.xlu0 %v1088, 24
  %v5148 = vpop.permute.xlu0 %5147
  %5149 = vrot.lane.b32.xlu0 %v1089, 24
  %v5150 = vpop.permute.xlu0 %5149
  %5151 = vrot.lane.b32.xlu0 %v1090, 24
  %v5152 = vpop.permute.xlu0 %5151
  %5153 = vrot.lane.b32.xlu0 %v3948, 24
  %v5154 = vpop.permute.xlu0 %5153
  %5155 = vrot.lane.b32.xlu0 %v4900, 24
  %v5156 = vpop.permute.xlu0 %5155
  %v5165 = vunpack.c.l.b16 %v72
  %v5166 = vunpack.c.l.b16 %v126
  %v5167 = vunpack.c.l.b16 %v180
  %v5168 = vunpack.c.l.b16 %v234
  %v5169 = vunpack.c.l.b16 %v288
  %v5170 = vunpack.c.l.b16 %v342
  %v5171 = vunpack.c.l.b16 %v396
  %v5172 = vunpack.c.l.b16 %v450
  %v5173 = vpack.c.b16 %v5165, %v5165
  %v5174 = vpack.c.b16 %v5166, %v5166
  %v5175 = vpack.c.b16 %v5167, %v5167
  %v5176 = vpack.c.b16 %v5168, %v5168
  %v5177 = vpack.c.b16 %v5169, %v5169
  %v5178 = vpack.c.b16 %v5170, %v5170
  %v5179 = vpack.c.b16 %v5171, %v5171
  %v5180 = vpack.c.b16 %v5172, %v5172
  %v5182 = vshrl.u32 %v4893, 16
  %v5184 = vshll.u32 %v4893, 16
  %v5186 = vrot.slane %v5184, 1
  %v5187 = vor.u32 %v5182, %v5186
  %v5189 = vshll.u32 %v5173, 16
  %v5191 = vrot.slane %v5189, 1
  %v5192 = vsel %vm1475, %v5187, %v5191
  %v5194 = vshrl.u32 %v4894, 16
  %v5196 = vshll.u32 %v4894, 16
  %v5198 = vrot.slane %v5196, 1
  %v5199 = vor.u32 %v5194, %v5198
  %v5201 = vshll.u32 %v5174, 16
  %v5203 = vrot.slane %v5201, 1
  %v5204 = vsel %vm1475, %v5199, %v5203
  %v5206 = vshrl.u32 %v4895, 16
  %v5208 = vshll.u32 %v4895, 16
  %v5210 = vrot.slane %v5208, 1
  %v5211 = vor.u32 %v5206, %v5210
  %v5213 = vshll.u32 %v5175, 16
  %v5215 = vrot.slane %v5213, 1
  %v5216 = vsel %vm1475, %v5211, %v5215
  %v5218 = vshrl.u32 %v4896, 16
  %v5220 = vshll.u32 %v4896, 16
  %v5222 = vrot.slane %v5220, 1
  %v5223 = vor.u32 %v5218, %v5222
  %v5225 = vshll.u32 %v5176, 16
  %v5227 = vrot.slane %v5225, 1
  %v5228 = vsel %vm1475, %v5223, %v5227
  %v5230 = vshrl.u32 %v4897, 16
  %v5232 = vshll.u32 %v4897, 16
  %v5234 = vrot.slane %v5232, 1
  %v5235 = vor.u32 %v5230, %v5234
  %v5237 = vshll.u32 %v5177, 16
  %v5239 = vrot.slane %v5237, 1
  %v5240 = vsel %vm1475, %v5235, %v5239
  %v5242 = vshrl.u32 %v4898, 16
  %v5244 = vshll.u32 %v4898, 16
  %v5246 = vrot.slane %v5244, 1
  %v5247 = vor.u32 %v5242, %v5246
  %v5249 = vshll.u32 %v5178, 16
  %v5251 = vrot.slane %v5249, 1
  %v5252 = vsel %vm1475, %v5247, %v5251
  %v5254 = vshrl.u32 %v4899, 16
  %v5256 = vshll.u32 %v4899, 16
  %v5258 = vrot.slane %v5256, 1
  %v5259 = vor.u32 %v5254, %v5258
  %v5261 = vshll.u32 %v5179, 16
  %v5263 = vrot.slane %v5261, 1
  %v5264 = vsel %vm1475, %v5259, %v5263
  %v5266 = vshrl.u32 %v4900, 16
  %v5268 = vshll.u32 %v4900, 16
  %v5270 = vrot.slane %v5268, 1
  %v5271 = vor.u32 %v5266, %v5270
  %v5273 = vshll.u32 %v5180, 16
  %v5275 = vrot.slane %v5273, 1
  %v5276 = vsel %vm1475, %v5271, %v5275
  %5277 = vrot.lane.b32.xlu0 %v1511, 28
  %v5278 = vpop.permute.xlu0 %5277
  %5279 = vrot.lane.b32.xlu0 %v1523, 28
  %v5280 = vpop.permute.xlu0 %5279
  %5281 = vrot.lane.b32.xlu0 %v1535, 28
  %v5282 = vpop.permute.xlu0 %5281
  %5283 = vrot.lane.b32.xlu0 %v1547, 28
  %v5284 = vpop.permute.xlu0 %5283
  %5285 = vrot.lane.b32.xlu0 %v1559, 28
  %v5286 = vpop.permute.xlu0 %5285
  %5287 = vrot.lane.b32.xlu0 %v1571, 28
  %v5288 = vpop.permute.xlu0 %5287
  %5289 = vrot.lane.b32.xlu0 %v1583, 28
  %v5290 = vpop.permute.xlu0 %5289
  %5291 = vrot.lane.b32.xlu0 %v1595, 28
  %v5292 = vpop.permute.xlu0 %5291
  %5293 = vrot.lane.b32.xlu0 %v1607, 28
  %v5294 = vpop.permute.xlu0 %5293
  %5295 = vrot.lane.b32.xlu0 %v1619, 28
  %v5296 = vpop.permute.xlu0 %5295
  %5297 = vrot.lane.b32.xlu0 %v1631, 28
  %v5298 = vpop.permute.xlu0 %5297
  %5299 = vrot.lane.b32.xlu0 %v1643, 28
  %v5300 = vpop.permute.xlu0 %5299
  %5301 = vrot.lane.b32.xlu0 %v1655, 28
  %v5302 = vpop.permute.xlu0 %5301
  %5303 = vrot.lane.b32.xlu0 %v1667, 28
  %v5304 = vpop.permute.xlu0 %5303
  %5305 = vrot.lane.b32.xlu0 %v4240, 28
  %v5306 = vpop.permute.xlu0 %5305
  %5307 = vrot.lane.b32.xlu0 %v5192, 28
  %v5308 = vpop.permute.xlu0 %5307
  %5309 = vrot.lane.b32.xlu0 %v1703, 28
  %v5310 = vpop.permute.xlu0 %5309
  %5311 = vrot.lane.b32.xlu0 %v1715, 28
  %v5312 = vpop.permute.xlu0 %5311
  %5313 = vrot.lane.b32.xlu0 %v1727, 28
  %v5314 = vpop.permute.xlu0 %5313
  %5315 = vrot.lane.b32.xlu0 %v1739, 28
  %v5316 = vpop.permute.xlu0 %5315
  %5317 = vrot.lane.b32.xlu0 %v1751, 28
  %v5318 = vpop.permute.xlu0 %5317
  %5319 = vrot.lane.b32.xlu0 %v1763, 28
  %v5320 = vpop.permute.xlu0 %5319
  %5321 = vrot.lane.b32.xlu0 %v1775, 28
  %v5322 = vpop.permute.xlu0 %5321
  %5323 = vrot.lane.b32.xlu0 %v1787, 28
  %v5324 = vpop.permute.xlu0 %5323
  %5325 = vrot.lane.b32.xlu0 %v1799, 28
  %v5326 = vpop.permute.xlu0 %5325
  %5327 = vrot.lane.b32.xlu0 %v1811, 28
  %v5328 = vpop.permute.xlu0 %5327
  %5329 = vrot.lane.b32.xlu0 %v1823, 28
  %v5330 = vpop.permute.xlu0 %5329
  %5331 = vrot.lane.b32.xlu0 %v1835, 28
  %v5332 = vpop.permute.xlu0 %5331
  %5333 = vrot.lane.b32.xlu0 %v1847, 28
  %v5334 = vpop.permute.xlu0 %5333
  %5335 = vrot.lane.b32.xlu0 %v1859, 28
  %v5336 = vpop.permute.xlu0 %5335
  %5337 = vrot.lane.b32.xlu0 %v4252, 28
  %v5338 = vpop.permute.xlu0 %5337
  %5339 = vrot.lane.b32.xlu0 %v5204, 28
  %v5340 = vpop.permute.xlu0 %5339
  %5341 = vrot.lane.b32.xlu0 %v1895, 28
  %v5342 = vpop.permute.xlu0 %5341
  %5343 = vrot.lane.b32.xlu0 %v1907, 28
  %v5344 = vpop.permute.xlu0 %5343
  %5345 = vrot.lane.b32.xlu0 %v1919, 28
  %v5346 = vpop.permute.xlu0 %5345
  %5347 = vrot.lane.b32.xlu0 %v1931, 28
  %v5348 = vpop.permute.xlu0 %5347
  %5349 = vrot.lane.b32.xlu0 %v1943, 28
  %v5350 = vpop.permute.xlu0 %5349
  %5351 = vrot.lane.b32.xlu0 %v1955, 28
  %v5352 = vpop.permute.xlu0 %5351
  %5353 = vrot.lane.b32.xlu0 %v1967, 28
  %v5354 = vpop.permute.xlu0 %5353
  %5355 = vrot.lane.b32.xlu0 %v1979, 28
  %v5356 = vpop.permute.xlu0 %5355
  %5357 = vrot.lane.b32.xlu0 %v1991, 28
  %v5358 = vpop.permute.xlu0 %5357
  %5359 = vrot.lane.b32.xlu0 %v2003, 28
  %v5360 = vpop.permute.xlu0 %5359
  %5361 = vrot.lane.b32.xlu0 %v2015, 28
  %v5362 = vpop.permute.xlu0 %5361
  %5363 = vrot.lane.b32.xlu0 %v2027, 28
  %v5364 = vpop.permute.xlu0 %5363
  %5365 = vrot.lane.b32.xlu0 %v2039, 28
  %v5366 = vpop.permute.xlu0 %5365
  %5367 = vrot.lane.b32.xlu0 %v2051, 28
  %v5368 = vpop.permute.xlu0 %5367
  %5369 = vrot.lane.b32.xlu0 %v4264, 28
  %v5370 = vpop.permute.xlu0 %5369
  %5371 = vrot.lane.b32.xlu0 %v5216, 28
  %v5372 = vpop.permute.xlu0 %5371
  %5373 = vrot.lane.b32.xlu0 %v2087, 28
  %v5374 = vpop.permute.xlu0 %5373
  %5375 = vrot.lane.b32.xlu0 %v2099, 28
  %v5376 = vpop.permute.xlu0 %5375
  %5377 = vrot.lane.b32.xlu0 %v2111, 28
  %v5378 = vpop.permute.xlu0 %5377
  %5379 = vrot.lane.b32.xlu0 %v2123, 28
  %v5380 = vpop.permute.xlu0 %5379
  %5381 = vrot.lane.b32.xlu0 %v2135, 28
  %v5382 = vpop.permute.xlu0 %5381
  %5383 = vrot.lane.b32.xlu0 %v2147, 28
  %v5384 = vpop.permute.xlu0 %5383
  %5385 = vrot.lane.b32.xlu0 %v2159, 28
  %v5386 = vpop.permute.xlu0 %5385
  %5387 = vrot.lane.b32.xlu0 %v2171, 28
  %v5388 = vpop.permute.xlu0 %5387
  %5389 = vrot.lane.b32.xlu0 %v2183, 28
  %v5390 = vpop.permute.xlu0 %5389
  %5391 = vrot.lane.b32.xlu0 %v2195, 28
  %v5392 = vpop.permute.xlu0 %5391
  %5393 = vrot.lane.b32.xlu0 %v2207, 28
  %v5394 = vpop.permute.xlu0 %5393
  %5395 = vrot.lane.b32.xlu0 %v2219, 28
  %v5396 = vpop.permute.xlu0 %5395
  %5397 = vrot.lane.b32.xlu0 %v2231, 28
  %v5398 = vpop.permute.xlu0 %5397
  %5399 = vrot.lane.b32.xlu0 %v2243, 28
  %v5400 = vpop.permute.xlu0 %5399
  %5401 = vrot.lane.b32.xlu0 %v4276, 28
  %v5402 = vpop.permute.xlu0 %5401
  %5403 = vrot.lane.b32.xlu0 %v5228, 28
  %v5404 = vpop.permute.xlu0 %5403
  %5405 = vrot.lane.b32.xlu0 %v2279, 28
  %v5406 = vpop.permute.xlu0 %5405
  %5407 = vrot.lane.b32.xlu0 %v2291, 28
  %v5408 = vpop.permute.xlu0 %5407
  %5409 = vrot.lane.b32.xlu0 %v2303, 28
  %v5410 = vpop.permute.xlu0 %5409
  %5411 = vrot.lane.b32.xlu0 %v2315, 28
  %v5412 = vpop.permute.xlu0 %5411
  %5413 = vrot.lane.b32.xlu0 %v2327, 28
  %v5414 = vpop.permute.xlu0 %5413
  %5415 = vrot.lane.b32.xlu0 %v2339, 28
  %v5416 = vpop.permute.xlu0 %5415
  %5417 = vrot.lane.b32.xlu0 %v2351, 28
  %v5418 = vpop.permute.xlu0 %5417
  %5419 = vrot.lane.b32.xlu0 %v2363, 28
  %v5420 = vpop.permute.xlu0 %5419
  %5421 = vrot.lane.b32.xlu0 %v2375, 28
  %v5422 = vpop.permute.xlu0 %5421
  %5423 = vrot.lane.b32.xlu0 %v2387, 28
  %v5424 = vpop.permute.xlu0 %5423
  %5425 = vrot.lane.b32.xlu0 %v2399, 28
  %v5426 = vpop.permute.xlu0 %5425
  %5427 = vrot.lane.b32.xlu0 %v2411, 28
  %v5428 = vpop.permute.xlu0 %5427
  %5429 = vrot.lane.b32.xlu0 %v2423, 28
  %v5430 = vpop.permute.xlu0 %5429
  %5431 = vrot.lane.b32.xlu0 %v2435, 28
  %v5432 = vpop.permute.xlu0 %5431
  %5433 = vrot.lane.b32.xlu0 %v4288, 28
  %v5434 = vpop.permute.xlu0 %5433
  %5435 = vrot.lane.b32.xlu0 %v5240, 28
  %v5436 = vpop.permute.xlu0 %5435
  %5437 = vrot.lane.b32.xlu0 %v2471, 28
  %v5438 = vpop.permute.xlu0 %5437
  %5439 = vrot.lane.b32.xlu0 %v2483, 28
  %v5440 = vpop.permute.xlu0 %5439
  %5441 = vrot.lane.b32.xlu0 %v2495, 28
  %v5442 = vpop.permute.xlu0 %5441
  %5443 = vrot.lane.b32.xlu0 %v2507, 28
  %v5444 = vpop.permute.xlu0 %5443
  %5445 = vrot.lane.b32.xlu0 %v2519, 28
  %v5446 = vpop.permute.xlu0 %5445
  %5447 = vrot.lane.b32.xlu0 %v2531, 28
  %v5448 = vpop.permute.xlu0 %5447
  %5449 = vrot.lane.b32.xlu0 %v2543, 28
  %v5450 = vpop.permute.xlu0 %5449
  %5451 = vrot.lane.b32.xlu0 %v2555, 28
  %v5452 = vpop.permute.xlu0 %5451
  %5453 = vrot.lane.b32.xlu0 %v2567, 28
  %v5454 = vpop.permute.xlu0 %5453
  %5455 = vrot.lane.b32.xlu0 %v2579, 28
  %v5456 = vpop.permute.xlu0 %5455
  %5457 = vrot.lane.b32.xlu0 %v2591, 28
  %v5458 = vpop.permute.xlu0 %5457
  %5459 = vrot.lane.b32.xlu0 %v2603, 28
  %v5460 = vpop.permute.xlu0 %5459
  %5461 = vrot.lane.b32.xlu0 %v2615, 28
  %v5462 = vpop.permute.xlu0 %5461
  %5463 = vrot.lane.b32.xlu0 %v2627, 28
  %v5464 = vpop.permute.xlu0 %5463
  %5465 = vrot.lane.b32.xlu0 %v4300, 28
  %v5466 = vpop.permute.xlu0 %5465
  %5467 = vrot.lane.b32.xlu0 %v5252, 28
  %v5468 = vpop.permute.xlu0 %5467
  %5469 = vrot.lane.b32.xlu0 %v2663, 28
  %v5470 = vpop.permute.xlu0 %5469
  %5471 = vrot.lane.b32.xlu0 %v2675, 28
  %v5472 = vpop.permute.xlu0 %5471
  %5473 = vrot.lane.b32.xlu0 %v2687, 28
  %v5474 = vpop.permute.xlu0 %5473
  %5475 = vrot.lane.b32.xlu0 %v2699, 28
  %v5476 = vpop.permute.xlu0 %5475
  %5477 = vrot.lane.b32.xlu0 %v2711, 28
  %v5478 = vpop.permute.xlu0 %5477
  %5479 = vrot.lane.b32.xlu0 %v2723, 28
  %v5480 = vpop.permute.xlu0 %5479
  %5481 = vrot.lane.b32.xlu0 %v2735, 28
  %v5482 = vpop.permute.xlu0 %5481
  %5483 = vrot.lane.b32.xlu0 %v2747, 28
  %v5484 = vpop.permute.xlu0 %5483
  %5485 = vrot.lane.b32.xlu0 %v2759, 28
  %v5486 = vpop.permute.xlu0 %5485
  %5487 = vrot.lane.b32.xlu0 %v2771, 28
  %v5488 = vpop.permute.xlu0 %5487
  %5489 = vrot.lane.b32.xlu0 %v2783, 28
  %v5490 = vpop.permute.xlu0 %5489
  %5491 = vrot.lane.b32.xlu0 %v2795, 28
  %v5492 = vpop.permute.xlu0 %5491
  %5493 = vrot.lane.b32.xlu0 %v2807, 28
  %v5494 = vpop.permute.xlu0 %5493
  %5495 = vrot.lane.b32.xlu0 %v2819, 28
  %v5496 = vpop.permute.xlu0 %5495
  %5497 = vrot.lane.b32.xlu0 %v4312, 28
  %v5498 = vpop.permute.xlu0 %5497
  %5499 = vrot.lane.b32.xlu0 %v5264, 28
  %v5500 = vpop.permute.xlu0 %5499
  %5501 = vrot.lane.b32.xlu0 %v2855, 28
  %v5502 = vpop.permute.xlu0 %5501
  %5503 = vrot.lane.b32.xlu0 %v2867, 28
  %v5504 = vpop.permute.xlu0 %5503
  %5505 = vrot.lane.b32.xlu0 %v2879, 28
  %v5506 = vpop.permute.xlu0 %5505
  %5507 = vrot.lane.b32.xlu0 %v2891, 28
  %v5508 = vpop.permute.xlu0 %5507
  %5509 = vrot.lane.b32.xlu0 %v2903, 28
  %v5510 = vpop.permute.xlu0 %5509
  %5511 = vrot.lane.b32.xlu0 %v2915, 28
  %v5512 = vpop.permute.xlu0 %5511
  %5513 = vrot.lane.b32.xlu0 %v2927, 28
  %v5514 = vpop.permute.xlu0 %5513
  %5515 = vrot.lane.b32.xlu0 %v2939, 28
  %v5516 = vpop.permute.xlu0 %5515
  %5517 = vrot.lane.b32.xlu0 %v2951, 28
  %v5518 = vpop.permute.xlu0 %5517
  %5519 = vrot.lane.b32.xlu0 %v2963, 28
  %v5520 = vpop.permute.xlu0 %5519
  %5521 = vrot.lane.b32.xlu0 %v2975, 28
  %v5522 = vpop.permute.xlu0 %5521
  %5523 = vrot.lane.b32.xlu0 %v2987, 28
  %v5524 = vpop.permute.xlu0 %5523
  %5525 = vrot.lane.b32.xlu0 %v2999, 28
  %v5526 = vpop.permute.xlu0 %5525
  %5527 = vrot.lane.b32.xlu0 %v3011, 28
  %v5528 = vpop.permute.xlu0 %5527
  %5529 = vrot.lane.b32.xlu0 %v4324, 28
  %v5530 = vpop.permute.xlu0 %5529
  %5531 = vrot.lane.b32.xlu0 %v5276, 28
  %v5532 = vpop.permute.xlu0 %5531
  %v5533 = vrot.slane %v4893, 1
  %v5534 = vrot.slane %v5173, 1
  %v5535 = vsel %vm3268, %v5533, %v5534
  %v5536 = vrot.slane %v4894, 1
  %v5537 = vrot.slane %v5174, 1
  %v5538 = vsel %vm3268, %v5536, %v5537
  %v5539 = vrot.slane %v4895, 1
  %v5540 = vrot.slane %v5175, 1
  %v5541 = vsel %vm3268, %v5539, %v5540
  %v5542 = vrot.slane %v4896, 1
  %v5543 = vrot.slane %v5176, 1
  %v5544 = vsel %vm3268, %v5542, %v5543
  %v5545 = vrot.slane %v4897, 1
  %v5546 = vrot.slane %v5177, 1
  %v5547 = vsel %vm3268, %v5545, %v5546
  %v5548 = vrot.slane %v4898, 1
  %v5549 = vrot.slane %v5178, 1
  %v5550 = vsel %vm3268, %v5548, %v5549
  %v5551 = vrot.slane %v4899, 1
  %v5552 = vrot.slane %v5179, 1
  %v5553 = vsel %vm3268, %v5551, %v5552
  %v5554 = vrot.slane %v4900, 1
  %v5555 = vrot.slane %v5180, 1
  %v5556 = vsel %vm3268, %v5554, %v5555
  %5557 = vrot.lane.b32.xlu0 %v3277, 32
  %v5558 = vpop.permute.xlu0 %5557
  %5559 = vrot.lane.b32.xlu0 %v3280, 32
  %v5560 = vpop.permute.xlu0 %5559
  %5561 = vrot.lane.b32.xlu0 %v3283, 32
  %v5562 = vpop.permute.xlu0 %5561
  %5563 = vrot.lane.b32.xlu0 %v3286, 32
  %v5564 = vpop.permute.xlu0 %5563
  %5565 = vrot.lane.b32.xlu0 %v3289, 32
  %v5566 = vpop.permute.xlu0 %5565
  %5567 = vrot.lane.b32.xlu0 %v3292, 32
  %v5568 = vpop.permute.xlu0 %5567
  %5569 = vrot.lane.b32.xlu0 %v3295, 32
  %v5570 = vpop.permute.xlu0 %5569
  %5571 = vrot.lane.b32.xlu0 %v3298, 32
  %v5572 = vpop.permute.xlu0 %5571
  %5573 = vrot.lane.b32.xlu0 %v3301, 32
  %v5574 = vpop.permute.xlu0 %5573
  %5575 = vrot.lane.b32.xlu0 %v3304, 32
  %v5576 = vpop.permute.xlu0 %5575
  %5577 = vrot.lane.b32.xlu0 %v3307, 32
  %v5578 = vpop.permute.xlu0 %5577
  %5579 = vrot.lane.b32.xlu0 %v3310, 32
  %v5580 = vpop.permute.xlu0 %5579
  %5581 = vrot.lane.b32.xlu0 %v3313, 32
  %v5582 = vpop.permute.xlu0 %5581
  %5583 = vrot.lane.b32.xlu0 %v3316, 32
  %v5584 = vpop.permute.xlu0 %5583
  %5585 = vrot.lane.b32.xlu0 %v4583, 32
  %v5586 = vpop.permute.xlu0 %5585
  %5587 = vrot.lane.b32.xlu0 %v5535, 32
  %v5588 = vpop.permute.xlu0 %5587
  %5589 = vrot.lane.b32.xlu0 %v3325, 32
  %v5590 = vpop.permute.xlu0 %5589
  %5591 = vrot.lane.b32.xlu0 %v3328, 32
  %v5592 = vpop.permute.xlu0 %5591
  %5593 = vrot.lane.b32.xlu0 %v3331, 32
  %v5594 = vpop.permute.xlu0 %5593
  %5595 = vrot.lane.b32.xlu0 %v3334, 32
  %v5596 = vpop.permute.xlu0 %5595
  %5597 = vrot.lane.b32.xlu0 %v3337, 32
  %v5598 = vpop.permute.xlu0 %5597
  %5599 = vrot.lane.b32.xlu0 %v3340, 32
  %v5600 = vpop.permute.xlu0 %5599
  %5601 = vrot.lane.b32.xlu0 %v3343, 32
  %v5602 = vpop.permute.xlu0 %5601
  %5603 = vrot.lane.b32.xlu0 %v3346, 32
  %v5604 = vpop.permute.xlu0 %5603
  %5605 = vrot.lane.b32.xlu0 %v3349, 32
  %v5606 = vpop.permute.xlu0 %5605
  %5607 = vrot.lane.b32.xlu0 %v3352, 32
  %v5608 = vpop.permute.xlu0 %5607
  %5609 = vrot.lane.b32.xlu0 %v3355, 32
  %v5610 = vpop.permute.xlu0 %5609
  %5611 = vrot.lane.b32.xlu0 %v3358, 32
  %v5612 = vpop.permute.xlu0 %5611
  %5613 = vrot.lane.b32.xlu0 %v3361, 32
  %v5614 = vpop.permute.xlu0 %5613
  %5615 = vrot.lane.b32.xlu0 %v3364, 32
  %v5616 = vpop.permute.xlu0 %5615
  %5617 = vrot.lane.b32.xlu0 %v4586, 32
  %v5618 = vpop.permute.xlu0 %5617
  %5619 = vrot.lane.b32.xlu0 %v5538, 32
  %v5620 = vpop.permute.xlu0 %5619
  %5621 = vrot.lane.b32.xlu0 %v3373, 32
  %v5622 = vpop.permute.xlu0 %5621
  %5623 = vrot.lane.b32.xlu0 %v3376, 32
  %v5624 = vpop.permute.xlu0 %5623
  %5625 = vrot.lane.b32.xlu0 %v3379, 32
  %v5626 = vpop.permute.xlu0 %5625
  %5627 = vrot.lane.b32.xlu0 %v3382, 32
  %v5628 = vpop.permute.xlu0 %5627
  %5629 = vrot.lane.b32.xlu0 %v3385, 32
  %v5630 = vpop.permute.xlu0 %5629
  %5631 = vrot.lane.b32.xlu0 %v3388, 32
  %v5632 = vpop.permute.xlu0 %5631
  %5633 = vrot.lane.b32.xlu0 %v3391, 32
  %v5634 = vpop.permute.xlu0 %5633
  %5635 = vrot.lane.b32.xlu0 %v3394, 32
  %v5636 = vpop.permute.xlu0 %5635
  %5637 = vrot.lane.b32.xlu0 %v3397, 32
  %v5638 = vpop.permute.xlu0 %5637
  %5639 = vrot.lane.b32.xlu0 %v3400, 32
  %v5640 = vpop.permute.xlu0 %5639
  %5641 = vrot.lane.b32.xlu0 %v3403, 32
  %v5642 = vpop.permute.xlu0 %5641
  %5643 = vrot.lane.b32.xlu0 %v3406, 32
  %v5644 = vpop.permute.xlu0 %5643
  %5645 = vrot.lane.b32.xlu0 %v3409, 32
  %v5646 = vpop.permute.xlu0 %5645
  %5647 = vrot.lane.b32.xlu0 %v3412, 32
  %v5648 = vpop.permute.xlu0 %5647
  %5649 = vrot.lane.b32.xlu0 %v4589, 32
  %v5650 = vpop.permute.xlu0 %5649
  %5651 = vrot.lane.b32.xlu0 %v5541, 32
  %v5652 = vpop.permute.xlu0 %5651
  %5653 = vrot.lane.b32.xlu0 %v3421, 32
  %v5654 = vpop.permute.xlu0 %5653
  %5655 = vrot.lane.b32.xlu0 %v3424, 32
  %v5656 = vpop.permute.xlu0 %5655
  %5657 = vrot.lane.b32.xlu0 %v3427, 32
  %v5658 = vpop.permute.xlu0 %5657
  %5659 = vrot.lane.b32.xlu0 %v3430, 32
  %v5660 = vpop.permute.xlu0 %5659
  %5661 = vrot.lane.b32.xlu0 %v3433, 32
  %v5662 = vpop.permute.xlu0 %5661
  %5663 = vrot.lane.b32.xlu0 %v3436, 32
  %v5664 = vpop.permute.xlu0 %5663
  %5665 = vrot.lane.b32.xlu0 %v3439, 32
  %v5666 = vpop.permute.xlu0 %5665
  %5667 = vrot.lane.b32.xlu0 %v3442, 32
  %v5668 = vpop.permute.xlu0 %5667
  %5669 = vrot.lane.b32.xlu0 %v3445, 32
  %v5670 = vpop.permute.xlu0 %5669
  %5671 = vrot.lane.b32.xlu0 %v3448, 32
  %v5672 = vpop.permute.xlu0 %5671
  %5673 = vrot.lane.b32.xlu0 %v3451, 32
  %v5674 = vpop.permute.xlu0 %5673
  %5675 = vrot.lane.b32.xlu0 %v3454, 32
  %v5676 = vpop.permute.xlu0 %5675
  %5677 = vrot.lane.b32.xlu0 %v3457, 32
  %v5678 = vpop.permute.xlu0 %5677
  %5679 = vrot.lane.b32.xlu0 %v3460, 32
  %v5680 = vpop.permute.xlu0 %5679
  %5681 = vrot.lane.b32.xlu0 %v4592, 32
  %v5682 = vpop.permute.xlu0 %5681
  %5683 = vrot.lane.b32.xlu0 %v5544, 32
  %v5684 = vpop.permute.xlu0 %5683
  %5685 = vrot.lane.b32.xlu0 %v3469, 32
  %v5686 = vpop.permute.xlu0 %5685
  %5687 = vrot.lane.b32.xlu0 %v3472, 32
  %v5688 = vpop.permute.xlu0 %5687
  %5689 = vrot.lane.b32.xlu0 %v3475, 32
  %v5690 = vpop.permute.xlu0 %5689
  %5691 = vrot.lane.b32.xlu0 %v3478, 32
  %v5692 = vpop.permute.xlu0 %5691
  %5693 = vrot.lane.b32.xlu0 %v3481, 32
  %v5694 = vpop.permute.xlu0 %5693
  %5695 = vrot.lane.b32.xlu0 %v3484, 32
  %v5696 = vpop.permute.xlu0 %5695
  %5697 = vrot.lane.b32.xlu0 %v3487, 32
  %v5698 = vpop.permute.xlu0 %5697
  %5699 = vrot.lane.b32.xlu0 %v3490, 32
  %v5700 = vpop.permute.xlu0 %5699
  %5701 = vrot.lane.b32.xlu0 %v3493, 32
  %v5702 = vpop.permute.xlu0 %5701
  %5703 = vrot.lane.b32.xlu0 %v3496, 32
  %v5704 = vpop.permute.xlu0 %5703
  %5705 = vrot.lane.b32.xlu0 %v3499, 32
  %v5706 = vpop.permute.xlu0 %5705
  %5707 = vrot.lane.b32.xlu0 %v3502, 32
  %v5708 = vpop.permute.xlu0 %5707
  %5709 = vrot.lane.b32.xlu0 %v3505, 32
  %v5710 = vpop.permute.xlu0 %5709
  %5711 = vrot.lane.b32.xlu0 %v3508, 32
  %v5712 = vpop.permute.xlu0 %5711
  %5713 = vrot.lane.b32.xlu0 %v4595, 32
  %v5714 = vpop.permute.xlu0 %5713
  %5715 = vrot.lane.b32.xlu0 %v5547, 32
  %v5716 = vpop.permute.xlu0 %5715
  %5717 = vrot.lane.b32.xlu0 %v3517, 32
  %v5718 = vpop.permute.xlu0 %5717
  %5719 = vrot.lane.b32.xlu0 %v3520, 32
  %v5720 = vpop.permute.xlu0 %5719
  %5721 = vrot.lane.b32.xlu0 %v3523, 32
  %v5722 = vpop.permute.xlu0 %5721
  %5723 = vrot.lane.b32.xlu0 %v3526, 32
  %v5724 = vpop.permute.xlu0 %5723
  %5725 = vrot.lane.b32.xlu0 %v3529, 32
  %v5726 = vpop.permute.xlu0 %5725
  %5727 = vrot.lane.b32.xlu0 %v3532, 32
  %v5728 = vpop.permute.xlu0 %5727
  %5729 = vrot.lane.b32.xlu0 %v3535, 32
  %v5730 = vpop.permute.xlu0 %5729
  %5731 = vrot.lane.b32.xlu0 %v3538, 32
  %v5732 = vpop.permute.xlu0 %5731
  %5733 = vrot.lane.b32.xlu0 %v3541, 32
  %v5734 = vpop.permute.xlu0 %5733
  %5735 = vrot.lane.b32.xlu0 %v3544, 32
  %v5736 = vpop.permute.xlu0 %5735
  %5737 = vrot.lane.b32.xlu0 %v3547, 32
  %v5738 = vpop.permute.xlu0 %5737
  %5739 = vrot.lane.b32.xlu0 %v3550, 32
  %v5740 = vpop.permute.xlu0 %5739
  %5741 = vrot.lane.b32.xlu0 %v3553, 32
  %v5742 = vpop.permute.xlu0 %5741
  %5743 = vrot.lane.b32.xlu0 %v3556, 32
  %v5744 = vpop.permute.xlu0 %5743
  %5745 = vrot.lane.b32.xlu0 %v4598, 32
  %v5746 = vpop.permute.xlu0 %5745
  %5747 = vrot.lane.b32.xlu0 %v5550, 32
  %v5748 = vpop.permute.xlu0 %5747
  %5749 = vrot.lane.b32.xlu0 %v3565, 32
  %v5750 = vpop.permute.xlu0 %5749
  %5751 = vrot.lane.b32.xlu0 %v3568, 32
  %v5752 = vpop.permute.xlu0 %5751
  %5753 = vrot.lane.b32.xlu0 %v3571, 32
  %v5754 = vpop.permute.xlu0 %5753
  %5755 = vrot.lane.b32.xlu0 %v3574, 32
  %v5756 = vpop.permute.xlu0 %5755
  %5757 = vrot.lane.b32.xlu0 %v3577, 32
  %v5758 = vpop.permute.xlu0 %5757
  %5759 = vrot.lane.b32.xlu0 %v3580, 32
  %v5760 = vpop.permute.xlu0 %5759
  %5761 = vrot.lane.b32.xlu0 %v3583, 32
  %v5762 = vpop.permute.xlu0 %5761
  %5763 = vrot.lane.b32.xlu0 %v3586, 32
  %v5764 = vpop.permute.xlu0 %5763
  %5765 = vrot.lane.b32.xlu0 %v3589, 32
  %v5766 = vpop.permute.xlu0 %5765
  %5767 = vrot.lane.b32.xlu0 %v3592, 32
  %v5768 = vpop.permute.xlu0 %5767
  %5769 = vrot.lane.b32.xlu0 %v3595, 32
  %v5770 = vpop.permute.xlu0 %5769
  %5771 = vrot.lane.b32.xlu0 %v3598, 32
  %v5772 = vpop.permute.xlu0 %5771
  %5773 = vrot.lane.b32.xlu0 %v3601, 32
  %v5774 = vpop.permute.xlu0 %5773
  %5775 = vrot.lane.b32.xlu0 %v3604, 32
  %v5776 = vpop.permute.xlu0 %5775
  %5777 = vrot.lane.b32.xlu0 %v4601, 32
  %v5778 = vpop.permute.xlu0 %5777
  %5779 = vrot.lane.b32.xlu0 %v5553, 32
  %v5780 = vpop.permute.xlu0 %5779
  %5781 = vrot.lane.b32.xlu0 %v3613, 32
  %v5782 = vpop.permute.xlu0 %5781
  %5783 = vrot.lane.b32.xlu0 %v3616, 32
  %v5784 = vpop.permute.xlu0 %5783
  %5785 = vrot.lane.b32.xlu0 %v3619, 32
  %v5786 = vpop.permute.xlu0 %5785
  %5787 = vrot.lane.b32.xlu0 %v3622, 32
  %v5788 = vpop.permute.xlu0 %5787
  %5789 = vrot.lane.b32.xlu0 %v3625, 32
  %v5790 = vpop.permute.xlu0 %5789
  %5791 = vrot.lane.b32.xlu0 %v3628, 32
  %v5792 = vpop.permute.xlu0 %5791
  %5793 = vrot.lane.b32.xlu0 %v3631, 32
  %v5794 = vpop.permute.xlu0 %5793
  %5795 = vrot.lane.b32.xlu0 %v3634, 32
  %v5796 = vpop.permute.xlu0 %5795
  %5797 = vrot.lane.b32.xlu0 %v3637, 32
  %v5798 = vpop.permute.xlu0 %5797
  %5799 = vrot.lane.b32.xlu0 %v3640, 32
  %v5800 = vpop.permute.xlu0 %5799
  %5801 = vrot.lane.b32.xlu0 %v3643, 32
  %v5802 = vpop.permute.xlu0 %5801
  %5803 = vrot.lane.b32.xlu0 %v3646, 32
  %v5804 = vpop.permute.xlu0 %5803
  %5805 = vrot.lane.b32.xlu0 %v3649, 32
  %v5806 = vpop.permute.xlu0 %5805
  %5807 = vrot.lane.b32.xlu0 %v3652, 32
  %v5808 = vpop.permute.xlu0 %5807
  %5809 = vrot.lane.b32.xlu0 %v4604, 32
  %v5810 = vpop.permute.xlu0 %5809
  %5811 = vrot.lane.b32.xlu0 %v5556, 32
  %v5812 = vpop.permute.xlu0 %5811
  %vm5813 = vcmask 31744
  %v5815 = vsel %vm5813, %v963, %v3013
  %v5817 = vsel %vm5813, %v964, %v3015
  %v5819 = vsel %vm5813, %v965, %v3017
  %v5821 = vsel %vm5813, %v966, %v3019
  %v5823 = vsel %vm5813, %v967, %v3021
  %v5825 = vsel %vm5813, %v968, %v3023
  %v5827 = vsel %vm5813, %v969, %v3025
  %v5829 = vsel %vm5813, %v970, %v3027
  %v5831 = vsel %vm5813, %v971, %v3029
  %v5833 = vsel %vm5813, %v972, %v3031
  %v5835 = vsel %vm5813, %v973, %v3033
  %v5837 = vsel %vm5813, %v974, %v3035
  %v5839 = vsel %vm5813, %v975, %v3037
  %v5841 = vsel %vm5813, %v976, %v3039
  %v5843 = vsel %vm5813, %v977, %v3041
  %v5845 = vsel %vm5813, %v978, %v3043
  %v5847 = vsel %vm5813, %v979, %v3045
  %v5849 = vsel %vm5813, %v980, %v3047
  %v5851 = vsel %vm5813, %v981, %v3049
  %v5853 = vsel %vm5813, %v982, %v3051
  %v5855 = vsel %vm5813, %v983, %v3053
  %v5857 = vsel %vm5813, %v984, %v3055
  %v5859 = vsel %vm5813, %v985, %v3057
  %v5861 = vsel %vm5813, %v986, %v3059
  %v5863 = vsel %vm5813, %v987, %v3061
  %v5865 = vsel %vm5813, %v988, %v3063
  %v5867 = vsel %vm5813, %v989, %v3065
  %v5869 = vsel %vm5813, %v990, %v3067
  %v5871 = vsel %vm5813, %v991, %v3069
  %v5873 = vsel %vm5813, %v992, %v3071
  %v5875 = vsel %vm5813, %v993, %v3073
  %v5877 = vsel %vm5813, %v994, %v3075
  %v5879 = vsel %vm5813, %v995, %v3077
  %v5881 = vsel %vm5813, %v996, %v3079
  %v5883 = vsel %vm5813, %v997, %v3081
  %v5885 = vsel %vm5813, %v998, %v3083
  %v5887 = vsel %vm5813, %v999, %v3085
  %v5889 = vsel %vm5813, %v1000, %v3087
  %v5891 = vsel %vm5813, %v1001, %v3089
  %v5893 = vsel %vm5813, %v1002, %v3091
  %v5895 = vsel %vm5813, %v1003, %v3093
  %v5897 = vsel %vm5813, %v1004, %v3095
  %v5899 = vsel %vm5813, %v1005, %v3097
  %v5901 = vsel %vm5813, %v1006, %v3099
  %v5903 = vsel %vm5813, %v1007, %v3101
  %v5905 = vsel %vm5813, %v1008, %v3103
  %v5907 = vsel %vm5813, %v1009, %v3105
  %v5909 = vsel %vm5813, %v1010, %v3107
  %v5911 = vsel %vm5813, %v1011, %v3109
  %v5913 = vsel %vm5813, %v1012, %v3111
  %v5915 = vsel %vm5813, %v1013, %v3113
  %v5917 = vsel %vm5813, %v1014, %v3115
  %v5919 = vsel %vm5813, %v1015, %v3117
  %v5921 = vsel %vm5813, %v1016, %v3119
  %v5923 = vsel %vm5813, %v1017, %v3121
  %v5925 = vsel %vm5813, %v1018, %v3123
  %v5927 = vsel %vm5813, %v1019, %v3125
  %v5929 = vsel %vm5813, %v1020, %v3127
  %v5931 = vsel %vm5813, %v1021, %v3129
  %v5933 = vsel %vm5813, %v1022, %v3131
  %v5935 = vsel %vm5813, %v1023, %v3133
  %v5937 = vsel %vm5813, %v1024, %v3135
  %v5939 = vsel %vm5813, %v1025, %v3137
  %v5941 = vsel %vm5813, %v1026, %v3139
  %v5943 = vsel %vm5813, %v1027, %v3141
  %v5945 = vsel %vm5813, %v1028, %v3143
  %v5947 = vsel %vm5813, %v1029, %v3145
  %v5949 = vsel %vm5813, %v1030, %v3147
  %v5951 = vsel %vm5813, %v1031, %v3149
  %v5953 = vsel %vm5813, %v1032, %v3151
  %v5955 = vsel %vm5813, %v1033, %v3153
  %v5957 = vsel %vm5813, %v1034, %v3155
  %v5959 = vsel %vm5813, %v1035, %v3157
  %v5961 = vsel %vm5813, %v1036, %v3159
  %v5963 = vsel %vm5813, %v1037, %v3161
  %v5965 = vsel %vm5813, %v1038, %v3163
  %v5967 = vsel %vm5813, %v1039, %v3165
  %v5969 = vsel %vm5813, %v1040, %v3167
  %v5971 = vsel %vm5813, %v1041, %v3169
  %v5973 = vsel %vm5813, %v1042, %v3171
  %v5975 = vsel %vm5813, %v1043, %v3173
  %v5977 = vsel %vm5813, %v1044, %v3175
  %v5979 = vsel %vm5813, %v1045, %v3177
  %v5981 = vsel %vm5813, %v1046, %v3179
  %v5983 = vsel %vm5813, %v1047, %v3181
  %v5985 = vsel %vm5813, %v1048, %v3183
  %v5987 = vsel %vm5813, %v1049, %v3185
  %v5989 = vsel %vm5813, %v1050, %v3187
  %v5991 = vsel %vm5813, %v1051, %v3189
  %v5993 = vsel %vm5813, %v1052, %v3191
  %v5995 = vsel %vm5813, %v1053, %v3193
  %v5997 = vsel %vm5813, %v1054, %v3195
  %v5999 = vsel %vm5813, %v1055, %v3197
  %v6001 = vsel %vm5813, %v1056, %v3199
  %v6003 = vsel %vm5813, %v1057, %v3201
  %v6005 = vsel %vm5813, %v1058, %v3203
  %v6007 = vsel %vm5813, %v1059, %v3205
  %v6009 = vsel %vm5813, %v1060, %v3207
  %v6011 = vsel %vm5813, %v1061, %v3209
  %v6013 = vsel %vm5813, %v1062, %v3211
  %v6015 = vsel %vm5813, %v1063, %v3213
  %v6017 = vsel %vm5813, %v1064, %v3215
  %v6019 = vsel %vm5813, %v1065, %v3217
  %v6021 = vsel %vm5813, %v1066, %v3219
  %v6023 = vsel %vm5813, %v1067, %v3221
  %v6025 = vsel %vm5813, %v1068, %v3223
  %v6027 = vsel %vm5813, %v1069, %v3225
  %v6029 = vsel %vm5813, %v1070, %v3227
  %v6031 = vsel %vm5813, %v1071, %v3229
  %v6033 = vsel %vm5813, %v1072, %v3231
  %v6035 = vsel %vm5813, %v1073, %v3233
  %v6037 = vsel %vm5813, %v1074, %v3235
  %v6039 = vsel %vm5813, %v1075, %v3237
  %v6041 = vsel %vm5813, %v1076, %v3239
  %v6043 = vsel %vm5813, %v1077, %v3241
  %v6045 = vsel %vm5813, %v1078, %v3243
  %v6047 = vsel %vm5813, %v1079, %v3245
  %v6049 = vsel %vm5813, %v1080, %v3247
  %v6051 = vsel %vm5813, %v1081, %v3249
  %v6053 = vsel %vm5813, %v1082, %v3251
  %v6055 = vsel %vm5813, %v1083, %v3253
  %v6057 = vsel %vm5813, %v1084, %v3255
  %v6059 = vsel %vm5813, %v1085, %v3257
  %v6061 = vsel %vm5813, %v1086, %v3259
  %v6063 = vsel %vm5813, %v1087, %v3261
  %v6065 = vsel %vm5813, %v1088, %v3263
  %v6067 = vsel %vm5813, %v1089, %v3265
  %v6069 = vsel %vm5813, %v1090, %v3267
  %vm6070 = vcmask 64512
  %v6072 = vsel %vm6070, %v5815, %v3654
  %v6074 = vsel %vm6070, %v5817, %v3656
  %v6076 = vsel %vm6070, %v5819, %v3658
  %v6078 = vsel %vm6070, %v5821, %v3660
  %v6080 = vsel %vm6070, %v5823, %v3662
  %v6082 = vsel %vm6070, %v5825, %v3664
  %v6084 = vsel %vm6070, %v5827, %v3666
  %v6086 = vsel %vm6070, %v5829, %v3668
  %v6088 = vsel %vm6070, %v5831, %v3670
  %v6090 = vsel %vm6070, %v5833, %v3672
  %v6092 = vsel %vm6070, %v5835, %v3674
  %v6094 = vsel %vm6070, %v5837, %v3676
  %v6096 = vsel %vm6070, %v5839, %v3678
  %v6098 = vsel %vm6070, %v5841, %v3680
  %v6100 = vsel %vm6070, %v5843, %v3682
  %v6102 = vsel %vm6070, %v5845, %v3684
  %v6104 = vsel %vm6070, %v5847, %v3686
  %v6106 = vsel %vm6070, %v5849, %v3688
  %v6108 = vsel %vm6070, %v5851, %v3690
  %v6110 = vsel %vm6070, %v5853, %v3692
  %v6112 = vsel %vm6070, %v5855, %v3694
  %v6114 = vsel %vm6070, %v5857, %v3696
  %v6116 = vsel %vm6070, %v5859, %v3698
  %v6118 = vsel %vm6070, %v5861, %v3700
  %v6120 = vsel %vm6070, %v5863, %v3702
  %v6122 = vsel %vm6070, %v5865, %v3704
  %v6124 = vsel %vm6070, %v5867, %v3706
  %v6126 = vsel %vm6070, %v5869, %v3708
  %v6128 = vsel %vm6070, %v5871, %v3710
  %v6130 = vsel %vm6070, %v5873, %v3712
  %v6132 = vsel %vm6070, %v5875, %v3714
  %v6134 = vsel %vm6070, %v5877, %v3716
  %v6136 = vsel %vm6070, %v5879, %v3718
  %v6138 = vsel %vm6070, %v5881, %v3720
  %v6140 = vsel %vm6070, %v5883, %v3722
  %v6142 = vsel %vm6070, %v5885, %v3724
  %v6144 = vsel %vm6070, %v5887, %v3726
  %v6146 = vsel %vm6070, %v5889, %v3728
  %v6148 = vsel %vm6070, %v5891, %v3730
  %v6150 = vsel %vm6070, %v5893, %v3732
  %v6152 = vsel %vm6070, %v5895, %v3734
  %v6154 = vsel %vm6070, %v5897, %v3736
  %v6156 = vsel %vm6070, %v5899, %v3738
  %v6158 = vsel %vm6070, %v5901, %v3740
  %v6160 = vsel %vm6070, %v5903, %v3742
  %v6162 = vsel %vm6070, %v5905, %v3744
  %v6164 = vsel %vm6070, %v5907, %v3746
  %v6166 = vsel %vm6070, %v5909, %v3748
  %v6168 = vsel %vm6070, %v5911, %v3750
  %v6170 = vsel %vm6070, %v5913, %v3752
  %v6172 = vsel %vm6070, %v5915, %v3754
  %v6174 = vsel %vm6070, %v5917, %v3756
  %v6176 = vsel %vm6070, %v5919, %v3758
  %v6178 = vsel %vm6070, %v5921, %v3760
  %v6180 = vsel %vm6070, %v5923, %v3762
  %v6182 = vsel %vm6070, %v5925, %v3764
  %v6184 = vsel %vm6070, %v5927, %v3766
  %v6186 = vsel %vm6070, %v5929, %v3768
  %v6188 = vsel %vm6070, %v5931, %v3770
  %v6190 = vsel %vm6070, %v5933, %v3772
  %v6192 = vsel %vm6070, %v5935, %v3774
  %v6194 = vsel %vm6070, %v5937, %v3776
  %v6196 = vsel %vm6070, %v5939, %v3778
  %v6198 = vsel %vm6070, %v5941, %v3780
  %v6200 = vsel %vm6070, %v5943, %v3782
  %v6202 = vsel %vm6070, %v5945, %v3784
  %v6204 = vsel %vm6070, %v5947, %v3786
  %v6206 = vsel %vm6070, %v5949, %v3788
  %v6208 = vsel %vm6070, %v5951, %v3790
  %v6210 = vsel %vm6070, %v5953, %v3792
  %v6212 = vsel %vm6070, %v5955, %v3794
  %v6214 = vsel %vm6070, %v5957, %v3796
  %v6216 = vsel %vm6070, %v5959, %v3798
  %v6218 = vsel %vm6070, %v5961, %v3800
  %v6220 = vsel %vm6070, %v5963, %v3802
  %v6222 = vsel %vm6070, %v5965, %v3804
  %v6224 = vsel %vm6070, %v5967, %v3806
  %v6226 = vsel %vm6070, %v5969, %v3808
  %v6228 = vsel %vm6070, %v5971, %v3810
  %v6230 = vsel %vm6070, %v5973, %v3812
  %v6232 = vsel %vm6070, %v5975, %v3814
  %v6234 = vsel %vm6070, %v5977, %v3816
  %v6236 = vsel %vm6070, %v5979, %v3818
  %v6238 = vsel %vm6070, %v5981, %v3820
  %v6240 = vsel %vm6070, %v5983, %v3822
  %v6242 = vsel %vm6070, %v5985, %v3824
  %v6244 = vsel %vm6070, %v5987, %v3826
  %v6246 = vsel %vm6070, %v5989, %v3828
  %v6248 = vsel %vm6070, %v5991, %v3830
  %v6250 = vsel %vm6070, %v5993, %v3832
  %v6252 = vsel %vm6070, %v5995, %v3834
  %v6254 = vsel %vm6070, %v5997, %v3836
  %v6256 = vsel %vm6070, %v5999, %v3838
  %v6258 = vsel %vm6070, %v6001, %v3840
  %v6260 = vsel %vm6070, %v6003, %v3842
  %v6262 = vsel %vm6070, %v6005, %v3844
  %v6264 = vsel %vm6070, %v6007, %v3846
  %v6266 = vsel %vm6070, %v6009, %v3848
  %v6268 = vsel %vm6070, %v6011, %v3850
  %v6270 = vsel %vm6070, %v6013, %v3852
  %v6272 = vsel %vm6070, %v6015, %v3854
  %v6274 = vsel %vm6070, %v6017, %v3856
  %v6276 = vsel %vm6070, %v6019, %v3858
  %v6278 = vsel %vm6070, %v6021, %v3860
  %v6280 = vsel %vm6070, %v6023, %v3862
  %v6282 = vsel %vm6070, %v6025, %v3864
  %v6284 = vsel %vm6070, %v6027, %v3866
  %v6286 = vsel %vm6070, %v6029, %v3868
  %v6288 = vsel %vm6070, %v6031, %v3870
  %v6290 = vsel %vm6070, %v6033, %v3872
  %v6292 = vsel %vm6070, %v6035, %v3874
  %v6294 = vsel %vm6070, %v6037, %v3876
  %v6296 = vsel %vm6070, %v6039, %v3878
  %v6298 = vsel %vm6070, %v6041, %v3880
  %v6300 = vsel %vm6070, %v6043, %v3882
  %v6302 = vsel %vm6070, %v6045, %v3884
  %v6304 = vsel %vm6070, %v6047, %v3886
  %v6306 = vsel %vm6070, %v6049, %v3888
  %v6308 = vsel %vm6070, %v6051, %v3890
  %v6310 = vsel %vm6070, %v6053, %v3892
  %v6312 = vsel %vm6070, %v6055, %v3894
  %v6314 = vsel %vm6070, %v6057, %v3896
  %v6316 = vsel %vm6070, %v6059, %v3898
  %v6318 = vsel %vm6070, %v6061, %v3900
  %v6320 = vsel %vm6070, %v6063, %v3902
  %v6322 = vsel %vm6070, %v6065, %v3904
  %v6324 = vsel %vm6070, %v6067, %v3906
  %v6326 = vsel %vm6070, %v6069, %v3908
  %vm6327 = vcmask 97280
  %v6329 = vsel %vm6327, %v6072, %v3950
  %v6331 = vsel %vm6327, %v6074, %v3952
  %v6333 = vsel %vm6327, %v6076, %v3954
  %v6335 = vsel %vm6327, %v6078, %v3956
  %v6337 = vsel %vm6327, %v6080, %v3958
  %v6339 = vsel %vm6327, %v6082, %v3960
  %v6341 = vsel %vm6327, %v6084, %v3962
  %v6343 = vsel %vm6327, %v6086, %v3964
  %v6345 = vsel %vm6327, %v6088, %v3966
  %v6347 = vsel %vm6327, %v6090, %v3968
  %v6349 = vsel %vm6327, %v6092, %v3970
  %v6351 = vsel %vm6327, %v6094, %v3972
  %v6353 = vsel %vm6327, %v6096, %v3974
  %v6355 = vsel %vm6327, %v6098, %v3976
  %v6357 = vsel %vm6327, %v6100, %v3978
  %v6359 = vsel %vm6327, %v6102, %v3980
  %v6361 = vsel %vm6327, %v6104, %v3982
  %v6363 = vsel %vm6327, %v6106, %v3984
  %v6365 = vsel %vm6327, %v6108, %v3986
  %v6367 = vsel %vm6327, %v6110, %v3988
  %v6369 = vsel %vm6327, %v6112, %v3990
  %v6371 = vsel %vm6327, %v6114, %v3992
  %v6373 = vsel %vm6327, %v6116, %v3994
  %v6375 = vsel %vm6327, %v6118, %v3996
  %v6377 = vsel %vm6327, %v6120, %v3998
  %v6379 = vsel %vm6327, %v6122, %v4000
  %v6381 = vsel %vm6327, %v6124, %v4002
  %v6383 = vsel %vm6327, %v6126, %v4004
  %v6385 = vsel %vm6327, %v6128, %v4006
  %v6387 = vsel %vm6327, %v6130, %v4008
  %v6389 = vsel %vm6327, %v6132, %v4010
  %v6391 = vsel %vm6327, %v6134, %v4012
  %v6393 = vsel %vm6327, %v6136, %v4014
  %v6395 = vsel %vm6327, %v6138, %v4016
  %v6397 = vsel %vm6327, %v6140, %v4018
  %v6399 = vsel %vm6327, %v6142, %v4020
  %v6401 = vsel %vm6327, %v6144, %v4022
  %v6403 = vsel %vm6327, %v6146, %v4024
  %v6405 = vsel %vm6327, %v6148, %v4026
  %v6407 = vsel %vm6327, %v6150, %v4028
  %v6409 = vsel %vm6327, %v6152, %v4030
  %v6411 = vsel %vm6327, %v6154, %v4032
  %v6413 = vsel %vm6327, %v6156, %v4034
  %v6415 = vsel %vm6327, %v6158, %v4036
  %v6417 = vsel %vm6327, %v6160, %v4038
  %v6419 = vsel %vm6327, %v6162, %v4040
  %v6421 = vsel %vm6327, %v6164, %v4042
  %v6423 = vsel %vm6327, %v6166, %v4044
  %v6425 = vsel %vm6327, %v6168, %v4046
  %v6427 = vsel %vm6327, %v6170, %v4048
  %v6429 = vsel %vm6327, %v6172, %v4050
  %v6431 = vsel %vm6327, %v6174, %v4052
  %v6433 = vsel %vm6327, %v6176, %v4054
  %v6435 = vsel %vm6327, %v6178, %v4056
  %v6437 = vsel %vm6327, %v6180, %v4058
  %v6439 = vsel %vm6327, %v6182, %v4060
  %v6441 = vsel %vm6327, %v6184, %v4062
  %v6443 = vsel %vm6327, %v6186, %v4064
  %v6445 = vsel %vm6327, %v6188, %v4066
  %v6447 = vsel %vm6327, %v6190, %v4068
  %v6449 = vsel %vm6327, %v6192, %v4070
  %v6451 = vsel %vm6327, %v6194, %v4072
  %v6453 = vsel %vm6327, %v6196, %v4074
  %v6455 = vsel %vm6327, %v6198, %v4076
  %v6457 = vsel %vm6327, %v6200, %v4078
  %v6459 = vsel %vm6327, %v6202, %v4080
  %v6461 = vsel %vm6327, %v6204, %v4082
  %v6463 = vsel %vm6327, %v6206, %v4084
  %v6465 = vsel %vm6327, %v6208, %v4086
  %v6467 = vsel %vm6327, %v6210, %v4088
  %v6469 = vsel %vm6327, %v6212, %v4090
  %v6471 = vsel %vm6327, %v6214, %v4092
  %v6473 = vsel %vm6327, %v6216, %v4094
  %v6475 = vsel %vm6327, %v6218, %v4096
  %v6477 = vsel %vm6327, %v6220, %v4098
  %v6479 = vsel %vm6327, %v6222, %v4100
  %v6481 = vsel %vm6327, %v6224, %v4102
  %v6483 = vsel %vm6327, %v6226, %v4104
  %v6485 = vsel %vm6327, %v6228, %v4106
  %v6487 = vsel %vm6327, %v6230, %v4108
  %v6489 = vsel %vm6327, %v6232, %v4110
  %v6491 = vsel %vm6327, %v6234, %v4112
  %v6493 = vsel %vm6327, %v6236, %v4114
  %v6495 = vsel %vm6327, %v6238, %v4116
  %v6497 = vsel %vm6327, %v6240, %v4118
  %v6499 = vsel %vm6327, %v6242, %v4120
  %v6501 = vsel %vm6327, %v6244, %v4122
  %v6503 = vsel %vm6327, %v6246, %v4124
  %v6505 = vsel %vm6327, %v6248, %v4126
  %v6507 = vsel %vm6327, %v6250, %v4128
  %v6509 = vsel %vm6327, %v6252, %v4130
  %v6511 = vsel %vm6327, %v6254, %v4132
  %v6513 = vsel %vm6327, %v6256, %v4134
  %v6515 = vsel %vm6327, %v6258, %v4136
  %v6517 = vsel %vm6327, %v6260, %v4138
  %v6519 = vsel %vm6327, %v6262, %v4140
  %v6521 = vsel %vm6327, %v6264, %v4142
  %v6523 = vsel %vm6327, %v6266, %v4144
  %v6525 = vsel %vm6327, %v6268, %v4146
  %v6527 = vsel %vm6327, %v6270, %v4148
  %v6529 = vsel %vm6327, %v6272, %v4150
  %v6531 = vsel %vm6327, %v6274, %v4152
  %v6533 = vsel %vm6327, %v6276, %v4154
  %v6535 = vsel %vm6327, %v6278, %v4156
  %v6537 = vsel %vm6327, %v6280, %v4158
  %v6539 = vsel %vm6327, %v6282, %v4160
  %v6541 = vsel %vm6327, %v6284, %v4162
  %v6543 = vsel %vm6327, %v6286, %v4164
  %v6545 = vsel %vm6327, %v6288, %v4166
  %v6547 = vsel %vm6327, %v6290, %v4168
  %v6549 = vsel %vm6327, %v6292, %v4170
  %v6551 = vsel %vm6327, %v6294, %v4172
  %v6553 = vsel %vm6327, %v6296, %v4174
  %v6555 = vsel %vm6327, %v6298, %v4176
  %v6557 = vsel %vm6327, %v6300, %v4178
  %v6559 = vsel %vm6327, %v6302, %v4180
  %v6561 = vsel %vm6327, %v6304, %v4182
  %v6563 = vsel %vm6327, %v6306, %v4184
  %v6565 = vsel %vm6327, %v6308, %v4186
  %v6567 = vsel %vm6327, %v6310, %v4188
  %v6569 = vsel %vm6327, %v6312, %v4190
  %v6571 = vsel %vm6327, %v6314, %v4192
  %v6573 = vsel %vm6327, %v6316, %v4194
  %v6575 = vsel %vm6327, %v6318, %v4196
  %v6577 = vsel %vm6327, %v6320, %v4198
  %v6579 = vsel %vm6327, %v6322, %v4200
  %v6581 = vsel %vm6327, %v6324, %v4202
  %v6583 = vsel %vm6327, %v6326, %v4204
  %vm6584 = vcmask 130048
  %v6586 = vsel %vm6584, %v6329, %v4326
  %v6588 = vsel %vm6584, %v6331, %v4328
  %v6590 = vsel %vm6584, %v6333, %v4330
  %v6592 = vsel %vm6584, %v6335, %v4332
  %v6594 = vsel %vm6584, %v6337, %v4334
  %v6596 = vsel %vm6584, %v6339, %v4336
  %v6598 = vsel %vm6584, %v6341, %v4338
  %v6600 = vsel %vm6584, %v6343, %v4340
  %v6602 = vsel %vm6584, %v6345, %v4342
  %v6604 = vsel %vm6584, %v6347, %v4344
  %v6606 = vsel %vm6584, %v6349, %v4346
  %v6608 = vsel %vm6584, %v6351, %v4348
  %v6610 = vsel %vm6584, %v6353, %v4350
  %v6612 = vsel %vm6584, %v6355, %v4352
  %v6614 = vsel %vm6584, %v6357, %v4354
  %v6616 = vsel %vm6584, %v6359, %v4356
  %v6618 = vsel %vm6584, %v6361, %v4358
  %v6620 = vsel %vm6584, %v6363, %v4360
  %v6622 = vsel %vm6584, %v6365, %v4362
  %v6624 = vsel %vm6584, %v6367, %v4364
  %v6626 = vsel %vm6584, %v6369, %v4366
  %v6628 = vsel %vm6584, %v6371, %v4368
  %v6630 = vsel %vm6584, %v6373, %v4370
  %v6632 = vsel %vm6584, %v6375, %v4372
  %v6634 = vsel %vm6584, %v6377, %v4374
  %v6636 = vsel %vm6584, %v6379, %v4376
  %v6638 = vsel %vm6584, %v6381, %v4378
  %v6640 = vsel %vm6584, %v6383, %v4380
  %v6642 = vsel %vm6584, %v6385, %v4382
  %v6644 = vsel %vm6584, %v6387, %v4384
  %v6646 = vsel %vm6584, %v6389, %v4386
  %v6648 = vsel %vm6584, %v6391, %v4388
  %v6650 = vsel %vm6584, %v6393, %v4390
  %v6652 = vsel %vm6584, %v6395, %v4392
  %v6654 = vsel %vm6584, %v6397, %v4394
  %v6656 = vsel %vm6584, %v6399, %v4396
  %v6658 = vsel %vm6584, %v6401, %v4398
  %v6660 = vsel %vm6584, %v6403, %v4400
  %v6662 = vsel %vm6584, %v6405, %v4402
  %v6664 = vsel %vm6584, %v6407, %v4404
  %v6666 = vsel %vm6584, %v6409, %v4406
  %v6668 = vsel %vm6584, %v6411, %v4408
  %v6670 = vsel %vm6584, %v6413, %v4410
  %v6672 = vsel %vm6584, %v6415, %v4412
  %v6674 = vsel %vm6584, %v6417, %v4414
  %v6676 = vsel %vm6584, %v6419, %v4416
  %v6678 = vsel %vm6584, %v6421, %v4418
  %v6680 = vsel %vm6584, %v6423, %v4420
  %v6682 = vsel %vm6584, %v6425, %v4422
  %v6684 = vsel %vm6584, %v6427, %v4424
  %v6686 = vsel %vm6584, %v6429, %v4426
  %v6688 = vsel %vm6584, %v6431, %v4428
  %v6690 = vsel %vm6584, %v6433, %v4430
  %v6692 = vsel %vm6584, %v6435, %v4432
  %v6694 = vsel %vm6584, %v6437, %v4434
  %v6696 = vsel %vm6584, %v6439, %v4436
  %v6698 = vsel %vm6584, %v6441, %v4438
  %v6700 = vsel %vm6584, %v6443, %v4440
  %v6702 = vsel %vm6584, %v6445, %v4442
  %v6704 = vsel %vm6584, %v6447, %v4444
  %v6706 = vsel %vm6584, %v6449, %v4446
  %v6708 = vsel %vm6584, %v6451, %v4448
  %v6710 = vsel %vm6584, %v6453, %v4450
  %v6712 = vsel %vm6584, %v6455, %v4452
  %v6714 = vsel %vm6584, %v6457, %v4454
  %v6716 = vsel %vm6584, %v6459, %v4456
  %v6718 = vsel %vm6584, %v6461, %v4458
  %v6720 = vsel %vm6584, %v6463, %v4460
  %v6722 = vsel %vm6584, %v6465, %v4462
  %v6724 = vsel %vm6584, %v6467, %v4464
  %v6726 = vsel %vm6584, %v6469, %v4466
  %v6728 = vsel %vm6584, %v6471, %v4468
  %v6730 = vsel %vm6584, %v6473, %v4470
  %v6732 = vsel %vm6584, %v6475, %v4472
  %v6734 = vsel %vm6584, %v6477, %v4474
  %v6736 = vsel %vm6584, %v6479, %v4476
  %v6738 = vsel %vm6584, %v6481, %v4478
  %v6740 = vsel %vm6584, %v6483, %v4480
  %v6742 = vsel %vm6584, %v6485, %v4482
  %v6744 = vsel %vm6584, %v6487, %v4484
  %v6746 = vsel %vm6584, %v6489, %v4486
  %v6748 = vsel %vm6584, %v6491, %v4488
  %v6750 = vsel %vm6584, %v6493, %v4490
  %v6752 = vsel %vm6584, %v6495, %v4492
  %v6754 = vsel %vm6584, %v6497, %v4494
  %v6756 = vsel %vm6584, %v6499, %v4496
  %v6758 = vsel %vm6584, %v6501, %v4498
  %v6760 = vsel %vm6584, %v6503, %v4500
  %v6762 = vsel %vm6584, %v6505, %v4502
  %v6764 = vsel %vm6584, %v6507, %v4504
  %v6766 = vsel %vm6584, %v6509, %v4506
  %v6768 = vsel %vm6584, %v6511, %v4508
  %v6770 = vsel %vm6584, %v6513, %v4510
  %v6772 = vsel %vm6584, %v6515, %v4512
  %v6774 = vsel %vm6584, %v6517, %v4514
  %v6776 = vsel %vm6584, %v6519, %v4516
  %v6778 = vsel %vm6584, %v6521, %v4518
  %v6780 = vsel %vm6584, %v6523, %v4520
  %v6782 = vsel %vm6584, %v6525, %v4522
  %v6784 = vsel %vm6584, %v6527, %v4524
  %v6786 = vsel %vm6584, %v6529, %v4526
  %v6788 = vsel %vm6584, %v6531, %v4528
  %v6790 = vsel %vm6584, %v6533, %v4530
  %v6792 = vsel %vm6584, %v6535, %v4532
  %v6794 = vsel %vm6584, %v6537, %v4534
  %v6796 = vsel %vm6584, %v6539, %v4536
  %v6798 = vsel %vm6584, %v6541, %v4538
  %v6800 = vsel %vm6584, %v6543, %v4540
  %v6802 = vsel %vm6584, %v6545, %v4542
  %v6804 = vsel %vm6584, %v6547, %v4544
  %v6806 = vsel %vm6584, %v6549, %v4546
  %v6808 = vsel %vm6584, %v6551, %v4548
  %v6810 = vsel %vm6584, %v6553, %v4550
  %v6812 = vsel %vm6584, %v6555, %v4552
  %v6814 = vsel %vm6584, %v6557, %v4554
  %v6816 = vsel %vm6584, %v6559, %v4556
  %v6818 = vsel %vm6584, %v6561, %v4558
  %v6820 = vsel %vm6584, %v6563, %v4560
  %v6822 = vsel %vm6584, %v6565, %v4562
  %v6824 = vsel %vm6584, %v6567, %v4564
  %v6826 = vsel %vm6584, %v6569, %v4566
  %v6828 = vsel %vm6584, %v6571, %v4568
  %v6830 = vsel %vm6584, %v6573, %v4570
  %v6832 = vsel %vm6584, %v6575, %v4572
  %v6834 = vsel %vm6584, %v6577, %v4574
  %v6836 = vsel %vm6584, %v6579, %v4576
  %v6838 = vsel %vm6584, %v6581, %v4578
  %v6840 = vsel %vm6584, %v6583, %v4580
  %vm6841 = vcmask 162816
  %v6843 = vsel %vm6841, %v6586, %v4606
  %v6845 = vsel %vm6841, %v6588, %v4608
  %v6847 = vsel %vm6841, %v6590, %v4610
  %v6849 = vsel %vm6841, %v6592, %v4612
  %v6851 = vsel %vm6841, %v6594, %v4614
  %v6853 = vsel %vm6841, %v6596, %v4616
  %v6855 = vsel %vm6841, %v6598, %v4618
  %v6857 = vsel %vm6841, %v6600, %v4620
  %v6859 = vsel %vm6841, %v6602, %v4622
  %v6861 = vsel %vm6841, %v6604, %v4624
  %v6863 = vsel %vm6841, %v6606, %v4626
  %v6865 = vsel %vm6841, %v6608, %v4628
  %v6867 = vsel %vm6841, %v6610, %v4630
  %v6869 = vsel %vm6841, %v6612, %v4632
  %v6871 = vsel %vm6841, %v6614, %v4634
  %v6873 = vsel %vm6841, %v6616, %v4636
  %v6875 = vsel %vm6841, %v6618, %v4638
  %v6877 = vsel %vm6841, %v6620, %v4640
  %v6879 = vsel %vm6841, %v6622, %v4642
  %v6881 = vsel %vm6841, %v6624, %v4644
  %v6883 = vsel %vm6841, %v6626, %v4646
  %v6885 = vsel %vm6841, %v6628, %v4648
  %v6887 = vsel %vm6841, %v6630, %v4650
  %v6889 = vsel %vm6841, %v6632, %v4652
  %v6891 = vsel %vm6841, %v6634, %v4654
  %v6893 = vsel %vm6841, %v6636, %v4656
  %v6895 = vsel %vm6841, %v6638, %v4658
  %v6897 = vsel %vm6841, %v6640, %v4660
  %v6899 = vsel %vm6841, %v6642, %v4662
  %v6901 = vsel %vm6841, %v6644, %v4664
  %v6903 = vsel %vm6841, %v6646, %v4666
  %v6905 = vsel %vm6841, %v6648, %v4668
  %v6907 = vsel %vm6841, %v6650, %v4670
  %v6909 = vsel %vm6841, %v6652, %v4672
  %v6911 = vsel %vm6841, %v6654, %v4674
  %v6913 = vsel %vm6841, %v6656, %v4676
  %v6915 = vsel %vm6841, %v6658, %v4678
  %v6917 = vsel %vm6841, %v6660, %v4680
  %v6919 = vsel %vm6841, %v6662, %v4682
  %v6921 = vsel %vm6841, %v6664, %v4684
  %v6923 = vsel %vm6841, %v6666, %v4686
  %v6925 = vsel %vm6841, %v6668, %v4688
  %v6927 = vsel %vm6841, %v6670, %v4690
  %v6929 = vsel %vm6841, %v6672, %v4692
  %v6931 = vsel %vm6841, %v6674, %v4694
  %v6933 = vsel %vm6841, %v6676, %v4696
  %v6935 = vsel %vm6841, %v6678, %v4698
  %v6937 = vsel %vm6841, %v6680, %v4700
  %v6939 = vsel %vm6841, %v6682, %v4702
  %v6941 = vsel %vm6841, %v6684, %v4704
  %v6943 = vsel %vm6841, %v6686, %v4706
  %v6945 = vsel %vm6841, %v6688, %v4708
  %v6947 = vsel %vm6841, %v6690, %v4710
  %v6949 = vsel %vm6841, %v6692, %v4712
  %v6951 = vsel %vm6841, %v6694, %v4714
  %v6953 = vsel %vm6841, %v6696, %v4716
  %v6955 = vsel %vm6841, %v6698, %v4718
  %v6957 = vsel %vm6841, %v6700, %v4720
  %v6959 = vsel %vm6841, %v6702, %v4722
  %v6961 = vsel %vm6841, %v6704, %v4724
  %v6963 = vsel %vm6841, %v6706, %v4726
  %v6965 = vsel %vm6841, %v6708, %v4728
  %v6967 = vsel %vm6841, %v6710, %v4730
  %v6969 = vsel %vm6841, %v6712, %v4732
  %v6971 = vsel %vm6841, %v6714, %v4734
  %v6973 = vsel %vm6841, %v6716, %v4736
  %v6975 = vsel %vm6841, %v6718, %v4738
  %v6977 = vsel %vm6841, %v6720, %v4740
  %v6979 = vsel %vm6841, %v6722, %v4742
  %v6981 = vsel %vm6841, %v6724, %v4744
  %v6983 = vsel %vm6841, %v6726, %v4746
  %v6985 = vsel %vm6841, %v6728, %v4748
  %v6987 = vsel %vm6841, %v6730, %v4750
  %v6989 = vsel %vm6841, %v6732, %v4752
  %v6991 = vsel %vm6841, %v6734, %v4754
  %v6993 = vsel %vm6841, %v6736, %v4756
  %v6995 = vsel %vm6841, %v6738, %v4758
  %v6997 = vsel %vm6841, %v6740, %v4760
  %v6999 = vsel %vm6841, %v6742, %v4762
  %v7001 = vsel %vm6841, %v6744, %v4764
  %v7003 = vsel %vm6841, %v6746, %v4766
  %v7005 = vsel %vm6841, %v6748, %v4768
  %v7007 = vsel %vm6841, %v6750, %v4770
  %v7009 = vsel %vm6841, %v6752, %v4772
  %v7011 = vsel %vm6841, %v6754, %v4774
  %v7013 = vsel %vm6841, %v6756, %v4776
  %v7015 = vsel %vm6841, %v6758, %v4778
  %v7017 = vsel %vm6841, %v6760, %v4780
  %v7019 = vsel %vm6841, %v6762, %v4782
  %v7021 = vsel %vm6841, %v6764, %v4784
  %v7023 = vsel %vm6841, %v6766, %v4786
  %v7025 = vsel %vm6841, %v6768, %v4788
  %v7027 = vsel %vm6841, %v6770, %v4790
  %v7029 = vsel %vm6841, %v6772, %v4792
  %v7031 = vsel %vm6841, %v6774, %v4794
  %v7033 = vsel %vm6841, %v6776, %v4796
  %v7035 = vsel %vm6841, %v6778, %v4798
  %v7037 = vsel %vm6841, %v6780, %v4800
  %v7039 = vsel %vm6841, %v6782, %v4802
  %v7041 = vsel %vm6841, %v6784, %v4804
  %v7043 = vsel %vm6841, %v6786, %v4806
  %v7045 = vsel %vm6841, %v6788, %v4808
  %v7047 = vsel %vm6841, %v6790, %v4810
  %v7049 = vsel %vm6841, %v6792, %v4812
  %v7051 = vsel %vm6841, %v6794, %v4814
  %v7053 = vsel %vm6841, %v6796, %v4816
  %v7055 = vsel %vm6841, %v6798, %v4818
  %v7057 = vsel %vm6841, %v6800, %v4820
  %v7059 = vsel %vm6841, %v6802, %v4822
  %v7061 = vsel %vm6841, %v6804, %v4824
  %v7063 = vsel %vm6841, %v6806, %v4826
  %v7065 = vsel %vm6841, %v6808, %v4828
  %v7067 = vsel %vm6841, %v6810, %v4830
  %v7069 = vsel %vm6841, %v6812, %v4832
  %v7071 = vsel %vm6841, %v6814, %v4834
  %v7073 = vsel %vm6841, %v6816, %v4836
  %v7075 = vsel %vm6841, %v6818, %v4838
  %v7077 = vsel %vm6841, %v6820, %v4840
  %v7079 = vsel %vm6841, %v6822, %v4842
  %v7081 = vsel %vm6841, %v6824, %v4844
  %v7083 = vsel %vm6841, %v6826, %v4846
  %v7085 = vsel %vm6841, %v6828, %v4848
  %v7087 = vsel %vm6841, %v6830, %v4850
  %v7089 = vsel %vm6841, %v6832, %v4852
  %v7091 = vsel %vm6841, %v6834, %v4854
  %v7093 = vsel %vm6841, %v6836, %v4856
  %v7095 = vsel %vm6841, %v6838, %v4858
  %v7097 = vsel %vm6841, %v6840, %v4860
  %vm7098 = vcmask 195584
  %v7100 = vsel %vm7098, %v6843, %v4902
  %v7102 = vsel %vm7098, %v6845, %v4904
  %v7104 = vsel %vm7098, %v6847, %v4906
  %v7106 = vsel %vm7098, %v6849, %v4908
  %v7108 = vsel %vm7098, %v6851, %v4910
  %v7110 = vsel %vm7098, %v6853, %v4912
  %v7112 = vsel %vm7098, %v6855, %v4914
  %v7114 = vsel %vm7098, %v6857, %v4916
  %v7116 = vsel %vm7098, %v6859, %v4918
  %v7118 = vsel %vm7098, %v6861, %v4920
  %v7120 = vsel %vm7098, %v6863, %v4922
  %v7122 = vsel %vm7098, %v6865, %v4924
  %v7124 = vsel %vm7098, %v6867, %v4926
  %v7126 = vsel %vm7098, %v6869, %v4928
  %v7128 = vsel %vm7098, %v6871, %v4930
  %v7130 = vsel %vm7098, %v6873, %v4932
  %v7132 = vsel %vm7098, %v6875, %v4934
  %v7134 = vsel %vm7098, %v6877, %v4936
  %v7136 = vsel %vm7098, %v6879, %v4938
  %v7138 = vsel %vm7098, %v6881, %v4940
  %v7140 = vsel %vm7098, %v6883, %v4942
  %v7142 = vsel %vm7098, %v6885, %v4944
  %v7144 = vsel %vm7098, %v6887, %v4946
  %v7146 = vsel %vm7098, %v6889, %v4948
  %v7148 = vsel %vm7098, %v6891, %v4950
  %v7150 = vsel %vm7098, %v6893, %v4952
  %v7152 = vsel %vm7098, %v6895, %v4954
  %v7154 = vsel %vm7098, %v6897, %v4956
  %v7156 = vsel %vm7098, %v6899, %v4958
  %v7158 = vsel %vm7098, %v6901, %v4960
  %v7160 = vsel %vm7098, %v6903, %v4962
  %v7162 = vsel %vm7098, %v6905, %v4964
  %v7164 = vsel %vm7098, %v6907, %v4966
  %v7166 = vsel %vm7098, %v6909, %v4968
  %v7168 = vsel %vm7098, %v6911, %v4970
  %v7170 = vsel %vm7098, %v6913, %v4972
  %v7172 = vsel %vm7098, %v6915, %v4974
  %v7174 = vsel %vm7098, %v6917, %v4976
  %v7176 = vsel %vm7098, %v6919, %v4978
  %v7178 = vsel %vm7098, %v6921, %v4980
  %v7180 = vsel %vm7098, %v6923, %v4982
  %v7182 = vsel %vm7098, %v6925, %v4984
  %v7184 = vsel %vm7098, %v6927, %v4986
  %v7186 = vsel %vm7098, %v6929, %v4988
  %v7188 = vsel %vm7098, %v6931, %v4990
  %v7190 = vsel %vm7098, %v6933, %v4992
  %v7192 = vsel %vm7098, %v6935, %v4994
  %v7194 = vsel %vm7098, %v6937, %v4996
  %v7196 = vsel %vm7098, %v6939, %v4998
  %v7198 = vsel %vm7098, %v6941, %v5000
  %v7200 = vsel %vm7098, %v6943, %v5002
  %v7202 = vsel %vm7098, %v6945, %v5004
  %v7204 = vsel %vm7098, %v6947, %v5006
  %v7206 = vsel %vm7098, %v6949, %v5008
  %v7208 = vsel %vm7098, %v6951, %v5010
  %v7210 = vsel %vm7098, %v6953, %v5012
  %v7212 = vsel %vm7098, %v6955, %v5014
  %v7214 = vsel %vm7098, %v6957, %v5016
  %v7216 = vsel %vm7098, %v6959, %v5018
  %v7218 = vsel %vm7098, %v6961, %v5020
  %v7220 = vsel %vm7098, %v6963, %v5022
  %v7222 = vsel %vm7098, %v6965, %v5024
  %v7224 = vsel %vm7098, %v6967, %v5026
  %v7226 = vsel %vm7098, %v6969, %v5028
  %v7228 = vsel %vm7098, %v6971, %v5030
  %v7230 = vsel %vm7098, %v6973, %v5032
  %v7232 = vsel %vm7098, %v6975, %v5034
  %v7234 = vsel %vm7098, %v6977, %v5036
  %v7236 = vsel %vm7098, %v6979, %v5038
  %v7238 = vsel %vm7098, %v6981, %v5040
  %v7240 = vsel %vm7098, %v6983, %v5042
  %v7242 = vsel %vm7098, %v6985, %v5044
  %v7244 = vsel %vm7098, %v6987, %v5046
  %v7246 = vsel %vm7098, %v6989, %v5048
  %v7248 = vsel %vm7098, %v6991, %v5050
  %v7250 = vsel %vm7098, %v6993, %v5052
  %v7252 = vsel %vm7098, %v6995, %v5054
  %v7254 = vsel %vm7098, %v6997, %v5056
  %v7256 = vsel %vm7098, %v6999, %v5058
  %v7258 = vsel %vm7098, %v7001, %v5060
  %v7260 = vsel %vm7098, %v7003, %v5062
  %v7262 = vsel %vm7098, %v7005, %v5064
  %v7264 = vsel %vm7098, %v7007, %v5066
  %v7266 = vsel %vm7098, %v7009, %v5068
  %v7268 = vsel %vm7098, %v7011, %v5070
  %v7270 = vsel %vm7098, %v7013, %v5072
  %v7272 = vsel %vm7098, %v7015, %v5074
  %v7274 = vsel %vm7098, %v7017, %v5076
  %v7276 = vsel %vm7098, %v7019, %v5078
  %v7278 = vsel %vm7098, %v7021, %v5080
  %v7280 = vsel %vm7098, %v7023, %v5082
  %v7282 = vsel %vm7098, %v7025, %v5084
  %v7284 = vsel %vm7098, %v7027, %v5086
  %v7286 = vsel %vm7098, %v7029, %v5088
  %v7288 = vsel %vm7098, %v7031, %v5090
  %v7290 = vsel %vm7098, %v7033, %v5092
  %v7292 = vsel %vm7098, %v7035, %v5094
  %v7294 = vsel %vm7098, %v7037, %v5096
  %v7296 = vsel %vm7098, %v7039, %v5098
  %v7298 = vsel %vm7098, %v7041, %v5100
  %v7300 = vsel %vm7098, %v7043, %v5102
  %v7302 = vsel %vm7098, %v7045, %v5104
  %v7304 = vsel %vm7098, %v7047, %v5106
  %v7306 = vsel %vm7098, %v7049, %v5108
  %v7308 = vsel %vm7098, %v7051, %v5110
  %v7310 = vsel %vm7098, %v7053, %v5112
  %v7312 = vsel %vm7098, %v7055, %v5114
  %v7314 = vsel %vm7098, %v7057, %v5116
  %v7316 = vsel %vm7098, %v7059, %v5118
  %v7318 = vsel %vm7098, %v7061, %v5120
  %v7320 = vsel %vm7098, %v7063, %v5122
  %v7322 = vsel %vm7098, %v7065, %v5124
  %v7324 = vsel %vm7098, %v7067, %v5126
  %v7326 = vsel %vm7098, %v7069, %v5128
  %v7328 = vsel %vm7098, %v7071, %v5130
  %v7330 = vsel %vm7098, %v7073, %v5132
  %v7332 = vsel %vm7098, %v7075, %v5134
  %v7334 = vsel %vm7098, %v7077, %v5136
  %v7336 = vsel %vm7098, %v7079, %v5138
  %v7338 = vsel %vm7098, %v7081, %v5140
  %v7340 = vsel %vm7098, %v7083, %v5142
  %v7342 = vsel %vm7098, %v7085, %v5144
  %v7344 = vsel %vm7098, %v7087, %v5146
  %v7346 = vsel %vm7098, %v7089, %v5148
  %v7348 = vsel %vm7098, %v7091, %v5150
  %v7350 = vsel %vm7098, %v7093, %v5152
  %v7352 = vsel %vm7098, %v7095, %v5154
  %v7354 = vsel %vm7098, %v7097, %v5156
  %vm7355 = vcmask 228352
  %v7357 = vsel %vm7355, %v7100, %v5278
  %v7359 = vsel %vm7355, %v7102, %v5280
  %v7361 = vsel %vm7355, %v7104, %v5282
  %v7363 = vsel %vm7355, %v7106, %v5284
  %v7365 = vsel %vm7355, %v7108, %v5286
  %v7367 = vsel %vm7355, %v7110, %v5288
  %v7369 = vsel %vm7355, %v7112, %v5290
  %v7371 = vsel %vm7355, %v7114, %v5292
  %v7373 = vsel %vm7355, %v7116, %v5294
  %v7375 = vsel %vm7355, %v7118, %v5296
  %v7377 = vsel %vm7355, %v7120, %v5298
  %v7379 = vsel %vm7355, %v7122, %v5300
  %v7381 = vsel %vm7355, %v7124, %v5302
  %v7383 = vsel %vm7355, %v7126, %v5304
  %v7385 = vsel %vm7355, %v7128, %v5306
  %v7387 = vsel %vm7355, %v7130, %v5308
  %v7389 = vsel %vm7355, %v7132, %v5310
  %v7391 = vsel %vm7355, %v7134, %v5312
  %v7393 = vsel %vm7355, %v7136, %v5314
  %v7395 = vsel %vm7355, %v7138, %v5316
  %v7397 = vsel %vm7355, %v7140, %v5318
  %v7399 = vsel %vm7355, %v7142, %v5320
  %v7401 = vsel %vm7355, %v7144, %v5322
  %v7403 = vsel %vm7355, %v7146, %v5324
  %v7405 = vsel %vm7355, %v7148, %v5326
  %v7407 = vsel %vm7355, %v7150, %v5328
  %v7409 = vsel %vm7355, %v7152, %v5330
  %v7411 = vsel %vm7355, %v7154, %v5332
  %v7413 = vsel %vm7355, %v7156, %v5334
  %v7415 = vsel %vm7355, %v7158, %v5336
  %v7417 = vsel %vm7355, %v7160, %v5338
  %v7419 = vsel %vm7355, %v7162, %v5340
  %v7421 = vsel %vm7355, %v7164, %v5342
  %v7423 = vsel %vm7355, %v7166, %v5344
  %v7425 = vsel %vm7355, %v7168, %v5346
  %v7427 = vsel %vm7355, %v7170, %v5348
  %v7429 = vsel %vm7355, %v7172, %v5350
  %v7431 = vsel %vm7355, %v7174, %v5352
  %v7433 = vsel %vm7355, %v7176, %v5354
  %v7435 = vsel %vm7355, %v7178, %v5356
  %v7437 = vsel %vm7355, %v7180, %v5358
  %v7439 = vsel %vm7355, %v7182, %v5360
  %v7441 = vsel %vm7355, %v7184, %v5362
  %v7443 = vsel %vm7355, %v7186, %v5364
  %v7445 = vsel %vm7355, %v7188, %v5366
  %v7447 = vsel %vm7355, %v7190, %v5368
  %v7449 = vsel %vm7355, %v7192, %v5370
  %v7451 = vsel %vm7355, %v7194, %v5372
  %v7453 = vsel %vm7355, %v7196, %v5374
  %v7455 = vsel %vm7355, %v7198, %v5376
  %v7457 = vsel %vm7355, %v7200, %v5378
  %v7459 = vsel %vm7355, %v7202, %v5380
  %v7461 = vsel %vm7355, %v7204, %v5382
  %v7463 = vsel %vm7355, %v7206, %v5384
  %v7465 = vsel %vm7355, %v7208, %v5386
  %v7467 = vsel %vm7355, %v7210, %v5388
  %v7469 = vsel %vm7355, %v7212, %v5390
  %v7471 = vsel %vm7355, %v7214, %v5392
  %v7473 = vsel %vm7355, %v7216, %v5394
  %v7475 = vsel %vm7355, %v7218, %v5396
  %v7477 = vsel %vm7355, %v7220, %v5398
  %v7479 = vsel %vm7355, %v7222, %v5400
  %v7481 = vsel %vm7355, %v7224, %v5402
  %v7483 = vsel %vm7355, %v7226, %v5404
  %v7485 = vsel %vm7355, %v7228, %v5406
  %v7487 = vsel %vm7355, %v7230, %v5408
  %v7489 = vsel %vm7355, %v7232, %v5410
  %v7491 = vsel %vm7355, %v7234, %v5412
  %v7493 = vsel %vm7355, %v7236, %v5414
  %v7495 = vsel %vm7355, %v7238, %v5416
  %v7497 = vsel %vm7355, %v7240, %v5418
  %v7499 = vsel %vm7355, %v7242, %v5420
  %v7501 = vsel %vm7355, %v7244, %v5422
  %v7503 = vsel %vm7355, %v7246, %v5424
  %v7505 = vsel %vm7355, %v7248, %v5426
  %v7507 = vsel %vm7355, %v7250, %v5428
  %v7509 = vsel %vm7355, %v7252, %v5430
  %v7511 = vsel %vm7355, %v7254, %v5432
  %v7513 = vsel %vm7355, %v7256, %v5434
  %v7515 = vsel %vm7355, %v7258, %v5436
  %v7517 = vsel %vm7355, %v7260, %v5438
  %v7519 = vsel %vm7355, %v7262, %v5440
  %v7521 = vsel %vm7355, %v7264, %v5442
  %v7523 = vsel %vm7355, %v7266, %v5444
  %v7525 = vsel %vm7355, %v7268, %v5446
  %v7527 = vsel %vm7355, %v7270, %v5448
  %v7529 = vsel %vm7355, %v7272, %v5450
  %v7531 = vsel %vm7355, %v7274, %v5452
  %v7533 = vsel %vm7355, %v7276, %v5454
  %v7535 = vsel %vm7355, %v7278, %v5456
  %v7537 = vsel %vm7355, %v7280, %v5458
  %v7539 = vsel %vm7355, %v7282, %v5460
  %v7541 = vsel %vm7355, %v7284, %v5462
  %v7543 = vsel %vm7355, %v7286, %v5464
  %v7545 = vsel %vm7355, %v7288, %v5466
  %v7547 = vsel %vm7355, %v7290, %v5468
  %v7549 = vsel %vm7355, %v7292, %v5470
  %v7551 = vsel %vm7355, %v7294, %v5472
  %v7553 = vsel %vm7355, %v7296, %v5474
  %v7555 = vsel %vm7355, %v7298, %v5476
  %v7557 = vsel %vm7355, %v7300, %v5478
  %v7559 = vsel %vm7355, %v7302, %v5480
  %v7561 = vsel %vm7355, %v7304, %v5482
  %v7563 = vsel %vm7355, %v7306, %v5484
  %v7565 = vsel %vm7355, %v7308, %v5486
  %v7567 = vsel %vm7355, %v7310, %v5488
  %v7569 = vsel %vm7355, %v7312, %v5490
  %v7571 = vsel %vm7355, %v7314, %v5492
  %v7573 = vsel %vm7355, %v7316, %v5494
  %v7575 = vsel %vm7355, %v7318, %v5496
  %v7577 = vsel %vm7355, %v7320, %v5498
  %v7579 = vsel %vm7355, %v7322, %v5500
  %v7581 = vsel %vm7355, %v7324, %v5502
  %v7583 = vsel %vm7355, %v7326, %v5504
  %v7585 = vsel %vm7355, %v7328, %v5506
  %v7587 = vsel %vm7355, %v7330, %v5508
  %v7589 = vsel %vm7355, %v7332, %v5510
  %v7591 = vsel %vm7355, %v7334, %v5512
  %v7593 = vsel %vm7355, %v7336, %v5514
  %v7595 = vsel %vm7355, %v7338, %v5516
  %v7597 = vsel %vm7355, %v7340, %v5518
  %v7599 = vsel %vm7355, %v7342, %v5520
  %v7601 = vsel %vm7355, %v7344, %v5522
  %v7603 = vsel %vm7355, %v7346, %v5524
  %v7605 = vsel %vm7355, %v7348, %v5526
  %v7607 = vsel %vm7355, %v7350, %v5528
  %v7609 = vsel %vm7355, %v7352, %v5530
  %v7611 = vsel %vm7355, %v7354, %v5532
  %vm7612 = vcmask 261120
  %v7614 = vsel %vm7612, %v7357, %v5558
  %v7616 = vsel %vm7612, %v7359, %v5560
  %v7618 = vsel %vm7612, %v7361, %v5562
  %v7620 = vsel %vm7612, %v7363, %v5564
  %v7622 = vsel %vm7612, %v7365, %v5566
  %v7624 = vsel %vm7612, %v7367, %v5568
  %v7626 = vsel %vm7612, %v7369, %v5570
  %v7628 = vsel %vm7612, %v7371, %v5572
  %v7630 = vsel %vm7612, %v7373, %v5574
  %v7632 = vsel %vm7612, %v7375, %v5576
  %v7634 = vsel %vm7612, %v7377, %v5578
  %v7636 = vsel %vm7612, %v7379, %v5580
  %v7638 = vsel %vm7612, %v7381, %v5582
  %v7640 = vsel %vm7612, %v7383, %v5584
  %v7642 = vsel %vm7612, %v7385, %v5586
  %v7644 = vsel %vm7612, %v7387, %v5588
  %v7646 = vsel %vm7612, %v7389, %v5590
  %v7648 = vsel %vm7612, %v7391, %v5592
  %v7650 = vsel %vm7612, %v7393, %v5594
  %v7652 = vsel %vm7612, %v7395, %v5596
  %v7654 = vsel %vm7612, %v7397, %v5598
  %v7656 = vsel %vm7612, %v7399, %v5600
  %v7658 = vsel %vm7612, %v7401, %v5602
  %v7660 = vsel %vm7612, %v7403, %v5604
  %v7662 = vsel %vm7612, %v7405, %v5606
  %v7664 = vsel %vm7612, %v7407, %v5608
  %v7666 = vsel %vm7612, %v7409, %v5610
  %v7668 = vsel %vm7612, %v7411, %v5612
  %v7670 = vsel %vm7612, %v7413, %v5614
  %v7672 = vsel %vm7612, %v7415, %v5616
  %v7674 = vsel %vm7612, %v7417, %v5618
  %v7676 = vsel %vm7612, %v7419, %v5620
  %v7678 = vsel %vm7612, %v7421, %v5622
  %v7680 = vsel %vm7612, %v7423, %v5624
  %v7682 = vsel %vm7612, %v7425, %v5626
  %v7684 = vsel %vm7612, %v7427, %v5628
  %v7686 = vsel %vm7612, %v7429, %v5630
  %v7688 = vsel %vm7612, %v7431, %v5632
  %v7690 = vsel %vm7612, %v7433, %v5634
  %v7692 = vsel %vm7612, %v7435, %v5636
  %v7694 = vsel %vm7612, %v7437, %v5638
  %v7696 = vsel %vm7612, %v7439, %v5640
  %v7698 = vsel %vm7612, %v7441, %v5642
  %v7700 = vsel %vm7612, %v7443, %v5644
  %v7702 = vsel %vm7612, %v7445, %v5646
  %v7704 = vsel %vm7612, %v7447, %v5648
  %v7706 = vsel %vm7612, %v7449, %v5650
  %v7708 = vsel %vm7612, %v7451, %v5652
  %v7710 = vsel %vm7612, %v7453, %v5654
  %v7712 = vsel %vm7612, %v7455, %v5656
  %v7714 = vsel %vm7612, %v7457, %v5658
  %v7716 = vsel %vm7612, %v7459, %v5660
  %v7718 = vsel %vm7612, %v7461, %v5662
  %v7720 = vsel %vm7612, %v7463, %v5664
  %v7722 = vsel %vm7612, %v7465, %v5666
  %v7724 = vsel %vm7612, %v7467, %v5668
  %v7726 = vsel %vm7612, %v7469, %v5670
  %v7728 = vsel %vm7612, %v7471, %v5672
  %v7730 = vsel %vm7612, %v7473, %v5674
  %v7732 = vsel %vm7612, %v7475, %v5676
  %v7734 = vsel %vm7612, %v7477, %v5678
  %v7736 = vsel %vm7612, %v7479, %v5680
  %v7738 = vsel %vm7612, %v7481, %v5682
  %v7740 = vsel %vm7612, %v7483, %v5684
  %v7742 = vsel %vm7612, %v7485, %v5686
  %v7744 = vsel %vm7612, %v7487, %v5688
  %v7746 = vsel %vm7612, %v7489, %v5690
  %v7748 = vsel %vm7612, %v7491, %v5692
  %v7750 = vsel %vm7612, %v7493, %v5694
  %v7752 = vsel %vm7612, %v7495, %v5696
  %v7754 = vsel %vm7612, %v7497, %v5698
  %v7756 = vsel %vm7612, %v7499, %v5700
  %v7758 = vsel %vm7612, %v7501, %v5702
  %v7760 = vsel %vm7612, %v7503, %v5704
  %v7762 = vsel %vm7612, %v7505, %v5706
  %v7764 = vsel %vm7612, %v7507, %v5708
  %v7766 = vsel %vm7612, %v7509, %v5710
  %v7768 = vsel %vm7612, %v7511, %v5712
  %v7770 = vsel %vm7612, %v7513, %v5714
  %v7772 = vsel %vm7612, %v7515, %v5716
  %v7774 = vsel %vm7612, %v7517, %v5718
  %v7776 = vsel %vm7612, %v7519, %v5720
  %v7778 = vsel %vm7612, %v7521, %v5722
  %v7780 = vsel %vm7612, %v7523, %v5724
  %v7782 = vsel %vm7612, %v7525, %v5726
  %v7784 = vsel %vm7612, %v7527, %v5728
  %v7786 = vsel %vm7612, %v7529, %v5730
  %v7788 = vsel %vm7612, %v7531, %v5732
  %v7790 = vsel %vm7612, %v7533, %v5734
  %v7792 = vsel %vm7612, %v7535, %v5736
  %v7794 = vsel %vm7612, %v7537, %v5738
  %v7796 = vsel %vm7612, %v7539, %v5740
  %v7798 = vsel %vm7612, %v7541, %v5742
  %v7800 = vsel %vm7612, %v7543, %v5744
  %v7802 = vsel %vm7612, %v7545, %v5746
  %v7804 = vsel %vm7612, %v7547, %v5748
  %v7806 = vsel %vm7612, %v7549, %v5750
  %v7808 = vsel %vm7612, %v7551, %v5752
  %v7810 = vsel %vm7612, %v7553, %v5754
  %v7812 = vsel %vm7612, %v7555, %v5756
  %v7814 = vsel %vm7612, %v7557, %v5758
  %v7816 = vsel %vm7612, %v7559, %v5760
  %v7818 = vsel %vm7612, %v7561, %v5762
  %v7820 = vsel %vm7612, %v7563, %v5764
  %v7822 = vsel %vm7612, %v7565, %v5766
  %v7824 = vsel %vm7612, %v7567, %v5768
  %v7826 = vsel %vm7612, %v7569, %v5770
  %v7828 = vsel %vm7612, %v7571, %v5772
  %v7830 = vsel %vm7612, %v7573, %v5774
  %v7832 = vsel %vm7612, %v7575, %v5776
  %v7834 = vsel %vm7612, %v7577, %v5778
  %v7836 = vsel %vm7612, %v7579, %v5780
  %v7838 = vsel %vm7612, %v7581, %v5782
  %v7840 = vsel %vm7612, %v7583, %v5784
  %v7842 = vsel %vm7612, %v7585, %v5786
  %v7844 = vsel %vm7612, %v7587, %v5788
  %v7846 = vsel %vm7612, %v7589, %v5790
  %v7848 = vsel %vm7612, %v7591, %v5792
  %v7850 = vsel %vm7612, %v7593, %v5794
  %v7852 = vsel %vm7612, %v7595, %v5796
  %v7854 = vsel %vm7612, %v7597, %v5798
  %v7856 = vsel %vm7612, %v7599, %v5800
  %v7858 = vsel %vm7612, %v7601, %v5802
  %v7860 = vsel %vm7612, %v7603, %v5804
  %v7862 = vsel %vm7612, %v7605, %v5806
  %v7864 = vsel %vm7612, %v7607, %v5808
  %v7866 = vsel %vm7612, %v7609, %v5810
  %v7868 = vsel %vm7612, %v7611, %v5812
  %vm7869 = vcmask 293888
  %v7871 = vsel %vm7869, %v7614, 1065369472
  %v7872 = vsel %vm7869, %v7616, 1065369472
  %v7873 = vsel %vm7869, %v7618, 1065369472
  %v7874 = vsel %vm7869, %v7620, 1065369472
  %v7875 = vsel %vm7869, %v7622, 1065369472
  %v7876 = vsel %vm7869, %v7624, 1065369472
  %v7877 = vsel %vm7869, %v7626, 1065369472
  %v7878 = vsel %vm7869, %v7628, 1065369472
  %v7879 = vsel %vm7869, %v7630, 1065369472
  %v7880 = vsel %vm7869, %v7632, 1065369472
  %v7881 = vsel %vm7869, %v7634, 1065369472
  %v7882 = vsel %vm7869, %v7636, 1065369472
  %v7883 = vsel %vm7869, %v7638, 1065369472
  %v7884 = vsel %vm7869, %v7640, 1065369472
  %v7885 = vsel %vm7869, %v7642, 1065369472
  %v7886 = vsel %vm7869, %v7644, 1065369472
  %v7887 = vsel %vm7869, %v7646, 1065369472
  %v7888 = vsel %vm7869, %v7648, 1065369472
  %v7889 = vsel %vm7869, %v7650, 1065369472
  %v7890 = vsel %vm7869, %v7652, 1065369472
  %v7891 = vsel %vm7869, %v7654, 1065369472
  %v7892 = vsel %vm7869, %v7656, 1065369472
  %v7893 = vsel %vm7869, %v7658, 1065369472
  %v7894 = vsel %vm7869, %v7660, 1065369472
  %v7895 = vsel %vm7869, %v7662, 1065369472
  %v7896 = vsel %vm7869, %v7664, 1065369472
  %v7897 = vsel %vm7869, %v7666, 1065369472
  %v7898 = vsel %vm7869, %v7668, 1065369472
  %v7899 = vsel %vm7869, %v7670, 1065369472
  %v7900 = vsel %vm7869, %v7672, 1065369472
  %v7901 = vsel %vm7869, %v7674, 1065369472
  %v7902 = vsel %vm7869, %v7676, 1065369472
  %v7903 = vsel %vm7869, %v7678, 1065369472
  %v7904 = vsel %vm7869, %v7680, 1065369472
  %v7905 = vsel %vm7869, %v7682, 1065369472
  %v7906 = vsel %vm7869, %v7684, 1065369472
  %v7907 = vsel %vm7869, %v7686, 1065369472
  %v7908 = vsel %vm7869, %v7688, 1065369472
  %v7909 = vsel %vm7869, %v7690, 1065369472
  %v7910 = vsel %vm7869, %v7692, 1065369472
  %v7911 = vsel %vm7869, %v7694, 1065369472
  %v7912 = vsel %vm7869, %v7696, 1065369472
  %v7913 = vsel %vm7869, %v7698, 1065369472
  %v7914 = vsel %vm7869, %v7700, 1065369472
  %v7915 = vsel %vm7869, %v7702, 1065369472
  %v7916 = vsel %vm7869, %v7704, 1065369472
  %v7917 = vsel %vm7869, %v7706, 1065369472
  %v7918 = vsel %vm7869, %v7708, 1065369472
  %v7919 = vsel %vm7869, %v7710, 1065369472
  %v7920 = vsel %vm7869, %v7712, 1065369472
  %v7921 = vsel %vm7869, %v7714, 1065369472
  %v7922 = vsel %vm7869, %v7716, 1065369472
  %v7923 = vsel %vm7869, %v7718, 1065369472
  %v7924 = vsel %vm7869, %v7720, 1065369472
  %v7925 = vsel %vm7869, %v7722, 1065369472
  %v7926 = vsel %vm7869, %v7724, 1065369472
  %v7927 = vsel %vm7869, %v7726, 1065369472
  %v7928 = vsel %vm7869, %v7728, 1065369472
  %v7929 = vsel %vm7869, %v7730, 1065369472
  %v7930 = vsel %vm7869, %v7732, 1065369472
  %v7931 = vsel %vm7869, %v7734, 1065369472
  %v7932 = vsel %vm7869, %v7736, 1065369472
  %v7933 = vsel %vm7869, %v7738, 1065369472
  %v7934 = vsel %vm7869, %v7740, 1065369472
  %v7935 = vsel %vm7869, %v7742, 1065369472
  %v7936 = vsel %vm7869, %v7744, 1065369472
  %v7937 = vsel %vm7869, %v7746, 1065369472
  %v7938 = vsel %vm7869, %v7748, 1065369472
  %v7939 = vsel %vm7869, %v7750, 1065369472
  %v7940 = vsel %vm7869, %v7752, 1065369472
  %v7941 = vsel %vm7869, %v7754, 1065369472
  %v7942 = vsel %vm7869, %v7756, 1065369472
  %v7943 = vsel %vm7869, %v7758, 1065369472
  %v7944 = vsel %vm7869, %v7760, 1065369472
  %v7945 = vsel %vm7869, %v7762, 1065369472
  %v7946 = vsel %vm7869, %v7764, 1065369472
  %v7947 = vsel %vm7869, %v7766, 1065369472
  %v7948 = vsel %vm7869, %v7768, 1065369472
  %v7949 = vsel %vm7869, %v7770, 1065369472
  %v7950 = vsel %vm7869, %v7772, 1065369472
  %v7951 = vsel %vm7869, %v7774, 1065369472
  %v7952 = vsel %vm7869, %v7776, 1065369472
  %v7953 = vsel %vm7869, %v7778, 1065369472
  %v7954 = vsel %vm7869, %v7780, 1065369472
  %v7955 = vsel %vm7869, %v7782, 1065369472
  %v7956 = vsel %vm7869, %v7784, 1065369472
  %v7957 = vsel %vm7869, %v7786, 1065369472
  %v7958 = vsel %vm7869, %v7788, 1065369472
  %v7959 = vsel %vm7869, %v7790, 1065369472
  %v7960 = vsel %vm7869, %v7792, 1065369472
  %v7961 = vsel %vm7869, %v7794, 1065369472
  %v7962 = vsel %vm7869, %v7796, 1065369472
  %v7963 = vsel %vm7869, %v7798, 1065369472
  %v7964 = vsel %vm7869, %v7800, 1065369472
  %v7965 = vsel %vm7869, %v7802, 1065369472
  %v7966 = vsel %vm7869, %v7804, 1065369472
  %v7967 = vsel %vm7869, %v7806, 1065369472
  %v7968 = vsel %vm7869, %v7808, 1065369472
  %v7969 = vsel %vm7869, %v7810, 1065369472
  %v7970 = vsel %vm7869, %v7812, 1065369472
  %v7971 = vsel %vm7869, %v7814, 1065369472
  %v7972 = vsel %vm7869, %v7816, 1065369472
  %v7973 = vsel %vm7869, %v7818, 1065369472
  %v7974 = vsel %vm7869, %v7820, 1065369472
  %v7975 = vsel %vm7869, %v7822, 1065369472
  %v7976 = vsel %vm7869, %v7824, 1065369472
  %v7977 = vsel %vm7869, %v7826, 1065369472
  %v7978 = vsel %vm7869, %v7828, 1065369472
  %v7979 = vsel %vm7869, %v7830, 1065369472
  %v7980 = vsel %vm7869, %v7832, 1065369472
  %v7981 = vsel %vm7869, %v7834, 1065369472
  %v7982 = vsel %vm7869, %v7836, 1065369472
  %v7983 = vsel %vm7869, %v7838, 1065369472
  %v7984 = vsel %vm7869, %v7840, 1065369472
  %v7985 = vsel %vm7869, %v7842, 1065369472
  %v7986 = vsel %vm7869, %v7844, 1065369472
  %v7987 = vsel %vm7869, %v7846, 1065369472
  %v7988 = vsel %vm7869, %v7848, 1065369472
  %v7989 = vsel %vm7869, %v7850, 1065369472
  %v7990 = vsel %vm7869, %v7852, 1065369472
  %v7991 = vsel %vm7869, %v7854, 1065369472
  %v7992 = vsel %vm7869, %v7856, 1065369472
  %v7993 = vsel %vm7869, %v7858, 1065369472
  %v7994 = vsel %vm7869, %v7860, 1065369472
  %v7995 = vsel %vm7869, %v7862, 1065369472
  %v7996 = vsel %vm7869, %v7864, 1065369472
  %v7997 = vsel %vm7869, %v7866, 1065369472
  %v7998 = vsel %vm7869, %v7868, 1065369472
  %v7999 = vld [vmem:[%s1] sm:$0xf]
  %v8000 = vld [vmem:[%s1 + $0x4] sm:$0xf]
  %v8001 = vld [vmem:[%s1 + $0x8] sm:$0xf]
  %v8002 = vld [vmem:[%s1 + $0xc] sm:$0xf]
  %v8003 = vld [vmem:[%s1 + $0x10] sm:$0x7]
  %v8009 = vunpack.c.l.b16 %v7999
  %v8010 = vunpack.c.l.b16 %v8000
  %v8011 = vunpack.c.l.b16 %v8001
  %v8012 = vunpack.c.l.b16 %v8002
  %v8013 = vunpack.c.l.b16 %v8003
  %v8014 = vpack.c.b16 %v8010, %v8009
  %v8015 = vpack.c.b16 %v8012, %v8011
  %v8016 = vpack.c.b16 %v8013, %v8013
  %vm8019 = vcmask 302080
  %v8020 = vsel %vm8019, %v7871, 0
  %v8022 = vsel %vm8019, %v7872, 0
  %v8024 = vsel %vm8019, %v7873, 0
  %v8026 = vsel %vm8019, %v7874, 0
  %v8028 = vsel %vm8019, %v7875, 0
  %v8030 = vsel %vm8019, %v7876, 0
  %v8032 = vsel %vm8019, %v7877, 0
  %v8034 = vsel %vm8019, %v7878, 0
  %v8036 = vsel %vm8019, %v7879, 0
  %v8038 = vsel %vm8019, %v7880, 0
  %v8040 = vsel %vm8019, %v7881, 0
  %v8042 = vsel %vm8019, %v7882, 0
  %v8044 = vsel %vm8019, %v7883, 0
  %v8046 = vsel %vm8019, %v7884, 0
  %v8048 = vsel %vm8019, %v7885, 0
  %v8050 = vsel %vm8019, %v7886, 0
  %v8052 = vsel %vm8019, %v7887, 0
  %v8054 = vsel %vm8019, %v7888, 0
  %v8056 = vsel %vm8019, %v7889, 0
  %v8058 = vsel %vm8019, %v7890, 0
  %v8060 = vsel %vm8019, %v7891, 0
  %v8062 = vsel %vm8019, %v7892, 0
  %v8064 = vsel %vm8019, %v7893, 0
  %v8066 = vsel %vm8019, %v7894, 0
  %v8068 = vsel %vm8019, %v7895, 0
  %v8070 = vsel %vm8019, %v7896, 0
  %v8072 = vsel %vm8019, %v7897, 0
  %v8074 = vsel %vm8019, %v7898, 0
  %v8076 = vsel %vm8019, %v7899, 0
  %v8078 = vsel %vm8019, %v7900, 0
  %v8080 = vsel %vm8019, %v7901, 0
  %v8082 = vsel %vm8019, %v7902, 0
  %v8084 = vsel %vm8019, %v7903, 0
  %v8086 = vsel %vm8019, %v7904, 0
  %v8088 = vsel %vm8019, %v7905, 0
  %v8090 = vsel %vm8019, %v7906, 0
  %v8092 = vsel %vm8019, %v7907, 0
  %v8094 = vsel %vm8019, %v7908, 0
  %v8096 = vsel %vm8019, %v7909, 0
  %v8098 = vsel %vm8019, %v7910, 0
  %v8100 = vsel %vm8019, %v7911, 0
  %v8102 = vsel %vm8019, %v7912, 0
  %v8104 = vsel %vm8019, %v7913, 0
  %v8106 = vsel %vm8019, %v7914, 0
  %v8108 = vsel %vm8019, %v7915, 0
  %v8110 = vsel %vm8019, %v7916, 0
  %v8112 = vsel %vm8019, %v7917, 0
  %v8114 = vsel %vm8019, %v7918, 0
  %v8116 = vsel %vm8019, %v7919, 0
  %v8118 = vsel %vm8019, %v7920, 0
  %v8120 = vsel %vm8019, %v7921, 0
  %v8122 = vsel %vm8019, %v7922, 0
  %v8124 = vsel %vm8019, %v7923, 0
  %v8126 = vsel %vm8019, %v7924, 0
  %v8128 = vsel %vm8019, %v7925, 0
  %v8130 = vsel %vm8019, %v7926, 0
  %v8132 = vsel %vm8019, %v7927, 0
  %v8134 = vsel %vm8019, %v7928, 0
  %v8136 = vsel %vm8019, %v7929, 0
  %v8138 = vsel %vm8019, %v7930, 0
  %v8140 = vsel %vm8019, %v7931, 0
  %v8142 = vsel %vm8019, %v7932, 0
  %v8144 = vsel %vm8019, %v7933, 0
  %v8146 = vsel %vm8019, %v7934, 0
  %v8148 = vsel %vm8019, %v7935, 0
  %v8150 = vsel %vm8019, %v7936, 0
  %v8152 = vsel %vm8019, %v7937, 0
  %v8154 = vsel %vm8019, %v7938, 0
  %v8156 = vsel %vm8019, %v7939, 0
  %v8158 = vsel %vm8019, %v7940, 0
  %v8160 = vsel %vm8019, %v7941, 0
  %v8162 = vsel %vm8019, %v7942, 0
  %v8164 = vsel %vm8019, %v7943, 0
  %v8166 = vsel %vm8019, %v7944, 0
  %v8168 = vsel %vm8019, %v7945, 0
  %v8170 = vsel %vm8019, %v7946, 0
  %v8172 = vsel %vm8019, %v7947, 0
  %v8174 = vsel %vm8019, %v7948, 0
  %v8176 = vsel %vm8019, %v7949, 0
  %v8178 = vsel %vm8019, %v7950, 0
  %v8180 = vsel %vm8019, %v7951, 0
  %v8182 = vsel %vm8019, %v7952, 0
  %v8184 = vsel %vm8019, %v7953, 0
  %v8186 = vsel %vm8019, %v7954, 0
  %v8188 = vsel %vm8019, %v7955, 0
  %v8190 = vsel %vm8019, %v7956, 0
  %v8192 = vsel %vm8019, %v7957, 0
  %v8194 = vsel %vm8019, %v7958, 0
  %v8196 = vsel %vm8019, %v7959, 0
  %v8198 = vsel %vm8019, %v7960, 0
  %v8200 = vsel %vm8019, %v7961, 0
  %v8202 = vsel %vm8019, %v7962, 0
  %v8204 = vsel %vm8019, %v7963, 0
  %v8206 = vsel %vm8019, %v7964, 0
  %v8208 = vsel %vm8019, %v7965, 0
  %v8210 = vsel %vm8019, %v7966, 0
  %v8212 = vsel %vm8019, %v7967, 0
  %v8214 = vsel %vm8019, %v7968, 0
  %v8216 = vsel %vm8019, %v7969, 0
  %v8218 = vsel %vm8019, %v7970, 0
  %v8220 = vsel %vm8019, %v7971, 0
  %v8222 = vsel %vm8019, %v7972, 0
  %v8224 = vsel %vm8019, %v7973, 0
  %v8226 = vsel %vm8019, %v7974, 0
  %v8228 = vsel %vm8019, %v7975, 0
  %v8230 = vsel %vm8019, %v7976, 0
  %v8232 = vsel %vm8019, %v7977, 0
  %v8234 = vsel %vm8019, %v7978, 0
  %v8236 = vsel %vm8019, %v7979, 0
  %v8238 = vsel %vm8019, %v7980, 0
  %v8240 = vsel %vm8019, %v7981, 0
  %v8242 = vsel %vm8019, %v7982, 0
  %v8244 = vsel %vm8019, %v7983, 0
  %v8246 = vsel %vm8019, %v7984, 0
  %v8248 = vsel %vm8019, %v7985, 0
  %v8250 = vsel %vm8019, %v7986, 0
  %v8252 = vsel %vm8019, %v7987, 0
  %v8254 = vsel %vm8019, %v7988, 0
  %v8256 = vsel %vm8019, %v7989, 0
  %v8258 = vsel %vm8019, %v7990, 0
  %v8260 = vsel %vm8019, %v7991, 0
  %v8262 = vsel %vm8019, %v7992, 0
  %v8264 = vsel %vm8019, %v7993, 0
  %v8266 = vsel %vm8019, %v7994, 0
  %v8268 = vsel %vm8019, %v7995, 0
  %v8270 = vsel %vm8019, %v7996, 0
  %v8272 = vsel %vm8019, %v7997, 0
  %v8274 = vsel %vm8019, %v7998, 0
  %vm8276 = vcmask 1041408
  %vm8277 = vcmask 1042432
  %v8278 = vsel %vm8276, 4294967295, 65535
  %v8279 = vsel %vm8277, %v8278, 0
  %v8281 = vand.u32 %v8016, %v8279
  %8283 = vmatpush.bf16.msra.mxu0 0
  %8284 = vmatpush.bf16.msra.mxu0 0
  %8285 = vmatpush.bf16.msra.mxu0 0
  %8286 = vmatpush.bf16.msra.mxu0 0
  %8287 = vmatpush.bf16.msra.mxu0 0
  %8288 = vmatpush.bf16.msra.mxu0 %v8281
  %8289 = vmatpush.bf16.msra.mxu0 %v8015
  %8290 = vmatpush.bf16.msra.mxu0 %v8014
  %8291 = vmatmul.bf16.gmra.mxu0 %v8020
  %v8292 = vpop.f32.mrf.mxu0
  %v8293 = vadd.f32 0.0, %v8292
  %v8294 = vpop.f32.mrf.mxu0
  %v8295 = vadd.f32 0.0, %v8294
  %8296 = vmatmul.bf16.gmra.mxu0 %v8022
  %v8297 = vpop.f32.mrf.mxu0
  %v8298 = vadd.f32 0.0, %v8297
  %v8299 = vpop.f32.mrf.mxu0
  %v8300 = vadd.f32 0.0, %v8299
  %8301 = vmatmul.bf16.gmra.mxu0 %v8024
  %v8302 = vpop.f32.mrf.mxu0
  %v8303 = vadd.f32 0.0, %v8302
  %v8304 = vpop.f32.mrf.mxu0
  %v8305 = vadd.f32 0.0, %v8304
  %8306 = vmatmul.bf16.gmra.mxu0 %v8026
  %v8307 = vpop.f32.mrf.mxu0
  %v8308 = vadd.f32 0.0, %v8307
  %v8309 = vpop.f32.mrf.mxu0
  %v8310 = vadd.f32 0.0, %v8309
  %8311 = vmatmul.bf16.gmra.mxu0 %v8028
  %v8312 = vpop.f32.mrf.mxu0
  %v8313 = vadd.f32 0.0, %v8312
  %v8314 = vpop.f32.mrf.mxu0
  %v8315 = vadd.f32 0.0, %v8314
  %8316 = vmatmul.bf16.gmra.mxu0 %v8030
  %v8317 = vpop.f32.mrf.mxu0
  %v8318 = vadd.f32 0.0, %v8317
  %v8319 = vpop.f32.mrf.mxu0
  %v8320 = vadd.f32 0.0, %v8319
  %8321 = vmatmul.bf16.gmra.mxu0 %v8032
  %v8322 = vpop.f32.mrf.mxu0
  %v8323 = vadd.f32 0.0, %v8322
  %v8324 = vpop.f32.mrf.mxu0
  %v8325 = vadd.f32 0.0, %v8324
  %8326 = vmatmul.bf16.gmra.mxu0 %v8034
  %v8327 = vpop.f32.mrf.mxu0
  %v8328 = vadd.f32 0.0, %v8327
  %v8329 = vpop.f32.mrf.mxu0
  %v8330 = vadd.f32 0.0, %v8329
  %8331 = vmatmul.bf16.gmra.mxu0 %v8036
  %v8332 = vpop.f32.mrf.mxu0
  %v8333 = vadd.f32 0.0, %v8332
  %v8334 = vpop.f32.mrf.mxu0
  %v8335 = vadd.f32 0.0, %v8334
  %8336 = vmatmul.bf16.gmra.mxu0 %v8038
  %v8337 = vpop.f32.mrf.mxu0
  %v8338 = vadd.f32 0.0, %v8337
  %v8339 = vpop.f32.mrf.mxu0
  %v8340 = vadd.f32 0.0, %v8339
  %8341 = vmatmul.bf16.gmra.mxu0 %v8040
  %v8342 = vpop.f32.mrf.mxu0
  %v8343 = vadd.f32 0.0, %v8342
  %v8344 = vpop.f32.mrf.mxu0
  %v8345 = vadd.f32 0.0, %v8344
  %8346 = vmatmul.bf16.gmra.mxu0 %v8042
  %v8347 = vpop.f32.mrf.mxu0
  %v8348 = vadd.f32 0.0, %v8347
  %v8349 = vpop.f32.mrf.mxu0
  %v8350 = vadd.f32 0.0, %v8349
  %8351 = vmatmul.bf16.gmra.mxu0 %v8044
  %v8352 = vpop.f32.mrf.mxu0
  %v8353 = vadd.f32 0.0, %v8352
  %v8354 = vpop.f32.mrf.mxu0
  %v8355 = vadd.f32 0.0, %v8354
  %8356 = vmatmul.bf16.gmra.mxu0 %v8046
  %v8357 = vpop.f32.mrf.mxu0
  %v8358 = vadd.f32 0.0, %v8357
  %v8359 = vpop.f32.mrf.mxu0
  %v8360 = vadd.f32 0.0, %v8359
  %8361 = vmatmul.bf16.gmra.mxu0 %v8048
  %v8362 = vpop.f32.mrf.mxu0
  %v8363 = vadd.f32 0.0, %v8362
  %v8364 = vpop.f32.mrf.mxu0
  %v8365 = vadd.f32 0.0, %v8364
  %8366 = vmatmul.bf16.gmra.mxu0 %v8050
  %v8367 = vpop.f32.mrf.mxu0
  %v8368 = vadd.f32 0.0, %v8367
  %v8369 = vpop.f32.mrf.mxu0
  %v8370 = vadd.f32 0.0, %v8369
  %8371 = vmatmul.bf16.gmra.mxu0 %v8052
  %v8372 = vpop.f32.mrf.mxu0
  %v8373 = vadd.f32 0.0, %v8372
  %v8374 = vpop.f32.mrf.mxu0
  %v8375 = vadd.f32 0.0, %v8374
  %8376 = vmatmul.bf16.gmra.mxu0 %v8054
  %v8377 = vpop.f32.mrf.mxu0
  %v8378 = vadd.f32 0.0, %v8377
  %v8379 = vpop.f32.mrf.mxu0
  %v8380 = vadd.f32 0.0, %v8379
  %8381 = vmatmul.bf16.gmra.mxu0 %v8056
  %v8382 = vpop.f32.mrf.mxu0
  %v8383 = vadd.f32 0.0, %v8382
  %v8384 = vpop.f32.mrf.mxu0
  %v8385 = vadd.f32 0.0, %v8384
  %8386 = vmatmul.bf16.gmra.mxu0 %v8058
  %v8387 = vpop.f32.mrf.mxu0
  %v8388 = vadd.f32 0.0, %v8387
  %v8389 = vpop.f32.mrf.mxu0
  %v8390 = vadd.f32 0.0, %v8389
  %8391 = vmatmul.bf16.gmra.mxu0 %v8060
  %v8392 = vpop.f32.mrf.mxu0
  %v8393 = vadd.f32 0.0, %v8392
  %v8394 = vpop.f32.mrf.mxu0
  %v8395 = vadd.f32 0.0, %v8394
  %8396 = vmatmul.bf16.gmra.mxu0 %v8062
  %v8397 = vpop.f32.mrf.mxu0
  %v8398 = vadd.f32 0.0, %v8397
  %v8399 = vpop.f32.mrf.mxu0
  %v8400 = vadd.f32 0.0, %v8399
  %8401 = vmatmul.bf16.gmra.mxu0 %v8064
  %v8402 = vpop.f32.mrf.mxu0
  %v8403 = vadd.f32 0.0, %v8402
  %v8404 = vpop.f32.mrf.mxu0
  %v8405 = vadd.f32 0.0, %v8404
  %8406 = vmatmul.bf16.gmra.mxu0 %v8066
  %v8407 = vpop.f32.mrf.mxu0
  %v8408 = vadd.f32 0.0, %v8407
  %v8409 = vpop.f32.mrf.mxu0
  %v8410 = vadd.f32 0.0, %v8409
  %8411 = vmatmul.bf16.gmra.mxu0 %v8068
  %v8412 = vpop.f32.mrf.mxu0
  %v8413 = vadd.f32 0.0, %v8412
  %v8414 = vpop.f32.mrf.mxu0
  %v8415 = vadd.f32 0.0, %v8414
  %8416 = vmatmul.bf16.gmra.mxu0 %v8070
  %v8417 = vpop.f32.mrf.mxu0
  %v8418 = vadd.f32 0.0, %v8417
  %v8419 = vpop.f32.mrf.mxu0
  %v8420 = vadd.f32 0.0, %v8419
  %8421 = vmatmul.bf16.gmra.mxu0 %v8072
  %v8422 = vpop.f32.mrf.mxu0
  %v8423 = vadd.f32 0.0, %v8422
  %v8424 = vpop.f32.mrf.mxu0
  %v8425 = vadd.f32 0.0, %v8424
  %8426 = vmatmul.bf16.gmra.mxu0 %v8074
  %v8427 = vpop.f32.mrf.mxu0
  %v8428 = vadd.f32 0.0, %v8427
  %v8429 = vpop.f32.mrf.mxu0
  %v8430 = vadd.f32 0.0, %v8429
  %8431 = vmatmul.bf16.gmra.mxu0 %v8076
  %v8432 = vpop.f32.mrf.mxu0
  %v8433 = vadd.f32 0.0, %v8432
  %v8434 = vpop.f32.mrf.mxu0
  %v8435 = vadd.f32 0.0, %v8434
  %8436 = vmatmul.bf16.gmra.mxu0 %v8078
  %v8437 = vpop.f32.mrf.mxu0
  %v8438 = vadd.f32 0.0, %v8437
  %v8439 = vpop.f32.mrf.mxu0
  %v8440 = vadd.f32 0.0, %v8439
  %8441 = vmatmul.bf16.gmra.mxu0 %v8080
  %v8442 = vpop.f32.mrf.mxu0
  %v8443 = vadd.f32 0.0, %v8442
  %v8444 = vpop.f32.mrf.mxu0
  %v8445 = vadd.f32 0.0, %v8444
  %8446 = vmatmul.bf16.gmra.mxu0 %v8082
  %v8447 = vpop.f32.mrf.mxu0
  %v8448 = vadd.f32 0.0, %v8447
  %v8449 = vpop.f32.mrf.mxu0
  %v8450 = vadd.f32 0.0, %v8449
  %8451 = vmatmul.bf16.gmra.mxu0 %v8084
  %v8452 = vpop.f32.mrf.mxu0
  %v8453 = vadd.f32 0.0, %v8452
  %v8454 = vpop.f32.mrf.mxu0
  %v8455 = vadd.f32 0.0, %v8454
  %8456 = vmatmul.bf16.gmra.mxu0 %v8086
  %v8457 = vpop.f32.mrf.mxu0
  %v8458 = vadd.f32 0.0, %v8457
  %v8459 = vpop.f32.mrf.mxu0
  %v8460 = vadd.f32 0.0, %v8459
  %8461 = vmatmul.bf16.gmra.mxu0 %v8088
  %v8462 = vpop.f32.mrf.mxu0
  %v8463 = vadd.f32 0.0, %v8462
  %v8464 = vpop.f32.mrf.mxu0
  %v8465 = vadd.f32 0.0, %v8464
  %8466 = vmatmul.bf16.gmra.mxu0 %v8090
  %v8467 = vpop.f32.mrf.mxu0
  %v8468 = vadd.f32 0.0, %v8467
  %v8469 = vpop.f32.mrf.mxu0
  %v8470 = vadd.f32 0.0, %v8469
  %8471 = vmatmul.bf16.gmra.mxu0 %v8092
  %v8472 = vpop.f32.mrf.mxu0
  %v8473 = vadd.f32 0.0, %v8472
  %v8474 = vpop.f32.mrf.mxu0
  %v8475 = vadd.f32 0.0, %v8474
  %8476 = vmatmul.bf16.gmra.mxu0 %v8094
  %v8477 = vpop.f32.mrf.mxu0
  %v8478 = vadd.f32 0.0, %v8477
  %v8479 = vpop.f32.mrf.mxu0
  %v8480 = vadd.f32 0.0, %v8479
  %8481 = vmatmul.bf16.gmra.mxu0 %v8096
  %v8482 = vpop.f32.mrf.mxu0
  %v8483 = vadd.f32 0.0, %v8482
  %v8484 = vpop.f32.mrf.mxu0
  %v8485 = vadd.f32 0.0, %v8484
  %8486 = vmatmul.bf16.gmra.mxu0 %v8098
  %v8487 = vpop.f32.mrf.mxu0
  %v8488 = vadd.f32 0.0, %v8487
  %v8489 = vpop.f32.mrf.mxu0
  %v8490 = vadd.f32 0.0, %v8489
  %8491 = vmatmul.bf16.gmra.mxu0 %v8100
  %v8492 = vpop.f32.mrf.mxu0
  %v8493 = vadd.f32 0.0, %v8492
  %v8494 = vpop.f32.mrf.mxu0
  %v8495 = vadd.f32 0.0, %v8494
  %8496 = vmatmul.bf16.gmra.mxu0 %v8102
  %v8497 = vpop.f32.mrf.mxu0
  %v8498 = vadd.f32 0.0, %v8497
  %v8499 = vpop.f32.mrf.mxu0
  %v8500 = vadd.f32 0.0, %v8499
  %8501 = vmatmul.bf16.gmra.mxu0 %v8104
  %v8502 = vpop.f32.mrf.mxu0
  %v8503 = vadd.f32 0.0, %v8502
  %v8504 = vpop.f32.mrf.mxu0
  %v8505 = vadd.f32 0.0, %v8504
  %8506 = vmatmul.bf16.gmra.mxu0 %v8106
  %v8507 = vpop.f32.mrf.mxu0
  %v8508 = vadd.f32 0.0, %v8507
  %v8509 = vpop.f32.mrf.mxu0
  %v8510 = vadd.f32 0.0, %v8509
  %8511 = vmatmul.bf16.gmra.mxu0 %v8108
  %v8512 = vpop.f32.mrf.mxu0
  %v8513 = vadd.f32 0.0, %v8512
  %v8514 = vpop.f32.mrf.mxu0
  %v8515 = vadd.f32 0.0, %v8514
  %8516 = vmatmul.bf16.gmra.mxu0 %v8110
  %v8517 = vpop.f32.mrf.mxu0
  %v8518 = vadd.f32 0.0, %v8517
  %v8519 = vpop.f32.mrf.mxu0
  %v8520 = vadd.f32 0.0, %v8519
  %8521 = vmatmul.bf16.gmra.mxu0 %v8112
  %v8522 = vpop.f32.mrf.mxu0
  %v8523 = vadd.f32 0.0, %v8522
  %v8524 = vpop.f32.mrf.mxu0
  %v8525 = vadd.f32 0.0, %v8524
  %8526 = vmatmul.bf16.gmra.mxu0 %v8114
  %v8527 = vpop.f32.mrf.mxu0
  %v8528 = vadd.f32 0.0, %v8527
  %v8529 = vpop.f32.mrf.mxu0
  %v8530 = vadd.f32 0.0, %v8529
  %8531 = vmatmul.bf16.gmra.mxu0 %v8116
  %v8532 = vpop.f32.mrf.mxu0
  %v8533 = vadd.f32 0.0, %v8532
  %v8534 = vpop.f32.mrf.mxu0
  %v8535 = vadd.f32 0.0, %v8534
  %8536 = vmatmul.bf16.gmra.mxu0 %v8118
  %v8537 = vpop.f32.mrf.mxu0
  %v8538 = vadd.f32 0.0, %v8537
  %v8539 = vpop.f32.mrf.mxu0
  %v8540 = vadd.f32 0.0, %v8539
  %8541 = vmatmul.bf16.gmra.mxu0 %v8120
  %v8542 = vpop.f32.mrf.mxu0
  %v8543 = vadd.f32 0.0, %v8542
  %v8544 = vpop.f32.mrf.mxu0
  %v8545 = vadd.f32 0.0, %v8544
  %8546 = vmatmul.bf16.gmra.mxu0 %v8122
  %v8547 = vpop.f32.mrf.mxu0
  %v8548 = vadd.f32 0.0, %v8547
  %v8549 = vpop.f32.mrf.mxu0
  %v8550 = vadd.f32 0.0, %v8549
  %8551 = vmatmul.bf16.gmra.mxu0 %v8124
  %v8552 = vpop.f32.mrf.mxu0
  %v8553 = vadd.f32 0.0, %v8552
  %v8554 = vpop.f32.mrf.mxu0
  %v8555 = vadd.f32 0.0, %v8554
  %8556 = vmatmul.bf16.gmra.mxu0 %v8126
  %v8557 = vpop.f32.mrf.mxu0
  %v8558 = vadd.f32 0.0, %v8557
  %v8559 = vpop.f32.mrf.mxu0
  %v8560 = vadd.f32 0.0, %v8559
  %8561 = vmatmul.bf16.gmra.mxu0 %v8128
  %v8562 = vpop.f32.mrf.mxu0
  %v8563 = vadd.f32 0.0, %v8562
  %v8564 = vpop.f32.mrf.mxu0
  %v8565 = vadd.f32 0.0, %v8564
  %8566 = vmatmul.bf16.gmra.mxu0 %v8130
  %v8567 = vpop.f32.mrf.mxu0
  %v8568 = vadd.f32 0.0, %v8567
  %v8569 = vpop.f32.mrf.mxu0
  %v8570 = vadd.f32 0.0, %v8569
  %8571 = vmatmul.bf16.gmra.mxu0 %v8132
  %v8572 = vpop.f32.mrf.mxu0
  %v8573 = vadd.f32 0.0, %v8572
  %v8574 = vpop.f32.mrf.mxu0
  %v8575 = vadd.f32 0.0, %v8574
  %8576 = vmatmul.bf16.gmra.mxu0 %v8134
  %v8577 = vpop.f32.mrf.mxu0
  %v8578 = vadd.f32 0.0, %v8577
  %v8579 = vpop.f32.mrf.mxu0
  %v8580 = vadd.f32 0.0, %v8579
  %8581 = vmatmul.bf16.gmra.mxu0 %v8136
  %v8582 = vpop.f32.mrf.mxu0
  %v8583 = vadd.f32 0.0, %v8582
  %v8584 = vpop.f32.mrf.mxu0
  %v8585 = vadd.f32 0.0, %v8584
  %8586 = vmatmul.bf16.gmra.mxu0 %v8138
  %v8587 = vpop.f32.mrf.mxu0
  %v8588 = vadd.f32 0.0, %v8587
  %v8589 = vpop.f32.mrf.mxu0
  %v8590 = vadd.f32 0.0, %v8589
  %8591 = vmatmul.bf16.gmra.mxu0 %v8140
  %v8592 = vpop.f32.mrf.mxu0
  %v8593 = vadd.f32 0.0, %v8592
  %v8594 = vpop.f32.mrf.mxu0
  %v8595 = vadd.f32 0.0, %v8594
  %8596 = vmatmul.bf16.gmra.mxu0 %v8142
  %v8597 = vpop.f32.mrf.mxu0
  %v8598 = vadd.f32 0.0, %v8597
  %v8599 = vpop.f32.mrf.mxu0
  %v8600 = vadd.f32 0.0, %v8599
  %8601 = vmatmul.bf16.gmra.mxu0 %v8144
  %v8602 = vpop.f32.mrf.mxu0
  %v8603 = vadd.f32 0.0, %v8602
  %v8604 = vpop.f32.mrf.mxu0
  %v8605 = vadd.f32 0.0, %v8604
  %8606 = vmatmul.bf16.gmra.mxu0 %v8146
  %v8607 = vpop.f32.mrf.mxu0
  %v8608 = vadd.f32 0.0, %v8607
  %v8609 = vpop.f32.mrf.mxu0
  %v8610 = vadd.f32 0.0, %v8609
  %8611 = vmatmul.bf16.gmra.mxu0 %v8148
  %v8612 = vpop.f32.mrf.mxu0
  %v8613 = vadd.f32 0.0, %v8612
  %v8614 = vpop.f32.mrf.mxu0
  %v8615 = vadd.f32 0.0, %v8614
  %8616 = vmatmul.bf16.gmra.mxu0 %v8150
  %v8617 = vpop.f32.mrf.mxu0
  %v8618 = vadd.f32 0.0, %v8617
  %v8619 = vpop.f32.mrf.mxu0
  %v8620 = vadd.f32 0.0, %v8619
  %8621 = vmatmul.bf16.gmra.mxu0 %v8152
  %v8622 = vpop.f32.mrf.mxu0
  %v8623 = vadd.f32 0.0, %v8622
  %v8624 = vpop.f32.mrf.mxu0
  %v8625 = vadd.f32 0.0, %v8624
  %8626 = vmatmul.bf16.gmra.mxu0 %v8154
  %v8627 = vpop.f32.mrf.mxu0
  %v8628 = vadd.f32 0.0, %v8627
  %v8629 = vpop.f32.mrf.mxu0
  %v8630 = vadd.f32 0.0, %v8629
  %8631 = vmatmul.bf16.gmra.mxu0 %v8156
  %v8632 = vpop.f32.mrf.mxu0
  %v8633 = vadd.f32 0.0, %v8632
  %v8634 = vpop.f32.mrf.mxu0
  %v8635 = vadd.f32 0.0, %v8634
  %8636 = vmatmul.bf16.gmra.mxu0 %v8158
  %v8637 = vpop.f32.mrf.mxu0
  %v8638 = vadd.f32 0.0, %v8637
  %v8639 = vpop.f32.mrf.mxu0
  %v8640 = vadd.f32 0.0, %v8639
  %8641 = vmatmul.bf16.gmra.mxu0 %v8160
  %v8642 = vpop.f32.mrf.mxu0
  %v8643 = vadd.f32 0.0, %v8642
  %v8644 = vpop.f32.mrf.mxu0
  %v8645 = vadd.f32 0.0, %v8644
  %8646 = vmatmul.bf16.gmra.mxu0 %v8162
  %v8647 = vpop.f32.mrf.mxu0
  %v8648 = vadd.f32 0.0, %v8647
  %v8649 = vpop.f32.mrf.mxu0
  %v8650 = vadd.f32 0.0, %v8649
  %8651 = vmatmul.bf16.gmra.mxu0 %v8164
  %v8652 = vpop.f32.mrf.mxu0
  %v8653 = vadd.f32 0.0, %v8652
  %v8654 = vpop.f32.mrf.mxu0
  %v8655 = vadd.f32 0.0, %v8654
  %8656 = vmatmul.bf16.gmra.mxu0 %v8166
  %v8657 = vpop.f32.mrf.mxu0
  %v8658 = vadd.f32 0.0, %v8657
  %v8659 = vpop.f32.mrf.mxu0
  %v8660 = vadd.f32 0.0, %v8659
  %8661 = vmatmul.bf16.gmra.mxu0 %v8168
  %v8662 = vpop.f32.mrf.mxu0
  %v8663 = vadd.f32 0.0, %v8662
  %v8664 = vpop.f32.mrf.mxu0
  %v8665 = vadd.f32 0.0, %v8664
  %8666 = vmatmul.bf16.gmra.mxu0 %v8170
  %v8667 = vpop.f32.mrf.mxu0
  %v8668 = vadd.f32 0.0, %v8667
  %v8669 = vpop.f32.mrf.mxu0
  %v8670 = vadd.f32 0.0, %v8669
  %8671 = vmatmul.bf16.gmra.mxu0 %v8172
  %v8672 = vpop.f32.mrf.mxu0
  %v8673 = vadd.f32 0.0, %v8672
  %v8674 = vpop.f32.mrf.mxu0
  %v8675 = vadd.f32 0.0, %v8674
  %8676 = vmatmul.bf16.gmra.mxu0 %v8174
  %v8677 = vpop.f32.mrf.mxu0
  %v8678 = vadd.f32 0.0, %v8677
  %v8679 = vpop.f32.mrf.mxu0
  %v8680 = vadd.f32 0.0, %v8679
  %8681 = vmatmul.bf16.gmra.mxu0 %v8176
  %v8682 = vpop.f32.mrf.mxu0
  %v8683 = vadd.f32 0.0, %v8682
  %v8684 = vpop.f32.mrf.mxu0
  %v8685 = vadd.f32 0.0, %v8684
  %8686 = vmatmul.bf16.gmra.mxu0 %v8178
  %v8687 = vpop.f32.mrf.mxu0
  %v8688 = vadd.f32 0.0, %v8687
  %v8689 = vpop.f32.mrf.mxu0
  %v8690 = vadd.f32 0.0, %v8689
  %8691 = vmatmul.bf16.gmra.mxu0 %v8180
  %v8692 = vpop.f32.mrf.mxu0
  %v8693 = vadd.f32 0.0, %v8692
  %v8694 = vpop.f32.mrf.mxu0
  %v8695 = vadd.f32 0.0, %v8694
  %8696 = vmatmul.bf16.gmra.mxu0 %v8182
  %v8697 = vpop.f32.mrf.mxu0
  %v8698 = vadd.f32 0.0, %v8697
  %v8699 = vpop.f32.mrf.mxu0
  %v8700 = vadd.f32 0.0, %v8699
  %8701 = vmatmul.bf16.gmra.mxu0 %v8184
  %v8702 = vpop.f32.mrf.mxu0
  %v8703 = vadd.f32 0.0, %v8702
  %v8704 = vpop.f32.mrf.mxu0
  %v8705 = vadd.f32 0.0, %v8704
  %8706 = vmatmul.bf16.gmra.mxu0 %v8186
  %v8707 = vpop.f32.mrf.mxu0
  %v8708 = vadd.f32 0.0, %v8707
  %v8709 = vpop.f32.mrf.mxu0
  %v8710 = vadd.f32 0.0, %v8709
  %8711 = vmatmul.bf16.gmra.mxu0 %v8188
  %v8712 = vpop.f32.mrf.mxu0
  %v8713 = vadd.f32 0.0, %v8712
  %v8714 = vpop.f32.mrf.mxu0
  %v8715 = vadd.f32 0.0, %v8714
  %8716 = vmatmul.bf16.gmra.mxu0 %v8190
  %v8717 = vpop.f32.mrf.mxu0
  %v8718 = vadd.f32 0.0, %v8717
  %v8719 = vpop.f32.mrf.mxu0
  %v8720 = vadd.f32 0.0, %v8719
  %8721 = vmatmul.bf16.gmra.mxu0 %v8192
  %v8722 = vpop.f32.mrf.mxu0
  %v8723 = vadd.f32 0.0, %v8722
  %v8724 = vpop.f32.mrf.mxu0
  %v8725 = vadd.f32 0.0, %v8724
  %8726 = vmatmul.bf16.gmra.mxu0 %v8194
  %v8727 = vpop.f32.mrf.mxu0
  %v8728 = vadd.f32 0.0, %v8727
  %v8729 = vpop.f32.mrf.mxu0
  %v8730 = vadd.f32 0.0, %v8729
  %8731 = vmatmul.bf16.gmra.mxu0 %v8196
  %v8732 = vpop.f32.mrf.mxu0
  %v8733 = vadd.f32 0.0, %v8732
  %v8734 = vpop.f32.mrf.mxu0
  %v8735 = vadd.f32 0.0, %v8734
  %8736 = vmatmul.bf16.gmra.mxu0 %v8198
  %v8737 = vpop.f32.mrf.mxu0
  %v8738 = vadd.f32 0.0, %v8737
  %v8739 = vpop.f32.mrf.mxu0
  %v8740 = vadd.f32 0.0, %v8739
  %8741 = vmatmul.bf16.gmra.mxu0 %v8200
  %v8742 = vpop.f32.mrf.mxu0
  %v8743 = vadd.f32 0.0, %v8742
  %v8744 = vpop.f32.mrf.mxu0
  %v8745 = vadd.f32 0.0, %v8744
  %8746 = vmatmul.bf16.gmra.mxu0 %v8202
  %v8747 = vpop.f32.mrf.mxu0
  %v8748 = vadd.f32 0.0, %v8747
  %v8749 = vpop.f32.mrf.mxu0
  %v8750 = vadd.f32 0.0, %v8749
  %8751 = vmatmul.bf16.gmra.mxu0 %v8204
  %v8752 = vpop.f32.mrf.mxu0
  %v8753 = vadd.f32 0.0, %v8752
  %v8754 = vpop.f32.mrf.mxu0
  %v8755 = vadd.f32 0.0, %v8754
  %8756 = vmatmul.bf16.gmra.mxu0 %v8206
  %v8757 = vpop.f32.mrf.mxu0
  %v8758 = vadd.f32 0.0, %v8757
  %v8759 = vpop.f32.mrf.mxu0
  %v8760 = vadd.f32 0.0, %v8759
  %8761 = vmatmul.bf16.gmra.mxu0 %v8208
  %v8762 = vpop.f32.mrf.mxu0
  %v8763 = vadd.f32 0.0, %v8762
  %v8764 = vpop.f32.mrf.mxu0
  %v8765 = vadd.f32 0.0, %v8764
  %8766 = vmatmul.bf16.gmra.mxu0 %v8210
  %v8767 = vpop.f32.mrf.mxu0
  %v8768 = vadd.f32 0.0, %v8767
  %v8769 = vpop.f32.mrf.mxu0
  %v8770 = vadd.f32 0.0, %v8769
  %8771 = vmatmul.bf16.gmra.mxu0 %v8212
  %v8772 = vpop.f32.mrf.mxu0
  %v8773 = vadd.f32 0.0, %v8772
  %v8774 = vpop.f32.mrf.mxu0
  %v8775 = vadd.f32 0.0, %v8774
  %8776 = vmatmul.bf16.gmra.mxu0 %v8214
  %v8777 = vpop.f32.mrf.mxu0
  %v8778 = vadd.f32 0.0, %v8777
  %v8779 = vpop.f32.mrf.mxu0
  %v8780 = vadd.f32 0.0, %v8779
  %8781 = vmatmul.bf16.gmra.mxu0 %v8216
  %v8782 = vpop.f32.mrf.mxu0
  %v8783 = vadd.f32 0.0, %v8782
  %v8784 = vpop.f32.mrf.mxu0
  %v8785 = vadd.f32 0.0, %v8784
  %8786 = vmatmul.bf16.gmra.mxu0 %v8218
  %v8787 = vpop.f32.mrf.mxu0
  %v8788 = vadd.f32 0.0, %v8787
  %v8789 = vpop.f32.mrf.mxu0
  %v8790 = vadd.f32 0.0, %v8789
  %8791 = vmatmul.bf16.gmra.mxu0 %v8220
  %v8792 = vpop.f32.mrf.mxu0
  %v8793 = vadd.f32 0.0, %v8792
  %v8794 = vpop.f32.mrf.mxu0
  %v8795 = vadd.f32 0.0, %v8794
  %8796 = vmatmul.bf16.gmra.mxu0 %v8222
  %v8797 = vpop.f32.mrf.mxu0
  %v8798 = vadd.f32 0.0, %v8797
  %v8799 = vpop.f32.mrf.mxu0
  %v8800 = vadd.f32 0.0, %v8799
  %8801 = vmatmul.bf16.gmra.mxu0 %v8224
  %v8802 = vpop.f32.mrf.mxu0
  %v8803 = vadd.f32 0.0, %v8802
  %v8804 = vpop.f32.mrf.mxu0
  %v8805 = vadd.f32 0.0, %v8804
  %8806 = vmatmul.bf16.gmra.mxu0 %v8226
  %v8807 = vpop.f32.mrf.mxu0
  %v8808 = vadd.f32 0.0, %v8807
  %v8809 = vpop.f32.mrf.mxu0
  %v8810 = vadd.f32 0.0, %v8809
  %8811 = vmatmul.bf16.gmra.mxu0 %v8228
  %v8812 = vpop.f32.mrf.mxu0
  %v8813 = vadd.f32 0.0, %v8812
  %v8814 = vpop.f32.mrf.mxu0
  %v8815 = vadd.f32 0.0, %v8814
  %8816 = vmatmul.bf16.gmra.mxu0 %v8230
  %v8817 = vpop.f32.mrf.mxu0
  %v8818 = vadd.f32 0.0, %v8817
  %v8819 = vpop.f32.mrf.mxu0
  %v8820 = vadd.f32 0.0, %v8819
  %8821 = vmatmul.bf16.gmra.mxu0 %v8232
  %v8822 = vpop.f32.mrf.mxu0
  %v8823 = vadd.f32 0.0, %v8822
  %v8824 = vpop.f32.mrf.mxu0
  %v8825 = vadd.f32 0.0, %v8824
  %8826 = vmatmul.bf16.gmra.mxu0 %v8234
  %v8827 = vpop.f32.mrf.mxu0
  %v8828 = vadd.f32 0.0, %v8827
  %v8829 = vpop.f32.mrf.mxu0
  %v8830 = vadd.f32 0.0, %v8829
  %8831 = vmatmul.bf16.gmra.mxu0 %v8236
  %v8832 = vpop.f32.mrf.mxu0
  %v8833 = vadd.f32 0.0, %v8832
  %v8834 = vpop.f32.mrf.mxu0
  %v8835 = vadd.f32 0.0, %v8834
  %8836 = vmatmul.bf16.gmra.mxu0 %v8238
  %v8837 = vpop.f32.mrf.mxu0
  %v8838 = vadd.f32 0.0, %v8837
  %v8839 = vpop.f32.mrf.mxu0
  %v8840 = vadd.f32 0.0, %v8839
  %8841 = vmatmul.bf16.gmra.mxu0 %v8240
  %v8842 = vpop.f32.mrf.mxu0
  %v8843 = vadd.f32 0.0, %v8842
  %v8844 = vpop.f32.mrf.mxu0
  %v8845 = vadd.f32 0.0, %v8844
  %8846 = vmatmul.bf16.gmra.mxu0 %v8242
  %v8847 = vpop.f32.mrf.mxu0
  %v8848 = vadd.f32 0.0, %v8847
  %v8849 = vpop.f32.mrf.mxu0
  %v8850 = vadd.f32 0.0, %v8849
  %8851 = vmatmul.bf16.gmra.mxu0 %v8244
  %v8852 = vpop.f32.mrf.mxu0
  %v8853 = vadd.f32 0.0, %v8852
  %v8854 = vpop.f32.mrf.mxu0
  %v8855 = vadd.f32 0.0, %v8854
  %8856 = vmatmul.bf16.gmra.mxu0 %v8246
  %v8857 = vpop.f32.mrf.mxu0
  %v8858 = vadd.f32 0.0, %v8857
  %v8859 = vpop.f32.mrf.mxu0
  %v8860 = vadd.f32 0.0, %v8859
  %8861 = vmatmul.bf16.gmra.mxu0 %v8248
  %v8862 = vpop.f32.mrf.mxu0
  %v8863 = vadd.f32 0.0, %v8862
  %v8864 = vpop.f32.mrf.mxu0
  %v8865 = vadd.f32 0.0, %v8864
  %8866 = vmatmul.bf16.gmra.mxu0 %v8250
  %v8867 = vpop.f32.mrf.mxu0
  %v8868 = vadd.f32 0.0, %v8867
  %v8869 = vpop.f32.mrf.mxu0
  %v8870 = vadd.f32 0.0, %v8869
  %8871 = vmatmul.bf16.gmra.mxu0 %v8252
  %v8872 = vpop.f32.mrf.mxu0
  %v8873 = vadd.f32 0.0, %v8872
  %v8874 = vpop.f32.mrf.mxu0
  %v8875 = vadd.f32 0.0, %v8874
  %8876 = vmatmul.bf16.gmra.mxu0 %v8254
  %v8877 = vpop.f32.mrf.mxu0
  %v8878 = vadd.f32 0.0, %v8877
  %v8879 = vpop.f32.mrf.mxu0
  %v8880 = vadd.f32 0.0, %v8879
  %8881 = vmatmul.bf16.gmra.mxu0 %v8256
  %v8882 = vpop.f32.mrf.mxu0
  %v8883 = vadd.f32 0.0, %v8882
  %v8884 = vpop.f32.mrf.mxu0
  %v8885 = vadd.f32 0.0, %v8884
  %8886 = vmatmul.bf16.gmra.mxu0 %v8258
  %v8887 = vpop.f32.mrf.mxu0
  %v8888 = vadd.f32 0.0, %v8887
  %v8889 = vpop.f32.mrf.mxu0
  %v8890 = vadd.f32 0.0, %v8889
  %8891 = vmatmul.bf16.gmra.mxu0 %v8260
  %v8892 = vpop.f32.mrf.mxu0
  %v8893 = vadd.f32 0.0, %v8892
  %v8894 = vpop.f32.mrf.mxu0
  %v8895 = vadd.f32 0.0, %v8894
  %8896 = vmatmul.bf16.gmra.mxu0 %v8262
  %v8897 = vpop.f32.mrf.mxu0
  %v8898 = vadd.f32 0.0, %v8897
  %v8899 = vpop.f32.mrf.mxu0
  %v8900 = vadd.f32 0.0, %v8899
  %8901 = vmatmul.bf16.gmra.mxu0 %v8264
  %v8902 = vpop.f32.mrf.mxu0
  %v8903 = vadd.f32 0.0, %v8902
  %v8904 = vpop.f32.mrf.mxu0
  %v8905 = vadd.f32 0.0, %v8904
  %8906 = vmatmul.bf16.gmra.mxu0 %v8266
  %v8907 = vpop.f32.mrf.mxu0
  %v8908 = vadd.f32 0.0, %v8907
  %v8909 = vpop.f32.mrf.mxu0
  %v8910 = vadd.f32 0.0, %v8909
  %8911 = vmatmul.bf16.gmra.mxu0 %v8268
  %v8912 = vpop.f32.mrf.mxu0
  %v8913 = vadd.f32 0.0, %v8912
  %v8914 = vpop.f32.mrf.mxu0
  %v8915 = vadd.f32 0.0, %v8914
  %8916 = vmatmul.bf16.gmra.mxu0 %v8270
  %v8917 = vpop.f32.mrf.mxu0
  %v8918 = vadd.f32 0.0, %v8917
  %v8919 = vpop.f32.mrf.mxu0
  %v8920 = vadd.f32 0.0, %v8919
  %8921 = vmatmul.bf16.gmra.mxu0 %v8272
  %v8922 = vpop.f32.mrf.mxu0
  %v8923 = vadd.f32 0.0, %v8922
  %v8924 = vpop.f32.mrf.mxu0
  %v8925 = vadd.f32 0.0, %v8924
  %8926 = vmatmul.bf16.gmra.mxu0 %v8274
  %v8927 = vpop.f32.mrf.mxu0
  %v8928 = vadd.f32 0.0, %v8927
  %v8929 = vpop.f32.mrf.mxu0
  %v8930 = vadd.f32 0.0, %v8929
  %8931 = vdwg.mxu0
  %v8932 = vmax.f32 %v8293, 0.0
  %v8933 = vmax.f32 %v8295, 0.0
  %v8934 = vmax.f32 %v8298, 0.0
  %v8935 = vmax.f32 %v8300, 0.0
  %v8936 = vmax.f32 %v8303, 0.0
  %v8937 = vmax.f32 %v8305, 0.0
  %v8938 = vmax.f32 %v8308, 0.0
  %v8939 = vmax.f32 %v8310, 0.0
  %v8940 = vmax.f32 %v8313, 0.0
  %v8941 = vmax.f32 %v8315, 0.0
  %v8942 = vmax.f32 %v8318, 0.0
  %v8943 = vmax.f32 %v8320, 0.0
  %v8944 = vmax.f32 %v8323, 0.0
  %v8945 = vmax.f32 %v8325, 0.0
  %v8946 = vmax.f32 %v8328, 0.0
  %v8947 = vmax.f32 %v8330, 0.0
  %v8948 = vmax.f32 %v8333, 0.0
  %v8949 = vmax.f32 %v8335, 0.0
  %v8950 = vmax.f32 %v8338, 0.0
  %v8951 = vmax.f32 %v8340, 0.0
  %v8952 = vmax.f32 %v8343, 0.0
  %v8953 = vmax.f32 %v8345, 0.0
  %v8954 = vmax.f32 %v8348, 0.0
  %v8955 = vmax.f32 %v8350, 0.0
  %v8956 = vmax.f32 %v8353, 0.0
  %v8957 = vmax.f32 %v8355, 0.0
  %v8958 = vmax.f32 %v8358, 0.0
  %v8959 = vmax.f32 %v8360, 0.0
  %v8960 = vmax.f32 %v8363, 0.0
  %v8961 = vmax.f32 %v8365, 0.0
  %v8962 = vmax.f32 %v8368, 0.0
  %v8963 = vmax.f32 %v8370, 0.0
  %v8964 = vmax.f32 %v8373, 0.0
  %v8965 = vmax.f32 %v8375, 0.0
  %v8966 = vmax.f32 %v8378, 0.0
  %v8967 = vmax.f32 %v8380, 0.0
  %v8968 = vmax.f32 %v8383, 0.0
  %v8969 = vmax.f32 %v8385, 0.0
  %v8970 = vmax.f32 %v8388, 0.0
  %v8971 = vmax.f32 %v8390, 0.0
  %v8972 = vmax.f32 %v8393, 0.0
  %v8973 = vmax.f32 %v8395, 0.0
  %v8974 = vmax.f32 %v8398, 0.0
  %v8975 = vmax.f32 %v8400, 0.0
  %v8976 = vmax.f32 %v8403, 0.0
  %v8977 = vmax.f32 %v8405, 0.0
  %v8978 = vmax.f32 %v8408, 0.0
  %v8979 = vmax.f32 %v8410, 0.0
  %v8980 = vmax.f32 %v8413, 0.0
  %v8981 = vmax.f32 %v8415, 0.0
  %v8982 = vmax.f32 %v8418, 0.0
  %v8983 = vmax.f32 %v8420, 0.0
  %v8984 = vmax.f32 %v8423, 0.0
  %v8985 = vmax.f32 %v8425, 0.0
  %v8986 = vmax.f32 %v8428, 0.0
  %v8987 = vmax.f32 %v8430, 0.0
  %v8988 = vmax.f32 %v8433, 0.0
  %v8989 = vmax.f32 %v8435, 0.0
  %v8990 = vmax.f32 %v8438, 0.0
  %v8991 = vmax.f32 %v8440, 0.0
  %v8992 = vmax.f32 %v8443, 0.0
  %v8993 = vmax.f32 %v8445, 0.0
  %v8994 = vmax.f32 %v8448, 0.0
  %v8995 = vmax.f32 %v8450, 0.0
  %v8996 = vmax.f32 %v8453, 0.0
  %v8997 = vmax.f32 %v8455, 0.0
  %v8998 = vmax.f32 %v8458, 0.0
  %v8999 = vmax.f32 %v8460, 0.0
  %v9000 = vmax.f32 %v8463, 0.0
  %v9001 = vmax.f32 %v8465, 0.0
  %v9002 = vmax.f32 %v8468, 0.0
  %v9003 = vmax.f32 %v8470, 0.0
  %v9004 = vmax.f32 %v8473, 0.0
  %v9005 = vmax.f32 %v8475, 0.0
  %v9006 = vmax.f32 %v8478, 0.0
  %v9007 = vmax.f32 %v8480, 0.0
  %v9008 = vmax.f32 %v8483, 0.0
  %v9009 = vmax.f32 %v8485, 0.0
  %v9010 = vmax.f32 %v8488, 0.0
  %v9011 = vmax.f32 %v8490, 0.0
  %v9012 = vmax.f32 %v8493, 0.0
  %v9013 = vmax.f32 %v8495, 0.0
  %v9014 = vmax.f32 %v8498, 0.0
  %v9015 = vmax.f32 %v8500, 0.0
  %v9016 = vmax.f32 %v8503, 0.0
  %v9017 = vmax.f32 %v8505, 0.0
  %v9018 = vmax.f32 %v8508, 0.0
  %v9019 = vmax.f32 %v8510, 0.0
  %v9020 = vmax.f32 %v8513, 0.0
  %v9021 = vmax.f32 %v8515, 0.0
  %v9022 = vmax.f32 %v8518, 0.0
  %v9023 = vmax.f32 %v8520, 0.0
  %v9024 = vmax.f32 %v8523, 0.0
  %v9025 = vmax.f32 %v8525, 0.0
  %v9026 = vmax.f32 %v8528, 0.0
  %v9027 = vmax.f32 %v8530, 0.0
  %v9028 = vmax.f32 %v8533, 0.0
  %v9029 = vmax.f32 %v8535, 0.0
  %v9030 = vmax.f32 %v8538, 0.0
  %v9031 = vmax.f32 %v8540, 0.0
  %v9032 = vmax.f32 %v8543, 0.0
  %v9033 = vmax.f32 %v8545, 0.0
  %v9034 = vmax.f32 %v8548, 0.0
  %v9035 = vmax.f32 %v8550, 0.0
  %v9036 = vmax.f32 %v8553, 0.0
  %v9037 = vmax.f32 %v8555, 0.0
  %v9038 = vmax.f32 %v8558, 0.0
  %v9039 = vmax.f32 %v8560, 0.0
  %v9040 = vmax.f32 %v8563, 0.0
  %v9041 = vmax.f32 %v8565, 0.0
  %v9042 = vmax.f32 %v8568, 0.0
  %v9043 = vmax.f32 %v8570, 0.0
  %v9044 = vmax.f32 %v8573, 0.0
  %v9045 = vmax.f32 %v8575, 0.0
  %v9046 = vmax.f32 %v8578, 0.0
  %v9047 = vmax.f32 %v8580, 0.0
  %v9048 = vmax.f32 %v8583, 0.0
  %v9049 = vmax.f32 %v8585, 0.0
  %v9050 = vmax.f32 %v8588, 0.0
  %v9051 = vmax.f32 %v8590, 0.0
  %v9052 = vmax.f32 %v8593, 0.0
  %v9053 = vmax.f32 %v8595, 0.0
  %v9054 = vmax.f32 %v8598, 0.0
  %v9055 = vmax.f32 %v8600, 0.0
  %v9056 = vmax.f32 %v8603, 0.0
  %v9057 = vmax.f32 %v8605, 0.0
  %v9058 = vmax.f32 %v8608, 0.0
  %v9059 = vmax.f32 %v8610, 0.0
  %v9060 = vmax.f32 %v8613, 0.0
  %v9061 = vmax.f32 %v8615, 0.0
  %v9062 = vmax.f32 %v8618, 0.0
  %v9063 = vmax.f32 %v8620, 0.0
  %v9064 = vmax.f32 %v8623, 0.0
  %v9065 = vmax.f32 %v8625, 0.0
  %v9066 = vmax.f32 %v8628, 0.0
  %v9067 = vmax.f32 %v8630, 0.0
  %v9068 = vmax.f32 %v8633, 0.0
  %v9069 = vmax.f32 %v8635, 0.0
  %v9070 = vmax.f32 %v8638, 0.0
  %v9071 = vmax.f32 %v8640, 0.0
  %v9072 = vmax.f32 %v8643, 0.0
  %v9073 = vmax.f32 %v8645, 0.0
  %v9074 = vmax.f32 %v8648, 0.0
  %v9075 = vmax.f32 %v8650, 0.0
  %v9076 = vmax.f32 %v8653, 0.0
  %v9077 = vmax.f32 %v8655, 0.0
  %v9078 = vmax.f32 %v8658, 0.0
  %v9079 = vmax.f32 %v8660, 0.0
  %v9080 = vmax.f32 %v8663, 0.0
  %v9081 = vmax.f32 %v8665, 0.0
  %v9082 = vmax.f32 %v8668, 0.0
  %v9083 = vmax.f32 %v8670, 0.0
  %v9084 = vmax.f32 %v8673, 0.0
  %v9085 = vmax.f32 %v8675, 0.0
  %v9086 = vmax.f32 %v8678, 0.0
  %v9087 = vmax.f32 %v8680, 0.0
  %v9088 = vmax.f32 %v8683, 0.0
  %v9089 = vmax.f32 %v8685, 0.0
  %v9090 = vmax.f32 %v8688, 0.0
  %v9091 = vmax.f32 %v8690, 0.0
  %v9092 = vmax.f32 %v8693, 0.0
  %v9093 = vmax.f32 %v8695, 0.0
  %v9094 = vmax.f32 %v8698, 0.0
  %v9095 = vmax.f32 %v8700, 0.0
  %v9096 = vmax.f32 %v8703, 0.0
  %v9097 = vmax.f32 %v8705, 0.0
  %v9098 = vmax.f32 %v8708, 0.0
  %v9099 = vmax.f32 %v8710, 0.0
  %v9100 = vmax.f32 %v8713, 0.0
  %v9101 = vmax.f32 %v8715, 0.0
  %v9102 = vmax.f32 %v8718, 0.0
  %v9103 = vmax.f32 %v8720, 0.0
  %v9104 = vmax.f32 %v8723, 0.0
  %v9105 = vmax.f32 %v8725, 0.0
  %v9106 = vmax.f32 %v8728, 0.0
  %v9107 = vmax.f32 %v8730, 0.0
  %v9108 = vmax.f32 %v8733, 0.0
  %v9109 = vmax.f32 %v8735, 0.0
  %v9110 = vmax.f32 %v8738, 0.0
  %v9111 = vmax.f32 %v8740, 0.0
  %v9112 = vmax.f32 %v8743, 0.0
  %v9113 = vmax.f32 %v8745, 0.0
  %v9114 = vmax.f32 %v8748, 0.0
  %v9115 = vmax.f32 %v8750, 0.0
  %v9116 = vmax.f32 %v8753, 0.0
  %v9117 = vmax.f32 %v8755, 0.0
  %v9118 = vmax.f32 %v8758, 0.0
  %v9119 = vmax.f32 %v8760, 0.0
  %v9120 = vmax.f32 %v8763, 0.0
  %v9121 = vmax.f32 %v8765, 0.0
  %v9122 = vmax.f32 %v8768, 0.0
  %v9123 = vmax.f32 %v8770, 0.0
  %v9124 = vmax.f32 %v8773, 0.0
  %v9125 = vmax.f32 %v8775, 0.0
  %v9126 = vmax.f32 %v8778, 0.0
  %v9127 = vmax.f32 %v8780, 0.0
  %v9128 = vmax.f32 %v8783, 0.0
  %v9129 = vmax.f32 %v8785, 0.0
  %v9130 = vmax.f32 %v8788, 0.0
  %v9131 = vmax.f32 %v8790, 0.0
  %v9132 = vmax.f32 %v8793, 0.0
  %v9133 = vmax.f32 %v8795, 0.0
  %v9134 = vmax.f32 %v8798, 0.0
  %v9135 = vmax.f32 %v8800, 0.0
  %v9136 = vmax.f32 %v8803, 0.0
  %v9137 = vmax.f32 %v8805, 0.0
  %v9138 = vmax.f32 %v8808, 0.0
  %v9139 = vmax.f32 %v8810, 0.0
  %v9140 = vmax.f32 %v8813, 0.0
  %v9141 = vmax.f32 %v8815, 0.0
  %v9142 = vmax.f32 %v8818, 0.0
  %v9143 = vmax.f32 %v8820, 0.0
  %v9144 = vmax.f32 %v8823, 0.0
  %v9145 = vmax.f32 %v8825, 0.0
  %v9146 = vmax.f32 %v8828, 0.0
  %v9147 = vmax.f32 %v8830, 0.0
  %v9148 = vmax.f32 %v8833, 0.0
  %v9149 = vmax.f32 %v8835, 0.0
  %v9150 = vmax.f32 %v8838, 0.0
  %v9151 = vmax.f32 %v8840, 0.0
  %v9152 = vmax.f32 %v8843, 0.0
  %v9153 = vmax.f32 %v8845, 0.0
  %v9154 = vmax.f32 %v8848, 0.0
  %v9155 = vmax.f32 %v8850, 0.0
  %v9156 = vmax.f32 %v8853, 0.0
  %v9157 = vmax.f32 %v8855, 0.0
  %v9158 = vmax.f32 %v8858, 0.0
  %v9159 = vmax.f32 %v8860, 0.0
  %v9160 = vmax.f32 %v8863, 0.0
  %v9161 = vmax.f32 %v8865, 0.0
  %v9162 = vmax.f32 %v8868, 0.0
  %v9163 = vmax.f32 %v8870, 0.0
  %v9164 = vmax.f32 %v8873, 0.0
  %v9165 = vmax.f32 %v8875, 0.0
  %v9166 = vmax.f32 %v8878, 0.0
  %v9167 = vmax.f32 %v8880, 0.0
  %v9168 = vmax.f32 %v8883, 0.0
  %v9169 = vmax.f32 %v8885, 0.0
  %v9170 = vmax.f32 %v8888, 0.0
  %v9171 = vmax.f32 %v8890, 0.0
  %v9172 = vmax.f32 %v8893, 0.0
  %v9173 = vmax.f32 %v8895, 0.0
  %v9174 = vmax.f32 %v8898, 0.0
  %v9175 = vmax.f32 %v8900, 0.0
  %v9176 = vmax.f32 %v8903, 0.0
  %v9177 = vmax.f32 %v8905, 0.0
  %v9178 = vmax.f32 %v8908, 0.0
  %v9179 = vmax.f32 %v8910, 0.0
  %v9180 = vmax.f32 %v8913, 0.0
  %v9181 = vmax.f32 %v8915, 0.0
  %v9182 = vmax.f32 %v8918, 0.0
  %v9183 = vmax.f32 %v8920, 0.0
  %v9184 = vmax.f32 %v8923, 0.0
  %v9185 = vmax.f32 %v8925, 0.0
  %v9186 = vmax.f32 %v8928, 0.0
  %v9187 = vmax.f32 %v8930, 0.0
  %v9188 = vadd.f32 %v8932, %v8933
  %v9189 = vadd.f32 %v9188, %v8934
  %v9190 = vadd.f32 %v9189, %v8935
  %v9191 = vadd.f32 %v9190, %v8936
  %v9192 = vadd.f32 %v9191, %v8937
  %v9193 = vadd.f32 %v9192, %v8938
  %v9194 = vadd.f32 %v9193, %v8939
  %v9195 = vadd.f32 %v9194, %v8940
  %v9196 = vadd.f32 %v9195, %v8941
  %v9197 = vadd.f32 %v9196, %v8942
  %v9198 = vadd.f32 %v9197, %v8943
  %v9199 = vadd.f32 %v9198, %v8944
  %v9200 = vadd.f32 %v9199, %v8945
  %v9201 = vadd.f32 %v9200, %v8946
  %v9202 = vadd.f32 %v9201, %v8947
  %v9203 = vadd.f32 %v9202, %v8948
  %v9204 = vadd.f32 %v9203, %v8949
  %v9205 = vadd.f32 %v9204, %v8950
  %v9206 = vadd.f32 %v9205, %v8951
  %v9207 = vadd.f32 %v9206, %v8952
  %v9208 = vadd.f32 %v9207, %v8953
  %v9209 = vadd.f32 %v9208, %v8954
  %v9210 = vadd.f32 %v9209, %v8955
  %v9211 = vadd.f32 %v9210, %v8956
  %v9212 = vadd.f32 %v9211, %v8957
  %v9213 = vadd.f32 %v9212, %v8958
  %v9214 = vadd.f32 %v9213, %v8959
  %v9215 = vadd.f32 %v9214, %v8960
  %v9216 = vadd.f32 %v9215, %v8961
  %v9217 = vadd.f32 %v9216, %v8962
  %v9218 = vadd.f32 %v9217, %v8963
  %v9219 = vrot.slane %v9218, 4
  %v9220 = vadd.f32 %v9218, %v9219
  %v9221 = vrot.slane %v9220, 2
  %v9222 = vadd.f32 %v9220, %v9221
  %v9223 = vrot.slane %v9222, 1
  %v9224 = vadd.f32 %v9222, %v9223
  %v9225 = vadd.f32 %v8964, %v8965
  %v9226 = vadd.f32 %v9225, %v8966
  %v9227 = vadd.f32 %v9226, %v8967
  %v9228 = vadd.f32 %v9227, %v8968
  %v9229 = vadd.f32 %v9228, %v8969
  %v9230 = vadd.f32 %v9229, %v8970
  %v9231 = vadd.f32 %v9230, %v8971
  %v9232 = vadd.f32 %v9231, %v8972
  %v9233 = vadd.f32 %v9232, %v8973
  %v9234 = vadd.f32 %v9233, %v8974
  %v9235 = vadd.f32 %v9234, %v8975
  %v9236 = vadd.f32 %v9235, %v8976
  %v9237 = vadd.f32 %v9236, %v8977
  %v9238 = vadd.f32 %v9237, %v8978
  %v9239 = vadd.f32 %v9238, %v8979
  %v9240 = vadd.f32 %v9239, %v8980
  %v9241 = vadd.f32 %v9240, %v8981
  %v9242 = vadd.f32 %v9241, %v8982
  %v9243 = vadd.f32 %v9242, %v8983
  %v9244 = vadd.f32 %v9243, %v8984
  %v9245 = vadd.f32 %v9244, %v8985
  %v9246 = vadd.f32 %v9245, %v8986
  %v9247 = vadd.f32 %v9246, %v8987
  %v9248 = vadd.f32 %v9247, %v8988
  %v9249 = vadd.f32 %v9248, %v8989
  %v9250 = vadd.f32 %v9249, %v8990
  %v9251 = vadd.f32 %v9250, %v8991
  %v9252 = vadd.f32 %v9251, %v8992
  %v9253 = vadd.f32 %v9252, %v8993
  %v9254 = vadd.f32 %v9253, %v8994
  %v9255 = vadd.f32 %v9254, %v8995
  %v9256 = vrot.slane %v9255, 4
  %v9257 = vadd.f32 %v9255, %v9256
  %v9258 = vrot.slane %v9257, 2
  %v9259 = vadd.f32 %v9257, %v9258
  %v9260 = vrot.slane %v9259, 1
  %v9261 = vadd.f32 %v9259, %v9260
  %v9262 = vadd.f32 %v8996, %v8997
  %v9263 = vadd.f32 %v9262, %v8998
  %v9264 = vadd.f32 %v9263, %v8999
  %v9265 = vadd.f32 %v9264, %v9000
  %v9266 = vadd.f32 %v9265, %v9001
  %v9267 = vadd.f32 %v9266, %v9002
  %v9268 = vadd.f32 %v9267, %v9003
  %v9269 = vadd.f32 %v9268, %v9004
  %v9270 = vadd.f32 %v9269, %v9005
  %v9271 = vadd.f32 %v9270, %v9006
  %v9272 = vadd.f32 %v9271, %v9007
  %v9273 = vadd.f32 %v9272, %v9008
  %v9274 = vadd.f32 %v9273, %v9009
  %v9275 = vadd.f32 %v9274, %v9010
  %v9276 = vadd.f32 %v9275, %v9011
  %v9277 = vadd.f32 %v9276, %v9012
  %v9278 = vadd.f32 %v9277, %v9013
  %v9279 = vadd.f32 %v9278, %v9014
  %v9280 = vadd.f32 %v9279, %v9015
  %v9281 = vadd.f32 %v9280, %v9016
  %v9282 = vadd.f32 %v9281, %v9017
  %v9283 = vadd.f32 %v9282, %v9018
  %v9284 = vadd.f32 %v9283, %v9019
  %v9285 = vadd.f32 %v9284, %v9020
  %v9286 = vadd.f32 %v9285, %v9021
  %v9287 = vadd.f32 %v9286, %v9022
  %v9288 = vadd.f32 %v9287, %v9023
  %v9289 = vadd.f32 %v9288, %v9024
  %v9290 = vadd.f32 %v9289, %v9025
  %v9291 = vadd.f32 %v9290, %v9026
  %v9292 = vadd.f32 %v9291, %v9027
  %v9293 = vrot.slane %v9292, 4
  %v9294 = vadd.f32 %v9292, %v9293
  %v9295 = vrot.slane %v9294, 2
  %v9296 = vadd.f32 %v9294, %v9295
  %v9297 = vrot.slane %v9296, 1
  %v9298 = vadd.f32 %v9296, %v9297
  %v9299 = vadd.f32 %v9028, %v9029
  %v9300 = vadd.f32 %v9299, %v9030
  %v9301 = vadd.f32 %v9300, %v9031
  %v9302 = vadd.f32 %v9301, %v9032
  %v9303 = vadd.f32 %v9302, %v9033
  %v9304 = vadd.f32 %v9303, %v9034
  %v9305 = vadd.f32 %v9304, %v9035
  %v9306 = vadd.f32 %v9305, %v9036
  %v9307 = vadd.f32 %v9306, %v9037
  %v9308 = vadd.f32 %v9307, %v9038
  %v9309 = vadd.f32 %v9308, %v9039
  %v9310 = vadd.f32 %v9309, %v9040
  %v9311 = vadd.f32 %v9310, %v9041
  %v9312 = vadd.f32 %v9311, %v9042
  %v9313 = vadd.f32 %v9312, %v9043
  %v9314 = vadd.f32 %v9313, %v9044
  %v9315 = vadd.f32 %v9314, %v9045
  %v9316 = vadd.f32 %v9315, %v9046
  %v9317 = vadd.f32 %v9316, %v9047
  %v9318 = vadd.f32 %v9317, %v9048
  %v9319 = vadd.f32 %v9318, %v9049
  %v9320 = vadd.f32 %v9319, %v9050
  %v9321 = vadd.f32 %v9320, %v9051
  %v9322 = vadd.f32 %v9321, %v9052
  %v9323 = vadd.f32 %v9322, %v9053
  %v9324 = vadd.f32 %v9323, %v9054
  %v9325 = vadd.f32 %v9324, %v9055
  %v9326 = vadd.f32 %v9325, %v9056
  %v9327 = vadd.f32 %v9326, %v9057
  %v9328 = vadd.f32 %v9327, %v9058
  %v9329 = vadd.f32 %v9328, %v9059
  %v9330 = vrot.slane %v9329, 4
  %v9331 = vadd.f32 %v9329, %v9330
  %v9332 = vrot.slane %v9331, 2
  %v9333 = vadd.f32 %v9331, %v9332
  %v9334 = vrot.slane %v9333, 1
  %v9335 = vadd.f32 %v9333, %v9334
  %v9336 = vadd.f32 %v9060, %v9061
  %v9337 = vadd.f32 %v9336, %v9062
  %v9338 = vadd.f32 %v9337, %v9063
  %v9339 = vadd.f32 %v9338, %v9064
  %v9340 = vadd.f32 %v9339, %v9065
  %v9341 = vadd.f32 %v9340, %v9066
  %v9342 = vadd.f32 %v9341, %v9067
  %v9343 = vadd.f32 %v9342, %v9068
  %v9344 = vadd.f32 %v9343, %v9069
  %v9345 = vadd.f32 %v9344, %v9070
  %v9346 = vadd.f32 %v9345, %v9071
  %v9347 = vadd.f32 %v9346, %v9072
  %v9348 = vadd.f32 %v9347, %v9073
  %v9349 = vadd.f32 %v9348, %v9074
  %v9350 = vadd.f32 %v9349, %v9075
  %v9351 = vadd.f32 %v9350, %v9076
  %v9352 = vadd.f32 %v9351, %v9077
  %v9353 = vadd.f32 %v9352, %v9078
  %v9354 = vadd.f32 %v9353, %v9079
  %v9355 = vadd.f32 %v9354, %v9080
  %v9356 = vadd.f32 %v9355, %v9081
  %v9357 = vadd.f32 %v9356, %v9082
  %v9358 = vadd.f32 %v9357, %v9083
  %v9359 = vadd.f32 %v9358, %v9084
  %v9360 = vadd.f32 %v9359, %v9085
  %v9361 = vadd.f32 %v9360, %v9086
  %v9362 = vadd.f32 %v9361, %v9087
  %v9363 = vadd.f32 %v9362, %v9088
  %v9364 = vadd.f32 %v9363, %v9089
  %v9365 = vadd.f32 %v9364, %v9090
  %v9366 = vadd.f32 %v9365, %v9091
  %v9367 = vrot.slane %v9366, 4
  %v9368 = vadd.f32 %v9366, %v9367
  %v9369 = vrot.slane %v9368, 2
  %v9370 = vadd.f32 %v9368, %v9369
  %v9371 = vrot.slane %v9370, 1
  %v9372 = vadd.f32 %v9370, %v9371
  %v9373 = vadd.f32 %v9092, %v9093
  %v9374 = vadd.f32 %v9373, %v9094
  %v9375 = vadd.f32 %v9374, %v9095
  %v9376 = vadd.f32 %v9375, %v9096
  %v9377 = vadd.f32 %v9376, %v9097
  %v9378 = vadd.f32 %v9377, %v9098
  %v9379 = vadd.f32 %v9378, %v9099
  %v9380 = vadd.f32 %v9379, %v9100
  %v9381 = vadd.f32 %v9380, %v9101
  %v9382 = vadd.f32 %v9381, %v9102
  %v9383 = vadd.f32 %v9382, %v9103
  %v9384 = vadd.f32 %v9383, %v9104
  %v9385 = vadd.f32 %v9384, %v9105
  %v9386 = vadd.f32 %v9385, %v9106
  %v9387 = vadd.f32 %v9386, %v9107
  %v9388 = vadd.f32 %v9387, %v9108
  %v9389 = vadd.f32 %v9388, %v9109
  %v9390 = vadd.f32 %v9389, %v9110
  %v9391 = vadd.f32 %v9390, %v9111
  %v9392 = vadd.f32 %v9391, %v9112
  %v9393 = vadd.f32 %v9392, %v9113
  %v9394 = vadd.f32 %v9393, %v9114
  %v9395 = vadd.f32 %v9394, %v9115
  %v9396 = vadd.f32 %v9395, %v9116
  %v9397 = vadd.f32 %v9396, %v9117
  %v9398 = vadd.f32 %v9397, %v9118
  %v9399 = vadd.f32 %v9398, %v9119
  %v9400 = vadd.f32 %v9399, %v9120
  %v9401 = vadd.f32 %v9400, %v9121
  %v9402 = vadd.f32 %v9401, %v9122
  %v9403 = vadd.f32 %v9402, %v9123
  %v9404 = vrot.slane %v9403, 4
  %v9405 = vadd.f32 %v9403, %v9404
  %v9406 = vrot.slane %v9405, 2
  %v9407 = vadd.f32 %v9405, %v9406
  %v9408 = vrot.slane %v9407, 1
  %v9409 = vadd.f32 %v9407, %v9408
  %v9410 = vadd.f32 %v9124, %v9125
  %v9411 = vadd.f32 %v9410, %v9126
  %v9412 = vadd.f32 %v9411, %v9127
  %v9413 = vadd.f32 %v9412, %v9128
  %v9414 = vadd.f32 %v9413, %v9129
  %v9415 = vadd.f32 %v9414, %v9130
  %v9416 = vadd.f32 %v9415, %v9131
  %v9417 = vadd.f32 %v9416, %v9132
  %v9418 = vadd.f32 %v9417, %v9133
  %v9419 = vadd.f32 %v9418, %v9134
  %v9420 = vadd.f32 %v9419, %v9135
  %v9421 = vadd.f32 %v9420, %v9136
  %v9422 = vadd.f32 %v9421, %v9137
  %v9423 = vadd.f32 %v9422, %v9138
  %v9424 = vadd.f32 %v9423, %v9139
  %v9425 = vadd.f32 %v9424, %v9140
  %v9426 = vadd.f32 %v9425, %v9141
  %v9427 = vadd.f32 %v9426, %v9142
  %v9428 = vadd.f32 %v9427, %v9143
  %v9429 = vadd.f32 %v9428, %v9144
  %v9430 = vadd.f32 %v9429, %v9145
  %v9431 = vadd.f32 %v9430, %v9146
  %v9432 = vadd.f32 %v9431, %v9147
  %v9433 = vadd.f32 %v9432, %v9148
  %v9434 = vadd.f32 %v9433, %v9149
  %v9435 = vadd.f32 %v9434, %v9150
  %v9436 = vadd.f32 %v9435, %v9151
  %v9437 = vadd.f32 %v9436, %v9152
  %v9438 = vadd.f32 %v9437, %v9153
  %v9439 = vadd.f32 %v9438, %v9154
  %v9440 = vadd.f32 %v9439, %v9155
  %v9441 = vrot.slane %v9440, 4
  %v9442 = vadd.f32 %v9440, %v9441
  %v9443 = vrot.slane %v9442, 2
  %v9444 = vadd.f32 %v9442, %v9443
  %v9445 = vrot.slane %v9444, 1
  %v9446 = vadd.f32 %v9444, %v9445
  %v9447 = vadd.f32 %v9156, %v9157
  %v9448 = vadd.f32 %v9447, %v9158
  %v9449 = vadd.f32 %v9448, %v9159
  %v9450 = vadd.f32 %v9449, %v9160
  %v9451 = vadd.f32 %v9450, %v9161
  %v9452 = vadd.f32 %v9451, %v9162
  %v9453 = vadd.f32 %v9452, %v9163
  %v9454 = vadd.f32 %v9453, %v9164
  %v9455 = vadd.f32 %v9454, %v9165
  %v9456 = vadd.f32 %v9455, %v9166
  %v9457 = vadd.f32 %v9456, %v9167
  %v9458 = vadd.f32 %v9457, %v9168
  %v9459 = vadd.f32 %v9458, %v9169
  %v9460 = vadd.f32 %v9459, %v9170
  %v9461 = vadd.f32 %v9460, %v9171
  %v9462 = vadd.f32 %v9461, %v9172
  %v9463 = vadd.f32 %v9462, %v9173
  %v9464 = vadd.f32 %v9463, %v9174
  %v9465 = vadd.f32 %v9464, %v9175
  %v9466 = vadd.f32 %v9465, %v9176
  %v9467 = vadd.f32 %v9466, %v9177
  %v9468 = vadd.f32 %v9467, %v9178
  %v9469 = vadd.f32 %v9468, %v9179
  %v9470 = vadd.f32 %v9469, %v9180
  %v9471 = vadd.f32 %v9470, %v9181
  %v9472 = vadd.f32 %v9471, %v9182
  %v9473 = vadd.f32 %v9472, %v9183
  %v9474 = vadd.f32 %v9473, %v9184
  %v9475 = vadd.f32 %v9474, %v9185
  %v9476 = vadd.f32 %v9475, %v9186
  %v9477 = vadd.f32 %v9476, %v9187
  %v9478 = vrot.slane %v9477, 4
  %v9479 = vadd.f32 %v9477, %v9478
  %v9480 = vrot.slane %v9479, 2
  %v9481 = vadd.f32 %v9479, %v9480
  %v9482 = vrot.slane %v9481, 1
  %v9483 = vadd.f32 %v9481, %v9482
  %v9484 = vpack.c.bf16 %v9224, %v9224
  %v9485 = vpack.c.bf16 %v9261, %v9261
  %v9486 = vpack.c.bf16 %v9298, %v9298
  %v9487 = vpack.c.bf16 %v9335, %v9335
  %v9488 = vpack.c.bf16 %v9372, %v9372
  %v9489 = vpack.c.bf16 %v9409, %v9409
  %v9490 = vpack.c.bf16 %v9446, %v9446
  %v9491 = vpack.c.bf16 %v9483, %v9483
  %v9492 = vld [vmem:[%s2] sm:$0xf]
  %v9493 = vld [vmem:[%s2 + $0x4] sm:$0xf]
  %v9494 = vld [vmem:[%s2 + $0x8] sm:$0xf]
  %v9495 = vld [vmem:[%s2 + $0xc] sm:$0xf]
  %v9496 = vld [vmem:[%s2 + $0x10] sm:$0xf]
  %v9497 = vld [vmem:[%s2 + $0x14] sm:$0xf]
  %v9498 = vld [vmem:[%s2 + $0x18] sm:$0xf]
  %v9499 = vld [vmem:[%s2 + $0x1c] sm:$0xf]
  %v9500 = vld [vmem:[%s2 + $0x20] sm:$0xf]
  %v9501 = vld [vmem:[%s2 + $0x24] sm:$0xf]
  %v9502 = vld [vmem:[%s2 + $0x28] sm:$0xf]
  %v9503 = vld [vmem:[%s2 + $0x2c] sm:$0xf]
  %v9504 = vld [vmem:[%s2 + $0x30] sm:$0xf]
  %v9505 = vld [vmem:[%s2 + $0x34] sm:$0xf]
  %v9506 = vld [vmem:[%s2 + $0x38] sm:$0xf]
  %v9507 = vld [vmem:[%s2 + $0x3c] sm:$0xf]
  %v9508 = vld [vmem:[%s3] sm:$0x1]
  %v9510 = vperm.slane %v9508, 0
  %v9520 = vunpack.c.l.b16 %v9484
  %v9521 = vunpack.c.l.b16 %v9485
  %v9522 = vunpack.c.l.b16 %v9486
  %v9523 = vunpack.c.l.b16 %v9487
  %v9524 = vunpack.c.l.b16 %v9488
  %v9525 = vunpack.c.l.b16 %v9489
  %v9526 = vunpack.c.l.b16 %v9490
  %v9527 = vunpack.c.l.b16 %v9491
  %vm9528 = vcmask 1041409
  %v9529 = vsel %vm9528, %v9521, %v9520
  %vm9530 = vcmask 1042434
  %v9531 = vsel %vm9530, %v9522, %v9529
  %vm9532 = vcmask 1043459
  %v9533 = vsel %vm9532, %v9523, %v9531
  %vm9534 = vcmask 1044484
  %v9535 = vsel %vm9534, %v9524, %v9533
  %vm9536 = vcmask 1045509
  %v9537 = vsel %vm9536, %v9525, %v9535
  %vm9538 = vcmask 1046534
  %v9539 = vsel %vm9538, %v9526, %v9537
  %vm9540 = vcmask 1047559
  %v9541 = vsel %vm9540, %v9527, %v9539
  %v9542 = vpack.c.b16 %v9541, %v9541
  %v9560 = vunpack.c.l.b16 %v9492
  %v9561 = vunpack.c.l.b16 %v9493
  %v9562 = vunpack.c.l.b16 %v9494
  %v9563 = vunpack.c.l.b16 %v9495
  %v9564 = vunpack.c.l.b16 %v9496
  %v9565 = vunpack.c.l.b16 %v9497
  %v9566 = vunpack.c.l.b16 %v9498
  %v9567 = vunpack.c.l.b16 %v9499
  %v9568 = vunpack.c.l.b16 %v9500
  %v9569 = vunpack.c.l.b16 %v9501
  %v9570 = vunpack.c.l.b16 %v9502
  %v9571 = vunpack.c.l.b16 %v9503
  %v9572 = vunpack.c.l.b16 %v9504
  %v9573 = vunpack.c.l.b16 %v9505
  %v9574 = vunpack.c.l.b16 %v9506
  %v9575 = vunpack.c.l.b16 %v9507
  %v9576 = vpack.c.b16 %v9561, %v9560
  %v9577 = vpack.c.b16 %v9563, %v9562
  %v9578 = vpack.c.b16 %v9565, %v9564
  %v9579 = vpack.c.b16 %v9567, %v9566
  %v9580 = vpack.c.b16 %v9569, %v9568
  %v9581 = vpack.c.b16 %v9571, %v9570
  %v9582 = vpack.c.b16 %v9573, %v9572
  %v9583 = vpack.c.b16 %v9575, %v9574
  %9592 = vmatpush.bf16.msra.mxu0 %v9583
  %9593 = vmatpush.bf16.msra.mxu0 %v9582
  %9594 = vmatpush.bf16.msra.mxu0 %v9581
  %9595 = vmatpush.bf16.msra.mxu0 %v9580
  %9596 = vmatpush.bf16.msra.mxu0 %v9579
  %9597 = vmatpush.bf16.msra.mxu0 %v9578
  %9598 = vmatpush.bf16.msra.mxu0 %v9577
  %9599 = vmatpush.bf16.msra.mxu0 %v9576
  %9600 = vmatmul.bf16.gmra.mxu0 %v9542
  %v9601 = vpop.f32.mrf.mxu0
  %v9602 = vadd.f32 %v9510, %v9601
  %v9603 = vpop.f32.mrf.mxu0
  %9604 = vdwg.mxu0
  %9605 = vst [vmem:[%s4] sm:$0xff] %v9602
  // Predicated region
  $region18: #{simclr_forward.1} parent=0 // pred_check
    _
  $region19: #{simclr_forward.1} parent=0 // pred_check_branch
    %9607 = sbr.rel (0) target = $region21
  $region20: #{simclr_forward.1} parent=0 // pred_region
    _
  $region21: #{simclr_forward.1} parent=0 // pred_fallthru
    _
  // Predicated region
  $region22: #{simclr_forward.1} parent=0 // pred_check
    _
  $region23: #{simclr_forward.1} parent=0 // pred_check_branch
    %9609 = sbr.rel (0) target = $region25
  $region24: #{simclr_forward.1} parent=0 // pred_region
    _
  $region25: #{simclr_forward.1} parent=0 // pred_fallthru
    _

</llo_original>
